<compile_context>
chip_gen: v6e
topology: v6e:2x2x1
jax: 0.10.0
libtpu: 0.0.40
codegen_flags: <defaults>
</compile_context>

<pallas_src>
import math

import jax
import jax.numpy as jnp
from jax import lax
from jax.experimental import pallas as pl
from jax.experimental.pallas import tpu as pltpu

# ----------------------------- configuration --------------------------------
B = 2
IMG = 16
PATCH = 4
C_X = 3          # stream-1 (video/RGB) channels
C_Y = 1          # stream-2 (audio/spectrogram) channels
D = 32           # embedding dim
HEADS = 4
HEAD_DIM = D // HEADS
DEPTH = 2
MLP_HID = 4 * D
NUM_CLASSES = 10
N = (IMG // PATCH) ** 2
N1 = N + 1       # + cls token
BN = B * N1      # flattened (batch, seq) rows
EPS = 1e-6
SCALE = 1.0 / math.sqrt(HEAD_DIM)
NEG_INF = -1e30
F32 = jnp.float32
BF16 = jnp.bfloat16

# fixed per-stream kernel-argument order
STREAM_KEYS = (
    'patches', 'patch_w', 'add', 'npe_g', 'npe_b',
    'ln1_g', 'ln1_b', 'wqkv', 'bqkv', 'wo', 'bo',
    'ln2_g', 'ln2_b', 'w1', 'b1', 'w2', 'b2',
    'norm_g', 'norm_b', 'head_w', 'head_b',
)
NSK = len(STREAM_KEYS)


# ----------------------------- small helpers --------------------------------
def _ln(x, g, b):
    mu = jnp.mean(x, axis=-1, keepdims=True)
    var = jnp.mean(jnp.square(x - mu), axis=-1, keepdims=True)
    return (x - mu) * lax.rsqrt(var + EPS) * g + b


def _gelu(x):
    # tanh-approx GELU (see TODO(synk) above)
    c = 0.7978845608028654  # sqrt(2/pi)
    return 0.5 * x * (1.0 + jnp.tanh(c * (x + 0.044715 * x * x * x)))


# ------------------------------- fused kernel --------------------------------
def ds_mvit_kernel(*refs):
    """Whole dual-stream forward: embed -> DEPTH blocks (+cls exchange) -> heads."""
    mask_ref = refs[0]
    px = dict(zip(STREAM_KEYS, refs[1:1 + NSK]))
    py = dict(zip(STREAM_KEYS, refs[1 + NSK:1 + 2 * NSK]))
    o_ref = refs[1 + 2 * NSK]

    mask = mask_ref[...]                      # (BN, BN) additive block-diag mask

    def embed(p):
        # Patch-embed matmul.  cls token, pos embed and conv bias are folded
        # into the precomputed additive term `add` (cls row of `patches` is 0).
        emb = jnp.dot(p['patches'][...], p['patch_w'][...],
                      preferred_element_type=F32)            # (BN, D) f32
        seq = emb + p['add'][...]
        # pos_drop: identity (eval).  norm_patch_embed:
        return _ln(seq, p['npe_g'][...], p['npe_b'][...])

    def attn_block(x, p, d):
        # x + Proj(MHA(LN(x))), all batches at once via block-diagonal mask.
        xn = _ln(x, p['ln1_g'][d], p['ln1_b'][d])
        qkv = jnp.dot(xn.astype(BF16), p['wqkv'][d],
                      preferred_element_type=F32) + p['bqkv'][d]   # (BN, 3D) f32
        q_all = qkv[:, :D] * SCALE
        k_all = qkv[:, D:2 * D]
        v_all = qkv[:, 2 * D:]
        ctxs = []
        for h in range(HEADS):
            lo, hi = h * HEAD_DIM, (h + 1) * HEAD_DIM
            qh = q_all[:, lo:hi].astype(BF16)
            kh = k_all[:, lo:hi].astype(BF16)
            vh = v_all[:, lo:hi].astype(BF16)
            s = lax.dot_general(qh, kh, (((1,), (1,)), ((), ())),
                                preferred_element_type=F32) + mask  # (BN, BN)
            s = s - jnp.max(s, axis=-1, keepdims=True)
            e = jnp.exp(s)
            inv = pl.reciprocal(jnp.sum(e, axis=-1, keepdims=True), approx=True)
            prob = (e * inv).astype(BF16)
            ctxs.append(jnp.dot(prob, vh, preferred_element_type=F32))  # (BN, hd)
        # concat heads -> single output-projection matmul
        ctx = jnp.concatenate(ctxs, axis=-1)                        # (BN, D)
        proj = jnp.dot(ctx.astype(BF16), p['wo'][d],
                       preferred_element_type=F32) + p['bo'][d]
        return x + proj

    def mlp_block(x, p, d):
        xn = _ln(x, p['ln2_g'][d], p['ln2_b'][d])
        h = jnp.dot(xn.astype(BF16), p['w1'][d],
                    preferred_element_type=F32) + p['b1'][d]        # (BN, 4D)
        h = _gelu(h)
        return x + jnp.dot(h.astype(BF16), p['w2'][d],
                           preferred_element_type=F32) + p['b2'][d]

    x = embed(px)
    y = embed(py)

    rows = lax.broadcasted_iota(jnp.int32, (BN, 1), 0)
    for d in range(DEPTH):
        x = mlp_block(attn_block(x, px, d), px, d)
        y = mlp_block(attn_block(y, py, d), py, d)
        # cross-stream cls exchange (PyTorch in-place view aliasing semantics)
        for b in range(B):
            r = b * N1
            cx = x[r:r + 1, :]
            cy = y[r:r + 1, :]
            ncx = (cx + cy) * 0.5
            ncy = (ncx + cy) * 0.5
            x = jnp.where(rows == r, ncx, x)
            y = jnp.where(rows == r, ncy, y)

    # gather cls rows -> final norm -> heads -> stream sum; one dense store
    cls_x = jnp.concatenate([x[b * N1:b * N1 + 1, :] for b in range(B)], axis=0)
    cls_y = jnp.concatenate([y[b * N1:b * N1 + 1, :] for b in range(B)], axis=0)
    cls_x = _ln(cls_x, px['norm_g'][...], px['norm_b'][...])        # (B, D)
    cls_y = _ln(cls_y, py['norm_g'][...], py['norm_b'][...])
    logits = (jnp.dot(cls_x.astype(BF16), px['head_w'][...],
                      preferred_element_type=F32) + px['head_b'][...]
              + jnp.dot(cls_y.astype(BF16), py['head_w'][...],
                        preferred_element_type=F32) + py['head_b'][...])
    o_ref[...] = logits                                             # (B, NUM_CLASSES)


# --------------------------- wrapper / preprocessing --------------------------
def _im2col(img):
    # Conv2d(kernel=stride=PATCH) as im2col; patch vector order (C, kh, kw).
    bsz, c, h, w = img.shape
    nh, nw = h // PATCH, w // PATCH
    p = img.reshape(bsz, c, nh, PATCH, nw, PATCH)
    p = p.transpose(0, 2, 4, 1, 3, 5)
    return p.reshape(bsz, nh * nw, c * PATCH * PATCH)          # (B, N, Cp)


def _prep_stream(p, img):
    pat = _im2col(img)                                          # (B, N, Cp)
    pat = jnp.pad(pat, ((0, 0), (1, 0), (0, 0)))                # zero row @ cls slot
    pat = pat.reshape(B * N1, -1).astype(BF16)                  # (BN, Cp)
    # additive term per row: cls row -> cls_token + pos[0]; patch rows -> pos + bias
    add = jnp.concatenate(
        [p['cls_token'].reshape(1, D) + p['pos_embed'][0:1],
         p['pos_embed'][1:] + p['patch_b']], axis=0)            # (N1, D)
    add = jnp.tile(add, (B, 1))                                 # (BN, D)
    vals = dict(p, patches=pat, add=add)
    vals['patch_w'] = p['patch_w'].astype(BF16)
    vals['wqkv'] = p['wqkv'].astype(BF16)
    vals['wo'] = p['wo'].astype(BF16)
    vals['w1'] = p['w1'].astype(BF16)
    vals['w2'] = p['w2'].astype(BF16)
    vals['head_w'] = p['head_w'].astype(BF16)
    return [vals[k] for k in STREAM_KEYS]


@jax.jit
def ds_mvit_forward(params_x, params_y, x_img, y_img):
    row_batch = jnp.arange(BN, dtype=jnp.int32) // N1
    attn_mask = jnp.where(row_batch[:, None] == row_batch[None, :],
                          0.0, NEG_INF).astype(F32)             # (BN, BN)
    inputs = ([attn_mask]
              + _prep_stream(params_x, x_img)
              + _prep_stream(params_y, y_img))
    return pl.pallas_call(
        ds_mvit_kernel,
        out_shape=jax.ShapeDtypeStruct((B, NUM_CLASSES), F32),
        in_specs=[pl.BlockSpec(memory_space=pltpu.MemorySpace.VMEM)
                  for _ in inputs],
        out_specs=pl.BlockSpec(memory_space=pltpu.MemorySpace.VMEM),
    )(*inputs)


# ----------------------------- parameter init --------------------------------
def init_stream_params(key, c_in):
    std = 0.02
    ks = jax.random.split(key, 8)
    return dict(
        patch_w=jax.random.normal(ks[0], (c_in * PATCH * PATCH, D), F32) * std,
        patch_b=jnp.zeros((1, D), F32),
        cls_token=jax.random.normal(ks[1], (1, 1, D), F32) * std,
        pos_embed=jax.random.normal(ks[2], (N1, D), F32) * std,
        npe_g=jnp.ones((1, D), F32), npe_b=jnp.zeros((1, D), F32),
        # transformer blocks, stacked over depth
        ln1_g=jnp.ones((DEPTH, 1, D), F32), ln1_b=jnp.zeros((DEPTH, 1, D), F32),
        wqkv=jax.random.normal(ks[3], (DEPTH, D, 3 * D), F32) * std,
        bqkv=jnp.zeros((DEPTH, 1, 3 * D), F32),
        wo=jax.random.normal(ks[4], (DEPTH, D, D), F32) * std,
        bo=jnp.zeros((DEPTH, 1, D), F32),
        ln2_g=jnp.ones((DEPTH, 1, D), F32), ln2_b=jnp.zeros((DEPTH, 1, D), F32),
        w1=jax.random.normal(ks[5], (DEPTH, D, MLP_HID), F32) * std,
        b1=jnp.zeros((DEPTH, 1, MLP_HID), F32),
        w2=jax.random.normal(ks[6], (DEPTH, MLP_HID, D), F32) * std,
        b2=jnp.zeros((DEPTH, 1, D), F32),
        norm_g=jnp.ones((1, D), F32), norm_b=jnp.zeros((1, D), F32),
        head_w=jax.random.normal(ks[7], (D, NUM_CLASSES), F32) * std,
        head_b=jnp.zeros((1, NUM_CLASSES), F32),
    )


# ---------------------------------- main --------------------------------------
if __name__ == "__main__":
    key = jax.random.PRNGKey(0)
    k_x, k_y, k_px, k_py = jax.random.split(key, 4)
    x_img = jax.random.normal(k_x, (B, C_X, IMG, IMG), F32)
    y_img = jax.random.normal(k_y, (B, C_Y, IMG, IMG), F32)
    params_x = init_stream_params(k_px, C_X)
    params_y = init_stream_params(k_py, C_Y)

    out = ds_mvit_forward(params_x, params_y, x_img, y_img)
    out = jax.block_until_ready(out)
    assert out.shape == (B, NUM_CLASSES), out.shape
    assert out.dtype == F32
    assert bool(jnp.all(jnp.isfinite(out)))
    print("KERNEL_OK")
</pallas_src>

<mosaic_0001>
module attributes {stable_mosaic.version = 11 : i64} {
  func.func @ds_mvit_kernel(%arg0: memref<34x34xf32, #tpu.memory_space<vmem>>, %arg1: memref<34x48xbf16, #tpu.memory_space<vmem>>, %arg2: memref<48x32xbf16, #tpu.memory_space<vmem>>, %arg3: memref<34x32xf32, #tpu.memory_space<vmem>>, %arg4: memref<1x32xf32, #tpu.memory_space<vmem>>, %arg5: memref<1x32xf32, #tpu.memory_space<vmem>>, %arg6: memref<2x1x32xf32, #tpu.memory_space<vmem>>, %arg7: memref<2x1x32xf32, #tpu.memory_space<vmem>>, %arg8: memref<2x32x96xbf16, #tpu.memory_space<vmem>>, %arg9: memref<2x1x96xf32, #tpu.memory_space<vmem>>, %arg10: memref<2x32x32xbf16, #tpu.memory_space<vmem>>, %arg11: memref<2x1x32xf32, #tpu.memory_space<vmem>>, %arg12: memref<2x1x32xf32, #tpu.memory_space<vmem>>, %arg13: memref<2x1x32xf32, #tpu.memory_space<vmem>>, %arg14: memref<2x32x128xbf16, #tpu.memory_space<vmem>>, %arg15: memref<2x1x128xf32, #tpu.memory_space<vmem>>, %arg16: memref<2x128x32xbf16, #tpu.memory_space<vmem>>, %arg17: memref<2x1x32xf32, #tpu.memory_space<vmem>>, %arg18: memref<1x32xf32, #tpu.memory_space<vmem>>, %arg19: memref<1x32xf32, #tpu.memory_space<vmem>>, %arg20: memref<32x10xbf16, #tpu.memory_space<vmem>>, %arg21: memref<1x10xf32, #tpu.memory_space<vmem>>, %arg22: memref<34x16xbf16, #tpu.memory_space<vmem>>, %arg23: memref<16x32xbf16, #tpu.memory_space<vmem>>, %arg24: memref<34x32xf32, #tpu.memory_space<vmem>>, %arg25: memref<1x32xf32, #tpu.memory_space<vmem>>, %arg26: memref<1x32xf32, #tpu.memory_space<vmem>>, %arg27: memref<2x1x32xf32, #tpu.memory_space<vmem>>, %arg28: memref<2x1x32xf32, #tpu.memory_space<vmem>>, %arg29: memref<2x32x96xbf16, #tpu.memory_space<vmem>>, %arg30: memref<2x1x96xf32, #tpu.memory_space<vmem>>, %arg31: memref<2x32x32xbf16, #tpu.memory_space<vmem>>, %arg32: memref<2x1x32xf32, #tpu.memory_space<vmem>>, %arg33: memref<2x1x32xf32, #tpu.memory_space<vmem>>, %arg34: memref<2x1x32xf32, #tpu.memory_space<vmem>>, %arg35: memref<2x32x128xbf16, #tpu.memory_space<vmem>>, %arg36: memref<2x1x128xf32, #tpu.memory_space<vmem>>, %arg37: memref<2x128x32xbf16, #tpu.memory_space<vmem>>, %arg38: memref<2x1x32xf32, #tpu.memory_space<vmem>>, %arg39: memref<1x32xf32, #tpu.memory_space<vmem>>, %arg40: memref<1x32xf32, #tpu.memory_space<vmem>>, %arg41: memref<32x10xbf16, #tpu.memory_space<vmem>>, %arg42: memref<1x10xf32, #tpu.memory_space<vmem>>, %arg43: memref<2x10xf32, #tpu.memory_space<vmem>>) attributes {dimension_semantics = [], scalar_prefetch = 0 : i64, scratch_operands = 0 : i64, tpu.core_type = #tpu.core_type<tc>} {
    %c0 = arith.constant 0 : index
    %c0_0 = arith.constant 0 : index
    %0 = vector.load %arg0[%c0, %c0_0] : memref<34x34xf32, #tpu.memory_space<vmem>>, vector<34x34xf32>
    %c0_1 = arith.constant 0 : index
    %c0_2 = arith.constant 0 : index
    %1 = vector.load %arg1[%c0_1, %c0_2] : memref<34x48xbf16, #tpu.memory_space<vmem>>, vector<34x48xbf16>
    %c0_3 = arith.constant 0 : index
    %c0_4 = arith.constant 0 : index
    %2 = vector.load %arg2[%c0_3, %c0_4] : memref<48x32xbf16, #tpu.memory_space<vmem>>, vector<48x32xbf16>
    %cst = arith.constant dense<0.000000e+00> : vector<34x32xf32>
    %3 = tpu.matmul %1, %2, %cst {dimension_numbers = #tpu.dot_dimension_numbers<[1], [0], [0], [1], [0, 0, 1, 1], [], []>} : vector<34x48xbf16>, vector<48x32xbf16>, vector<34x32xf32> -> vector<34x32xf32>
    %c0_5 = arith.constant 0 : index
    %c0_6 = arith.constant 0 : index
    %4 = vector.load %arg3[%c0_5, %c0_6] : memref<34x32xf32, #tpu.memory_space<vmem>>, vector<34x32xf32>
    %5 = arith.addf %3, %4 : vector<34x32xf32>
    %c0_7 = arith.constant 0 : index
    %c0_8 = arith.constant 0 : index
    %6 = vector.load %arg4[%c0_7, %c0_8] : memref<1x32xf32, #tpu.memory_space<vmem>>, vector<1x32xf32>
    %c0_9 = arith.constant 0 : index
    %c0_10 = arith.constant 0 : index
    %7 = vector.load %arg5[%c0_9, %c0_10] : memref<1x32xf32, #tpu.memory_space<vmem>>, vector<1x32xf32>
    %cst_11 = arith.constant dense<0.000000e+00> : vector<34xf32>
    %8 = vector.multi_reduction <add>, %5, %cst_11 [1] : vector<34x32xf32> to vector<34xf32>
    %9 = vector.shape_cast %8 : vector<34xf32> to vector<34x1xf32>
    %cst_12 = arith.constant 3.200000e+01 : f32
    %10 = vector.broadcast %cst_12 : f32 to vector<34x1xf32>
    %11 = arith.divf %9, %10 : vector<34x1xf32>
    %12 = vector.broadcast %11 : vector<34x1xf32> to vector<34x32xf32>
    %13 = arith.subf %5, %12 : vector<34x32xf32>
    %14 = arith.mulf %13, %13 : vector<34x32xf32>
    %cst_13 = arith.constant dense<0.000000e+00> : vector<34xf32>
    %15 = vector.multi_reduction <add>, %14, %cst_13 [1] : vector<34x32xf32> to vector<34xf32>
    %16 = vector.shape_cast %15 : vector<34xf32> to vector<34x1xf32>
    %cst_14 = arith.constant 3.200000e+01 : f32
    %17 = vector.broadcast %cst_14 : f32 to vector<34x1xf32>
    %18 = arith.divf %16, %17 : vector<34x1xf32>
    %19 = vector.broadcast %11 : vector<34x1xf32> to vector<34x32xf32>
    %20 = arith.subf %5, %19 : vector<34x32xf32>
    %cst_15 = arith.constant 9.99999997E-7 : f32
    %21 = vector.broadcast %cst_15 : f32 to vector<34x1xf32>
    %22 = arith.addf %18, %21 : vector<34x1xf32>
    %23 = math.rsqrt %22 : vector<34x1xf32>
    %24 = vector.broadcast %23 : vector<34x1xf32> to vector<34x32xf32>
    %25 = arith.mulf %20, %24 : vector<34x32xf32>
    %26 = vector.broadcast %6 : vector<1x32xf32> to vector<34x32xf32>
    %27 = arith.mulf %25, %26 : vector<34x32xf32>
    %28 = vector.broadcast %7 : vector<1x32xf32> to vector<34x32xf32>
    %29 = arith.addf %27, %28 : vector<34x32xf32>
    %c0_16 = arith.constant 0 : index
    %c0_17 = arith.constant 0 : index
    %30 = vector.load %arg22[%c0_16, %c0_17] : memref<34x16xbf16, #tpu.memory_space<vmem>>, vector<34x16xbf16>
    %c0_18 = arith.constant 0 : index
    %c0_19 = arith.constant 0 : index
    %31 = vector.load %arg23[%c0_18, %c0_19] : memref<16x32xbf16, #tpu.memory_space<vmem>>, vector<16x32xbf16>
    %cst_20 = arith.constant dense<0.000000e+00> : vector<34x32xf32>
    %32 = tpu.matmul %30, %31, %cst_20 {dimension_numbers = #tpu.dot_dimension_numbers<[1], [0], [0], [1], [0, 0, 1, 1], [], []>} : vector<34x16xbf16>, vector<16x32xbf16>, vector<34x32xf32> -> vector<34x32xf32>
    %c0_21 = arith.constant 0 : index
    %c0_22 = arith.constant 0 : index
    %33 = vector.load %arg24[%c0_21, %c0_22] : memref<34x32xf32, #tpu.memory_space<vmem>>, vector<34x32xf32>
    %34 = arith.addf %32, %33 : vector<34x32xf32>
    %c0_23 = arith.constant 0 : index
    %c0_24 = arith.constant 0 : index
    %35 = vector.load %arg25[%c0_23, %c0_24] : memref<1x32xf32, #tpu.memory_space<vmem>>, vector<1x32xf32>
    %c0_25 = arith.constant 0 : index
    %c0_26 = arith.constant 0 : index
    %36 = vector.load %arg26[%c0_25, %c0_26] : memref<1x32xf32, #tpu.memory_space<vmem>>, vector<1x32xf32>
    %cst_27 = arith.constant dense<0.000000e+00> : vector<34xf32>
    %37 = vector.multi_reduction <add>, %34, %cst_27 [1] : vector<34x32xf32> to vector<34xf32>
    %38 = vector.shape_cast %37 : vector<34xf32> to vector<34x1xf32>
    %cst_28 = arith.constant 3.200000e+01 : f32
    %39 = vector.broadcast %cst_28 : f32 to vector<34x1xf32>
    %40 = arith.divf %38, %39 : vector<34x1xf32>
    %41 = vector.broadcast %40 : vector<34x1xf32> to vector<34x32xf32>
    %42 = arith.subf %34, %41 : vector<34x32xf32>
    %43 = arith.mulf %42, %42 : vector<34x32xf32>
    %cst_29 = arith.constant dense<0.000000e+00> : vector<34xf32>
    %44 = vector.multi_reduction <add>, %43, %cst_29 [1] : vector<34x32xf32> to vector<34xf32>
    %45 = vector.shape_cast %44 : vector<34xf32> to vector<34x1xf32>
    %cst_30 = arith.constant 3.200000e+01 : f32
    %46 = vector.broadcast %cst_30 : f32 to vector<34x1xf32>
    %47 = arith.divf %45, %46 : vector<34x1xf32>
    %48 = vector.broadcast %40 : vector<34x1xf32> to vector<34x32xf32>
    %49 = arith.subf %34, %48 : vector<34x32xf32>
    %cst_31 = arith.constant 9.99999997E-7 : f32
    %50 = vector.broadcast %cst_31 : f32 to vector<34x1xf32>
    %51 = arith.addf %47, %50 : vector<34x1xf32>
    %52 = math.rsqrt %51 : vector<34x1xf32>
    %53 = vector.broadcast %52 : vector<34x1xf32> to vector<34x32xf32>
    %54 = arith.mulf %49, %53 : vector<34x32xf32>
    %55 = vector.broadcast %35 : vector<1x32xf32> to vector<34x32xf32>
    %56 = arith.mulf %54, %55 : vector<34x32xf32>
    %57 = vector.broadcast %36 : vector<1x32xf32> to vector<34x32xf32>
    %58 = arith.addf %56, %57 : vector<34x32xf32>
    %59 = tpu.iota {dimensions = array<i32: 0>} : vector<34x1xi32>
    %c0_32 = arith.constant 0 : index
    %c0_33 = arith.constant 0 : index
    %c0_34 = arith.constant 0 : index
    %60 = vector.load %arg6[%c0_32, %c0_33, %c0_34] : memref<2x1x32xf32, #tpu.memory_space<vmem>>, vector<1x1x32xf32>
    %61 = vector.shape_cast %60 : vector<1x1x32xf32> to vector<1x32xf32>
    %c0_35 = arith.constant 0 : index
    %c0_36 = arith.constant 0 : index
    %c0_37 = arith.constant 0 : index
    %62 = vector.load %arg7[%c0_35, %c0_36, %c0_37] : memref<2x1x32xf32, #tpu.memory_space<vmem>>, vector<1x1x32xf32>
    %63 = vector.shape_cast %62 : vector<1x1x32xf32> to vector<1x32xf32>
    %cst_38 = arith.constant dense<0.000000e+00> : vector<34xf32>
    %64 = vector.multi_reduction <add>, %29, %cst_38 [1] : vector<34x32xf32> to vector<34xf32>
    %65 = vector.shape_cast %64 : vector<34xf32> to vector<34x1xf32>
    %cst_39 = arith.constant 3.200000e+01 : f32
    %66 = vector.broadcast %cst_39 : f32 to vector<34x1xf32>
    %67 = arith.divf %65, %66 : vector<34x1xf32>
    %68 = vector.broadcast %67 : vector<34x1xf32> to vector<34x32xf32>
    %69 = arith.subf %29, %68 : vector<34x32xf32>
    %70 = arith.mulf %69, %69 : vector<34x32xf32>
    %cst_40 = arith.constant dense<0.000000e+00> : vector<34xf32>
    %71 = vector.multi_reduction <add>, %70, %cst_40 [1] : vector<34x32xf32> to vector<34xf32>
    %72 = vector.shape_cast %71 : vector<34xf32> to vector<34x1xf32>
    %cst_41 = arith.constant 3.200000e+01 : f32
    %73 = vector.broadcast %cst_41 : f32 to vector<34x1xf32>
    %74 = arith.divf %72, %73 : vector<34x1xf32>
    %75 = vector.broadcast %67 : vector<34x1xf32> to vector<34x32xf32>
    %76 = arith.subf %29, %75 : vector<34x32xf32>
    %cst_42 = arith.constant 9.99999997E-7 : f32
    %77 = vector.broadcast %cst_42 : f32 to vector<34x1xf32>
    %78 = arith.addf %74, %77 : vector<34x1xf32>
    %79 = math.rsqrt %78 : vector<34x1xf32>
    %80 = vector.broadcast %79 : vector<34x1xf32> to vector<34x32xf32>
    %81 = arith.mulf %76, %80 : vector<34x32xf32>
    %82 = vector.broadcast %61 : vector<1x32xf32> to vector<34x32xf32>
    %83 = arith.mulf %81, %82 : vector<34x32xf32>
    %84 = vector.broadcast %63 : vector<1x32xf32> to vector<34x32xf32>
    %85 = arith.addf %83, %84 : vector<34x32xf32>
    %86 = arith.truncf %85 : vector<34x32xf32> to vector<34x32xbf16>
    %c0_43 = arith.constant 0 : index
    %c0_44 = arith.constant 0 : index
    %c0_45 = arith.constant 0 : index
    %87 = vector.load %arg8[%c0_43, %c0_44, %c0_45] : memref<2x32x96xbf16, #tpu.memory_space<vmem>>, vector<1x32x96xbf16>
    %88 = vector.shape_cast %87 : vector<1x32x96xbf16> to vector<32x96xbf16>
    %cst_46 = arith.constant dense<0.000000e+00> : vector<34x96xf32>
    %89 = tpu.matmul %86, %88, %cst_46 {dimension_numbers = #tpu.dot_dimension_numbers<[1], [0], [0], [1], [0, 0, 1, 1], [], []>} : vector<34x32xbf16>, vector<32x96xbf16>, vector<34x96xf32> -> vector<34x96xf32>
    %c0_47 = arith.constant 0 : index
    %c0_48 = arith.constant 0 : index
    %c0_49 = arith.constant 0 : index
    %90 = vector.load %arg9[%c0_47, %c0_48, %c0_49] : memref<2x1x96xf32, #tpu.memory_space<vmem>>, vector<1x1x96xf32>
    %91 = vector.shape_cast %90 : vector<1x1x96xf32> to vector<1x96xf32>
    %92 = vector.broadcast %91 : vector<1x96xf32> to vector<34x96xf32>
    %93 = arith.addf %89, %92 : vector<34x96xf32>
    %94 = vector.extract_strided_slice %93 {offsets = [0, 0], sizes = [34, 32], strides = [1, 1]} : vector<34x96xf32> to vector<34x32xf32>
    %cst_50 = arith.constant 0.353553385 : f32
    %95 = vector.broadcast %cst_50 : f32 to vector<34x32xf32>
    %96 = arith.mulf %94, %95 : vector<34x32xf32>
    %97 = vector.extract_strided_slice %93 {offsets = [0, 32], sizes = [34, 32], strides = [1, 1]} : vector<34x96xf32> to vector<34x32xf32>
    %98 = vector.extract_strided_slice %93 {offsets = [0, 64], sizes = [34, 32], strides = [1, 1]} : vector<34x96xf32> to vector<34x32xf32>
    %99 = vector.extract_strided_slice %96 {offsets = [0, 0], sizes = [34, 8], strides = [1, 1]} : vector<34x32xf32> to vector<34x8xf32>
    %100 = arith.truncf %99 : vector<34x8xf32> to vector<34x8xbf16>
    %101 = vector.extract_strided_slice %97 {offsets = [0, 0], sizes = [34, 8], strides = [1, 1]} : vector<34x32xf32> to vector<34x8xf32>
    %102 = arith.truncf %101 : vector<34x8xf32> to vector<34x8xbf16>
    %103 = vector.extract_strided_slice %98 {offsets = [0, 0], sizes = [34, 8], strides = [1, 1]} : vector<34x32xf32> to vector<34x8xf32>
    %104 = arith.truncf %103 : vector<34x8xf32> to vector<34x8xbf16>
    %cst_51 = arith.constant dense<0.000000e+00> : vector<34x34xf32>
    %105 = tpu.matmul %100, %102, %cst_51 {dimension_numbers = #tpu.dot_dimension_numbers<[1], [1], [0], [0], [0, 0, 1, 0], [], []>} : vector<34x8xbf16>, vector<34x8xbf16>, vector<34x34xf32> -> vector<34x34xf32>
    %106 = arith.addf %105, %0 : vector<34x34xf32>
    %cst_52 = arith.constant dense<0xFF800000> : vector<34xf32>
    %107 = vector.multi_reduction <maximumf>, %106, %cst_52 [1] : vector<34x34xf32> to vector<34xf32>
    %108 = vector.shape_cast %107 : vector<34xf32> to vector<34x1xf32>
    %109 = vector.broadcast %108 : vector<34x1xf32> to vector<34x34xf32>
    %110 = arith.subf %106, %109 : vector<34x34xf32>
    %111 = math.exp %110 : vector<34x34xf32>
    %cst_53 = arith.constant dense<0.000000e+00> : vector<34xf32>
    %112 = vector.multi_reduction <add>, %111, %cst_53 [1] : vector<34x34xf32> to vector<34xf32>
    %113 = vector.shape_cast %112 : vector<34xf32> to vector<34x1xf32>
    %114 = tpu.reciprocal %113 {approx = true} : vector<34x1xf32> -> vector<34x1xf32>
    %115 = vector.broadcast %114 : vector<34x1xf32> to vector<34x34xf32>
    %116 = arith.mulf %111, %115 : vector<34x34xf32>
    %117 = arith.truncf %116 : vector<34x34xf32> to vector<34x34xbf16>
    %cst_54 = arith.constant dense<0.000000e+00> : vector<34x8xf32>
    %118 = tpu.matmul %117, %104, %cst_54 {dimension_numbers = #tpu.dot_dimension_numbers<[1], [0], [0], [1], [0, 0, 1, 1], [], []>} : vector<34x34xbf16>, vector<34x8xbf16>, vector<34x8xf32> -> vector<34x8xf32>
    %119 = vector.extract_strided_slice %96 {offsets = [0, 8], sizes = [34, 8], strides = [1, 1]} : vector<34x32xf32> to vector<34x8xf32>
    %120 = arith.truncf %119 : vector<34x8xf32> to vector<34x8xbf16>
    %121 = vector.extract_strided_slice %97 {offsets = [0, 8], sizes = [34, 8], strides = [1, 1]} : vector<34x32xf32> to vector<34x8xf32>
    %122 = arith.truncf %121 : vector<34x8xf32> to vector<34x8xbf16>
    %123 = vector.extract_strided_slice %98 {offsets = [0, 8], sizes = [34, 8], strides = [1, 1]} : vector<34x32xf32> to vector<34x8xf32>
    %124 = arith.truncf %123 : vector<34x8xf32> to vector<34x8xbf16>
    %cst_55 = arith.constant dense<0.000000e+00> : vector<34x34xf32>
    %125 = tpu.matmul %120, %122, %cst_55 {dimension_numbers = #tpu.dot_dimension_numbers<[1], [1], [0], [0], [0, 0, 1, 0], [], []>} : vector<34x8xbf16>, vector<34x8xbf16>, vector<34x34xf32> -> vector<34x34xf32>
    %126 = arith.addf %125, %0 : vector<34x34xf32>
    %cst_56 = arith.constant dense<0xFF800000> : vector<34xf32>
    %127 = vector.multi_reduction <maximumf>, %126, %cst_56 [1] : vector<34x34xf32> to vector<34xf32>
    %128 = vector.shape_cast %127 : vector<34xf32> to vector<34x1xf32>
    %129 = vector.broadcast %128 : vector<34x1xf32> to vector<34x34xf32>
    %130 = arith.subf %126, %129 : vector<34x34xf32>
    %131 = math.exp %130 : vector<34x34xf32>
    %cst_57 = arith.constant dense<0.000000e+00> : vector<34xf32>
    %132 = vector.multi_reduction <add>, %131, %cst_57 [1] : vector<34x34xf32> to vector<34xf32>
    %133 = vector.shape_cast %132 : vector<34xf32> to vector<34x1xf32>
    %134 = tpu.reciprocal %133 {approx = true} : vector<34x1xf32> -> vector<34x1xf32>
    %135 = vector.broadcast %134 : vector<34x1xf32> to vector<34x34xf32>
    %136 = arith.mulf %131, %135 : vector<34x34xf32>
    %137 = arith.truncf %136 : vector<34x34xf32> to vector<34x34xbf16>
    %cst_58 = arith.constant dense<0.000000e+00> : vector<34x8xf32>
    %138 = tpu.matmul %137, %124, %cst_58 {dimension_numbers = #tpu.dot_dimension_numbers<[1], [0], [0], [1], [0, 0, 1, 1], [], []>} : vector<34x34xbf16>, vector<34x8xbf16>, vector<34x8xf32> -> vector<34x8xf32>
    %139 = vector.extract_strided_slice %96 {offsets = [0, 16], sizes = [34, 8], strides = [1, 1]} : vector<34x32xf32> to vector<34x8xf32>
    %140 = arith.truncf %139 : vector<34x8xf32> to vector<34x8xbf16>
    %141 = vector.extract_strided_slice %97 {offsets = [0, 16], sizes = [34, 8], strides = [1, 1]} : vector<34x32xf32> to vector<34x8xf32>
    %142 = arith.truncf %141 : vector<34x8xf32> to vector<34x8xbf16>
    %143 = vector.extract_strided_slice %98 {offsets = [0, 16], sizes = [34, 8], strides = [1, 1]} : vector<34x32xf32> to vector<34x8xf32>
    %144 = arith.truncf %143 : vector<34x8xf32> to vector<34x8xbf16>
    %cst_59 = arith.constant dense<0.000000e+00> : vector<34x34xf32>
    %145 = tpu.matmul %140, %142, %cst_59 {dimension_numbers = #tpu.dot_dimension_numbers<[1], [1], [0], [0], [0, 0, 1, 0], [], []>} : vector<34x8xbf16>, vector<34x8xbf16>, vector<34x34xf32> -> vector<34x34xf32>
    %146 = arith.addf %145, %0 : vector<34x34xf32>
    %cst_60 = arith.constant dense<0xFF800000> : vector<34xf32>
    %147 = vector.multi_reduction <maximumf>, %146, %cst_60 [1] : vector<34x34xf32> to vector<34xf32>
    %148 = vector.shape_cast %147 : vector<34xf32> to vector<34x1xf32>
    %149 = vector.broadcast %148 : vector<34x1xf32> to vector<34x34xf32>
    %150 = arith.subf %146, %149 : vector<34x34xf32>
    %151 = math.exp %150 : vector<34x34xf32>
    %cst_61 = arith.constant dense<0.000000e+00> : vector<34xf32>
    %152 = vector.multi_reduction <add>, %151, %cst_61 [1] : vector<34x34xf32> to vector<34xf32>
    %153 = vector.shape_cast %152 : vector<34xf32> to vector<34x1xf32>
    %154 = tpu.reciprocal %153 {approx = true} : vector<34x1xf32> -> vector<34x1xf32>
    %155 = vector.broadcast %154 : vector<34x1xf32> to vector<34x34xf32>
    %156 = arith.mulf %151, %155 : vector<34x34xf32>
    %157 = arith.truncf %156 : vector<34x34xf32> to vector<34x34xbf16>
    %cst_62 = arith.constant dense<0.000000e+00> : vector<34x8xf32>
    %158 = tpu.matmul %157, %144, %cst_62 {dimension_numbers = #tpu.dot_dimension_numbers<[1], [0], [0], [1], [0, 0, 1, 1], [], []>} : vector<34x34xbf16>, vector<34x8xbf16>, vector<34x8xf32> -> vector<34x8xf32>
    %159 = vector.extract_strided_slice %96 {offsets = [0, 24], sizes = [34, 8], strides = [1, 1]} : vector<34x32xf32> to vector<34x8xf32>
    %160 = arith.truncf %159 : vector<34x8xf32> to vector<34x8xbf16>
    %161 = vector.extract_strided_slice %97 {offsets = [0, 24], sizes = [34, 8], strides = [1, 1]} : vector<34x32xf32> to vector<34x8xf32>
    %162 = arith.truncf %161 : vector<34x8xf32> to vector<34x8xbf16>
    %163 = vector.extract_strided_slice %98 {offsets = [0, 24], sizes = [34, 8], strides = [1, 1]} : vector<34x32xf32> to vector<34x8xf32>
    %164 = arith.truncf %163 : vector<34x8xf32> to vector<34x8xbf16>
    %cst_63 = arith.constant dense<0.000000e+00> : vector<34x34xf32>
    %165 = tpu.matmul %160, %162, %cst_63 {dimension_numbers = #tpu.dot_dimension_numbers<[1], [1], [0], [0], [0, 0, 1, 0], [], []>} : vector<34x8xbf16>, vector<34x8xbf16>, vector<34x34xf32> -> vector<34x34xf32>
    %166 = arith.addf %165, %0 : vector<34x34xf32>
    %cst_64 = arith.constant dense<0xFF800000> : vector<34xf32>
    %167 = vector.multi_reduction <maximumf>, %166, %cst_64 [1] : vector<34x34xf32> to vector<34xf32>
    %168 = vector.shape_cast %167 : vector<34xf32> to vector<34x1xf32>
    %169 = vector.broadcast %168 : vector<34x1xf32> to vector<34x34xf32>
    %170 = arith.subf %166, %169 : vector<34x34xf32>
    %171 = math.exp %170 : vector<34x34xf32>
    %cst_65 = arith.constant dense<0.000000e+00> : vector<34xf32>
    %172 = vector.multi_reduction <add>, %171, %cst_65 [1] : vector<34x34xf32> to vector<34xf32>
    %173 = vector.shape_cast %172 : vector<34xf32> to vector<34x1xf32>
    %174 = tpu.reciprocal %173 {approx = true} : vector<34x1xf32> -> vector<34x1xf32>
    %175 = vector.broadcast %174 : vector<34x1xf32> to vector<34x34xf32>
    %176 = arith.mulf %171, %175 : vector<34x34xf32>
    %177 = arith.truncf %176 : vector<34x34xf32> to vector<34x34xbf16>
    %cst_66 = arith.constant dense<0.000000e+00> : vector<34x8xf32>
    %178 = tpu.matmul %177, %164, %cst_66 {dimension_numbers = #tpu.dot_dimension_numbers<[1], [0], [0], [1], [0, 0, 1, 1], [], []>} : vector<34x34xbf16>, vector<34x8xbf16>, vector<34x8xf32> -> vector<34x8xf32>
    %179 = tpu.concatenate %118, %138, %158, %178 in 1 : vector<34x8xf32>, vector<34x8xf32>, vector<34x8xf32>, vector<34x8xf32> -> vector<34x32xf32>
    %180 = arith.truncf %179 : vector<34x32xf32> to vector<34x32xbf16>
    %c0_67 = arith.constant 0 : index
    %c0_68 = arith.constant 0 : index
    %c0_69 = arith.constant 0 : index
    %181 = vector.load %arg10[%c0_67, %c0_68, %c0_69] : memref<2x32x32xbf16, #tpu.memory_space<vmem>>, vector<1x32x32xbf16>
    %182 = vector.shape_cast %181 : vector<1x32x32xbf16> to vector<32x32xbf16>
    %cst_70 = arith.constant dense<0.000000e+00> : vector<34x32xf32>
    %183 = tpu.matmul %180, %182, %cst_70 {dimension_numbers = #tpu.dot_dimension_numbers<[1], [0], [0], [1], [0, 0, 1, 1], [], []>} : vector<34x32xbf16>, vector<32x32xbf16>, vector<34x32xf32> -> vector<34x32xf32>
    %c0_71 = arith.constant 0 : index
    %c0_72 = arith.constant 0 : index
    %c0_73 = arith.constant 0 : index
    %184 = vector.load %arg11[%c0_71, %c0_72, %c0_73] : memref<2x1x32xf32, #tpu.memory_space<vmem>>, vector<1x1x32xf32>
    %185 = vector.shape_cast %184 : vector<1x1x32xf32> to vector<1x32xf32>
    %186 = vector.broadcast %185 : vector<1x32xf32> to vector<34x32xf32>
    %187 = arith.addf %183, %186 : vector<34x32xf32>
    %188 = arith.addf %29, %187 : vector<34x32xf32>
    %c0_74 = arith.constant 0 : index
    %c0_75 = arith.constant 0 : index
    %c0_76 = arith.constant 0 : index
    %189 = vector.load %arg12[%c0_74, %c0_75, %c0_76] : memref<2x1x32xf32, #tpu.memory_space<vmem>>, vector<1x1x32xf32>
    %190 = vector.shape_cast %189 : vector<1x1x32xf32> to vector<1x32xf32>
    %c0_77 = arith.constant 0 : index
    %c0_78 = arith.constant 0 : index
    %c0_79 = arith.constant 0 : index
    %191 = vector.load %arg13[%c0_77, %c0_78, %c0_79] : memref<2x1x32xf32, #tpu.memory_space<vmem>>, vector<1x1x32xf32>
    %192 = vector.shape_cast %191 : vector<1x1x32xf32> to vector<1x32xf32>
    %cst_80 = arith.constant dense<0.000000e+00> : vector<34xf32>
    %193 = vector.multi_reduction <add>, %188, %cst_80 [1] : vector<34x32xf32> to vector<34xf32>
    %194 = vector.shape_cast %193 : vector<34xf32> to vector<34x1xf32>
    %cst_81 = arith.constant 3.200000e+01 : f32
    %195 = vector.broadcast %cst_81 : f32 to vector<34x1xf32>
    %196 = arith.divf %194, %195 : vector<34x1xf32>
    %197 = vector.broadcast %196 : vector<34x1xf32> to vector<34x32xf32>
    %198 = arith.subf %188, %197 : vector<34x32xf32>
    %199 = arith.mulf %198, %198 : vector<34x32xf32>
    %cst_82 = arith.constant dense<0.000000e+00> : vector<34xf32>
    %200 = vector.multi_reduction <add>, %199, %cst_82 [1] : vector<34x32xf32> to vector<34xf32>
    %201 = vector.shape_cast %200 : vector<34xf32> to vector<34x1xf32>
    %cst_83 = arith.constant 3.200000e+01 : f32
    %202 = vector.broadcast %cst_83 : f32 to vector<34x1xf32>
    %203 = arith.divf %201, %202 : vector<34x1xf32>
    %204 = vector.broadcast %196 : vector<34x1xf32> to vector<34x32xf32>
    %205 = arith.subf %188, %204 : vector<34x32xf32>
    %cst_84 = arith.constant 9.99999997E-7 : f32
    %206 = vector.broadcast %cst_84 : f32 to vector<34x1xf32>
    %207 = arith.addf %203, %206 : vector<34x1xf32>
    %208 = math.rsqrt %207 : vector<34x1xf32>
    %209 = vector.broadcast %208 : vector<34x1xf32> to vector<34x32xf32>
    %210 = arith.mulf %205, %209 : vector<34x32xf32>
    %211 = vector.broadcast %190 : vector<1x32xf32> to vector<34x32xf32>
    %212 = arith.mulf %210, %211 : vector<34x32xf32>
    %213 = vector.broadcast %192 : vector<1x32xf32> to vector<34x32xf32>
    %214 = arith.addf %212, %213 : vector<34x32xf32>
    %215 = arith.truncf %214 : vector<34x32xf32> to vector<34x32xbf16>
    %c0_85 = arith.constant 0 : index
    %c0_86 = arith.constant 0 : index
    %c0_87 = arith.constant 0 : index
    %216 = vector.load %arg14[%c0_85, %c0_86, %c0_87] : memref<2x32x128xbf16, #tpu.memory_space<vmem>>, vector<1x32x128xbf16>
    %217 = vector.shape_cast %216 : vector<1x32x128xbf16> to vector<32x128xbf16>
    %cst_88 = arith.constant dense<0.000000e+00> : vector<34x128xf32>
    %218 = tpu.matmul %215, %217, %cst_88 {dimension_numbers = #tpu.dot_dimension_numbers<[1], [0], [0], [1], [0, 0, 1, 1], [], []>} : vector<34x32xbf16>, vector<32x128xbf16>, vector<34x128xf32> -> vector<34x128xf32>
    %c0_89 = arith.constant 0 : index
    %c0_90 = arith.constant 0 : index
    %c0_91 = arith.constant 0 : index
    %219 = vector.load %arg15[%c0_89, %c0_90, %c0_91] : memref<2x1x128xf32, #tpu.memory_space<vmem>>, vector<1x1x128xf32>
    %220 = vector.shape_cast %219 : vector<1x1x128xf32> to vector<1x128xf32>
    %221 = vector.broadcast %220 : vector<1x128xf32> to vector<34x128xf32>
    %222 = arith.addf %218, %221 : vector<34x128xf32>
    %cst_92 = arith.constant 5.000000e-01 : f32
    %223 = vector.broadcast %cst_92 : f32 to vector<34x128xf32>
    %224 = arith.mulf %223, %222 : vector<34x128xf32>
    %cst_93 = arith.constant 4.471500e-02 : f32
    %225 = vector.broadcast %cst_93 : f32 to vector<34x128xf32>
    %226 = arith.mulf %225, %222 : vector<34x128xf32>
    %227 = arith.mulf %226, %222 : vector<34x128xf32>
    %228 = arith.mulf %227, %222 : vector<34x128xf32>
    %229 = arith.addf %222, %228 : vector<34x128xf32>
    %cst_94 = arith.constant 0.797884583 : f32
    %230 = vector.broadcast %cst_94 : f32 to vector<34x128xf32>
    %231 = arith.mulf %230, %229 : vector<34x128xf32>
    %232 = math.tanh %231 : vector<34x128xf32>
    %cst_95 = arith.constant 1.000000e+00 : f32
    %233 = vector.broadcast %cst_95 : f32 to vector<34x128xf32>
    %234 = arith.addf %233, %232 : vector<34x128xf32>
    %235 = arith.mulf %224, %234 : vector<34x128xf32>
    %236 = arith.truncf %235 : vector<34x128xf32> to vector<34x128xbf16>
    %c0_96 = arith.constant 0 : index
    %c0_97 = arith.constant 0 : index
    %c0_98 = arith.constant 0 : index
    %237 = vector.load %arg16[%c0_96, %c0_97, %c0_98] : memref<2x128x32xbf16, #tpu.memory_space<vmem>>, vector<1x128x32xbf16>
    %238 = vector.shape_cast %237 : vector<1x128x32xbf16> to vector<128x32xbf16>
    %cst_99 = arith.constant dense<0.000000e+00> : vector<34x32xf32>
    %239 = tpu.matmul %236, %238, %cst_99 {dimension_numbers = #tpu.dot_dimension_numbers<[1], [0], [0], [1], [0, 0, 1, 1], [], []>} : vector<34x128xbf16>, vector<128x32xbf16>, vector<34x32xf32> -> vector<34x32xf32>
    %240 = arith.addf %188, %239 : vector<34x32xf32>
    %c0_100 = arith.constant 0 : index
    %c0_101 = arith.constant 0 : index
    %c0_102 = arith.constant 0 : index
    %241 = vector.load %arg17[%c0_100, %c0_101, %c0_102] : memref<2x1x32xf32, #tpu.memory_space<vmem>>, vector<1x1x32xf32>
    %242 = vector.shape_cast %241 : vector<1x1x32xf32> to vector<1x32xf32>
    %243 = vector.broadcast %242 : vector<1x32xf32> to vector<34x32xf32>
    %244 = arith.addf %240, %243 : vector<34x32xf32>
    %c0_103 = arith.constant 0 : index
    %c0_104 = arith.constant 0 : index
    %c0_105 = arith.constant 0 : index
    %245 = vector.load %arg27[%c0_103, %c0_104, %c0_105] : memref<2x1x32xf32, #tpu.memory_space<vmem>>, vector<1x1x32xf32>
    %246 = vector.shape_cast %245 : vector<1x1x32xf32> to vector<1x32xf32>
    %c0_106 = arith.constant 0 : index
    %c0_107 = arith.constant 0 : index
    %c0_108 = arith.constant 0 : index
    %247 = vector.load %arg28[%c0_106, %c0_107, %c0_108] : memref<2x1x32xf32, #tpu.memory_space<vmem>>, vector<1x1x32xf32>
    %248 = vector.shape_cast %247 : vector<1x1x32xf32> to vector<1x32xf32>
    %cst_109 = arith.constant dense<0.000000e+00> : vector<34xf32>
    %249 = vector.multi_reduction <add>, %58, %cst_109 [1] : vector<34x32xf32> to vector<34xf32>
    %250 = vector.shape_cast %249 : vector<34xf32> to vector<34x1xf32>
    %cst_110 = arith.constant 3.200000e+01 : f32
    %251 = vector.broadcast %cst_110 : f32 to vector<34x1xf32>
    %252 = arith.divf %250, %251 : vector<34x1xf32>
    %253 = vector.broadcast %252 : vector<34x1xf32> to vector<34x32xf32>
    %254 = arith.subf %58, %253 : vector<34x32xf32>
    %255 = arith.mulf %254, %254 : vector<34x32xf32>
    %cst_111 = arith.constant dense<0.000000e+00> : vector<34xf32>
    %256 = vector.multi_reduction <add>, %255, %cst_111 [1] : vector<34x32xf32> to vector<34xf32>
    %257 = vector.shape_cast %256 : vector<34xf32> to vector<34x1xf32>
    %cst_112 = arith.constant 3.200000e+01 : f32
    %258 = vector.broadcast %cst_112 : f32 to vector<34x1xf32>
    %259 = arith.divf %257, %258 : vector<34x1xf32>
    %260 = vector.broadcast %252 : vector<34x1xf32> to vector<34x32xf32>
    %261 = arith.subf %58, %260 : vector<34x32xf32>
    %cst_113 = arith.constant 9.99999997E-7 : f32
    %262 = vector.broadcast %cst_113 : f32 to vector<34x1xf32>
    %263 = arith.addf %259, %262 : vector<34x1xf32>
    %264 = math.rsqrt %263 : vector<34x1xf32>
    %265 = vector.broadcast %264 : vector<34x1xf32> to vector<34x32xf32>
    %266 = arith.mulf %261, %265 : vector<34x32xf32>
    %267 = vector.broadcast %246 : vector<1x32xf32> to vector<34x32xf32>
    %268 = arith.mulf %266, %267 : vector<34x32xf32>
    %269 = vector.broadcast %248 : vector<1x32xf32> to vector<34x32xf32>
    %270 = arith.addf %268, %269 : vector<34x32xf32>
    %271 = arith.truncf %270 : vector<34x32xf32> to vector<34x32xbf16>
    %c0_114 = arith.constant 0 : index
    %c0_115 = arith.constant 0 : index
    %c0_116 = arith.constant 0 : index
    %272 = vector.load %arg29[%c0_114, %c0_115, %c0_116] : memref<2x32x96xbf16, #tpu.memory_space<vmem>>, vector<1x32x96xbf16>
    %273 = vector.shape_cast %272 : vector<1x32x96xbf16> to vector<32x96xbf16>
    %cst_117 = arith.constant dense<0.000000e+00> : vector<34x96xf32>
    %274 = tpu.matmul %271, %273, %cst_117 {dimension_numbers = #tpu.dot_dimension_numbers<[1], [0], [0], [1], [0, 0, 1, 1], [], []>} : vector<34x32xbf16>, vector<32x96xbf16>, vector<34x96xf32> -> vector<34x96xf32>
    %c0_118 = arith.constant 0 : index
    %c0_119 = arith.constant 0 : index
    %c0_120 = arith.constant 0 : index
    %275 = vector.load %arg30[%c0_118, %c0_119, %c0_120] : memref<2x1x96xf32, #tpu.memory_space<vmem>>, vector<1x1x96xf32>
    %276 = vector.shape_cast %275 : vector<1x1x96xf32> to vector<1x96xf32>
    %277 = vector.broadcast %276 : vector<1x96xf32> to vector<34x96xf32>
    %278 = arith.addf %274, %277 : vector<34x96xf32>
    %279 = vector.extract_strided_slice %278 {offsets = [0, 0], sizes = [34, 32], strides = [1, 1]} : vector<34x96xf32> to vector<34x32xf32>
    %cst_121 = arith.constant 0.353553385 : f32
    %280 = vector.broadcast %cst_121 : f32 to vector<34x32xf32>
    %281 = arith.mulf %279, %280 : vector<34x32xf32>
    %282 = vector.extract_strided_slice %278 {offsets = [0, 32], sizes = [34, 32], strides = [1, 1]} : vector<34x96xf32> to vector<34x32xf32>
    %283 = vector.extract_strided_slice %278 {offsets = [0, 64], sizes = [34, 32], strides = [1, 1]} : vector<34x96xf32> to vector<34x32xf32>
    %284 = vector.extract_strided_slice %281 {offsets = [0, 0], sizes = [34, 8], strides = [1, 1]} : vector<34x32xf32> to vector<34x8xf32>
    %285 = arith.truncf %284 : vector<34x8xf32> to vector<34x8xbf16>
    %286 = vector.extract_strided_slice %282 {offsets = [0, 0], sizes = [34, 8], strides = [1, 1]} : vector<34x32xf32> to vector<34x8xf32>
    %287 = arith.truncf %286 : vector<34x8xf32> to vector<34x8xbf16>
    %288 = vector.extract_strided_slice %283 {offsets = [0, 0], sizes = [34, 8], strides = [1, 1]} : vector<34x32xf32> to vector<34x8xf32>
    %289 = arith.truncf %288 : vector<34x8xf32> to vector<34x8xbf16>
    %cst_122 = arith.constant dense<0.000000e+00> : vector<34x34xf32>
    %290 = tpu.matmul %285, %287, %cst_122 {dimension_numbers = #tpu.dot_dimension_numbers<[1], [1], [0], [0], [0, 0, 1, 0], [], []>} : vector<34x8xbf16>, vector<34x8xbf16>, vector<34x34xf32> -> vector<34x34xf32>
    %291 = arith.addf %290, %0 : vector<34x34xf32>
    %cst_123 = arith.constant dense<0xFF800000> : vector<34xf32>
    %292 = vector.multi_reduction <maximumf>, %291, %cst_123 [1] : vector<34x34xf32> to vector<34xf32>
    %293 = vector.shape_cast %292 : vector<34xf32> to vector<34x1xf32>
    %294 = vector.broadcast %293 : vector<34x1xf32> to vector<34x34xf32>
    %295 = arith.subf %291, %294 : vector<34x34xf32>
    %296 = math.exp %295 : vector<34x34xf32>
    %cst_124 = arith.constant dense<0.000000e+00> : vector<34xf32>
    %297 = vector.multi_reduction <add>, %296, %cst_124 [1] : vector<34x34xf32> to vector<34xf32>
    %298 = vector.shape_cast %297 : vector<34xf32> to vector<34x1xf32>
    %299 = tpu.reciprocal %298 {approx = true} : vector<34x1xf32> -> vector<34x1xf32>
    %300 = vector.broadcast %299 : vector<34x1xf32> to vector<34x34xf32>
    %301 = arith.mulf %296, %300 : vector<34x34xf32>
    %302 = arith.truncf %301 : vector<34x34xf32> to vector<34x34xbf16>
    %cst_125 = arith.constant dense<0.000000e+00> : vector<34x8xf32>
    %303 = tpu.matmul %302, %289, %cst_125 {dimension_numbers = #tpu.dot_dimension_numbers<[1], [0], [0], [1], [0, 0, 1, 1], [], []>} : vector<34x34xbf16>, vector<34x8xbf16>, vector<34x8xf32> -> vector<34x8xf32>
    %304 = vector.extract_strided_slice %281 {offsets = [0, 8], sizes = [34, 8], strides = [1, 1]} : vector<34x32xf32> to vector<34x8xf32>
    %305 = arith.truncf %304 : vector<34x8xf32> to vector<34x8xbf16>
    %306 = vector.extract_strided_slice %282 {offsets = [0, 8], sizes = [34, 8], strides = [1, 1]} : vector<34x32xf32> to vector<34x8xf32>
    %307 = arith.truncf %306 : vector<34x8xf32> to vector<34x8xbf16>
    %308 = vector.extract_strided_slice %283 {offsets = [0, 8], sizes = [34, 8], strides = [1, 1]} : vector<34x32xf32> to vector<34x8xf32>
    %309 = arith.truncf %308 : vector<34x8xf32> to vector<34x8xbf16>
    %cst_126 = arith.constant dense<0.000000e+00> : vector<34x34xf32>
    %310 = tpu.matmul %305, %307, %cst_126 {dimension_numbers = #tpu.dot_dimension_numbers<[1], [1], [0], [0], [0, 0, 1, 0], [], []>} : vector<34x8xbf16>, vector<34x8xbf16>, vector<34x34xf32> -> vector<34x34xf32>
    %311 = arith.addf %310, %0 : vector<34x34xf32>
    %cst_127 = arith.constant dense<0xFF800000> : vector<34xf32>
    %312 = vector.multi_reduction <maximumf>, %311, %cst_127 [1] : vector<34x34xf32> to vector<34xf32>
    %313 = vector.shape_cast %312 : vector<34xf32> to vector<34x1xf32>
    %314 = vector.broadcast %313 : vector<34x1xf32> to vector<34x34xf32>
    %315 = arith.subf %311, %314 : vector<34x34xf32>
    %316 = math.exp %315 : vector<34x34xf32>
    %cst_128 = arith.constant dense<0.000000e+00> : vector<34xf32>
    %317 = vector.multi_reduction <add>, %316, %cst_128 [1] : vector<34x34xf32> to vector<34xf32>
    %318 = vector.shape_cast %317 : vector<34xf32> to vector<34x1xf32>
    %319 = tpu.reciprocal %318 {approx = true} : vector<34x1xf32> -> vector<34x1xf32>
    %320 = vector.broadcast %319 : vector<34x1xf32> to vector<34x34xf32>
    %321 = arith.mulf %316, %320 : vector<34x34xf32>
    %322 = arith.truncf %321 : vector<34x34xf32> to vector<34x34xbf16>
    %cst_129 = arith.constant dense<0.000000e+00> : vector<34x8xf32>
    %323 = tpu.matmul %322, %309, %cst_129 {dimension_numbers = #tpu.dot_dimension_numbers<[1], [0], [0], [1], [0, 0, 1, 1], [], []>} : vector<34x34xbf16>, vector<34x8xbf16>, vector<34x8xf32> -> vector<34x8xf32>
    %324 = vector.extract_strided_slice %281 {offsets = [0, 16], sizes = [34, 8], strides = [1, 1]} : vector<34x32xf32> to vector<34x8xf32>
    %325 = arith.truncf %324 : vector<34x8xf32> to vector<34x8xbf16>
    %326 = vector.extract_strided_slice %282 {offsets = [0, 16], sizes = [34, 8], strides = [1, 1]} : vector<34x32xf32> to vector<34x8xf32>
    %327 = arith.truncf %326 : vector<34x8xf32> to vector<34x8xbf16>
    %328 = vector.extract_strided_slice %283 {offsets = [0, 16], sizes = [34, 8], strides = [1, 1]} : vector<34x32xf32> to vector<34x8xf32>
    %329 = arith.truncf %328 : vector<34x8xf32> to vector<34x8xbf16>
    %cst_130 = arith.constant dense<0.000000e+00> : vector<34x34xf32>
    %330 = tpu.matmul %325, %327, %cst_130 {dimension_numbers = #tpu.dot_dimension_numbers<[1], [1], [0], [0], [0, 0, 1, 0], [], []>} : vector<34x8xbf16>, vector<34x8xbf16>, vector<34x34xf32> -> vector<34x34xf32>
    %331 = arith.addf %330, %0 : vector<34x34xf32>
    %cst_131 = arith.constant dense<0xFF800000> : vector<34xf32>
    %332 = vector.multi_reduction <maximumf>, %331, %cst_131 [1] : vector<34x34xf32> to vector<34xf32>
    %333 = vector.shape_cast %332 : vector<34xf32> to vector<34x1xf32>
    %334 = vector.broadcast %333 : vector<34x1xf32> to vector<34x34xf32>
    %335 = arith.subf %331, %334 : vector<34x34xf32>
    %336 = math.exp %335 : vector<34x34xf32>
    %cst_132 = arith.constant dense<0.000000e+00> : vector<34xf32>
    %337 = vector.multi_reduction <add>, %336, %cst_132 [1] : vector<34x34xf32> to vector<34xf32>
    %338 = vector.shape_cast %337 : vector<34xf32> to vector<34x1xf32>
    %339 = tpu.reciprocal %338 {approx = true} : vector<34x1xf32> -> vector<34x1xf32>
    %340 = vector.broadcast %339 : vector<34x1xf32> to vector<34x34xf32>
    %341 = arith.mulf %336, %340 : vector<34x34xf32>
    %342 = arith.truncf %341 : vector<34x34xf32> to vector<34x34xbf16>
    %cst_133 = arith.constant dense<0.000000e+00> : vector<34x8xf32>
    %343 = tpu.matmul %342, %329, %cst_133 {dimension_numbers = #tpu.dot_dimension_numbers<[1], [0], [0], [1], [0, 0, 1, 1], [], []>} : vector<34x34xbf16>, vector<34x8xbf16>, vector<34x8xf32> -> vector<34x8xf32>
    %344 = vector.extract_strided_slice %281 {offsets = [0, 24], sizes = [34, 8], strides = [1, 1]} : vector<34x32xf32> to vector<34x8xf32>
    %345 = arith.truncf %344 : vector<34x8xf32> to vector<34x8xbf16>
    %346 = vector.extract_strided_slice %282 {offsets = [0, 24], sizes = [34, 8], strides = [1, 1]} : vector<34x32xf32> to vector<34x8xf32>
    %347 = arith.truncf %346 : vector<34x8xf32> to vector<34x8xbf16>
    %348 = vector.extract_strided_slice %283 {offsets = [0, 24], sizes = [34, 8], strides = [1, 1]} : vector<34x32xf32> to vector<34x8xf32>
    %349 = arith.truncf %348 : vector<34x8xf32> to vector<34x8xbf16>
    %cst_134 = arith.constant dense<0.000000e+00> : vector<34x34xf32>
    %350 = tpu.matmul %345, %347, %cst_134 {dimension_numbers = #tpu.dot_dimension_numbers<[1], [1], [0], [0], [0, 0, 1, 0], [], []>} : vector<34x8xbf16>, vector<34x8xbf16>, vector<34x34xf32> -> vector<34x34xf32>
    %351 = arith.addf %350, %0 : vector<34x34xf32>
    %cst_135 = arith.constant dense<0xFF800000> : vector<34xf32>
    %352 = vector.multi_reduction <maximumf>, %351, %cst_135 [1] : vector<34x34xf32> to vector<34xf32>
    %353 = vector.shape_cast %352 : vector<34xf32> to vector<34x1xf32>
    %354 = vector.broadcast %353 : vector<34x1xf32> to vector<34x34xf32>
    %355 = arith.subf %351, %354 : vector<34x34xf32>
    %356 = math.exp %355 : vector<34x34xf32>
    %cst_136 = arith.constant dense<0.000000e+00> : vector<34xf32>
    %357 = vector.multi_reduction <add>, %356, %cst_136 [1] : vector<34x34xf32> to vector<34xf32>
    %358 = vector.shape_cast %357 : vector<34xf32> to vector<34x1xf32>
    %359 = tpu.reciprocal %358 {approx = true} : vector<34x1xf32> -> vector<34x1xf32>
    %360 = vector.broadcast %359 : vector<34x1xf32> to vector<34x34xf32>
    %361 = arith.mulf %356, %360 : vector<34x34xf32>
    %362 = arith.truncf %361 : vector<34x34xf32> to vector<34x34xbf16>
    %cst_137 = arith.constant dense<0.000000e+00> : vector<34x8xf32>
    %363 = tpu.matmul %362, %349, %cst_137 {dimension_numbers = #tpu.dot_dimension_numbers<[1], [0], [0], [1], [0, 0, 1, 1], [], []>} : vector<34x34xbf16>, vector<34x8xbf16>, vector<34x8xf32> -> vector<34x8xf32>
    %364 = tpu.concatenate %303, %323, %343, %363 in 1 : vector<34x8xf32>, vector<34x8xf32>, vector<34x8xf32>, vector<34x8xf32> -> vector<34x32xf32>
    %365 = arith.truncf %364 : vector<34x32xf32> to vector<34x32xbf16>
    %c0_138 = arith.constant 0 : index
    %c0_139 = arith.constant 0 : index
    %c0_140 = arith.constant 0 : index
    %366 = vector.load %arg31[%c0_138, %c0_139, %c0_140] : memref<2x32x32xbf16, #tpu.memory_space<vmem>>, vector<1x32x32xbf16>
    %367 = vector.shape_cast %366 : vector<1x32x32xbf16> to vector<32x32xbf16>
    %cst_141 = arith.constant dense<0.000000e+00> : vector<34x32xf32>
    %368 = tpu.matmul %365, %367, %cst_141 {dimension_numbers = #tpu.dot_dimension_numbers<[1], [0], [0], [1], [0, 0, 1, 1], [], []>} : vector<34x32xbf16>, vector<32x32xbf16>, vector<34x32xf32> -> vector<34x32xf32>
    %c0_142 = arith.constant 0 : index
    %c0_143 = arith.constant 0 : index
    %c0_144 = arith.constant 0 : index
    %369 = vector.load %arg32[%c0_142, %c0_143, %c0_144] : memref<2x1x32xf32, #tpu.memory_space<vmem>>, vector<1x1x32xf32>
    %370 = vector.shape_cast %369 : vector<1x1x32xf32> to vector<1x32xf32>
    %371 = vector.broadcast %370 : vector<1x32xf32> to vector<34x32xf32>
    %372 = arith.addf %368, %371 : vector<34x32xf32>
    %373 = arith.addf %58, %372 : vector<34x32xf32>
    %c0_145 = arith.constant 0 : index
    %c0_146 = arith.constant 0 : index
    %c0_147 = arith.constant 0 : index
    %374 = vector.load %arg33[%c0_145, %c0_146, %c0_147] : memref<2x1x32xf32, #tpu.memory_space<vmem>>, vector<1x1x32xf32>
    %375 = vector.shape_cast %374 : vector<1x1x32xf32> to vector<1x32xf32>
    %c0_148 = arith.constant 0 : index
    %c0_149 = arith.constant 0 : index
    %c0_150 = arith.constant 0 : index
    %376 = vector.load %arg34[%c0_148, %c0_149, %c0_150] : memref<2x1x32xf32, #tpu.memory_space<vmem>>, vector<1x1x32xf32>
    %377 = vector.shape_cast %376 : vector<1x1x32xf32> to vector<1x32xf32>
    %cst_151 = arith.constant dense<0.000000e+00> : vector<34xf32>
    %378 = vector.multi_reduction <add>, %373, %cst_151 [1] : vector<34x32xf32> to vector<34xf32>
    %379 = vector.shape_cast %378 : vector<34xf32> to vector<34x1xf32>
    %cst_152 = arith.constant 3.200000e+01 : f32
    %380 = vector.broadcast %cst_152 : f32 to vector<34x1xf32>
    %381 = arith.divf %379, %380 : vector<34x1xf32>
    %382 = vector.broadcast %381 : vector<34x1xf32> to vector<34x32xf32>
    %383 = arith.subf %373, %382 : vector<34x32xf32>
    %384 = arith.mulf %383, %383 : vector<34x32xf32>
    %cst_153 = arith.constant dense<0.000000e+00> : vector<34xf32>
    %385 = vector.multi_reduction <add>, %384, %cst_153 [1] : vector<34x32xf32> to vector<34xf32>
    %386 = vector.shape_cast %385 : vector<34xf32> to vector<34x1xf32>
    %cst_154 = arith.constant 3.200000e+01 : f32
    %387 = vector.broadcast %cst_154 : f32 to vector<34x1xf32>
    %388 = arith.divf %386, %387 : vector<34x1xf32>
    %389 = vector.broadcast %381 : vector<34x1xf32> to vector<34x32xf32>
    %390 = arith.subf %373, %389 : vector<34x32xf32>
    %cst_155 = arith.constant 9.99999997E-7 : f32
    %391 = vector.broadcast %cst_155 : f32 to vector<34x1xf32>
    %392 = arith.addf %388, %391 : vector<34x1xf32>
    %393 = math.rsqrt %392 : vector<34x1xf32>
    %394 = vector.broadcast %393 : vector<34x1xf32> to vector<34x32xf32>
    %395 = arith.mulf %390, %394 : vector<34x32xf32>
    %396 = vector.broadcast %375 : vector<1x32xf32> to vector<34x32xf32>
    %397 = arith.mulf %395, %396 : vector<34x32xf32>
    %398 = vector.broadcast %377 : vector<1x32xf32> to vector<34x32xf32>
    %399 = arith.addf %397, %398 : vector<34x32xf32>
    %400 = arith.truncf %399 : vector<34x32xf32> to vector<34x32xbf16>
    %c0_156 = arith.constant 0 : index
    %c0_157 = arith.constant 0 : index
    %c0_158 = arith.constant 0 : index
    %401 = vector.load %arg35[%c0_156, %c0_157, %c0_158] : memref<2x32x128xbf16, #tpu.memory_space<vmem>>, vector<1x32x128xbf16>
    %402 = vector.shape_cast %401 : vector<1x32x128xbf16> to vector<32x128xbf16>
    %cst_159 = arith.constant dense<0.000000e+00> : vector<34x128xf32>
    %403 = tpu.matmul %400, %402, %cst_159 {dimension_numbers = #tpu.dot_dimension_numbers<[1], [0], [0], [1], [0, 0, 1, 1], [], []>} : vector<34x32xbf16>, vector<32x128xbf16>, vector<34x128xf32> -> vector<34x128xf32>
    %c0_160 = arith.constant 0 : index
    %c0_161 = arith.constant 0 : index
    %c0_162 = arith.constant 0 : index
    %404 = vector.load %arg36[%c0_160, %c0_161, %c0_162] : memref<2x1x128xf32, #tpu.memory_space<vmem>>, vector<1x1x128xf32>
    %405 = vector.shape_cast %404 : vector<1x1x128xf32> to vector<1x128xf32>
    %406 = vector.broadcast %405 : vector<1x128xf32> to vector<34x128xf32>
    %407 = arith.addf %403, %406 : vector<34x128xf32>
    %cst_163 = arith.constant 5.000000e-01 : f32
    %408 = vector.broadcast %cst_163 : f32 to vector<34x128xf32>
    %409 = arith.mulf %408, %407 : vector<34x128xf32>
    %cst_164 = arith.constant 4.471500e-02 : f32
    %410 = vector.broadcast %cst_164 : f32 to vector<34x128xf32>
    %411 = arith.mulf %410, %407 : vector<34x128xf32>
    %412 = arith.mulf %411, %407 : vector<34x128xf32>
    %413 = arith.mulf %412, %407 : vector<34x128xf32>
    %414 = arith.addf %407, %413 : vector<34x128xf32>
    %cst_165 = arith.constant 0.797884583 : f32
    %415 = vector.broadcast %cst_165 : f32 to vector<34x128xf32>
    %416 = arith.mulf %415, %414 : vector<34x128xf32>
    %417 = math.tanh %416 : vector<34x128xf32>
    %cst_166 = arith.constant 1.000000e+00 : f32
    %418 = vector.broadcast %cst_166 : f32 to vector<34x128xf32>
    %419 = arith.addf %418, %417 : vector<34x128xf32>
    %420 = arith.mulf %409, %419 : vector<34x128xf32>
    %421 = arith.truncf %420 : vector<34x128xf32> to vector<34x128xbf16>
    %c0_167 = arith.constant 0 : index
    %c0_168 = arith.constant 0 : index
    %c0_169 = arith.constant 0 : index
    %422 = vector.load %arg37[%c0_167, %c0_168, %c0_169] : memref<2x128x32xbf16, #tpu.memory_space<vmem>>, vector<1x128x32xbf16>
    %423 = vector.shape_cast %422 : vector<1x128x32xbf16> to vector<128x32xbf16>
    %cst_170 = arith.constant dense<0.000000e+00> : vector<34x32xf32>
    %424 = tpu.matmul %421, %423, %cst_170 {dimension_numbers = #tpu.dot_dimension_numbers<[1], [0], [0], [1], [0, 0, 1, 1], [], []>} : vector<34x128xbf16>, vector<128x32xbf16>, vector<34x32xf32> -> vector<34x32xf32>
    %425 = arith.addf %373, %424 : vector<34x32xf32>
    %c0_171 = arith.constant 0 : index
    %c0_172 = arith.constant 0 : index
    %c0_173 = arith.constant 0 : index
    %426 = vector.load %arg38[%c0_171, %c0_172, %c0_173] : memref<2x1x32xf32, #tpu.memory_space<vmem>>, vector<1x1x32xf32>
    %427 = vector.shape_cast %426 : vector<1x1x32xf32> to vector<1x32xf32>
    %428 = vector.broadcast %427 : vector<1x32xf32> to vector<34x32xf32>
    %429 = arith.addf %425, %428 : vector<34x32xf32>
    %430 = vector.extract_strided_slice %244 {offsets = [0, 0], sizes = [1, 32], strides = [1, 1]} : vector<34x32xf32> to vector<1x32xf32>
    %431 = vector.extract_strided_slice %429 {offsets = [0, 0], sizes = [1, 32], strides = [1, 1]} : vector<34x32xf32> to vector<1x32xf32>
    %432 = arith.addf %430, %431 : vector<1x32xf32>
    %cst_174 = arith.constant 5.000000e-01 : f32
    %433 = vector.broadcast %cst_174 : f32 to vector<1x32xf32>
    %434 = arith.mulf %432, %433 : vector<1x32xf32>
    %435 = arith.addf %434, %431 : vector<1x32xf32>
    %cst_175 = arith.constant 5.000000e-01 : f32
    %436 = vector.broadcast %cst_175 : f32 to vector<1x32xf32>
    %437 = arith.mulf %435, %436 : vector<1x32xf32>
    %c0_i32 = arith.constant 0 : i32
    %438 = vector.broadcast %c0_i32 : i32 to vector<34x1xi32>
    %439 = arith.cmpi eq, %59, %438 : vector<34x1xi32>
    %440 = vector.shape_cast %439 : vector<34x1xi1> to vector<34x1xi1>
    %441 = vector.broadcast %440 : vector<34x1xi1> to vector<34x32xi1>
    %442 = vector.shape_cast %434 : vector<1x32xf32> to vector<1x32xf32>
    %443 = vector.broadcast %442 : vector<1x32xf32> to vector<34x32xf32>
    %444 = arith.select %441, %443, %244 : vector<34x32xi1>, vector<34x32xf32>
    %c0_i32_176 = arith.constant 0 : i32
    %445 = vector.broadcast %c0_i32_176 : i32 to vector<34x1xi32>
    %446 = arith.cmpi eq, %59, %445 : vector<34x1xi32>
    %447 = vector.shape_cast %446 : vector<34x1xi1> to vector<34x1xi1>
    %448 = vector.broadcast %447 : vector<34x1xi1> to vector<34x32xi1>
    %449 = vector.shape_cast %437 : vector<1x32xf32> to vector<1x32xf32>
    %450 = vector.broadcast %449 : vector<1x32xf32> to vector<34x32xf32>
    %451 = arith.select %448, %450, %429 : vector<34x32xi1>, vector<34x32xf32>
    %452 = vector.extract_strided_slice %444 {offsets = [17, 0], sizes = [1, 32], strides = [1, 1]} : vector<34x32xf32> to vector<1x32xf32>
    %453 = vector.extract_strided_slice %451 {offsets = [17, 0], sizes = [1, 32], strides = [1, 1]} : vector<34x32xf32> to vector<1x32xf32>
    %454 = arith.addf %452, %453 : vector<1x32xf32>
    %cst_177 = arith.constant 5.000000e-01 : f32
    %455 = vector.broadcast %cst_177 : f32 to vector<1x32xf32>
    %456 = arith.mulf %454, %455 : vector<1x32xf32>
    %457 = arith.addf %456, %453 : vector<1x32xf32>
    %cst_178 = arith.constant 5.000000e-01 : f32
    %458 = vector.broadcast %cst_178 : f32 to vector<1x32xf32>
    %459 = arith.mulf %457, %458 : vector<1x32xf32>
    %c17_i32 = arith.constant 17 : i32
    %460 = vector.broadcast %c17_i32 : i32 to vector<34x1xi32>
    %461 = arith.cmpi eq, %59, %460 : vector<34x1xi32>
    %462 = vector.shape_cast %461 : vector<34x1xi1> to vector<34x1xi1>
    %463 = vector.broadcast %462 : vector<34x1xi1> to vector<34x32xi1>
    %464 = vector.shape_cast %456 : vector<1x32xf32> to vector<1x32xf32>
    %465 = vector.broadcast %464 : vector<1x32xf32> to vector<34x32xf32>
    %466 = arith.select %463, %465, %444 : vector<34x32xi1>, vector<34x32xf32>
    %c17_i32_179 = arith.constant 17 : i32
    %467 = vector.broadcast %c17_i32_179 : i32 to vector<34x1xi32>
    %468 = arith.cmpi eq, %59, %467 : vector<34x1xi32>
    %469 = vector.shape_cast %468 : vector<34x1xi1> to vector<34x1xi1>
    %470 = vector.broadcast %469 : vector<34x1xi1> to vector<34x32xi1>
    %471 = vector.shape_cast %459 : vector<1x32xf32> to vector<1x32xf32>
    %472 = vector.broadcast %471 : vector<1x32xf32> to vector<34x32xf32>
    %473 = arith.select %470, %472, %451 : vector<34x32xi1>, vector<34x32xf32>
    %c1 = arith.constant 1 : index
    %c0_180 = arith.constant 0 : index
    %c0_181 = arith.constant 0 : index
    %474 = vector.load %arg6[%c1, %c0_180, %c0_181] : memref<2x1x32xf32, #tpu.memory_space<vmem>>, vector<1x1x32xf32>
    %475 = vector.shape_cast %474 : vector<1x1x32xf32> to vector<1x32xf32>
    %c1_182 = arith.constant 1 : index
    %c0_183 = arith.constant 0 : index
    %c0_184 = arith.constant 0 : index
    %476 = vector.load %arg7[%c1_182, %c0_183, %c0_184] : memref<2x1x32xf32, #tpu.memory_space<vmem>>, vector<1x1x32xf32>
    %477 = vector.shape_cast %476 : vector<1x1x32xf32> to vector<1x32xf32>
    %cst_185 = arith.constant dense<0.000000e+00> : vector<34xf32>
    %478 = vector.multi_reduction <add>, %466, %cst_185 [1] : vector<34x32xf32> to vector<34xf32>
    %479 = vector.shape_cast %478 : vector<34xf32> to vector<34x1xf32>
    %cst_186 = arith.constant 3.200000e+01 : f32
    %480 = vector.broadcast %cst_186 : f32 to vector<34x1xf32>
    %481 = arith.divf %479, %480 : vector<34x1xf32>
    %482 = vector.broadcast %481 : vector<34x1xf32> to vector<34x32xf32>
    %483 = arith.subf %466, %482 : vector<34x32xf32>
    %484 = arith.mulf %483, %483 : vector<34x32xf32>
    %cst_187 = arith.constant dense<0.000000e+00> : vector<34xf32>
    %485 = vector.multi_reduction <add>, %484, %cst_187 [1] : vector<34x32xf32> to vector<34xf32>
    %486 = vector.shape_cast %485 : vector<34xf32> to vector<34x1xf32>
    %cst_188 = arith.constant 3.200000e+01 : f32
    %487 = vector.broadcast %cst_188 : f32 to vector<34x1xf32>
    %488 = arith.divf %486, %487 : vector<34x1xf32>
    %489 = vector.broadcast %481 : vector<34x1xf32> to vector<34x32xf32>
    %490 = arith.subf %466, %489 : vector<34x32xf32>
    %cst_189 = arith.constant 9.99999997E-7 : f32
    %491 = vector.broadcast %cst_189 : f32 to vector<34x1xf32>
    %492 = arith.addf %488, %491 : vector<34x1xf32>
    %493 = math.rsqrt %492 : vector<34x1xf32>
    %494 = vector.broadcast %493 : vector<34x1xf32> to vector<34x32xf32>
    %495 = arith.mulf %490, %494 : vector<34x32xf32>
    %496 = vector.broadcast %475 : vector<1x32xf32> to vector<34x32xf32>
    %497 = arith.mulf %495, %496 : vector<34x32xf32>
    %498 = vector.broadcast %477 : vector<1x32xf32> to vector<34x32xf32>
    %499 = arith.addf %497, %498 : vector<34x32xf32>
    %500 = arith.truncf %499 : vector<34x32xf32> to vector<34x32xbf16>
    %c1_190 = arith.constant 1 : index
    %c0_191 = arith.constant 0 : index
    %c0_192 = arith.constant 0 : index
    %501 = vector.load %arg8[%c1_190, %c0_191, %c0_192] : memref<2x32x96xbf16, #tpu.memory_space<vmem>>, vector<1x32x96xbf16>
    %502 = vector.shape_cast %501 : vector<1x32x96xbf16> to vector<32x96xbf16>
    %cst_193 = arith.constant dense<0.000000e+00> : vector<34x96xf32>
    %503 = tpu.matmul %500, %502, %cst_193 {dimension_numbers = #tpu.dot_dimension_numbers<[1], [0], [0], [1], [0, 0, 1, 1], [], []>} : vector<34x32xbf16>, vector<32x96xbf16>, vector<34x96xf32> -> vector<34x96xf32>
    %c1_194 = arith.constant 1 : index
    %c0_195 = arith.constant 0 : index
    %c0_196 = arith.constant 0 : index
    %504 = vector.load %arg9[%c1_194, %c0_195, %c0_196] : memref<2x1x96xf32, #tpu.memory_space<vmem>>, vector<1x1x96xf32>
    %505 = vector.shape_cast %504 : vector<1x1x96xf32> to vector<1x96xf32>
    %506 = vector.broadcast %505 : vector<1x96xf32> to vector<34x96xf32>
    %507 = arith.addf %503, %506 : vector<34x96xf32>
    %508 = vector.extract_strided_slice %507 {offsets = [0, 0], sizes = [34, 32], strides = [1, 1]} : vector<34x96xf32> to vector<34x32xf32>
    %cst_197 = arith.constant 0.353553385 : f32
    %509 = vector.broadcast %cst_197 : f32 to vector<34x32xf32>
    %510 = arith.mulf %508, %509 : vector<34x32xf32>
    %511 = vector.extract_strided_slice %507 {offsets = [0, 32], sizes = [34, 32], strides = [1, 1]} : vector<34x96xf32> to vector<34x32xf32>
    %512 = vector.extract_strided_slice %507 {offsets = [0, 64], sizes = [34, 32], strides = [1, 1]} : vector<34x96xf32> to vector<34x32xf32>
    %513 = vector.extract_strided_slice %510 {offsets = [0, 0], sizes = [34, 8], strides = [1, 1]} : vector<34x32xf32> to vector<34x8xf32>
    %514 = arith.truncf %513 : vector<34x8xf32> to vector<34x8xbf16>
    %515 = vector.extract_strided_slice %511 {offsets = [0, 0], sizes = [34, 8], strides = [1, 1]} : vector<34x32xf32> to vector<34x8xf32>
    %516 = arith.truncf %515 : vector<34x8xf32> to vector<34x8xbf16>
    %517 = vector.extract_strided_slice %512 {offsets = [0, 0], sizes = [34, 8], strides = [1, 1]} : vector<34x32xf32> to vector<34x8xf32>
    %518 = arith.truncf %517 : vector<34x8xf32> to vector<34x8xbf16>
    %cst_198 = arith.constant dense<0.000000e+00> : vector<34x34xf32>
    %519 = tpu.matmul %514, %516, %cst_198 {dimension_numbers = #tpu.dot_dimension_numbers<[1], [1], [0], [0], [0, 0, 1, 0], [], []>} : vector<34x8xbf16>, vector<34x8xbf16>, vector<34x34xf32> -> vector<34x34xf32>
    %520 = arith.addf %519, %0 : vector<34x34xf32>
    %cst_199 = arith.constant dense<0xFF800000> : vector<34xf32>
    %521 = vector.multi_reduction <maximumf>, %520, %cst_199 [1] : vector<34x34xf32> to vector<34xf32>
    %522 = vector.shape_cast %521 : vector<34xf32> to vector<34x1xf32>
    %523 = vector.broadcast %522 : vector<34x1xf32> to vector<34x34xf32>
    %524 = arith.subf %520, %523 : vector<34x34xf32>
    %525 = math.exp %524 : vector<34x34xf32>
    %cst_200 = arith.constant dense<0.000000e+00> : vector<34xf32>
    %526 = vector.multi_reduction <add>, %525, %cst_200 [1] : vector<34x34xf32> to vector<34xf32>
    %527 = vector.shape_cast %526 : vector<34xf32> to vector<34x1xf32>
    %528 = tpu.reciprocal %527 {approx = true} : vector<34x1xf32> -> vector<34x1xf32>
    %529 = vector.broadcast %528 : vector<34x1xf32> to vector<34x34xf32>
    %530 = arith.mulf %525, %529 : vector<34x34xf32>
    %531 = arith.truncf %530 : vector<34x34xf32> to vector<34x34xbf16>
    %cst_201 = arith.constant dense<0.000000e+00> : vector<34x8xf32>
    %532 = tpu.matmul %531, %518, %cst_201 {dimension_numbers = #tpu.dot_dimension_numbers<[1], [0], [0], [1], [0, 0, 1, 1], [], []>} : vector<34x34xbf16>, vector<34x8xbf16>, vector<34x8xf32> -> vector<34x8xf32>
    %533 = vector.extract_strided_slice %510 {offsets = [0, 8], sizes = [34, 8], strides = [1, 1]} : vector<34x32xf32> to vector<34x8xf32>
    %534 = arith.truncf %533 : vector<34x8xf32> to vector<34x8xbf16>
    %535 = vector.extract_strided_slice %511 {offsets = [0, 8], sizes = [34, 8], strides = [1, 1]} : vector<34x32xf32> to vector<34x8xf32>
    %536 = arith.truncf %535 : vector<34x8xf32> to vector<34x8xbf16>
    %537 = vector.extract_strided_slice %512 {offsets = [0, 8], sizes = [34, 8], strides = [1, 1]} : vector<34x32xf32> to vector<34x8xf32>
    %538 = arith.truncf %537 : vector<34x8xf32> to vector<34x8xbf16>
    %cst_202 = arith.constant dense<0.000000e+00> : vector<34x34xf32>
    %539 = tpu.matmul %534, %536, %cst_202 {dimension_numbers = #tpu.dot_dimension_numbers<[1], [1], [0], [0], [0, 0, 1, 0], [], []>} : vector<34x8xbf16>, vector<34x8xbf16>, vector<34x34xf32> -> vector<34x34xf32>
    %540 = arith.addf %539, %0 : vector<34x34xf32>
    %cst_203 = arith.constant dense<0xFF800000> : vector<34xf32>
    %541 = vector.multi_reduction <maximumf>, %540, %cst_203 [1] : vector<34x34xf32> to vector<34xf32>
    %542 = vector.shape_cast %541 : vector<34xf32> to vector<34x1xf32>
    %543 = vector.broadcast %542 : vector<34x1xf32> to vector<34x34xf32>
    %544 = arith.subf %540, %543 : vector<34x34xf32>
    %545 = math.exp %544 : vector<34x34xf32>
    %cst_204 = arith.constant dense<0.000000e+00> : vector<34xf32>
    %546 = vector.multi_reduction <add>, %545, %cst_204 [1] : vector<34x34xf32> to vector<34xf32>
    %547 = vector.shape_cast %546 : vector<34xf32> to vector<34x1xf32>
    %548 = tpu.reciprocal %547 {approx = true} : vector<34x1xf32> -> vector<34x1xf32>
    %549 = vector.broadcast %548 : vector<34x1xf32> to vector<34x34xf32>
    %550 = arith.mulf %545, %549 : vector<34x34xf32>
    %551 = arith.truncf %550 : vector<34x34xf32> to vector<34x34xbf16>
    %cst_205 = arith.constant dense<0.000000e+00> : vector<34x8xf32>
    %552 = tpu.matmul %551, %538, %cst_205 {dimension_numbers = #tpu.dot_dimension_numbers<[1], [0], [0], [1], [0, 0, 1, 1], [], []>} : vector<34x34xbf16>, vector<34x8xbf16>, vector<34x8xf32> -> vector<34x8xf32>
    %553 = vector.extract_strided_slice %510 {offsets = [0, 16], sizes = [34, 8], strides = [1, 1]} : vector<34x32xf32> to vector<34x8xf32>
    %554 = arith.truncf %553 : vector<34x8xf32> to vector<34x8xbf16>
    %555 = vector.extract_strided_slice %511 {offsets = [0, 16], sizes = [34, 8], strides = [1, 1]} : vector<34x32xf32> to vector<34x8xf32>
    %556 = arith.truncf %555 : vector<34x8xf32> to vector<34x8xbf16>
    %557 = vector.extract_strided_slice %512 {offsets = [0, 16], sizes = [34, 8], strides = [1, 1]} : vector<34x32xf32> to vector<34x8xf32>
    %558 = arith.truncf %557 : vector<34x8xf32> to vector<34x8xbf16>
    %cst_206 = arith.constant dense<0.000000e+00> : vector<34x34xf32>
    %559 = tpu.matmul %554, %556, %cst_206 {dimension_numbers = #tpu.dot_dimension_numbers<[1], [1], [0], [0], [0, 0, 1, 0], [], []>} : vector<34x8xbf16>, vector<34x8xbf16>, vector<34x34xf32> -> vector<34x34xf32>
    %560 = arith.addf %559, %0 : vector<34x34xf32>
    %cst_207 = arith.constant dense<0xFF800000> : vector<34xf32>
    %561 = vector.multi_reduction <maximumf>, %560, %cst_207 [1] : vector<34x34xf32> to vector<34xf32>
    %562 = vector.shape_cast %561 : vector<34xf32> to vector<34x1xf32>
    %563 = vector.broadcast %562 : vector<34x1xf32> to vector<34x34xf32>
    %564 = arith.subf %560, %563 : vector<34x34xf32>
    %565 = math.exp %564 : vector<34x34xf32>
    %cst_208 = arith.constant dense<0.000000e+00> : vector<34xf32>
    %566 = vector.multi_reduction <add>, %565, %cst_208 [1] : vector<34x34xf32> to vector<34xf32>
    %567 = vector.shape_cast %566 : vector<34xf32> to vector<34x1xf32>
    %568 = tpu.reciprocal %567 {approx = true} : vector<34x1xf32> -> vector<34x1xf32>
    %569 = vector.broadcast %568 : vector<34x1xf32> to vector<34x34xf32>
    %570 = arith.mulf %565, %569 : vector<34x34xf32>
    %571 = arith.truncf %570 : vector<34x34xf32> to vector<34x34xbf16>
    %cst_209 = arith.constant dense<0.000000e+00> : vector<34x8xf32>
    %572 = tpu.matmul %571, %558, %cst_209 {dimension_numbers = #tpu.dot_dimension_numbers<[1], [0], [0], [1], [0, 0, 1, 1], [], []>} : vector<34x34xbf16>, vector<34x8xbf16>, vector<34x8xf32> -> vector<34x8xf32>
    %573 = vector.extract_strided_slice %510 {offsets = [0, 24], sizes = [34, 8], strides = [1, 1]} : vector<34x32xf32> to vector<34x8xf32>
    %574 = arith.truncf %573 : vector<34x8xf32> to vector<34x8xbf16>
    %575 = vector.extract_strided_slice %511 {offsets = [0, 24], sizes = [34, 8], strides = [1, 1]} : vector<34x32xf32> to vector<34x8xf32>
    %576 = arith.truncf %575 : vector<34x8xf32> to vector<34x8xbf16>
    %577 = vector.extract_strided_slice %512 {offsets = [0, 24], sizes = [34, 8], strides = [1, 1]} : vector<34x32xf32> to vector<34x8xf32>
    %578 = arith.truncf %577 : vector<34x8xf32> to vector<34x8xbf16>
    %cst_210 = arith.constant dense<0.000000e+00> : vector<34x34xf32>
    %579 = tpu.matmul %574, %576, %cst_210 {dimension_numbers = #tpu.dot_dimension_numbers<[1], [1], [0], [0], [0, 0, 1, 0], [], []>} : vector<34x8xbf16>, vector<34x8xbf16>, vector<34x34xf32> -> vector<34x34xf32>
    %580 = arith.addf %579, %0 : vector<34x34xf32>
    %cst_211 = arith.constant dense<0xFF800000> : vector<34xf32>
    %581 = vector.multi_reduction <maximumf>, %580, %cst_211 [1] : vector<34x34xf32> to vector<34xf32>
    %582 = vector.shape_cast %581 : vector<34xf32> to vector<34x1xf32>
    %583 = vector.broadcast %582 : vector<34x1xf32> to vector<34x34xf32>
    %584 = arith.subf %580, %583 : vector<34x34xf32>
    %585 = math.exp %584 : vector<34x34xf32>
    %cst_212 = arith.constant dense<0.000000e+00> : vector<34xf32>
    %586 = vector.multi_reduction <add>, %585, %cst_212 [1] : vector<34x34xf32> to vector<34xf32>
    %587 = vector.shape_cast %586 : vector<34xf32> to vector<34x1xf32>
    %588 = tpu.reciprocal %587 {approx = true} : vector<34x1xf32> -> vector<34x1xf32>
    %589 = vector.broadcast %588 : vector<34x1xf32> to vector<34x34xf32>
    %590 = arith.mulf %585, %589 : vector<34x34xf32>
    %591 = arith.truncf %590 : vector<34x34xf32> to vector<34x34xbf16>
    %cst_213 = arith.constant dense<0.000000e+00> : vector<34x8xf32>
    %592 = tpu.matmul %591, %578, %cst_213 {dimension_numbers = #tpu.dot_dimension_numbers<[1], [0], [0], [1], [0, 0, 1, 1], [], []>} : vector<34x34xbf16>, vector<34x8xbf16>, vector<34x8xf32> -> vector<34x8xf32>
    %593 = tpu.concatenate %532, %552, %572, %592 in 1 : vector<34x8xf32>, vector<34x8xf32>, vector<34x8xf32>, vector<34x8xf32> -> vector<34x32xf32>
    %594 = arith.truncf %593 : vector<34x32xf32> to vector<34x32xbf16>
    %c1_214 = arith.constant 1 : index
    %c0_215 = arith.constant 0 : index
    %c0_216 = arith.constant 0 : index
    %595 = vector.load %arg10[%c1_214, %c0_215, %c0_216] : memref<2x32x32xbf16, #tpu.memory_space<vmem>>, vector<1x32x32xbf16>
    %596 = vector.shape_cast %595 : vector<1x32x32xbf16> to vector<32x32xbf16>
    %cst_217 = arith.constant dense<0.000000e+00> : vector<34x32xf32>
    %597 = tpu.matmul %594, %596, %cst_217 {dimension_numbers = #tpu.dot_dimension_numbers<[1], [0], [0], [1], [0, 0, 1, 1], [], []>} : vector<34x32xbf16>, vector<32x32xbf16>, vector<34x32xf32> -> vector<34x32xf32>
    %c1_218 = arith.constant 1 : index
    %c0_219 = arith.constant 0 : index
    %c0_220 = arith.constant 0 : index
    %598 = vector.load %arg11[%c1_218, %c0_219, %c0_220] : memref<2x1x32xf32, #tpu.memory_space<vmem>>, vector<1x1x32xf32>
    %599 = vector.shape_cast %598 : vector<1x1x32xf32> to vector<1x32xf32>
    %600 = vector.broadcast %599 : vector<1x32xf32> to vector<34x32xf32>
    %601 = arith.addf %597, %600 : vector<34x32xf32>
    %602 = arith.addf %466, %601 : vector<34x32xf32>
    %c1_221 = arith.constant 1 : index
    %c0_222 = arith.constant 0 : index
    %c0_223 = arith.constant 0 : index
    %603 = vector.load %arg12[%c1_221, %c0_222, %c0_223] : memref<2x1x32xf32, #tpu.memory_space<vmem>>, vector<1x1x32xf32>
    %604 = vector.shape_cast %603 : vector<1x1x32xf32> to vector<1x32xf32>
    %c1_224 = arith.constant 1 : index
    %c0_225 = arith.constant 0 : index
    %c0_226 = arith.constant 0 : index
    %605 = vector.load %arg13[%c1_224, %c0_225, %c0_226] : memref<2x1x32xf32, #tpu.memory_space<vmem>>, vector<1x1x32xf32>
    %606 = vector.shape_cast %605 : vector<1x1x32xf32> to vector<1x32xf32>
    %cst_227 = arith.constant dense<0.000000e+00> : vector<34xf32>
    %607 = vector.multi_reduction <add>, %602, %cst_227 [1] : vector<34x32xf32> to vector<34xf32>
    %608 = vector.shape_cast %607 : vector<34xf32> to vector<34x1xf32>
    %cst_228 = arith.constant 3.200000e+01 : f32
    %609 = vector.broadcast %cst_228 : f32 to vector<34x1xf32>
    %610 = arith.divf %608, %609 : vector<34x1xf32>
    %611 = vector.broadcast %610 : vector<34x1xf32> to vector<34x32xf32>
    %612 = arith.subf %602, %611 : vector<34x32xf32>
    %613 = arith.mulf %612, %612 : vector<34x32xf32>
    %cst_229 = arith.constant dense<0.000000e+00> : vector<34xf32>
    %614 = vector.multi_reduction <add>, %613, %cst_229 [1] : vector<34x32xf32> to vector<34xf32>
    %615 = vector.shape_cast %614 : vector<34xf32> to vector<34x1xf32>
    %cst_230 = arith.constant 3.200000e+01 : f32
    %616 = vector.broadcast %cst_230 : f32 to vector<34x1xf32>
    %617 = arith.divf %615, %616 : vector<34x1xf32>
    %618 = vector.broadcast %610 : vector<34x1xf32> to vector<34x32xf32>
    %619 = arith.subf %602, %618 : vector<34x32xf32>
    %cst_231 = arith.constant 9.99999997E-7 : f32
    %620 = vector.broadcast %cst_231 : f32 to vector<34x1xf32>
    %621 = arith.addf %617, %620 : vector<34x1xf32>
    %622 = math.rsqrt %621 : vector<34x1xf32>
    %623 = vector.broadcast %622 : vector<34x1xf32> to vector<34x32xf32>
    %624 = arith.mulf %619, %623 : vector<34x32xf32>
    %625 = vector.broadcast %604 : vector<1x32xf32> to vector<34x32xf32>
    %626 = arith.mulf %624, %625 : vector<34x32xf32>
    %627 = vector.broadcast %606 : vector<1x32xf32> to vector<34x32xf32>
    %628 = arith.addf %626, %627 : vector<34x32xf32>
    %629 = arith.truncf %628 : vector<34x32xf32> to vector<34x32xbf16>
    %c1_232 = arith.constant 1 : index
    %c0_233 = arith.constant 0 : index
    %c0_234 = arith.constant 0 : index
    %630 = vector.load %arg14[%c1_232, %c0_233, %c0_234] : memref<2x32x128xbf16, #tpu.memory_space<vmem>>, vector<1x32x128xbf16>
    %631 = vector.shape_cast %630 : vector<1x32x128xbf16> to vector<32x128xbf16>
    %cst_235 = arith.constant dense<0.000000e+00> : vector<34x128xf32>
    %632 = tpu.matmul %629, %631, %cst_235 {dimension_numbers = #tpu.dot_dimension_numbers<[1], [0], [0], [1], [0, 0, 1, 1], [], []>} : vector<34x32xbf16>, vector<32x128xbf16>, vector<34x128xf32> -> vector<34x128xf32>
    %c1_236 = arith.constant 1 : index
    %c0_237 = arith.constant 0 : index
    %c0_238 = arith.constant 0 : index
    %633 = vector.load %arg15[%c1_236, %c0_237, %c0_238] : memref<2x1x128xf32, #tpu.memory_space<vmem>>, vector<1x1x128xf32>
    %634 = vector.shape_cast %633 : vector<1x1x128xf32> to vector<1x128xf32>
    %635 = vector.broadcast %634 : vector<1x128xf32> to vector<34x128xf32>
    %636 = arith.addf %632, %635 : vector<34x128xf32>
    %cst_239 = arith.constant 5.000000e-01 : f32
    %637 = vector.broadcast %cst_239 : f32 to vector<34x128xf32>
    %638 = arith.mulf %637, %636 : vector<34x128xf32>
    %cst_240 = arith.constant 4.471500e-02 : f32
    %639 = vector.broadcast %cst_240 : f32 to vector<34x128xf32>
    %640 = arith.mulf %639, %636 : vector<34x128xf32>
    %641 = arith.mulf %640, %636 : vector<34x128xf32>
    %642 = arith.mulf %641, %636 : vector<34x128xf32>
    %643 = arith.addf %636, %642 : vector<34x128xf32>
    %cst_241 = arith.constant 0.797884583 : f32
    %644 = vector.broadcast %cst_241 : f32 to vector<34x128xf32>
    %645 = arith.mulf %644, %643 : vector<34x128xf32>
    %646 = math.tanh %645 : vector<34x128xf32>
    %cst_242 = arith.constant 1.000000e+00 : f32
    %647 = vector.broadcast %cst_242 : f32 to vector<34x128xf32>
    %648 = arith.addf %647, %646 : vector<34x128xf32>
    %649 = arith.mulf %638, %648 : vector<34x128xf32>
    %650 = arith.truncf %649 : vector<34x128xf32> to vector<34x128xbf16>
    %c1_243 = arith.constant 1 : index
    %c0_244 = arith.constant 0 : index
    %c0_245 = arith.constant 0 : index
    %651 = vector.load %arg16[%c1_243, %c0_244, %c0_245] : memref<2x128x32xbf16, #tpu.memory_space<vmem>>, vector<1x128x32xbf16>
    %652 = vector.shape_cast %651 : vector<1x128x32xbf16> to vector<128x32xbf16>
    %cst_246 = arith.constant dense<0.000000e+00> : vector<34x32xf32>
    %653 = tpu.matmul %650, %652, %cst_246 {dimension_numbers = #tpu.dot_dimension_numbers<[1], [0], [0], [1], [0, 0, 1, 1], [], []>} : vector<34x128xbf16>, vector<128x32xbf16>, vector<34x32xf32> -> vector<34x32xf32>
    %654 = arith.addf %602, %653 : vector<34x32xf32>
    %c1_247 = arith.constant 1 : index
    %c0_248 = arith.constant 0 : index
    %c0_249 = arith.constant 0 : index
    %655 = vector.load %arg17[%c1_247, %c0_248, %c0_249] : memref<2x1x32xf32, #tpu.memory_space<vmem>>, vector<1x1x32xf32>
    %656 = vector.shape_cast %655 : vector<1x1x32xf32> to vector<1x32xf32>
    %657 = vector.broadcast %656 : vector<1x32xf32> to vector<34x32xf32>
    %658 = arith.addf %654, %657 : vector<34x32xf32>
    %c1_250 = arith.constant 1 : index
    %c0_251 = arith.constant 0 : index
    %c0_252 = arith.constant 0 : index
    %659 = vector.load %arg27[%c1_250, %c0_251, %c0_252] : memref<2x1x32xf32, #tpu.memory_space<vmem>>, vector<1x1x32xf32>
    %660 = vector.shape_cast %659 : vector<1x1x32xf32> to vector<1x32xf32>
    %c1_253 = arith.constant 1 : index
    %c0_254 = arith.constant 0 : index
    %c0_255 = arith.constant 0 : index
    %661 = vector.load %arg28[%c1_253, %c0_254, %c0_255] : memref<2x1x32xf32, #tpu.memory_space<vmem>>, vector<1x1x32xf32>
    %662 = vector.shape_cast %661 : vector<1x1x32xf32> to vector<1x32xf32>
    %cst_256 = arith.constant dense<0.000000e+00> : vector<34xf32>
    %663 = vector.multi_reduction <add>, %473, %cst_256 [1] : vector<34x32xf32> to vector<34xf32>
    %664 = vector.shape_cast %663 : vector<34xf32> to vector<34x1xf32>
    %cst_257 = arith.constant 3.200000e+01 : f32
    %665 = vector.broadcast %cst_257 : f32 to vector<34x1xf32>
    %666 = arith.divf %664, %665 : vector<34x1xf32>
    %667 = vector.broadcast %666 : vector<34x1xf32> to vector<34x32xf32>
    %668 = arith.subf %473, %667 : vector<34x32xf32>
    %669 = arith.mulf %668, %668 : vector<34x32xf32>
    %cst_258 = arith.constant dense<0.000000e+00> : vector<34xf32>
    %670 = vector.multi_reduction <add>, %669, %cst_258 [1] : vector<34x32xf32> to vector<34xf32>
    %671 = vector.shape_cast %670 : vector<34xf32> to vector<34x1xf32>
    %cst_259 = arith.constant 3.200000e+01 : f32
    %672 = vector.broadcast %cst_259 : f32 to vector<34x1xf32>
    %673 = arith.divf %671, %672 : vector<34x1xf32>
    %674 = vector.broadcast %666 : vector<34x1xf32> to vector<34x32xf32>
    %675 = arith.subf %473, %674 : vector<34x32xf32>
    %cst_260 = arith.constant 9.99999997E-7 : f32
    %676 = vector.broadcast %cst_260 : f32 to vector<34x1xf32>
    %677 = arith.addf %673, %676 : vector<34x1xf32>
    %678 = math.rsqrt %677 : vector<34x1xf32>
    %679 = vector.broadcast %678 : vector<34x1xf32> to vector<34x32xf32>
    %680 = arith.mulf %675, %679 : vector<34x32xf32>
    %681 = vector.broadcast %660 : vector<1x32xf32> to vector<34x32xf32>
    %682 = arith.mulf %680, %681 : vector<34x32xf32>
    %683 = vector.broadcast %662 : vector<1x32xf32> to vector<34x32xf32>
    %684 = arith.addf %682, %683 : vector<34x32xf32>
    %685 = arith.truncf %684 : vector<34x32xf32> to vector<34x32xbf16>
    %c1_261 = arith.constant 1 : index
    %c0_262 = arith.constant 0 : index
    %c0_263 = arith.constant 0 : index
    %686 = vector.load %arg29[%c1_261, %c0_262, %c0_263] : memref<2x32x96xbf16, #tpu.memory_space<vmem>>, vector<1x32x96xbf16>
    %687 = vector.shape_cast %686 : vector<1x32x96xbf16> to vector<32x96xbf16>
    %cst_264 = arith.constant dense<0.000000e+00> : vector<34x96xf32>
    %688 = tpu.matmul %685, %687, %cst_264 {dimension_numbers = #tpu.dot_dimension_numbers<[1], [0], [0], [1], [0, 0, 1, 1], [], []>} : vector<34x32xbf16>, vector<32x96xbf16>, vector<34x96xf32> -> vector<34x96xf32>
    %c1_265 = arith.constant 1 : index
    %c0_266 = arith.constant 0 : index
    %c0_267 = arith.constant 0 : index
    %689 = vector.load %arg30[%c1_265, %c0_266, %c0_267] : memref<2x1x96xf32, #tpu.memory_space<vmem>>, vector<1x1x96xf32>
    %690 = vector.shape_cast %689 : vector<1x1x96xf32> to vector<1x96xf32>
    %691 = vector.broadcast %690 : vector<1x96xf32> to vector<34x96xf32>
    %692 = arith.addf %688, %691 : vector<34x96xf32>
    %693 = vector.extract_strided_slice %692 {offsets = [0, 0], sizes = [34, 32], strides = [1, 1]} : vector<34x96xf32> to vector<34x32xf32>
    %cst_268 = arith.constant 0.353553385 : f32
    %694 = vector.broadcast %cst_268 : f32 to vector<34x32xf32>
    %695 = arith.mulf %693, %694 : vector<34x32xf32>
    %696 = vector.extract_strided_slice %692 {offsets = [0, 32], sizes = [34, 32], strides = [1, 1]} : vector<34x96xf32> to vector<34x32xf32>
    %697 = vector.extract_strided_slice %692 {offsets = [0, 64], sizes = [34, 32], strides = [1, 1]} : vector<34x96xf32> to vector<34x32xf32>
    %698 = vector.extract_strided_slice %695 {offsets = [0, 0], sizes = [34, 8], strides = [1, 1]} : vector<34x32xf32> to vector<34x8xf32>
    %699 = arith.truncf %698 : vector<34x8xf32> to vector<34x8xbf16>
    %700 = vector.extract_strided_slice %696 {offsets = [0, 0], sizes = [34, 8], strides = [1, 1]} : vector<34x32xf32> to vector<34x8xf32>
    %701 = arith.truncf %700 : vector<34x8xf32> to vector<34x8xbf16>
    %702 = vector.extract_strided_slice %697 {offsets = [0, 0], sizes = [34, 8], strides = [1, 1]} : vector<34x32xf32> to vector<34x8xf32>
    %703 = arith.truncf %702 : vector<34x8xf32> to vector<34x8xbf16>
    %cst_269 = arith.constant dense<0.000000e+00> : vector<34x34xf32>
    %704 = tpu.matmul %699, %701, %cst_269 {dimension_numbers = #tpu.dot_dimension_numbers<[1], [1], [0], [0], [0, 0, 1, 0], [], []>} : vector<34x8xbf16>, vector<34x8xbf16>, vector<34x34xf32> -> vector<34x34xf32>
    %705 = arith.addf %704, %0 : vector<34x34xf32>
    %cst_270 = arith.constant dense<0xFF800000> : vector<34xf32>
    %706 = vector.multi_reduction <maximumf>, %705, %cst_270 [1] : vector<34x34xf32> to vector<34xf32>
    %707 = vector.shape_cast %706 : vector<34xf32> to vector<34x1xf32>
    %708 = vector.broadcast %707 : vector<34x1xf32> to vector<34x34xf32>
    %709 = arith.subf %705, %708 : vector<34x34xf32>
    %710 = math.exp %709 : vector<34x34xf32>
    %cst_271 = arith.constant dense<0.000000e+00> : vector<34xf32>
    %711 = vector.multi_reduction <add>, %710, %cst_271 [1] : vector<34x34xf32> to vector<34xf32>
    %712 = vector.shape_cast %711 : vector<34xf32> to vector<34x1xf32>
    %713 = tpu.reciprocal %712 {approx = true} : vector<34x1xf32> -> vector<34x1xf32>
    %714 = vector.broadcast %713 : vector<34x1xf32> to vector<34x34xf32>
    %715 = arith.mulf %710, %714 : vector<34x34xf32>
    %716 = arith.truncf %715 : vector<34x34xf32> to vector<34x34xbf16>
    %cst_272 = arith.constant dense<0.000000e+00> : vector<34x8xf32>
    %717 = tpu.matmul %716, %703, %cst_272 {dimension_numbers = #tpu.dot_dimension_numbers<[1], [0], [0], [1], [0, 0, 1, 1], [], []>} : vector<34x34xbf16>, vector<34x8xbf16>, vector<34x8xf32> -> vector<34x8xf32>
    %718 = vector.extract_strided_slice %695 {offsets = [0, 8], sizes = [34, 8], strides = [1, 1]} : vector<34x32xf32> to vector<34x8xf32>
    %719 = arith.truncf %718 : vector<34x8xf32> to vector<34x8xbf16>
    %720 = vector.extract_strided_slice %696 {offsets = [0, 8], sizes = [34, 8], strides = [1, 1]} : vector<34x32xf32> to vector<34x8xf32>
    %721 = arith.truncf %720 : vector<34x8xf32> to vector<34x8xbf16>
    %722 = vector.extract_strided_slice %697 {offsets = [0, 8], sizes = [34, 8], strides = [1, 1]} : vector<34x32xf32> to vector<34x8xf32>
    %723 = arith.truncf %722 : vector<34x8xf32> to vector<34x8xbf16>
    %cst_273 = arith.constant dense<0.000000e+00> : vector<34x34xf32>
    %724 = tpu.matmul %719, %721, %cst_273 {dimension_numbers = #tpu.dot_dimension_numbers<[1], [1], [0], [0], [0, 0, 1, 0], [], []>} : vector<34x8xbf16>, vector<34x8xbf16>, vector<34x34xf32> -> vector<34x34xf32>
    %725 = arith.addf %724, %0 : vector<34x34xf32>
    %cst_274 = arith.constant dense<0xFF800000> : vector<34xf32>
    %726 = vector.multi_reduction <maximumf>, %725, %cst_274 [1] : vector<34x34xf32> to vector<34xf32>
    %727 = vector.shape_cast %726 : vector<34xf32> to vector<34x1xf32>
    %728 = vector.broadcast %727 : vector<34x1xf32> to vector<34x34xf32>
    %729 = arith.subf %725, %728 : vector<34x34xf32>
    %730 = math.exp %729 : vector<34x34xf32>
    %cst_275 = arith.constant dense<0.000000e+00> : vector<34xf32>
    %731 = vector.multi_reduction <add>, %730, %cst_275 [1] : vector<34x34xf32> to vector<34xf32>
    %732 = vector.shape_cast %731 : vector<34xf32> to vector<34x1xf32>
    %733 = tpu.reciprocal %732 {approx = true} : vector<34x1xf32> -> vector<34x1xf32>
    %734 = vector.broadcast %733 : vector<34x1xf32> to vector<34x34xf32>
    %735 = arith.mulf %730, %734 : vector<34x34xf32>
    %736 = arith.truncf %735 : vector<34x34xf32> to vector<34x34xbf16>
    %cst_276 = arith.constant dense<0.000000e+00> : vector<34x8xf32>
    %737 = tpu.matmul %736, %723, %cst_276 {dimension_numbers = #tpu.dot_dimension_numbers<[1], [0], [0], [1], [0, 0, 1, 1], [], []>} : vector<34x34xbf16>, vector<34x8xbf16>, vector<34x8xf32> -> vector<34x8xf32>
    %738 = vector.extract_strided_slice %695 {offsets = [0, 16], sizes = [34, 8], strides = [1, 1]} : vector<34x32xf32> to vector<34x8xf32>
    %739 = arith.truncf %738 : vector<34x8xf32> to vector<34x8xbf16>
    %740 = vector.extract_strided_slice %696 {offsets = [0, 16], sizes = [34, 8], strides = [1, 1]} : vector<34x32xf32> to vector<34x8xf32>
    %741 = arith.truncf %740 : vector<34x8xf32> to vector<34x8xbf16>
    %742 = vector.extract_strided_slice %697 {offsets = [0, 16], sizes = [34, 8], strides = [1, 1]} : vector<34x32xf32> to vector<34x8xf32>
    %743 = arith.truncf %742 : vector<34x8xf32> to vector<34x8xbf16>
    %cst_277 = arith.constant dense<0.000000e+00> : vector<34x34xf32>
    %744 = tpu.matmul %739, %741, %cst_277 {dimension_numbers = #tpu.dot_dimension_numbers<[1], [1], [0], [0], [0, 0, 1, 0], [], []>} : vector<34x8xbf16>, vector<34x8xbf16>, vector<34x34xf32> -> vector<34x34xf32>
    %745 = arith.addf %744, %0 : vector<34x34xf32>
    %cst_278 = arith.constant dense<0xFF800000> : vector<34xf32>
    %746 = vector.multi_reduction <maximumf>, %745, %cst_278 [1] : vector<34x34xf32> to vector<34xf32>
    %747 = vector.shape_cast %746 : vector<34xf32> to vector<34x1xf32>
    %748 = vector.broadcast %747 : vector<34x1xf32> to vector<34x34xf32>
    %749 = arith.subf %745, %748 : vector<34x34xf32>
    %750 = math.exp %749 : vector<34x34xf32>
    %cst_279 = arith.constant dense<0.000000e+00> : vector<34xf32>
    %751 = vector.multi_reduction <add>, %750, %cst_279 [1] : vector<34x34xf32> to vector<34xf32>
    %752 = vector.shape_cast %751 : vector<34xf32> to vector<34x1xf32>
    %753 = tpu.reciprocal %752 {approx = true} : vector<34x1xf32> -> vector<34x1xf32>
    %754 = vector.broadcast %753 : vector<34x1xf32> to vector<34x34xf32>
    %755 = arith.mulf %750, %754 : vector<34x34xf32>
    %756 = arith.truncf %755 : vector<34x34xf32> to vector<34x34xbf16>
    %cst_280 = arith.constant dense<0.000000e+00> : vector<34x8xf32>
    %757 = tpu.matmul %756, %743, %cst_280 {dimension_numbers = #tpu.dot_dimension_numbers<[1], [0], [0], [1], [0, 0, 1, 1], [], []>} : vector<34x34xbf16>, vector<34x8xbf16>, vector<34x8xf32> -> vector<34x8xf32>
    %758 = vector.extract_strided_slice %695 {offsets = [0, 24], sizes = [34, 8], strides = [1, 1]} : vector<34x32xf32> to vector<34x8xf32>
    %759 = arith.truncf %758 : vector<34x8xf32> to vector<34x8xbf16>
    %760 = vector.extract_strided_slice %696 {offsets = [0, 24], sizes = [34, 8], strides = [1, 1]} : vector<34x32xf32> to vector<34x8xf32>
    %761 = arith.truncf %760 : vector<34x8xf32> to vector<34x8xbf16>
    %762 = vector.extract_strided_slice %697 {offsets = [0, 24], sizes = [34, 8], strides = [1, 1]} : vector<34x32xf32> to vector<34x8xf32>
    %763 = arith.truncf %762 : vector<34x8xf32> to vector<34x8xbf16>
    %cst_281 = arith.constant dense<0.000000e+00> : vector<34x34xf32>
    %764 = tpu.matmul %759, %761, %cst_281 {dimension_numbers = #tpu.dot_dimension_numbers<[1], [1], [0], [0], [0, 0, 1, 0], [], []>} : vector<34x8xbf16>, vector<34x8xbf16>, vector<34x34xf32> -> vector<34x34xf32>
    %765 = arith.addf %764, %0 : vector<34x34xf32>
    %cst_282 = arith.constant dense<0xFF800000> : vector<34xf32>
    %766 = vector.multi_reduction <maximumf>, %765, %cst_282 [1] : vector<34x34xf32> to vector<34xf32>
    %767 = vector.shape_cast %766 : vector<34xf32> to vector<34x1xf32>
    %768 = vector.broadcast %767 : vector<34x1xf32> to vector<34x34xf32>
    %769 = arith.subf %765, %768 : vector<34x34xf32>
    %770 = math.exp %769 : vector<34x34xf32>
    %cst_283 = arith.constant dense<0.000000e+00> : vector<34xf32>
    %771 = vector.multi_reduction <add>, %770, %cst_283 [1] : vector<34x34xf32> to vector<34xf32>
    %772 = vector.shape_cast %771 : vector<34xf32> to vector<34x1xf32>
    %773 = tpu.reciprocal %772 {approx = true} : vector<34x1xf32> -> vector<34x1xf32>
    %774 = vector.broadcast %773 : vector<34x1xf32> to vector<34x34xf32>
    %775 = arith.mulf %770, %774 : vector<34x34xf32>
    %776 = arith.truncf %775 : vector<34x34xf32> to vector<34x34xbf16>
    %cst_284 = arith.constant dense<0.000000e+00> : vector<34x8xf32>
    %777 = tpu.matmul %776, %763, %cst_284 {dimension_numbers = #tpu.dot_dimension_numbers<[1], [0], [0], [1], [0, 0, 1, 1], [], []>} : vector<34x34xbf16>, vector<34x8xbf16>, vector<34x8xf32> -> vector<34x8xf32>
    %778 = tpu.concatenate %717, %737, %757, %777 in 1 : vector<34x8xf32>, vector<34x8xf32>, vector<34x8xf32>, vector<34x8xf32> -> vector<34x32xf32>
    %779 = arith.truncf %778 : vector<34x32xf32> to vector<34x32xbf16>
    %c1_285 = arith.constant 1 : index
    %c0_286 = arith.constant 0 : index
    %c0_287 = arith.constant 0 : index
    %780 = vector.load %arg31[%c1_285, %c0_286, %c0_287] : memref<2x32x32xbf16, #tpu.memory_space<vmem>>, vector<1x32x32xbf16>
    %781 = vector.shape_cast %780 : vector<1x32x32xbf16> to vector<32x32xbf16>
    %cst_288 = arith.constant dense<0.000000e+00> : vector<34x32xf32>
    %782 = tpu.matmul %779, %781, %cst_288 {dimension_numbers = #tpu.dot_dimension_numbers<[1], [0], [0], [1], [0, 0, 1, 1], [], []>} : vector<34x32xbf16>, vector<32x32xbf16>, vector<34x32xf32> -> vector<34x32xf32>
    %c1_289 = arith.constant 1 : index
    %c0_290 = arith.constant 0 : index
    %c0_291 = arith.constant 0 : index
    %783 = vector.load %arg32[%c1_289, %c0_290, %c0_291] : memref<2x1x32xf32, #tpu.memory_space<vmem>>, vector<1x1x32xf32>
    %784 = vector.shape_cast %783 : vector<1x1x32xf32> to vector<1x32xf32>
    %785 = vector.broadcast %784 : vector<1x32xf32> to vector<34x32xf32>
    %786 = arith.addf %782, %785 : vector<34x32xf32>
    %787 = arith.addf %473, %786 : vector<34x32xf32>
    %c1_292 = arith.constant 1 : index
    %c0_293 = arith.constant 0 : index
    %c0_294 = arith.constant 0 : index
    %788 = vector.load %arg33[%c1_292, %c0_293, %c0_294] : memref<2x1x32xf32, #tpu.memory_space<vmem>>, vector<1x1x32xf32>
    %789 = vector.shape_cast %788 : vector<1x1x32xf32> to vector<1x32xf32>
    %c1_295 = arith.constant 1 : index
    %c0_296 = arith.constant 0 : index
    %c0_297 = arith.constant 0 : index
    %790 = vector.load %arg34[%c1_295, %c0_296, %c0_297] : memref<2x1x32xf32, #tpu.memory_space<vmem>>, vector<1x1x32xf32>
    %791 = vector.shape_cast %790 : vector<1x1x32xf32> to vector<1x32xf32>
    %cst_298 = arith.constant dense<0.000000e+00> : vector<34xf32>
    %792 = vector.multi_reduction <add>, %787, %cst_298 [1] : vector<34x32xf32> to vector<34xf32>
    %793 = vector.shape_cast %792 : vector<34xf32> to vector<34x1xf32>
    %cst_299 = arith.constant 3.200000e+01 : f32
    %794 = vector.broadcast %cst_299 : f32 to vector<34x1xf32>
    %795 = arith.divf %793, %794 : vector<34x1xf32>
    %796 = vector.broadcast %795 : vector<34x1xf32> to vector<34x32xf32>
    %797 = arith.subf %787, %796 : vector<34x32xf32>
    %798 = arith.mulf %797, %797 : vector<34x32xf32>
    %cst_300 = arith.constant dense<0.000000e+00> : vector<34xf32>
    %799 = vector.multi_reduction <add>, %798, %cst_300 [1] : vector<34x32xf32> to vector<34xf32>
    %800 = vector.shape_cast %799 : vector<34xf32> to vector<34x1xf32>
    %cst_301 = arith.constant 3.200000e+01 : f32
    %801 = vector.broadcast %cst_301 : f32 to vector<34x1xf32>
    %802 = arith.divf %800, %801 : vector<34x1xf32>
    %803 = vector.broadcast %795 : vector<34x1xf32> to vector<34x32xf32>
    %804 = arith.subf %787, %803 : vector<34x32xf32>
    %cst_302 = arith.constant 9.99999997E-7 : f32
    %805 = vector.broadcast %cst_302 : f32 to vector<34x1xf32>
    %806 = arith.addf %802, %805 : vector<34x1xf32>
    %807 = math.rsqrt %806 : vector<34x1xf32>
    %808 = vector.broadcast %807 : vector<34x1xf32> to vector<34x32xf32>
    %809 = arith.mulf %804, %808 : vector<34x32xf32>
    %810 = vector.broadcast %789 : vector<1x32xf32> to vector<34x32xf32>
    %811 = arith.mulf %809, %810 : vector<34x32xf32>
    %812 = vector.broadcast %791 : vector<1x32xf32> to vector<34x32xf32>
    %813 = arith.addf %811, %812 : vector<34x32xf32>
    %814 = arith.truncf %813 : vector<34x32xf32> to vector<34x32xbf16>
    %c1_303 = arith.constant 1 : index
    %c0_304 = arith.constant 0 : index
    %c0_305 = arith.constant 0 : index
    %815 = vector.load %arg35[%c1_303, %c0_304, %c0_305] : memref<2x32x128xbf16, #tpu.memory_space<vmem>>, vector<1x32x128xbf16>
    %816 = vector.shape_cast %815 : vector<1x32x128xbf16> to vector<32x128xbf16>
    %cst_306 = arith.constant dense<0.000000e+00> : vector<34x128xf32>
    %817 = tpu.matmul %814, %816, %cst_306 {dimension_numbers = #tpu.dot_dimension_numbers<[1], [0], [0], [1], [0, 0, 1, 1], [], []>} : vector<34x32xbf16>, vector<32x128xbf16>, vector<34x128xf32> -> vector<34x128xf32>
    %c1_307 = arith.constant 1 : index
    %c0_308 = arith.constant 0 : index
    %c0_309 = arith.constant 0 : index
    %818 = vector.load %arg36[%c1_307, %c0_308, %c0_309] : memref<2x1x128xf32, #tpu.memory_space<vmem>>, vector<1x1x128xf32>
    %819 = vector.shape_cast %818 : vector<1x1x128xf32> to vector<1x128xf32>
    %820 = vector.broadcast %819 : vector<1x128xf32> to vector<34x128xf32>
    %821 = arith.addf %817, %820 : vector<34x128xf32>
    %cst_310 = arith.constant 5.000000e-01 : f32
    %822 = vector.broadcast %cst_310 : f32 to vector<34x128xf32>
    %823 = arith.mulf %822, %821 : vector<34x128xf32>
    %cst_311 = arith.constant 4.471500e-02 : f32
    %824 = vector.broadcast %cst_311 : f32 to vector<34x128xf32>
    %825 = arith.mulf %824, %821 : vector<34x128xf32>
    %826 = arith.mulf %825, %821 : vector<34x128xf32>
    %827 = arith.mulf %826, %821 : vector<34x128xf32>
    %828 = arith.addf %821, %827 : vector<34x128xf32>
    %cst_312 = arith.constant 0.797884583 : f32
    %829 = vector.broadcast %cst_312 : f32 to vector<34x128xf32>
    %830 = arith.mulf %829, %828 : vector<34x128xf32>
    %831 = math.tanh %830 : vector<34x128xf32>
    %cst_313 = arith.constant 1.000000e+00 : f32
    %832 = vector.broadcast %cst_313 : f32 to vector<34x128xf32>
    %833 = arith.addf %832, %831 : vector<34x128xf32>
    %834 = arith.mulf %823, %833 : vector<34x128xf32>
    %835 = arith.truncf %834 : vector<34x128xf32> to vector<34x128xbf16>
    %c1_314 = arith.constant 1 : index
    %c0_315 = arith.constant 0 : index
    %c0_316 = arith.constant 0 : index
    %836 = vector.load %arg37[%c1_314, %c0_315, %c0_316] : memref<2x128x32xbf16, #tpu.memory_space<vmem>>, vector<1x128x32xbf16>
    %837 = vector.shape_cast %836 : vector<1x128x32xbf16> to vector<128x32xbf16>
    %cst_317 = arith.constant dense<0.000000e+00> : vector<34x32xf32>
    %838 = tpu.matmul %835, %837, %cst_317 {dimension_numbers = #tpu.dot_dimension_numbers<[1], [0], [0], [1], [0, 0, 1, 1], [], []>} : vector<34x128xbf16>, vector<128x32xbf16>, vector<34x32xf32> -> vector<34x32xf32>
    %839 = arith.addf %787, %838 : vector<34x32xf32>
    %c1_318 = arith.constant 1 : index
    %c0_319 = arith.constant 0 : index
    %c0_320 = arith.constant 0 : index
    %840 = vector.load %arg38[%c1_318, %c0_319, %c0_320] : memref<2x1x32xf32, #tpu.memory_space<vmem>>, vector<1x1x32xf32>
    %841 = vector.shape_cast %840 : vector<1x1x32xf32> to vector<1x32xf32>
    %842 = vector.broadcast %841 : vector<1x32xf32> to vector<34x32xf32>
    %843 = arith.addf %839, %842 : vector<34x32xf32>
    %844 = vector.extract_strided_slice %658 {offsets = [0, 0], sizes = [1, 32], strides = [1, 1]} : vector<34x32xf32> to vector<1x32xf32>
    %845 = vector.extract_strided_slice %843 {offsets = [0, 0], sizes = [1, 32], strides = [1, 1]} : vector<34x32xf32> to vector<1x32xf32>
    %846 = arith.addf %844, %845 : vector<1x32xf32>
    %cst_321 = arith.constant 5.000000e-01 : f32
    %847 = vector.broadcast %cst_321 : f32 to vector<1x32xf32>
    %848 = arith.mulf %846, %847 : vector<1x32xf32>
    %849 = arith.addf %848, %845 : vector<1x32xf32>
    %cst_322 = arith.constant 5.000000e-01 : f32
    %850 = vector.broadcast %cst_322 : f32 to vector<1x32xf32>
    %851 = arith.mulf %849, %850 : vector<1x32xf32>
    %c0_i32_323 = arith.constant 0 : i32
    %852 = vector.broadcast %c0_i32_323 : i32 to vector<34x1xi32>
    %853 = arith.cmpi eq, %59, %852 : vector<34x1xi32>
    %854 = vector.shape_cast %853 : vector<34x1xi1> to vector<34x1xi1>
    %855 = vector.broadcast %854 : vector<34x1xi1> to vector<34x32xi1>
    %856 = vector.shape_cast %848 : vector<1x32xf32> to vector<1x32xf32>
    %857 = vector.broadcast %856 : vector<1x32xf32> to vector<34x32xf32>
    %858 = arith.select %855, %857, %658 : vector<34x32xi1>, vector<34x32xf32>
    %c0_i32_324 = arith.constant 0 : i32
    %859 = vector.broadcast %c0_i32_324 : i32 to vector<34x1xi32>
    %860 = arith.cmpi eq, %59, %859 : vector<34x1xi32>
    %861 = vector.shape_cast %860 : vector<34x1xi1> to vector<34x1xi1>
    %862 = vector.broadcast %861 : vector<34x1xi1> to vector<34x32xi1>
    %863 = vector.shape_cast %851 : vector<1x32xf32> to vector<1x32xf32>
    %864 = vector.broadcast %863 : vector<1x32xf32> to vector<34x32xf32>
    %865 = arith.select %862, %864, %843 : vector<34x32xi1>, vector<34x32xf32>
    %866 = vector.extract_strided_slice %858 {offsets = [17, 0], sizes = [1, 32], strides = [1, 1]} : vector<34x32xf32> to vector<1x32xf32>
    %867 = vector.extract_strided_slice %865 {offsets = [17, 0], sizes = [1, 32], strides = [1, 1]} : vector<34x32xf32> to vector<1x32xf32>
    %868 = arith.addf %866, %867 : vector<1x32xf32>
    %cst_325 = arith.constant 5.000000e-01 : f32
    %869 = vector.broadcast %cst_325 : f32 to vector<1x32xf32>
    %870 = arith.mulf %868, %869 : vector<1x32xf32>
    %871 = arith.addf %870, %867 : vector<1x32xf32>
    %cst_326 = arith.constant 5.000000e-01 : f32
    %872 = vector.broadcast %cst_326 : f32 to vector<1x32xf32>
    %873 = arith.mulf %871, %872 : vector<1x32xf32>
    %c17_i32_327 = arith.constant 17 : i32
    %874 = vector.broadcast %c17_i32_327 : i32 to vector<34x1xi32>
    %875 = arith.cmpi eq, %59, %874 : vector<34x1xi32>
    %876 = vector.shape_cast %875 : vector<34x1xi1> to vector<34x1xi1>
    %877 = vector.broadcast %876 : vector<34x1xi1> to vector<34x32xi1>
    %878 = vector.shape_cast %870 : vector<1x32xf32> to vector<1x32xf32>
    %879 = vector.broadcast %878 : vector<1x32xf32> to vector<34x32xf32>
    %880 = arith.select %877, %879, %858 : vector<34x32xi1>, vector<34x32xf32>
    %c17_i32_328 = arith.constant 17 : i32
    %881 = vector.broadcast %c17_i32_328 : i32 to vector<34x1xi32>
    %882 = arith.cmpi eq, %59, %881 : vector<34x1xi32>
    %883 = vector.shape_cast %882 : vector<34x1xi1> to vector<34x1xi1>
    %884 = vector.broadcast %883 : vector<34x1xi1> to vector<34x32xi1>
    %885 = vector.shape_cast %873 : vector<1x32xf32> to vector<1x32xf32>
    %886 = vector.broadcast %885 : vector<1x32xf32> to vector<34x32xf32>
    %887 = arith.select %884, %886, %865 : vector<34x32xi1>, vector<34x32xf32>
    %888 = vector.extract_strided_slice %880 {offsets = [0, 0], sizes = [1, 32], strides = [1, 1]} : vector<34x32xf32> to vector<1x32xf32>
    %889 = vector.extract_strided_slice %880 {offsets = [17, 0], sizes = [1, 32], strides = [1, 1]} : vector<34x32xf32> to vector<1x32xf32>
    %890 = tpu.concatenate %888, %889 in 0 : vector<1x32xf32>, vector<1x32xf32> -> vector<2x32xf32>
    %891 = vector.extract_strided_slice %887 {offsets = [0, 0], sizes = [1, 32], strides = [1, 1]} : vector<34x32xf32> to vector<1x32xf32>
    %892 = vector.extract_strided_slice %887 {offsets = [17, 0], sizes = [1, 32], strides = [1, 1]} : vector<34x32xf32> to vector<1x32xf32>
    %893 = tpu.concatenate %891, %892 in 0 : vector<1x32xf32>, vector<1x32xf32> -> vector<2x32xf32>
    %c0_329 = arith.constant 0 : index
    %c0_330 = arith.constant 0 : index
    %894 = vector.load %arg18[%c0_329, %c0_330] : memref<1x32xf32, #tpu.memory_space<vmem>>, vector<1x32xf32>
    %c0_331 = arith.constant 0 : index
    %c0_332 = arith.constant 0 : index
    %895 = vector.load %arg19[%c0_331, %c0_332] : memref<1x32xf32, #tpu.memory_space<vmem>>, vector<1x32xf32>
    %cst_333 = arith.constant dense<0.000000e+00> : vector<2xf32>
    %896 = vector.multi_reduction <add>, %890, %cst_333 [1] : vector<2x32xf32> to vector<2xf32>
    %897 = vector.shape_cast %896 : vector<2xf32> to vector<2x1xf32>
    %cst_334 = arith.constant 3.200000e+01 : f32
    %898 = vector.broadcast %cst_334 : f32 to vector<2x1xf32>
    %899 = arith.divf %897, %898 : vector<2x1xf32>
    %900 = vector.broadcast %899 : vector<2x1xf32> to vector<2x32xf32>
    %901 = arith.subf %890, %900 : vector<2x32xf32>
    %902 = arith.mulf %901, %901 : vector<2x32xf32>
    %cst_335 = arith.constant dense<0.000000e+00> : vector<2xf32>
    %903 = vector.multi_reduction <add>, %902, %cst_335 [1] : vector<2x32xf32> to vector<2xf32>
    %904 = vector.shape_cast %903 : vector<2xf32> to vector<2x1xf32>
    %cst_336 = arith.constant 3.200000e+01 : f32
    %905 = vector.broadcast %cst_336 : f32 to vector<2x1xf32>
    %906 = arith.divf %904, %905 : vector<2x1xf32>
    %907 = vector.broadcast %899 : vector<2x1xf32> to vector<2x32xf32>
    %908 = arith.subf %890, %907 : vector<2x32xf32>
    %cst_337 = arith.constant 9.99999997E-7 : f32
    %909 = vector.broadcast %cst_337 : f32 to vector<2x1xf32>
    %910 = arith.addf %906, %909 : vector<2x1xf32>
    %911 = math.rsqrt %910 : vector<2x1xf32>
    %912 = vector.broadcast %911 : vector<2x1xf32> to vector<2x32xf32>
    %913 = arith.mulf %908, %912 : vector<2x32xf32>
    %914 = vector.broadcast %894 : vector<1x32xf32> to vector<2x32xf32>
    %915 = arith.mulf %913, %914 : vector<2x32xf32>
    %916 = vector.broadcast %895 : vector<1x32xf32> to vector<2x32xf32>
    %917 = arith.addf %915, %916 : vector<2x32xf32>
    %c0_338 = arith.constant 0 : index
    %c0_339 = arith.constant 0 : index
    %918 = vector.load %arg39[%c0_338, %c0_339] : memref<1x32xf32, #tpu.memory_space<vmem>>, vector<1x32xf32>
    %c0_340 = arith.constant 0 : index
    %c0_341 = arith.constant 0 : index
    %919 = vector.load %arg40[%c0_340, %c0_341] : memref<1x32xf32, #tpu.memory_space<vmem>>, vector<1x32xf32>
    %cst_342 = arith.constant dense<0.000000e+00> : vector<2xf32>
    %920 = vector.multi_reduction <add>, %893, %cst_342 [1] : vector<2x32xf32> to vector<2xf32>
    %921 = vector.shape_cast %920 : vector<2xf32> to vector<2x1xf32>
    %cst_343 = arith.constant 3.200000e+01 : f32
    %922 = vector.broadcast %cst_343 : f32 to vector<2x1xf32>
    %923 = arith.divf %921, %922 : vector<2x1xf32>
    %924 = vector.broadcast %923 : vector<2x1xf32> to vector<2x32xf32>
    %925 = arith.subf %893, %924 : vector<2x32xf32>
    %926 = arith.mulf %925, %925 : vector<2x32xf32>
    %cst_344 = arith.constant dense<0.000000e+00> : vector<2xf32>
    %927 = vector.multi_reduction <add>, %926, %cst_344 [1] : vector<2x32xf32> to vector<2xf32>
    %928 = vector.shape_cast %927 : vector<2xf32> to vector<2x1xf32>
    %cst_345 = arith.constant 3.200000e+01 : f32
    %929 = vector.broadcast %cst_345 : f32 to vector<2x1xf32>
    %930 = arith.divf %928, %929 : vector<2x1xf32>
    %931 = vector.broadcast %923 : vector<2x1xf32> to vector<2x32xf32>
    %932 = arith.subf %893, %931 : vector<2x32xf32>
    %cst_346 = arith.constant 9.99999997E-7 : f32
    %933 = vector.broadcast %cst_346 : f32 to vector<2x1xf32>
    %934 = arith.addf %930, %933 : vector<2x1xf32>
    %935 = math.rsqrt %934 : vector<2x1xf32>
    %936 = vector.broadcast %935 : vector<2x1xf32> to vector<2x32xf32>
    %937 = arith.mulf %932, %936 : vector<2x32xf32>
    %938 = vector.broadcast %918 : vector<1x32xf32> to vector<2x32xf32>
    %939 = arith.mulf %937, %938 : vector<2x32xf32>
    %940 = vector.broadcast %919 : vector<1x32xf32> to vector<2x32xf32>
    %941 = arith.addf %939, %940 : vector<2x32xf32>
    %942 = arith.truncf %917 : vector<2x32xf32> to vector<2x32xbf16>
    %c0_347 = arith.constant 0 : index
    %c0_348 = arith.constant 0 : index
    %943 = vector.load %arg20[%c0_347, %c0_348] : memref<32x10xbf16, #tpu.memory_space<vmem>>, vector<32x10xbf16>
    %cst_349 = arith.constant dense<0.000000e+00> : vector<2x10xf32>
    %944 = tpu.matmul %942, %943, %cst_349 {dimension_numbers = #tpu.dot_dimension_numbers<[1], [0], [0], [1], [0, 0, 1, 1], [], []>} : vector<2x32xbf16>, vector<32x10xbf16>, vector<2x10xf32> -> vector<2x10xf32>
    %c0_350 = arith.constant 0 : index
    %c0_351 = arith.constant 0 : index
    %945 = vector.load %arg21[%c0_350, %c0_351] : memref<1x10xf32, #tpu.memory_space<vmem>>, vector<1x10xf32>
    %946 = vector.broadcast %945 : vector<1x10xf32> to vector<2x10xf32>
    %947 = arith.addf %944, %946 : vector<2x10xf32>
    %948 = arith.truncf %941 : vector<2x32xf32> to vector<2x32xbf16>
    %c0_352 = arith.constant 0 : index
    %c0_353 = arith.constant 0 : index
    %949 = vector.load %arg41[%c0_352, %c0_353] : memref<32x10xbf16, #tpu.memory_space<vmem>>, vector<32x10xbf16>
    %cst_354 = arith.constant dense<0.000000e+00> : vector<2x10xf32>
    %950 = tpu.matmul %948, %949, %cst_354 {dimension_numbers = #tpu.dot_dimension_numbers<[1], [0], [0], [1], [0, 0, 1, 1], [], []>} : vector<2x32xbf16>, vector<32x10xbf16>, vector<2x10xf32> -> vector<2x10xf32>
    %951 = arith.addf %947, %950 : vector<2x10xf32>
    %c0_355 = arith.constant 0 : index
    %c0_356 = arith.constant 0 : index
    %952 = vector.load %arg42[%c0_355, %c0_356] : memref<1x10xf32, #tpu.memory_space<vmem>>, vector<1x10xf32>
    %953 = vector.broadcast %952 : vector<1x10xf32> to vector<2x10xf32>
    %954 = arith.addf %951, %953 : vector<2x10xf32>
    %c0_357 = arith.constant 0 : index
    %c0_358 = arith.constant 0 : index
    %955 = vector.load %arg43[%c0_357, %c0_358] : memref<2x10xf32, #tpu.memory_space<vmem>>, vector<2x10xf32>
    tpu.vector_store %arg43[%c0_357, %c0_358], %954 {strides = array<i32>} : memref<2x10xf32, #tpu.memory_space<vmem>>, vector<2x10xf32>,
    return
  }
}

</mosaic_0001>

<llo_original>
// kernel: tile.14
$region0: #{tile.14}
  %s0 = inlined_call_operand.vmem [shape: f32[2,17,32], index: 0, kind: input, shape index: {}]
  %s1 = inlined_call_operand.vmem [shape: f32[34,32], index: 1, kind: output, shape index: {}]
  %v2 = vld [vmem:[%s0] sm:$0xff]
  %vm3 = vcmask 261120
  %4 = vst.msk [vmem:[%s1] sm:$0xff] %vm3, %v2
  %s5 = scalar_lea.vmem %s0, 8
  %v6 = vld [vmem:[%s5] sm:$0xff]
  %vm7 = vcmask 261120
  %s8 = scalar_lea.vmem %s1, 8
  %9 = vst.msk [vmem:[%s8] sm:$0xff] %vm7, %v6
  %s10 = scalar_lea.vmem %s0, 16
  %s11 = smov 3
  %v12 = vld [vmem:[%s10] ss:$8 sm:%s11]
  %vm13 = vcmask 261120
  %s14 = scalar_lea.vmem %s1, 16
  %15 = vst.msk [vmem:[%s14] sm:$0x3] %vm13, %v12
  %s16 = scalar_lea.vmem %s0, 25
  %v17 = vld [vmem:[%s16] sm:$0xff]
  %vm18 = vcmask 261120
  %s19 = scalar_lea.vmem %s1, 18
  %20 = vst.msk [vmem:[%s19] sm:$0xff] %vm18, %v17
  %s21 = scalar_lea.vmem %s0, 33
  %v22 = vld [vmem:[%s21] sm:$0xff]
  %vm23 = vcmask 261120
  %s24 = scalar_lea.vmem %s1, 26
  %25 = vst.msk [vmem:[%s24] sm:$0xff] %vm23, %v22

// kernel: ds_mvit_forward.1
$region0: #{ds_mvit_forward.1}
  #allocation0 [shape = 'u32[]', space=smem, size = 0x4, offset = 0x4, fixed_abs, tag = 'smem constant byte address 0x4 - core index']
  #allocation1 [shape = 'u32[144,128]{1,0:T(1,128)}', space=vmem, size = 0x12000, scoped, tag = 'internal scratch']
  %s0 = inlined_call_operand.smem [shape: u32[44], index: -1, kind: input, shape index: {}]
  %s1 = sld [smem:[%s0]]
  %s2 = scalar_lea.smem %s0, 1
  %s3 = sld [smem:[%s2]]
  %s4 = scalar_lea.smem %s0, 2
  %s5 = sld [smem:[%s4]]
  %s6 = scalar_lea.smem %s0, 3
  %s7 = sld [smem:[%s6]]
  %s8 = scalar_lea.smem %s0, 4
  %s9 = sld [smem:[%s8]]
  %s10 = scalar_lea.smem %s0, 5
  %s11 = sld [smem:[%s10]]
  %s12 = scalar_lea.smem %s0, 6
  %s13 = sld [smem:[%s12]]
  %s14 = scalar_lea.smem %s0, 7
  %s15 = sld [smem:[%s14]]
  %s16 = scalar_lea.smem %s0, 8
  %s17 = sld [smem:[%s16]]
  %s18 = scalar_lea.smem %s0, 9
  %s19 = sld [smem:[%s18]]
  %s20 = scalar_lea.smem %s0, 10
  %s21 = sld [smem:[%s20]]
  %s22 = scalar_lea.smem %s0, 11
  %s23 = sld [smem:[%s22]]
  %s24 = scalar_lea.smem %s0, 12
  %s25 = sld [smem:[%s24]]
  %s26 = scalar_lea.smem %s0, 13
  %s27 = sld [smem:[%s26]]
  %s28 = scalar_lea.smem %s0, 14
  %s29 = sld [smem:[%s28]]
  %s30 = scalar_lea.smem %s0, 15
  %s31 = sld [smem:[%s30]]
  %s32 = scalar_lea.smem %s0, 16
  %s33 = sld [smem:[%s32]]
  %s34 = scalar_lea.smem %s0, 17
  %s35 = sld [smem:[%s34]]
  %s36 = scalar_lea.smem %s0, 18
  %s37 = sld [smem:[%s36]]
  %s38 = scalar_lea.smem %s0, 19
  %s39 = sld [smem:[%s38]]
  %s40 = scalar_lea.smem %s0, 20
  %s41 = sld [smem:[%s40]]
  %s42 = scalar_lea.smem %s0, 21
  %s43 = sld [smem:[%s42]]
  %s44 = scalar_lea.smem %s0, 22
  %s45 = sld [smem:[%s44]]
  %s46 = scalar_lea.smem %s0, 23
  %s47 = sld [smem:[%s46]]
  %s48 = scalar_lea.smem %s0, 24
  %s49 = sld [smem:[%s48]]
  %s50 = scalar_lea.smem %s0, 25
  %s51 = sld [smem:[%s50]]
  %s52 = scalar_lea.smem %s0, 26
  %s53 = sld [smem:[%s52]]
  %s54 = scalar_lea.smem %s0, 27
  %s55 = sld [smem:[%s54]]
  %s56 = scalar_lea.smem %s0, 28
  %s57 = sld [smem:[%s56]]
  %s58 = scalar_lea.smem %s0, 29
  %s59 = sld [smem:[%s58]]
  %s60 = scalar_lea.smem %s0, 30
  %s61 = sld [smem:[%s60]]
  %s62 = scalar_lea.smem %s0, 31
  %s63 = sld [smem:[%s62]]
  %s64 = scalar_lea.smem %s0, 32
  %s65 = sld [smem:[%s64]]
  %s66 = scalar_lea.smem %s0, 33
  %s67 = sld [smem:[%s66]]
  %s68 = scalar_lea.smem %s0, 34
  %s69 = sld [smem:[%s68]]
  %s70 = scalar_lea.smem %s0, 35
  %s71 = sld [smem:[%s70]]
  %s72 = scalar_lea.smem %s0, 36
  %s73 = sld [smem:[%s72]]
  %s74 = scalar_lea.smem %s0, 37
  %s75 = sld [smem:[%s74]]
  %s76 = scalar_lea.smem %s0, 38
  %s77 = sld [smem:[%s76]]
  %s78 = scalar_lea.smem %s0, 39
  %s79 = sld [smem:[%s78]]
  %s80 = scalar_lea.smem %s0, 40
  %s81 = sld [smem:[%s80]]
  %s82 = scalar_lea.smem %s0, 41
  %s83 = sld [smem:[%s82]]
  %s84 = scalar_lea.smem %s0, 42
  %s85 = sld [smem:[%s84]]
  %s86 = scalar_lea.smem %s0, 43
  %s87 = sld [smem:[%s86]]
  %s88 = sld [smem:[#allocation0]]
  $region182: #{ds_mvit_forward.1} parent=0
    _
  %s90 = ssub.s32 1, %s88
  %s91 = scalar_select 0, %s90, %s88
  $region1: #{ds_mvit_forward.1} parent=0
    #allocation2 [shape = 'u8[1024]{0}', space=vmem, size = 0x400, scoped, tag = 'output window, operand 0, single buffered']
    #allocation3 [shape = 's32[1]{0}', space=sflag, size = 0x4, scoped, tag = 'scoped memory for ds_mvit_forward.1']
    %92 = vsyncpa [#allocation3], 0
    // Predicated region
    $region2: #{ds_mvit_forward.1} parent=1 // pred_check
      _
    $region3: #{ds_mvit_forward.1} parent=1 // pred_check_branch
      %94 = sbr.rel (0) target = $region5
    $region4: #{ds_mvit_forward.1} parent=1 // pred_region
      _
    $region5: #{ds_mvit_forward.1} parent=1 // pred_fallthru
      _
    // Predicated region
    $region6: #{ds_mvit_forward.1} parent=1 // pred_check
      _
    $region7: #{ds_mvit_forward.1} parent=1 // pred_check_branch
      %96 = sbr.rel (0) target = $region9
    $region8: #{ds_mvit_forward.1} parent=1 // pred_region
      _
    $region9: #{ds_mvit_forward.1} parent=1 // pred_fallthru
      _
    // Predicated region
    $region10: #{ds_mvit_forward.1} parent=1 // pred_check
      _
    $region11: #{ds_mvit_forward.1} parent=1 // pred_check_branch
      %98 = sbr.rel (0) target = $region13
    $region12: #{ds_mvit_forward.1} parent=1 // pred_region
      _
    $region13: #{ds_mvit_forward.1} parent=1 // pred_fallthru
      _
    // Predicated region
    $region14: #{ds_mvit_forward.1} parent=1 // pred_check
      _
    $region15: #{ds_mvit_forward.1} parent=1 // pred_check_branch
      %100 = sbr.rel (0) target = $region17
    $region16: #{ds_mvit_forward.1} parent=1 // pred_region
      _
    $region17: #{ds_mvit_forward.1} parent=1 // pred_fallthru
      _
    // Predicated region
    $region18: #{ds_mvit_forward.1} parent=1 // pred_check
      _
    $region19: #{ds_mvit_forward.1} parent=1 // pred_check_branch
      %102 = sbr.rel (0) target = $region21
    $region20: #{ds_mvit_forward.1} parent=1 // pred_region
      _
    $region21: #{ds_mvit_forward.1} parent=1 // pred_fallthru
      _
    // Predicated region
    $region22: #{ds_mvit_forward.1} parent=1 // pred_check
      _
    $region23: #{ds_mvit_forward.1} parent=1 // pred_check_branch
      %104 = sbr.rel (0) target = $region25
    $region24: #{ds_mvit_forward.1} parent=1 // pred_region
      _
    $region25: #{ds_mvit_forward.1} parent=1 // pred_fallthru
      _
    // Predicated region
    $region26: #{ds_mvit_forward.1} parent=1 // pred_check
      _
    $region27: #{ds_mvit_forward.1} parent=1 // pred_check_branch
      %106 = sbr.rel (0) target = $region29
    $region28: #{ds_mvit_forward.1} parent=1 // pred_region
      _
    $region29: #{ds_mvit_forward.1} parent=1 // pred_fallthru
      _
    // Predicated region
    $region30: #{ds_mvit_forward.1} parent=1 // pred_check
      _
    $region31: #{ds_mvit_forward.1} parent=1 // pred_check_branch
      %108 = sbr.rel (0) target = $region33
    $region32: #{ds_mvit_forward.1} parent=1 // pred_region
      _
    $region33: #{ds_mvit_forward.1} parent=1 // pred_fallthru
      _
    // Predicated region
    $region34: #{ds_mvit_forward.1} parent=1 // pred_check
      _
    $region35: #{ds_mvit_forward.1} parent=1 // pred_check_branch
      %110 = sbr.rel (0) target = $region37
    $region36: #{ds_mvit_forward.1} parent=1 // pred_region
      _
    $region37: #{ds_mvit_forward.1} parent=1 // pred_fallthru
      _
    // Predicated region
    $region38: #{ds_mvit_forward.1} parent=1 // pred_check
      _
    $region39: #{ds_mvit_forward.1} parent=1 // pred_check_branch
      %112 = sbr.rel (0) target = $region41
    $region40: #{ds_mvit_forward.1} parent=1 // pred_region
      _
    $region41: #{ds_mvit_forward.1} parent=1 // pred_fallthru
      _
    // Predicated region
    $region42: #{ds_mvit_forward.1} parent=1 // pred_check
      _
    $region43: #{ds_mvit_forward.1} parent=1 // pred_check_branch
      %114 = sbr.rel (0) target = $region45
    $region44: #{ds_mvit_forward.1} parent=1 // pred_region
      _
    $region45: #{ds_mvit_forward.1} parent=1 // pred_fallthru
      _
    // Predicated region
    $region46: #{ds_mvit_forward.1} parent=1 // pred_check
      _
    $region47: #{ds_mvit_forward.1} parent=1 // pred_check_branch
      %116 = sbr.rel (0) target = $region49
    $region48: #{ds_mvit_forward.1} parent=1 // pred_region
      _
    $region49: #{ds_mvit_forward.1} parent=1 // pred_fallthru
      _
    // Predicated region
    $region50: #{ds_mvit_forward.1} parent=1 // pred_check
      _
    $region51: #{ds_mvit_forward.1} parent=1 // pred_check_branch
      %118 = sbr.rel (0) target = $region53
    $region52: #{ds_mvit_forward.1} parent=1 // pred_region
      _
    $region53: #{ds_mvit_forward.1} parent=1 // pred_fallthru
      _
    // Predicated region
    $region54: #{ds_mvit_forward.1} parent=1 // pred_check
      _
    $region55: #{ds_mvit_forward.1} parent=1 // pred_check_branch
      %120 = sbr.rel (0) target = $region57
    $region56: #{ds_mvit_forward.1} parent=1 // pred_region
      _
    $region57: #{ds_mvit_forward.1} parent=1 // pred_fallthru
      _
    // Predicated region
    $region58: #{ds_mvit_forward.1} parent=1 // pred_check
      _
    $region59: #{ds_mvit_forward.1} parent=1 // pred_check_branch
      %122 = sbr.rel (0) target = $region61
    $region60: #{ds_mvit_forward.1} parent=1 // pred_region
      _
    $region61: #{ds_mvit_forward.1} parent=1 // pred_fallthru
      _
    // Predicated region
    $region62: #{ds_mvit_forward.1} parent=1 // pred_check
      _
    $region63: #{ds_mvit_forward.1} parent=1 // pred_check_branch
      %124 = sbr.rel (0) target = $region65
    $region64: #{ds_mvit_forward.1} parent=1 // pred_region
      _
    $region65: #{ds_mvit_forward.1} parent=1 // pred_fallthru
      _
    // Predicated region
    $region66: #{ds_mvit_forward.1} parent=1 // pred_check
      _
    $region67: #{ds_mvit_forward.1} parent=1 // pred_check_branch
      %126 = sbr.rel (0) target = $region69
    $region68: #{ds_mvit_forward.1} parent=1 // pred_region
      _
    $region69: #{ds_mvit_forward.1} parent=1 // pred_fallthru
      _
    // Predicated region
    $region70: #{ds_mvit_forward.1} parent=1 // pred_check
      _
    $region71: #{ds_mvit_forward.1} parent=1 // pred_check_branch
      %128 = sbr.rel (0) target = $region73
    $region72: #{ds_mvit_forward.1} parent=1 // pred_region
      _
    $region73: #{ds_mvit_forward.1} parent=1 // pred_fallthru
      _
    // Predicated region
    $region74: #{ds_mvit_forward.1} parent=1 // pred_check
      _
    $region75: #{ds_mvit_forward.1} parent=1 // pred_check_branch
      %130 = sbr.rel (0) target = $region77
    $region76: #{ds_mvit_forward.1} parent=1 // pred_region
      _
    $region77: #{ds_mvit_forward.1} parent=1 // pred_fallthru
      _
    // Predicated region
    $region78: #{ds_mvit_forward.1} parent=1 // pred_check
      _
    $region79: #{ds_mvit_forward.1} parent=1 // pred_check_branch
      %132 = sbr.rel (0) target = $region81
    $region80: #{ds_mvit_forward.1} parent=1 // pred_region
      _
    $region81: #{ds_mvit_forward.1} parent=1 // pred_fallthru
      _
    // Predicated region
    $region82: #{ds_mvit_forward.1} parent=1 // pred_check
      _
    $region83: #{ds_mvit_forward.1} parent=1 // pred_check_branch
      %134 = sbr.rel (0) target = $region85
    $region84: #{ds_mvit_forward.1} parent=1 // pred_region
      _
    $region85: #{ds_mvit_forward.1} parent=1 // pred_fallthru
      _
    // Predicated region
    $region86: #{ds_mvit_forward.1} parent=1 // pred_check
      _
    $region87: #{ds_mvit_forward.1} parent=1 // pred_check_branch
      %136 = sbr.rel (0) target = $region89
    $region88: #{ds_mvit_forward.1} parent=1 // pred_region
      _
    $region89: #{ds_mvit_forward.1} parent=1 // pred_fallthru
      _
    // Predicated region
    $region90: #{ds_mvit_forward.1} parent=1 // pred_check
      _
    $region91: #{ds_mvit_forward.1} parent=1 // pred_check_branch
      %138 = sbr.rel (0) target = $region93
    $region92: #{ds_mvit_forward.1} parent=1 // pred_region
      _
    $region93: #{ds_mvit_forward.1} parent=1 // pred_fallthru
      _
    // Predicated region
    $region94: #{ds_mvit_forward.1} parent=1 // pred_check
      _
    $region95: #{ds_mvit_forward.1} parent=1 // pred_check_branch
      %140 = sbr.rel (0) target = $region97
    $region96: #{ds_mvit_forward.1} parent=1 // pred_region
      _
    $region97: #{ds_mvit_forward.1} parent=1 // pred_fallthru
      _
    // Predicated region
    $region98: #{ds_mvit_forward.1} parent=1 // pred_check
      _
    $region99: #{ds_mvit_forward.1} parent=1 // pred_check_branch
      %142 = sbr.rel (0) target = $region101
    $region100: #{ds_mvit_forward.1} parent=1 // pred_region
      _
    $region101: #{ds_mvit_forward.1} parent=1 // pred_fallthru
      _
    // Predicated region
    $region102: #{ds_mvit_forward.1} parent=1 // pred_check
      _
    $region103: #{ds_mvit_forward.1} parent=1 // pred_check_branch
      %144 = sbr.rel (0) target = $region105
    $region104: #{ds_mvit_forward.1} parent=1 // pred_region
      _
    $region105: #{ds_mvit_forward.1} parent=1 // pred_fallthru
      _
    // Predicated region
    $region106: #{ds_mvit_forward.1} parent=1 // pred_check
      _
    $region107: #{ds_mvit_forward.1} parent=1 // pred_check_branch
      %146 = sbr.rel (0) target = $region109
    $region108: #{ds_mvit_forward.1} parent=1 // pred_region
      _
    $region109: #{ds_mvit_forward.1} parent=1 // pred_fallthru
      _
    // Predicated region
    $region110: #{ds_mvit_forward.1} parent=1 // pred_check
      _
    $region111: #{ds_mvit_forward.1} parent=1 // pred_check_branch
      %148 = sbr.rel (0) target = $region113
    $region112: #{ds_mvit_forward.1} parent=1 // pred_region
      _
    $region113: #{ds_mvit_forward.1} parent=1 // pred_fallthru
      _
    // Predicated region
    $region114: #{ds_mvit_forward.1} parent=1 // pred_check
      _
    $region115: #{ds_mvit_forward.1} parent=1 // pred_check_branch
      %150 = sbr.rel (0) target = $region117
    $region116: #{ds_mvit_forward.1} parent=1 // pred_region
      _
    $region117: #{ds_mvit_forward.1} parent=1 // pred_fallthru
      _
    // Predicated region
    $region118: #{ds_mvit_forward.1} parent=1 // pred_check
      _
    $region119: #{ds_mvit_forward.1} parent=1 // pred_check_branch
      %152 = sbr.rel (0) target = $region121
    $region120: #{ds_mvit_forward.1} parent=1 // pred_region
      _
    $region121: #{ds_mvit_forward.1} parent=1 // pred_fallthru
      _
    // Predicated region
    $region122: #{ds_mvit_forward.1} parent=1 // pred_check
      _
    $region123: #{ds_mvit_forward.1} parent=1 // pred_check_branch
      %154 = sbr.rel (0) target = $region125
    $region124: #{ds_mvit_forward.1} parent=1 // pred_region
      _
    $region125: #{ds_mvit_forward.1} parent=1 // pred_fallthru
      _
    // Predicated region
    $region126: #{ds_mvit_forward.1} parent=1 // pred_check
      _
    $region127: #{ds_mvit_forward.1} parent=1 // pred_check_branch
      %156 = sbr.rel (0) target = $region129
    $region128: #{ds_mvit_forward.1} parent=1 // pred_region
      _
    $region129: #{ds_mvit_forward.1} parent=1 // pred_fallthru
      _
    // Predicated region
    $region130: #{ds_mvit_forward.1} parent=1 // pred_check
      _
    $region131: #{ds_mvit_forward.1} parent=1 // pred_check_branch
      %158 = sbr.rel (0) target = $region133
    $region132: #{ds_mvit_forward.1} parent=1 // pred_region
      _
    $region133: #{ds_mvit_forward.1} parent=1 // pred_fallthru
      _
    // Predicated region
    $region134: #{ds_mvit_forward.1} parent=1 // pred_check
      _
    $region135: #{ds_mvit_forward.1} parent=1 // pred_check_branch
      %160 = sbr.rel (0) target = $region137
    $region136: #{ds_mvit_forward.1} parent=1 // pred_region
      _
    $region137: #{ds_mvit_forward.1} parent=1 // pred_fallthru
      _
    // Predicated region
    $region138: #{ds_mvit_forward.1} parent=1 // pred_check
      _
    $region139: #{ds_mvit_forward.1} parent=1 // pred_check_branch
      %162 = sbr.rel (0) target = $region141
    $region140: #{ds_mvit_forward.1} parent=1 // pred_region
      _
    $region141: #{ds_mvit_forward.1} parent=1 // pred_fallthru
      _
    // Predicated region
    $region142: #{ds_mvit_forward.1} parent=1 // pred_check
      _
    $region143: #{ds_mvit_forward.1} parent=1 // pred_check_branch
      %164 = sbr.rel (0) target = $region145
    $region144: #{ds_mvit_forward.1} parent=1 // pred_region
      _
    $region145: #{ds_mvit_forward.1} parent=1 // pred_fallthru
      _
    // Predicated region
    $region146: #{ds_mvit_forward.1} parent=1 // pred_check
      _
    $region147: #{ds_mvit_forward.1} parent=1 // pred_check_branch
      %166 = sbr.rel (0) target = $region149
    $region148: #{ds_mvit_forward.1} parent=1 // pred_region
      _
    $region149: #{ds_mvit_forward.1} parent=1 // pred_fallthru
      _
    // Predicated region
    $region150: #{ds_mvit_forward.1} parent=1 // pred_check
      _
    $region151: #{ds_mvit_forward.1} parent=1 // pred_check_branch
      %168 = sbr.rel (0) target = $region153
    $region152: #{ds_mvit_forward.1} parent=1 // pred_region
      _
    $region153: #{ds_mvit_forward.1} parent=1 // pred_fallthru
      _
    // Predicated region
    $region154: #{ds_mvit_forward.1} parent=1 // pred_check
      _
    $region155: #{ds_mvit_forward.1} parent=1 // pred_check_branch
      %170 = sbr.rel (0) target = $region157
    $region156: #{ds_mvit_forward.1} parent=1 // pred_region
      _
    $region157: #{ds_mvit_forward.1} parent=1 // pred_fallthru
      _
    // Predicated region
    $region158: #{ds_mvit_forward.1} parent=1 // pred_check
      _
    $region159: #{ds_mvit_forward.1} parent=1 // pred_check_branch
      %172 = sbr.rel (0) target = $region161
    $region160: #{ds_mvit_forward.1} parent=1 // pred_region
      _
    $region161: #{ds_mvit_forward.1} parent=1 // pred_fallthru
      _
    // Predicated region
    $region162: #{ds_mvit_forward.1} parent=1 // pred_check
      _
    $region163: #{ds_mvit_forward.1} parent=1 // pred_check_branch
      %174 = sbr.rel (0) target = $region165
    $region164: #{ds_mvit_forward.1} parent=1 // pred_region
      _
    $region165: #{ds_mvit_forward.1} parent=1 // pred_fallthru
      _
    // Predicated region
    $region166: #{ds_mvit_forward.1} parent=1 // pred_check
      _
    $region167: #{ds_mvit_forward.1} parent=1 // pred_check_branch
      %176 = sbr.rel (0) target = $region169
    $region168: #{ds_mvit_forward.1} parent=1 // pred_region
      _
    $region169: #{ds_mvit_forward.1} parent=1 // pred_fallthru
      _
    // Predicated region
    $region170: #{ds_mvit_forward.1} parent=1 // pred_check
      _
    $region171: #{ds_mvit_forward.1} parent=1 // pred_check_branch
      %178 = sbr.rel (0) target = $region173
    $region172: #{ds_mvit_forward.1} parent=1 // pred_region
      _
    $region173: #{ds_mvit_forward.1} parent=1 // pred_fallthru
      _
    %v180 = vld [vmem:[%s1] sm:$0xff]
    %v181 = vld [vmem:[%s1 + $0x8] sm:$0xff]
    %v182 = vld [vmem:[%s1 + $0x10] sm:$0xff]
    %v183 = vld [vmem:[%s1 + $0x18] sm:$0xff]
    %v184 = vld [vmem:[%s1 + $0x20] sm:$0x3]
    %v185 = vld [vmem:[%s3] sm:$0xf]
    %v186 = vld [vmem:[%s3 + $0x4] sm:$0xf]
    %v187 = vld [vmem:[%s3 + $0x8] sm:$0xf]
    %v188 = vld [vmem:[%s3 + $0xc] sm:$0xf]
    %v189 = vld [vmem:[%s3 + $0x10] sm:$0x1]
    %v190 = vld [vmem:[%s5] sm:$0xf]
    %v191 = vld [vmem:[%s5 + $0x4] sm:$0xf]
    %v192 = vld [vmem:[%s5 + $0x8] sm:$0xf]
    %v193 = vld [vmem:[%s5 + $0xc] sm:$0xf]
    %v194 = vld [vmem:[%s5 + $0x10] sm:$0xf]
    %v195 = vld [vmem:[%s5 + $0x14] sm:$0xf]
    %v196 = vld [vmem:[%s7] sm:$0xff]
    %v197 = vld [vmem:[%s7 + $0x8] sm:$0xff]
    %v198 = vld [vmem:[%s7 + $0x10] sm:$0xff]
    %v199 = vld [vmem:[%s7 + $0x18] sm:$0xff]
    %v200 = vld [vmem:[%s7 + $0x20] sm:$0x3]
    %v206 = vunpack.c.l.b16 %v185
    %v207 = vunpack.c.l.b16 %v186
    %v208 = vunpack.c.l.b16 %v187
    %v209 = vunpack.c.l.b16 %v188
    %v210 = vunpack.c.l.b16 %v189
    %v211 = vpack.c.b16 %v207, %v206
    %v212 = vpack.c.b16 %v209, %v208
    %v213 = vpack.c.b16 %v210, %v210
    %v220 = vunpack.c.l.b16 %v190
    %v221 = vunpack.c.l.b16 %v191
    %v222 = vunpack.c.l.b16 %v192
    %v223 = vunpack.c.l.b16 %v193
    %v224 = vunpack.c.l.b16 %v194
    %v225 = vunpack.c.l.b16 %v195
    %v226 = vpack.c.b16 %v221, %v220
    %v227 = vpack.c.b16 %v223, %v222
    %v228 = vpack.c.b16 %v225, %v224
    %vm232 = vcmask 392192
    %v234 = vsel %vm232, %v211, 0
    %v237 = vsel %vm232, %v212, 0
    %v240 = vsel %vm232, %v213, 0
    %242 = vmatprep.subr.bf16.mxu0 0
    %243 = vmatpush1.bf16.msra.mxu0 0
    %244 = vmatprep.subr.bf16.mxu0 0
    %245 = vmatpush1.bf16.msra.mxu0 0
    %246 = vmatprep.subr.bf16.mxu0 0
    %247 = vmatpush1.bf16.msra.mxu0 0
    %248 = vmatprep.subr.bf16.mxu0 0
    %249 = vmatpush1.bf16.msra.mxu0 0
    %250 = vmatprep.subr.bf16.mxu0 0
    %251 = vmatpush1.bf16.msra.mxu0 0
    %252 = vmatprep.subr.bf16.mxu0 0
    %253 = vmatpush1.bf16.msra.mxu0 %v228
    %254 = vmatprep.subr.bf16.mxu0 0
    %255 = vmatpush1.bf16.msra.mxu0 %v227
    %256 = vmatprep.subr.bf16.mxu0 0
    %257 = vmatpush1.bf16.msra.mxu0 %v226
    %258 = vmatprep.subr.bf16.mxu0 0
    %259 = vmatpush2.bf16.msra.mxu0 0
    %260 = vmatprep.subr.bf16.mxu0 0
    %261 = vmatpush2.bf16.msra.mxu0 0
    %262 = vmatprep.subr.bf16.mxu0 0
    %263 = vmatpush2.bf16.msra.mxu0 0
    %264 = vmatprep.subr.bf16.mxu0 0
    %265 = vmatpush2.bf16.msra.mxu0 0
    %266 = vmatprep.subr.bf16.mxu0 0
    %267 = vmatpush2.bf16.msra.mxu0 0
    %268 = vmatprep.subr.bf16.mxu0 0
    %269 = vmatpush2.bf16.msra.mxu0 0
    %270 = vmatprep.subr.bf16.mxu0 0
    %271 = vmatpush2.bf16.msra.mxu0 0
    %272 = vmatprep.subr.bf16.mxu0 0
    %273 = vmatpush2.bf16.msra.mxu0 0
    %274 = vmatprep.mubr.bf16.mxu0 0
    %275 = vmatmul.mubr.bf16.gmra.mxu0 %v234
    %v276 = vpop.f32.mrf.mxu0
    %v277 = vadd.f32 %v196, %v276
    %v278 = vpop.f32.mrf.mxu0
    %v279 = vpop.f32.mrf.mxu0
    %v280 = vadd.f32 %v197, %v279
    %v281 = vpop.f32.mrf.mxu0
    %282 = vmatprep.mubr.bf16.mxu0 0
    %283 = vmatmul.mubr.bf16.gmra.mxu0 %v237
    %v284 = vpop.f32.mrf.mxu0
    %v285 = vadd.f32 %v198, %v284
    %v286 = vpop.f32.mrf.mxu0
    %v287 = vpop.f32.mrf.mxu0
    %v288 = vadd.f32 %v199, %v287
    %v289 = vpop.f32.mrf.mxu0
    %290 = vmatprep.mubr.bf16.mxu0 0
    %291 = vmatmul.mubr.bf16.gmra.mxu0 %v240
    %v292 = vpop.f32.mrf.mxu0
    %v293 = vadd.f32 %v200, %v292
    %v294 = vpop.f32.mrf.mxu0
    %v295 = vpop.f32.mrf.mxu0
    %v296 = vpop.f32.mrf.mxu0
    %297 = vdwg.mxu0
    %v298 = vld [vmem:[%s9] sm:$0x1]
    %v299 = vld [vmem:[%s11] sm:$0x1]
    %vm300 = vcmask 261120
    %v301 = vsel %vm300, %v277, 0.0
    %302 = vadd.xlane.f32.xlu0 %v301
    %v303 = vpop.xlane.xlu0 %302
    %v304 = vsel %vm300, %v280, 0.0
    %305 = vadd.xlane.f32.xlu0 %v304
    %v306 = vpop.xlane.xlu0 %305
    %v307 = vsel %vm300, %v285, 0.0
    %308 = vadd.xlane.f32.xlu0 %v307
    %v309 = vpop.xlane.xlu0 %308
    %v310 = vsel %vm300, %v288, 0.0
    %311 = vadd.xlane.f32.xlu0 %v310
    %v312 = vpop.xlane.xlu0 %311
    %vm313 = vcmask 254976
    %v314 = vsel %vm313, %v293, 0.0
    %315 = vadd.xlane.f32.xlu0 %v314
    %v316 = vpop.xlane.xlu0 %315
    %v317 = vrcp.pop 32.0
    %v318 = vmul.f32 %v303, %v317
    %v319 = vmul.f32 %v306, %v317
    %v320 = vmul.f32 %v309, %v317
    %v321 = vmul.f32 %v312, %v317
    %v322 = vmul.f32 %v316, %v317
    %v323 = vsub.f32 %v277, %v318
    %v324 = vsub.f32 %v280, %v319
    %v325 = vsub.f32 %v285, %v320
    %v326 = vsub.f32 %v288, %v321
    %v327 = vsub.f32 %v293, %v322
    %v328 = vmul.f32 %v323, %v323
    %v329 = vmul.f32 %v324, %v324
    %v330 = vmul.f32 %v325, %v325
    %v331 = vmul.f32 %v326, %v326
    %v332 = vmul.f32 %v327, %v327
    %v333 = vsel %vm300, %v328, 0.0
    %334 = vadd.xlane.f32.xlu0 %v333
    %v335 = vpop.xlane.xlu0 %334
    %v336 = vsel %vm300, %v329, 0.0
    %337 = vadd.xlane.f32.xlu0 %v336
    %v338 = vpop.xlane.xlu0 %337
    %v339 = vsel %vm300, %v330, 0.0
    %340 = vadd.xlane.f32.xlu0 %v339
    %v341 = vpop.xlane.xlu0 %340
    %v342 = vsel %vm300, %v331, 0.0
    %343 = vadd.xlane.f32.xlu0 %v342
    %v344 = vpop.xlane.xlu0 %343
    %v345 = vsel %vm313, %v332, 0.0
    %346 = vadd.xlane.f32.xlu0 %v345
    %v347 = vpop.xlane.xlu0 %346
    %v348 = vmul.f32 %v335, %v317
    %v349 = vmul.f32 %v338, %v317
    %v350 = vmul.f32 %v341, %v317
    %v351 = vmul.f32 %v344, %v317
    %v352 = vmul.f32 %v347, %v317
    %v353 = vadd.f32 %v348, 1e-06
    %v354 = vadd.f32 %v349, 1e-06
    %v355 = vadd.f32 %v350, 1e-06
    %v356 = vadd.f32 %v351, 1e-06
    %v357 = vadd.f32 %v352, 1e-06
    %v358 = vrsqrt.pop %v353
    %v359 = vrsqrt.pop %v354
    %v360 = vrsqrt.pop %v355
    %v361 = vrsqrt.pop %v356
    %v362 = vrsqrt.pop %v357
    %v363 = vmul.f32 %v323, %v358
    %v364 = vmul.f32 %v324, %v359
    %v365 = vmul.f32 %v325, %v360
    %v366 = vmul.f32 %v326, %v361
    %v367 = vmul.f32 %v327, %v362
    %v369 = vlaneseq
    %v370 = vshrl.u32 %v369, 7
    %v371 = vsub.s32 0, %v370
    %v372 = vrot.slane %v298, %v371
    %v374 = vmul.f32 %v363, %v372
    %v375 = vmul.f32 %v364, %v372
    %v376 = vmul.f32 %v365, %v372
    %v377 = vmul.f32 %v366, %v372
    %v378 = vmul.f32 %v367, %v372
    %v380 = vlaneseq
    %v381 = vshrl.u32 %v380, 7
    %v382 = vsub.s32 0, %v381
    %v383 = vrot.slane %v299, %v382
    %v385 = vadd.f32 %v374, %v383
    %v386 = vadd.f32 %v375, %v383
    %v387 = vadd.f32 %v376, %v383
    %v388 = vadd.f32 %v377, %v383
    %v389 = vadd.f32 %v378, %v383
    %v390 = vld [vmem:[%s45] sm:$0xf]
    %v391 = vld [vmem:[%s45 + $0x4] sm:$0xf]
    %v392 = vld [vmem:[%s45 + $0x8] sm:$0xf]
    %v393 = vld [vmem:[%s45 + $0xc] sm:$0xf]
    %v394 = vld [vmem:[%s45 + $0x10] sm:$0x1]
    %v395 = vld [vmem:[%s47] sm:$0xf]
    %v396 = vld [vmem:[%s47 + $0x4] sm:$0xf]
    %v397 = vld [vmem:[%s49] sm:$0xff]
    %v398 = vld [vmem:[%s49 + $0x8] sm:$0xff]
    %v399 = vld [vmem:[%s49 + $0x10] sm:$0xff]
    %v400 = vld [vmem:[%s49 + $0x18] sm:$0xff]
    %v401 = vld [vmem:[%s49 + $0x20] sm:$0x3]
    %v407 = vunpack.c.l.b16 %v390
    %v408 = vunpack.c.l.b16 %v391
    %v409 = vunpack.c.l.b16 %v392
    %v410 = vunpack.c.l.b16 %v393
    %v411 = vunpack.c.l.b16 %v394
    %v412 = vpack.c.b16 %v408, %v407
    %v413 = vpack.c.b16 %v410, %v409
    %v414 = vpack.c.b16 %v411, %v411
    %v417 = vunpack.c.l.b16 %v395
    %v418 = vunpack.c.l.b16 %v396
    %v419 = vpack.c.b16 %v418, %v417
    %vm421 = vcmask 130048
    %v423 = vsel %vm421, %v412, 0
    %v426 = vsel %vm421, %v413, 0
    %v429 = vsel %vm421, %v414, 0
    %431 = vmatprep.subr.bf16.mxu0 0
    %432 = vmatpush1.bf16.msra.mxu0 0
    %433 = vmatprep.subr.bf16.mxu0 0
    %434 = vmatpush1.bf16.msra.mxu0 0
    %435 = vmatprep.subr.bf16.mxu0 0
    %436 = vmatpush1.bf16.msra.mxu0 0
    %437 = vmatprep.subr.bf16.mxu0 0
    %438 = vmatpush1.bf16.msra.mxu0 0
    %439 = vmatprep.subr.bf16.mxu0 0
    %440 = vmatpush1.bf16.msra.mxu0 0
    %441 = vmatprep.subr.bf16.mxu0 0
    %442 = vmatpush1.bf16.msra.mxu0 0
    %443 = vmatprep.subr.bf16.mxu0 0
    %444 = vmatpush1.bf16.msra.mxu0 0
    %445 = vmatprep.subr.bf16.mxu0 0
    %446 = vmatpush1.bf16.msra.mxu0 %v419
    %447 = vmatprep.subr.bf16.mxu0 0
    %448 = vmatpush2.bf16.msra.mxu0 0
    %449 = vmatprep.subr.bf16.mxu0 0
    %450 = vmatpush2.bf16.msra.mxu0 0
    %451 = vmatprep.subr.bf16.mxu0 0
    %452 = vmatpush2.bf16.msra.mxu0 0
    %453 = vmatprep.subr.bf16.mxu0 0
    %454 = vmatpush2.bf16.msra.mxu0 0
    %455 = vmatprep.subr.bf16.mxu0 0
    %456 = vmatpush2.bf16.msra.mxu0 0
    %457 = vmatprep.subr.bf16.mxu0 0
    %458 = vmatpush2.bf16.msra.mxu0 0
    %459 = vmatprep.subr.bf16.mxu0 0
    %460 = vmatpush2.bf16.msra.mxu0 0
    %461 = vmatprep.subr.bf16.mxu0 0
    %462 = vmatpush2.bf16.msra.mxu0 0
    %463 = vmatprep.mubr.bf16.mxu0 0
    %464 = vmatmul.mubr.bf16.gmra.mxu0 %v423
    %v465 = vpop.f32.mrf.mxu0
    %v466 = vadd.f32 %v397, %v465
    %v467 = vpop.f32.mrf.mxu0
    %v468 = vpop.f32.mrf.mxu0
    %v469 = vadd.f32 %v398, %v468
    %v470 = vpop.f32.mrf.mxu0
    %471 = vmatprep.mubr.bf16.mxu0 0
    %472 = vmatmul.mubr.bf16.gmra.mxu0 %v426
    %v473 = vpop.f32.mrf.mxu0
    %v474 = vadd.f32 %v399, %v473
    %v475 = vpop.f32.mrf.mxu0
    %v476 = vpop.f32.mrf.mxu0
    %v477 = vadd.f32 %v400, %v476
    %v478 = vpop.f32.mrf.mxu0
    %479 = vmatprep.mubr.bf16.mxu0 0
    %480 = vmatmul.mubr.bf16.gmra.mxu0 %v429
    %v481 = vpop.f32.mrf.mxu0
    %v482 = vadd.f32 %v401, %v481
    %v483 = vpop.f32.mrf.mxu0
    %v484 = vpop.f32.mrf.mxu0
    %v485 = vpop.f32.mrf.mxu0
    %486 = vdwg.mxu0
    %v487 = vld [vmem:[%s51] sm:$0x1]
    %v488 = vld [vmem:[%s53] sm:$0x1]
    %v489 = vsel %vm300, %v466, 0.0
    %490 = vadd.xlane.f32.xlu0 %v489
    %v491 = vpop.xlane.xlu0 %490
    %v492 = vsel %vm300, %v469, 0.0
    %493 = vadd.xlane.f32.xlu0 %v492
    %v494 = vpop.xlane.xlu0 %493
    %v495 = vsel %vm300, %v474, 0.0
    %496 = vadd.xlane.f32.xlu0 %v495
    %v497 = vpop.xlane.xlu0 %496
    %v498 = vsel %vm300, %v477, 0.0
    %499 = vadd.xlane.f32.xlu0 %v498
    %v500 = vpop.xlane.xlu0 %499
    %v501 = vsel %vm313, %v482, 0.0
    %502 = vadd.xlane.f32.xlu0 %v501
    %v503 = vpop.xlane.xlu0 %502
    %v504 = vmul.f32 %v491, %v317
    %v505 = vmul.f32 %v494, %v317
    %v506 = vmul.f32 %v497, %v317
    %v507 = vmul.f32 %v500, %v317
    %v508 = vmul.f32 %v503, %v317
    %v509 = vsub.f32 %v466, %v504
    %v510 = vsub.f32 %v469, %v505
    %v511 = vsub.f32 %v474, %v506
    %v512 = vsub.f32 %v477, %v507
    %v513 = vsub.f32 %v482, %v508
    %v514 = vmul.f32 %v509, %v509
    %v515 = vmul.f32 %v510, %v510
    %v516 = vmul.f32 %v511, %v511
    %v517 = vmul.f32 %v512, %v512
    %v518 = vmul.f32 %v513, %v513
    %v519 = vsel %vm300, %v514, 0.0
    %520 = vadd.xlane.f32.xlu0 %v519
    %v521 = vpop.xlane.xlu0 %520
    %v522 = vsel %vm300, %v515, 0.0
    %523 = vadd.xlane.f32.xlu0 %v522
    %v524 = vpop.xlane.xlu0 %523
    %v525 = vsel %vm300, %v516, 0.0
    %526 = vadd.xlane.f32.xlu0 %v525
    %v527 = vpop.xlane.xlu0 %526
    %v528 = vsel %vm300, %v517, 0.0
    %529 = vadd.xlane.f32.xlu0 %v528
    %v530 = vpop.xlane.xlu0 %529
    %v531 = vsel %vm313, %v518, 0.0
    %532 = vadd.xlane.f32.xlu0 %v531
    %v533 = vpop.xlane.xlu0 %532
    %v534 = vmul.f32 %v521, %v317
    %v535 = vmul.f32 %v524, %v317
    %v536 = vmul.f32 %v527, %v317
    %v537 = vmul.f32 %v530, %v317
    %v538 = vmul.f32 %v533, %v317
    %v539 = vadd.f32 %v534, 1e-06
    %v540 = vadd.f32 %v535, 1e-06
    %v541 = vadd.f32 %v536, 1e-06
    %v542 = vadd.f32 %v537, 1e-06
    %v543 = vadd.f32 %v538, 1e-06
    %v544 = vrsqrt.pop %v539
    %v545 = vrsqrt.pop %v540
    %v546 = vrsqrt.pop %v541
    %v547 = vrsqrt.pop %v542
    %v548 = vrsqrt.pop %v543
    %v549 = vmul.f32 %v509, %v544
    %v550 = vmul.f32 %v510, %v545
    %v551 = vmul.f32 %v511, %v546
    %v552 = vmul.f32 %v512, %v547
    %v553 = vmul.f32 %v513, %v548
    %v555 = vlaneseq
    %v556 = vshrl.u32 %v555, 7
    %v557 = vsub.s32 0, %v556
    %v558 = vrot.slane %v487, %v557
    %v560 = vmul.f32 %v549, %v558
    %v561 = vmul.f32 %v550, %v558
    %v562 = vmul.f32 %v551, %v558
    %v563 = vmul.f32 %v552, %v558
    %v564 = vmul.f32 %v553, %v558
    %v566 = vlaneseq
    %v567 = vshrl.u32 %v566, 7
    %v568 = vsub.s32 0, %v567
    %v569 = vrot.slane %v488, %v568
    %v571 = vadd.f32 %v560, %v569
    %v572 = vadd.f32 %v561, %v569
    %v573 = vadd.f32 %v562, %v569
    %v574 = vadd.f32 %v563, %v569
    %v575 = vadd.f32 %v564, %v569
    %v576 = vlaneseq
    %v577 = vshrl.u32 %v576, 7
    %v578 = vadd.s32 %v577, 8
    %v579 = vadd.s32 %v577, 16
    %v580 = vadd.s32 %v577, 24
    %v581 = vadd.s32 %v577, 32
    %v582 = vld [vmem:[%s13] sm:$0x1]
    %v583 = vld [vmem:[%s15] sm:$0x1]
    %v584 = vsel %vm300, %v385, 0.0
    %585 = vadd.xlane.f32.xlu0 %v584
    %v586 = vpop.xlane.xlu0 %585
    %v587 = vsel %vm300, %v386, 0.0
    %588 = vadd.xlane.f32.xlu0 %v587
    %v589 = vpop.xlane.xlu0 %588
    %v590 = vsel %vm300, %v387, 0.0
    %591 = vadd.xlane.f32.xlu0 %v590
    %v592 = vpop.xlane.xlu0 %591
    %v593 = vsel %vm300, %v388, 0.0
    %594 = vadd.xlane.f32.xlu0 %v593
    %v595 = vpop.xlane.xlu0 %594
    %v596 = vsel %vm313, %v389, 0.0
    %597 = vadd.xlane.f32.xlu0 %v596
    %v598 = vpop.xlane.xlu0 %597
    %v599 = vmul.f32 %v586, %v317
    %v600 = vmul.f32 %v589, %v317
    %v601 = vmul.f32 %v592, %v317
    %v602 = vmul.f32 %v595, %v317
    %v603 = vmul.f32 %v598, %v317
    %v604 = vsub.f32 %v385, %v599
    %v605 = vsub.f32 %v386, %v600
    %v606 = vsub.f32 %v387, %v601
    %v607 = vsub.f32 %v388, %v602
    %v608 = vsub.f32 %v389, %v603
    %v609 = vmul.f32 %v604, %v604
    %v610 = vmul.f32 %v605, %v605
    %v611 = vmul.f32 %v606, %v606
    %v612 = vmul.f32 %v607, %v607
    %v613 = vmul.f32 %v608, %v608
    %v614 = vsel %vm300, %v609, 0.0
    %615 = vadd.xlane.f32.xlu0 %v614
    %v616 = vpop.xlane.xlu0 %615
    %v617 = vsel %vm300, %v610, 0.0
    %618 = vadd.xlane.f32.xlu0 %v617
    %v619 = vpop.xlane.xlu0 %618
    %v620 = vsel %vm300, %v611, 0.0
    %621 = vadd.xlane.f32.xlu0 %v620
    %v622 = vpop.xlane.xlu0 %621
    %v623 = vsel %vm300, %v612, 0.0
    %624 = vadd.xlane.f32.xlu0 %v623
    %v625 = vpop.xlane.xlu0 %624
    %v626 = vsel %vm313, %v613, 0.0
    %627 = vadd.xlane.f32.xlu0 %v626
    %v628 = vpop.xlane.xlu0 %627
    %v629 = vmul.f32 %v616, %v317
    %v630 = vmul.f32 %v619, %v317
    %v631 = vmul.f32 %v622, %v317
    %v632 = vmul.f32 %v625, %v317
    %v633 = vmul.f32 %v628, %v317
    %v634 = vadd.f32 %v629, 1e-06
    %v635 = vadd.f32 %v630, 1e-06
    %v636 = vadd.f32 %v631, 1e-06
    %v637 = vadd.f32 %v632, 1e-06
    %v638 = vadd.f32 %v633, 1e-06
    %v639 = vrsqrt.pop %v634
    %v640 = vrsqrt.pop %v635
    %v641 = vrsqrt.pop %v636
    %v642 = vrsqrt.pop %v637
    %v643 = vrsqrt.pop %v638
    %v644 = vmul.f32 %v604, %v639
    %v645 = vmul.f32 %v605, %v640
    %v646 = vmul.f32 %v606, %v641
    %v647 = vmul.f32 %v607, %v642
    %v648 = vmul.f32 %v608, %v643
    %v650 = vlaneseq
    %v651 = vshrl.u32 %v650, 7
    %v652 = vsub.s32 0, %v651
    %v653 = vrot.slane %v582, %v652
    %v655 = vmul.f32 %v644, %v653
    %v656 = vmul.f32 %v645, %v653
    %v657 = vmul.f32 %v646, %v653
    %v658 = vmul.f32 %v647, %v653
    %v659 = vmul.f32 %v648, %v653
    %v661 = vlaneseq
    %v662 = vshrl.u32 %v661, 7
    %v663 = vsub.s32 0, %v662
    %v664 = vrot.slane %v583, %v663
    %v666 = vadd.f32 %v655, %v664
    %v667 = vadd.f32 %v656, %v664
    %v668 = vadd.f32 %v657, %v664
    %v669 = vadd.f32 %v658, %v664
    %v670 = vadd.f32 %v659, %v664
    %v671 = vpack.c.bf16 %v667, %v666
    %v672 = vpack.c.bf16 %v669, %v668
    %v673 = vpack.c.bf16 %v670, %v670
    %v674 = vld [vmem:[%s17] sm:$0xf]
    %v675 = vld [vmem:[%s17 + $0x4] sm:$0xf]
    %v676 = vld [vmem:[%s17 + $0x8] sm:$0xf]
    %v677 = vld [vmem:[%s17 + $0xc] sm:$0xf]
    %v678 = vld [vmem:[%s19] sm:$0x1]
    %v680 = vlaneseq
    %v681 = vshrl.u32 %v680, 7
    %v682 = vsub.s32 0, %v681
    %v683 = vrot.slane %v678, %v682
    %v689 = vunpack.c.l.b16 %v674
    %v690 = vunpack.c.l.b16 %v675
    %v691 = vunpack.c.l.b16 %v676
    %v692 = vunpack.c.l.b16 %v677
    %v693 = vpack.c.b16 %v690, %v689
    %v694 = vpack.c.b16 %v692, %v691
    %v698 = vsel %vm300, %v671, 0
    %v701 = vsel %vm300, %v672, 0
    %v704 = vsel %vm300, %v673, 0
    %706 = vmatprep.subr.bf16.mxu0 0
    %707 = vmatpush1.bf16.msra.mxu0 0
    %708 = vmatprep.subr.bf16.mxu0 0
    %709 = vmatpush1.bf16.msra.mxu0 0
    %710 = vmatprep.subr.bf16.mxu0 0
    %711 = vmatpush1.bf16.msra.mxu0 0
    %712 = vmatprep.subr.bf16.mxu0 0
    %713 = vmatpush1.bf16.msra.mxu0 0
    %714 = vmatprep.subr.bf16.mxu0 0
    %715 = vmatpush1.bf16.msra.mxu0 0
    %716 = vmatprep.subr.bf16.mxu0 0
    %717 = vmatpush1.bf16.msra.mxu0 0
    %718 = vmatprep.subr.bf16.mxu0 0
    %719 = vmatpush1.bf16.msra.mxu0 %v694
    %720 = vmatprep.subr.bf16.mxu0 0
    %721 = vmatpush1.bf16.msra.mxu0 %v693
    %722 = vmatprep.subr.bf16.mxu0 0
    %723 = vmatpush2.bf16.msra.mxu0 0
    %724 = vmatprep.subr.bf16.mxu0 0
    %725 = vmatpush2.bf16.msra.mxu0 0
    %726 = vmatprep.subr.bf16.mxu0 0
    %727 = vmatpush2.bf16.msra.mxu0 0
    %728 = vmatprep.subr.bf16.mxu0 0
    %729 = vmatpush2.bf16.msra.mxu0 0
    %730 = vmatprep.subr.bf16.mxu0 0
    %731 = vmatpush2.bf16.msra.mxu0 0
    %732 = vmatprep.subr.bf16.mxu0 0
    %733 = vmatpush2.bf16.msra.mxu0 0
    %734 = vmatprep.subr.bf16.mxu0 0
    %735 = vmatpush2.bf16.msra.mxu0 0
    %736 = vmatprep.subr.bf16.mxu0 0
    %737 = vmatpush2.bf16.msra.mxu0 0
    %738 = vmatprep.mubr.bf16.mxu0 0
    %739 = vmatmul.mubr.bf16.gmra.mxu0 %v698
    %v740 = vpop.f32.mrf.mxu0
    %v741 = vadd.f32 %v683, %v740
    %v742 = vpop.f32.mrf.mxu0
    %v743 = vpop.f32.mrf.mxu0
    %v744 = vadd.f32 %v683, %v743
    %v745 = vpop.f32.mrf.mxu0
    %746 = vmatprep.mubr.bf16.mxu0 0
    %747 = vmatmul.mubr.bf16.gmra.mxu0 %v701
    %v748 = vpop.f32.mrf.mxu0
    %v749 = vadd.f32 %v683, %v748
    %v750 = vpop.f32.mrf.mxu0
    %v751 = vpop.f32.mrf.mxu0
    %v752 = vadd.f32 %v683, %v751
    %v753 = vpop.f32.mrf.mxu0
    %754 = vmatprep.mubr.bf16.mxu0 0
    %755 = vmatmul.mubr.bf16.gmra.mxu0 %v704
    %v756 = vpop.f32.mrf.mxu0
    %v757 = vadd.f32 %v683, %v756
    %v758 = vpop.f32.mrf.mxu0
    %v759 = vpop.f32.mrf.mxu0
    %v760 = vpop.f32.mrf.mxu0
    %761 = vdwg.mxu0
    %v762 = vmul.f32 %v741, 0.35355338
    %v763 = vmul.f32 %v744, 0.35355338
    %v764 = vmul.f32 %v749, 0.35355338
    %v765 = vmul.f32 %v752, 0.35355338
    %v766 = vmul.f32 %v757, 0.35355338
    %v767 = vpack.c.bf16 %v763, %v762
    %v768 = vpack.c.bf16 %v765, %v764
    %v769 = vpack.c.bf16 %v766, %v766
    %v770 = vpack.c.bf16 %v744, %v741
    %v771 = vpack.c.bf16 %v752, %v749
    %v772 = vpack.c.bf16 %v757, %v757
    %776 = vrot.lane.b32.xlu0 %v770, 96
    %v777 = vpop.permute.xlu0 %776
    %778 = vrot.lane.b32.xlu0 %v771, 96
    %v779 = vpop.permute.xlu0 %778
    %780 = vrot.lane.b32.xlu0 %v772, 96
    %v781 = vpop.permute.xlu0 %780
    %vm782 = vcmask 64512
    %v784 = vsel %vm782, %v767, 0
    %v787 = vsel %vm782, %v768, 0
    %v790 = vsel %vm782, %v769, 0
    %v793 = vsel %vm782, %v777, 0
    %v796 = vsel %vm782, %v779, 0
    %v799 = vsel %vm782, %v781, 0
    %801 = vmatprep.subr.bf16.mxu0 0
    %802 = vmatpush1.bf16.xpose.msra.mxu0 0
    %803 = vmatprep.subr.bf16.mxu0 0
    %804 = vmatpush1.bf16.xpose.msra.mxu0 0
    %805 = vmatprep.subr.bf16.mxu0 0
    %806 = vmatpush1.bf16.xpose.msra.mxu0 0
    %807 = vmatprep.subr.bf16.mxu0 0
    %808 = vmatpush1.bf16.xpose.msra.mxu0 0
    %809 = vmatprep.subr.bf16.mxu0 0
    %810 = vmatpush1.bf16.xpose.msra.mxu0 0
    %811 = vmatprep.subr.bf16.mxu0 0
    %812 = vmatpush1.bf16.xpose.msra.mxu0 %v799
    %813 = vmatprep.subr.bf16.mxu0 0
    %814 = vmatpush1.bf16.xpose.msra.mxu0 %v796
    %815 = vmatprep.subr.bf16.mxu0 0
    %816 = vmatpush1.bf16.xpose.msra.mxu0 %v793
    %817 = vmatprep.subr.bf16.mxu0 0
    %818 = vmatpush2.bf16.xpose.msra.mxu0 0
    %819 = vmatprep.subr.bf16.mxu0 0
    %820 = vmatpush2.bf16.xpose.msra.mxu0 0
    %821 = vmatprep.subr.bf16.mxu0 0
    %822 = vmatpush2.bf16.xpose.msra.mxu0 0
    %823 = vmatprep.subr.bf16.mxu0 0
    %824 = vmatpush2.bf16.xpose.msra.mxu0 0
    %825 = vmatprep.subr.bf16.mxu0 0
    %826 = vmatpush2.bf16.xpose.msra.mxu0 0
    %827 = vmatprep.subr.bf16.mxu0 0
    %828 = vmatpush2.bf16.xpose.msra.mxu0 0
    %829 = vmatprep.subr.bf16.mxu0 0
    %830 = vmatpush2.bf16.xpose.msra.mxu0 0
    %831 = vmatprep.subr.bf16.mxu0 0
    %832 = vmatpush2.bf16.xpose.msra.mxu0 0
    %833 = vmatprep.mubr.bf16.mxu0 0
    %834 = vmatmul.mubr.bf16.gmra.mxu0 %v784
    %v835 = vpop.f32.mrf.mxu0
    %v836 = vadd.f32 %v180, %v835
    %v837 = vpop.f32.mrf.mxu0
    %v838 = vpop.f32.mrf.mxu0
    %v839 = vadd.f32 %v181, %v838
    %v840 = vpop.f32.mrf.mxu0
    %841 = vmatprep.mubr.bf16.mxu0 0
    %842 = vmatmul.mubr.bf16.gmra.mxu0 %v787
    %v843 = vpop.f32.mrf.mxu0
    %v844 = vadd.f32 %v182, %v843
    %v845 = vpop.f32.mrf.mxu0
    %v846 = vpop.f32.mrf.mxu0
    %v847 = vadd.f32 %v183, %v846
    %v848 = vpop.f32.mrf.mxu0
    %849 = vmatprep.mubr.bf16.mxu0 0
    %850 = vmatmul.mubr.bf16.gmra.mxu0 %v790
    %v851 = vpop.f32.mrf.mxu0
    %v852 = vadd.f32 %v184, %v851
    %v853 = vpop.f32.mrf.mxu0
    %v854 = vpop.f32.mrf.mxu0
    %v855 = vpop.f32.mrf.mxu0
    %856 = vdwg.mxu0
    %vm857 = vcmask 277504
    %v858 = vsel %vm857, %v836, -inf
    %859 = vmax.xlane.f32.xlu0 %v858
    %v860 = vpop.xlane.xlu0 %859
    %v861 = vsel %vm857, %v839, -inf
    %862 = vmax.xlane.f32.xlu0 %v861
    %v863 = vpop.xlane.xlu0 %862
    %v864 = vsel %vm857, %v844, -inf
    %865 = vmax.xlane.f32.xlu0 %v864
    %v866 = vpop.xlane.xlu0 %865
    %v867 = vsel %vm857, %v847, -inf
    %868 = vmax.xlane.f32.xlu0 %v867
    %v869 = vpop.xlane.xlu0 %868
    %vm870 = vcmask 271360
    %v871 = vsel %vm870, %v852, -inf
    %872 = vmax.xlane.f32.xlu0 %v871
    %v873 = vpop.xlane.xlu0 %872
    %v874 = vsub.f32 %v836, %v860
    %v875 = vsub.f32 %v839, %v863
    %v876 = vsub.f32 %v844, %v866
    %v877 = vsub.f32 %v847, %v869
    %v878 = vsub.f32 %v852, %v873
    %v879 = vmul.f32 %v874, 1.442695
    %v880 = vpow.pop %v879
    %v881 = vmul.f32 %v875, 1.442695
    %v882 = vpow.pop %v881
    %v883 = vmul.f32 %v876, 1.442695
    %v884 = vpow.pop %v883
    %v885 = vmul.f32 %v877, 1.442695
    %v886 = vpow.pop %v885
    %v887 = vmul.f32 %v878, 1.442695
    %v888 = vpow.pop %v887
    %v889 = vsel %vm857, %v880, 0.0
    %890 = vadd.xlane.f32.xlu0 %v889
    %v891 = vpop.xlane.xlu0 %890
    %v892 = vsel %vm857, %v882, 0.0
    %893 = vadd.xlane.f32.xlu0 %v892
    %v894 = vpop.xlane.xlu0 %893
    %v895 = vsel %vm857, %v884, 0.0
    %896 = vadd.xlane.f32.xlu0 %v895
    %v897 = vpop.xlane.xlu0 %896
    %v898 = vsel %vm857, %v886, 0.0
    %899 = vadd.xlane.f32.xlu0 %v898
    %v900 = vpop.xlane.xlu0 %899
    %v901 = vsel %vm870, %v888, 0.0
    %902 = vadd.xlane.f32.xlu0 %v901
    %v903 = vpop.xlane.xlu0 %902
    %v904 = vrcp.pop %v891
    %v905 = vrcp.pop %v894
    %v906 = vrcp.pop %v897
    %v907 = vrcp.pop %v900
    %v908 = vrcp.pop %v903
    %v909 = vmul.f32 %v880, %v904
    %v910 = vmul.f32 %v882, %v905
    %v911 = vmul.f32 %v884, %v906
    %v912 = vmul.f32 %v886, %v907
    %v913 = vmul.f32 %v888, %v908
    %v914 = vpack.c.bf16 %v910, %v909
    %v915 = vpack.c.bf16 %v912, %v911
    %v916 = vpack.c.bf16 %v913, %v913
    %917 = vrot.lane.b32.xlu0 %v770, 64
    %v918 = vpop.permute.xlu0 %917
    %919 = vrot.lane.b32.xlu0 %v771, 64
    %v920 = vpop.permute.xlu0 %919
    %921 = vrot.lane.b32.xlu0 %v772, 64
    %v922 = vpop.permute.xlu0 %921
    %v926 = vsel %vm857, %v914, 0
    %v929 = vsel %vm857, %v915, 0
    %v932 = vsel %vm857, %v916, 0
    %vm934 = vcmask 1040384
    %v936 = vsel %vm934, %v922, 0
    %938 = vmatprep.subr.bf16.mxu0 0
    %939 = vmatpush1.bf16.msra.mxu0 0
    %940 = vmatprep.subr.bf16.mxu0 0
    %941 = vmatpush1.bf16.msra.mxu0 0
    %942 = vmatprep.subr.bf16.mxu0 0
    %943 = vmatpush1.bf16.msra.mxu0 0
    %944 = vmatprep.subr.bf16.mxu0 0
    %945 = vmatpush1.bf16.msra.mxu0 0
    %946 = vmatprep.subr.bf16.mxu0 0
    %947 = vmatpush1.bf16.msra.mxu0 0
    %948 = vmatprep.subr.bf16.mxu0 0
    %949 = vmatpush1.bf16.msra.mxu0 %v936
    %950 = vmatprep.subr.bf16.mxu0 0
    %951 = vmatpush1.bf16.msra.mxu0 %v920
    %952 = vmatprep.subr.bf16.mxu0 0
    %953 = vmatpush1.bf16.msra.mxu0 %v918
    %954 = vmatprep.subr.bf16.mxu0 0
    %955 = vmatpush2.bf16.msra.mxu0 0
    %956 = vmatprep.subr.bf16.mxu0 0
    %957 = vmatpush2.bf16.msra.mxu0 0
    %958 = vmatprep.subr.bf16.mxu0 0
    %959 = vmatpush2.bf16.msra.mxu0 0
    %960 = vmatprep.subr.bf16.mxu0 0
    %961 = vmatpush2.bf16.msra.mxu0 0
    %962 = vmatprep.subr.bf16.mxu0 0
    %963 = vmatpush2.bf16.msra.mxu0 0
    %964 = vmatprep.subr.bf16.mxu0 0
    %965 = vmatpush2.bf16.msra.mxu0 0
    %966 = vmatprep.subr.bf16.mxu0 0
    %967 = vmatpush2.bf16.msra.mxu0 0
    %968 = vmatprep.subr.bf16.mxu0 0
    %969 = vmatpush2.bf16.msra.mxu0 0
    %970 = vmatprep.mubr.bf16.mxu0 0
    %971 = vmatmul.mubr.bf16.gmra.mxu0 %v926
    %v972 = vpop.f32.mrf.mxu0
    %v973 = vadd.f32 0.0, %v972
    %v974 = vpop.f32.mrf.mxu0
    %v975 = vpop.f32.mrf.mxu0
    %v976 = vadd.f32 0.0, %v975
    %v977 = vpop.f32.mrf.mxu0
    %978 = vmatprep.mubr.bf16.mxu0 0
    %979 = vmatmul.mubr.bf16.gmra.mxu0 %v929
    %v980 = vpop.f32.mrf.mxu0
    %v981 = vadd.f32 0.0, %v980
    %v982 = vpop.f32.mrf.mxu0
    %v983 = vpop.f32.mrf.mxu0
    %v984 = vadd.f32 0.0, %v983
    %v985 = vpop.f32.mrf.mxu0
    %986 = vmatprep.mubr.bf16.mxu0 0
    %987 = vmatmul.mubr.bf16.gmra.mxu0 %v932
    %v988 = vpop.f32.mrf.mxu0
    %v989 = vadd.f32 0.0, %v988
    %v990 = vpop.f32.mrf.mxu0
    %v991 = vpop.f32.mrf.mxu0
    %v992 = vpop.f32.mrf.mxu0
    %993 = vdwg.mxu0
    %997 = vrot.lane.b32.xlu0 %v767, 120
    %v998 = vpop.permute.xlu0 %997
    %999 = vrot.lane.b32.xlu0 %v768, 120
    %v1000 = vpop.permute.xlu0 %999
    %1001 = vrot.lane.b32.xlu0 %v769, 120
    %v1002 = vpop.permute.xlu0 %1001
    %1003 = vrot.lane.b32.xlu0 %v770, 88
    %v1004 = vpop.permute.xlu0 %1003
    %1005 = vrot.lane.b32.xlu0 %v771, 88
    %v1006 = vpop.permute.xlu0 %1005
    %1007 = vrot.lane.b32.xlu0 %v772, 88
    %v1008 = vpop.permute.xlu0 %1007
    %v1010 = vsel %vm782, %v998, 0
    %v1013 = vsel %vm782, %v1000, 0
    %v1016 = vsel %vm782, %v1002, 0
    %v1019 = vsel %vm782, %v1004, 0
    %v1022 = vsel %vm782, %v1006, 0
    %v1025 = vsel %vm782, %v1008, 0
    %1027 = vmatprep.subr.bf16.mxu0 0
    %1028 = vmatpush1.bf16.xpose.msra.mxu0 0
    %1029 = vmatprep.subr.bf16.mxu0 0
    %1030 = vmatpush1.bf16.xpose.msra.mxu0 0
    %1031 = vmatprep.subr.bf16.mxu0 0
    %1032 = vmatpush1.bf16.xpose.msra.mxu0 0
    %1033 = vmatprep.subr.bf16.mxu0 0
    %1034 = vmatpush1.bf16.xpose.msra.mxu0 0
    %1035 = vmatprep.subr.bf16.mxu0 0
    %1036 = vmatpush1.bf16.xpose.msra.mxu0 0
    %1037 = vmatprep.subr.bf16.mxu0 0
    %1038 = vmatpush1.bf16.xpose.msra.mxu0 %v1025
    %1039 = vmatprep.subr.bf16.mxu0 0
    %1040 = vmatpush1.bf16.xpose.msra.mxu0 %v1022
    %1041 = vmatprep.subr.bf16.mxu0 0
    %1042 = vmatpush1.bf16.xpose.msra.mxu0 %v1019
    %1043 = vmatprep.subr.bf16.mxu0 0
    %1044 = vmatpush2.bf16.xpose.msra.mxu0 0
    %1045 = vmatprep.subr.bf16.mxu0 0
    %1046 = vmatpush2.bf16.xpose.msra.mxu0 0
    %1047 = vmatprep.subr.bf16.mxu0 0
    %1048 = vmatpush2.bf16.xpose.msra.mxu0 0
    %1049 = vmatprep.subr.bf16.mxu0 0
    %1050 = vmatpush2.bf16.xpose.msra.mxu0 0
    %1051 = vmatprep.subr.bf16.mxu0 0
    %1052 = vmatpush2.bf16.xpose.msra.mxu0 0
    %1053 = vmatprep.subr.bf16.mxu0 0
    %1054 = vmatpush2.bf16.xpose.msra.mxu0 0
    %1055 = vmatprep.subr.bf16.mxu0 0
    %1056 = vmatpush2.bf16.xpose.msra.mxu0 0
    %1057 = vmatprep.subr.bf16.mxu0 0
    %1058 = vmatpush2.bf16.xpose.msra.mxu0 0
    %1059 = vmatprep.mubr.bf16.mxu0 0
    %1060 = vmatmul.mubr.bf16.gmra.mxu0 %v1010
    %v1061 = vpop.f32.mrf.mxu0
    %v1062 = vadd.f32 %v180, %v1061
    %v1063 = vpop.f32.mrf.mxu0
    %v1064 = vpop.f32.mrf.mxu0
    %v1065 = vadd.f32 %v181, %v1064
    %v1066 = vpop.f32.mrf.mxu0
    %1067 = vmatprep.mubr.bf16.mxu0 0
    %1068 = vmatmul.mubr.bf16.gmra.mxu0 %v1013
    %v1069 = vpop.f32.mrf.mxu0
    %v1070 = vadd.f32 %v182, %v1069
    %v1071 = vpop.f32.mrf.mxu0
    %v1072 = vpop.f32.mrf.mxu0
    %v1073 = vadd.f32 %v183, %v1072
    %v1074 = vpop.f32.mrf.mxu0
    %1075 = vmatprep.mubr.bf16.mxu0 0
    %1076 = vmatmul.mubr.bf16.gmra.mxu0 %v1016
    %v1077 = vpop.f32.mrf.mxu0
    %v1078 = vadd.f32 %v184, %v1077
    %v1079 = vpop.f32.mrf.mxu0
    %v1080 = vpop.f32.mrf.mxu0
    %v1081 = vpop.f32.mrf.mxu0
    %1082 = vdwg.mxu0
    %v1083 = vsel %vm857, %v1062, -inf
    %1084 = vmax.xlane.f32.xlu0 %v1083
    %v1085 = vpop.xlane.xlu0 %1084
    %v1086 = vsel %vm857, %v1065, -inf
    %1087 = vmax.xlane.f32.xlu0 %v1086
    %v1088 = vpop.xlane.xlu0 %1087
    %v1089 = vsel %vm857, %v1070, -inf
    %1090 = vmax.xlane.f32.xlu0 %v1089
    %v1091 = vpop.xlane.xlu0 %1090
    %v1092 = vsel %vm857, %v1073, -inf
    %1093 = vmax.xlane.f32.xlu0 %v1092
    %v1094 = vpop.xlane.xlu0 %1093
    %v1095 = vsel %vm870, %v1078, -inf
    %1096 = vmax.xlane.f32.xlu0 %v1095
    %v1097 = vpop.xlane.xlu0 %1096
    %v1098 = vsub.f32 %v1062, %v1085
    %v1099 = vsub.f32 %v1065, %v1088
    %v1100 = vsub.f32 %v1070, %v1091
    %v1101 = vsub.f32 %v1073, %v1094
    %v1102 = vsub.f32 %v1078, %v1097
    %v1103 = vmul.f32 %v1098, 1.442695
    %v1104 = vpow.pop %v1103
    %v1105 = vmul.f32 %v1099, 1.442695
    %v1106 = vpow.pop %v1105
    %v1107 = vmul.f32 %v1100, 1.442695
    %v1108 = vpow.pop %v1107
    %v1109 = vmul.f32 %v1101, 1.442695
    %v1110 = vpow.pop %v1109
    %v1111 = vmul.f32 %v1102, 1.442695
    %v1112 = vpow.pop %v1111
    %v1113 = vsel %vm857, %v1104, 0.0
    %1114 = vadd.xlane.f32.xlu0 %v1113
    %v1115 = vpop.xlane.xlu0 %1114
    %v1116 = vsel %vm857, %v1106, 0.0
    %1117 = vadd.xlane.f32.xlu0 %v1116
    %v1118 = vpop.xlane.xlu0 %1117
    %v1119 = vsel %vm857, %v1108, 0.0
    %1120 = vadd.xlane.f32.xlu0 %v1119
    %v1121 = vpop.xlane.xlu0 %1120
    %v1122 = vsel %vm857, %v1110, 0.0
    %1123 = vadd.xlane.f32.xlu0 %v1122
    %v1124 = vpop.xlane.xlu0 %1123
    %v1125 = vsel %vm870, %v1112, 0.0
    %1126 = vadd.xlane.f32.xlu0 %v1125
    %v1127 = vpop.xlane.xlu0 %1126
    %v1128 = vrcp.pop %v1115
    %v1129 = vrcp.pop %v1118
    %v1130 = vrcp.pop %v1121
    %v1131 = vrcp.pop %v1124
    %v1132 = vrcp.pop %v1127
    %v1133 = vmul.f32 %v1104, %v1128
    %v1134 = vmul.f32 %v1106, %v1129
    %v1135 = vmul.f32 %v1108, %v1130
    %v1136 = vmul.f32 %v1110, %v1131
    %v1137 = vmul.f32 %v1112, %v1132
    %v1138 = vpack.c.bf16 %v1134, %v1133
    %v1139 = vpack.c.bf16 %v1136, %v1135
    %v1140 = vpack.c.bf16 %v1137, %v1137
    %1141 = vrot.lane.b32.xlu0 %v770, 56
    %v1142 = vpop.permute.xlu0 %1141
    %1143 = vrot.lane.b32.xlu0 %v771, 56
    %v1144 = vpop.permute.xlu0 %1143
    %1145 = vrot.lane.b32.xlu0 %v772, 56
    %v1146 = vpop.permute.xlu0 %1145
    %v1150 = vsel %vm857, %v1138, 0
    %v1153 = vsel %vm857, %v1139, 0
    %v1156 = vsel %vm857, %v1140, 0
    %v1159 = vsel %vm934, %v1146, 0
    %1161 = vmatprep.subr.bf16.mxu0 0
    %1162 = vmatpush1.bf16.msra.mxu0 0
    %1163 = vmatprep.subr.bf16.mxu0 0
    %1164 = vmatpush1.bf16.msra.mxu0 0
    %1165 = vmatprep.subr.bf16.mxu0 0
    %1166 = vmatpush1.bf16.msra.mxu0 0
    %1167 = vmatprep.subr.bf16.mxu0 0
    %1168 = vmatpush1.bf16.msra.mxu0 0
    %1169 = vmatprep.subr.bf16.mxu0 0
    %1170 = vmatpush1.bf16.msra.mxu0 0
    %1171 = vmatprep.subr.bf16.mxu0 0
    %1172 = vmatpush1.bf16.msra.mxu0 %v1159
    %1173 = vmatprep.subr.bf16.mxu0 0
    %1174 = vmatpush1.bf16.msra.mxu0 %v1144
    %1175 = vmatprep.subr.bf16.mxu0 0
    %1176 = vmatpush1.bf16.msra.mxu0 %v1142
    %1177 = vmatprep.subr.bf16.mxu0 0
    %1178 = vmatpush2.bf16.msra.mxu0 0
    %1179 = vmatprep.subr.bf16.mxu0 0
    %1180 = vmatpush2.bf16.msra.mxu0 0
    %1181 = vmatprep.subr.bf16.mxu0 0
    %1182 = vmatpush2.bf16.msra.mxu0 0
    %1183 = vmatprep.subr.bf16.mxu0 0
    %1184 = vmatpush2.bf16.msra.mxu0 0
    %1185 = vmatprep.subr.bf16.mxu0 0
    %1186 = vmatpush2.bf16.msra.mxu0 0
    %1187 = vmatprep.subr.bf16.mxu0 0
    %1188 = vmatpush2.bf16.msra.mxu0 0
    %1189 = vmatprep.subr.bf16.mxu0 0
    %1190 = vmatpush2.bf16.msra.mxu0 0
    %1191 = vmatprep.subr.bf16.mxu0 0
    %1192 = vmatpush2.bf16.msra.mxu0 0
    %1193 = vmatprep.mubr.bf16.mxu0 0
    %1194 = vmatmul.mubr.bf16.gmra.mxu0 %v1150
    %v1195 = vpop.f32.mrf.mxu0
    %v1196 = vadd.f32 0.0, %v1195
    %v1197 = vpop.f32.mrf.mxu0
    %v1198 = vpop.f32.mrf.mxu0
    %v1199 = vadd.f32 0.0, %v1198
    %v1200 = vpop.f32.mrf.mxu0
    %1201 = vmatprep.mubr.bf16.mxu0 0
    %1202 = vmatmul.mubr.bf16.gmra.mxu0 %v1153
    %v1203 = vpop.f32.mrf.mxu0
    %v1204 = vadd.f32 0.0, %v1203
    %v1205 = vpop.f32.mrf.mxu0
    %v1206 = vpop.f32.mrf.mxu0
    %v1207 = vadd.f32 0.0, %v1206
    %v1208 = vpop.f32.mrf.mxu0
    %1209 = vmatprep.mubr.bf16.mxu0 0
    %1210 = vmatmul.mubr.bf16.gmra.mxu0 %v1156
    %v1211 = vpop.f32.mrf.mxu0
    %v1212 = vadd.f32 0.0, %v1211
    %v1213 = vpop.f32.mrf.mxu0
    %v1214 = vpop.f32.mrf.mxu0
    %v1215 = vpop.f32.mrf.mxu0
    %1216 = vdwg.mxu0
    %1217 = vrot.lane.b32.xlu0 %v767, 112
    %v1218 = vpop.permute.xlu0 %1217
    %1219 = vrot.lane.b32.xlu0 %v768, 112
    %v1220 = vpop.permute.xlu0 %1219
    %1221 = vrot.lane.b32.xlu0 %v769, 112
    %v1222 = vpop.permute.xlu0 %1221
    %1223 = vrot.lane.b32.xlu0 %v770, 80
    %v1224 = vpop.permute.xlu0 %1223
    %1225 = vrot.lane.b32.xlu0 %v771, 80
    %v1226 = vpop.permute.xlu0 %1225
    %1227 = vrot.lane.b32.xlu0 %v772, 80
    %v1228 = vpop.permute.xlu0 %1227
    %v1230 = vsel %vm782, %v1218, 0
    %v1233 = vsel %vm782, %v1220, 0
    %v1236 = vsel %vm782, %v1222, 0
    %v1239 = vsel %vm782, %v1224, 0
    %v1242 = vsel %vm782, %v1226, 0
    %v1245 = vsel %vm782, %v1228, 0
    %1247 = vmatprep.subr.bf16.mxu0 0
    %1248 = vmatpush1.bf16.xpose.msra.mxu0 0
    %1249 = vmatprep.subr.bf16.mxu0 0
    %1250 = vmatpush1.bf16.xpose.msra.mxu0 0
    %1251 = vmatprep.subr.bf16.mxu0 0
    %1252 = vmatpush1.bf16.xpose.msra.mxu0 0
    %1253 = vmatprep.subr.bf16.mxu0 0
    %1254 = vmatpush1.bf16.xpose.msra.mxu0 0
    %1255 = vmatprep.subr.bf16.mxu0 0
    %1256 = vmatpush1.bf16.xpose.msra.mxu0 0
    %1257 = vmatprep.subr.bf16.mxu0 0
    %1258 = vmatpush1.bf16.xpose.msra.mxu0 %v1245
    %1259 = vmatprep.subr.bf16.mxu0 0
    %1260 = vmatpush1.bf16.xpose.msra.mxu0 %v1242
    %1261 = vmatprep.subr.bf16.mxu0 0
    %1262 = vmatpush1.bf16.xpose.msra.mxu0 %v1239
    %1263 = vmatprep.subr.bf16.mxu0 0
    %1264 = vmatpush2.bf16.xpose.msra.mxu0 0
    %1265 = vmatprep.subr.bf16.mxu0 0
    %1266 = vmatpush2.bf16.xpose.msra.mxu0 0
    %1267 = vmatprep.subr.bf16.mxu0 0
    %1268 = vmatpush2.bf16.xpose.msra.mxu0 0
    %1269 = vmatprep.subr.bf16.mxu0 0
    %1270 = vmatpush2.bf16.xpose.msra.mxu0 0
    %1271 = vmatprep.subr.bf16.mxu0 0
    %1272 = vmatpush2.bf16.xpose.msra.mxu0 0
    %1273 = vmatprep.subr.bf16.mxu0 0
    %1274 = vmatpush2.bf16.xpose.msra.mxu0 0
    %1275 = vmatprep.subr.bf16.mxu0 0
    %1276 = vmatpush2.bf16.xpose.msra.mxu0 0
    %1277 = vmatprep.subr.bf16.mxu0 0
    %1278 = vmatpush2.bf16.xpose.msra.mxu0 0
    %1279 = vmatprep.mubr.bf16.mxu0 0
    %1280 = vmatmul.mubr.bf16.gmra.mxu0 %v1230
    %v1281 = vpop.f32.mrf.mxu0
    %v1282 = vadd.f32 %v180, %v1281
    %v1283 = vpop.f32.mrf.mxu0
    %v1284 = vpop.f32.mrf.mxu0
    %v1285 = vadd.f32 %v181, %v1284
    %v1286 = vpop.f32.mrf.mxu0
    %1287 = vmatprep.mubr.bf16.mxu0 0
    %1288 = vmatmul.mubr.bf16.gmra.mxu0 %v1233
    %v1289 = vpop.f32.mrf.mxu0
    %v1290 = vadd.f32 %v182, %v1289
    %v1291 = vpop.f32.mrf.mxu0
    %v1292 = vpop.f32.mrf.mxu0
    %v1293 = vadd.f32 %v183, %v1292
    %v1294 = vpop.f32.mrf.mxu0
    %1295 = vmatprep.mubr.bf16.mxu0 0
    %1296 = vmatmul.mubr.bf16.gmra.mxu0 %v1236
    %v1297 = vpop.f32.mrf.mxu0
    %v1298 = vadd.f32 %v184, %v1297
    %v1299 = vpop.f32.mrf.mxu0
    %v1300 = vpop.f32.mrf.mxu0
    %v1301 = vpop.f32.mrf.mxu0
    %1302 = vdwg.mxu0
    %v1303 = vsel %vm857, %v1282, -inf
    %1304 = vmax.xlane.f32.xlu0 %v1303
    %v1305 = vpop.xlane.xlu0 %1304
    %v1306 = vsel %vm857, %v1285, -inf
    %1307 = vmax.xlane.f32.xlu0 %v1306
    %v1308 = vpop.xlane.xlu0 %1307
    %v1309 = vsel %vm857, %v1290, -inf
    %1310 = vmax.xlane.f32.xlu0 %v1309
    %v1311 = vpop.xlane.xlu0 %1310
    %v1312 = vsel %vm857, %v1293, -inf
    %1313 = vmax.xlane.f32.xlu0 %v1312
    %v1314 = vpop.xlane.xlu0 %1313
    %v1315 = vsel %vm870, %v1298, -inf
    %1316 = vmax.xlane.f32.xlu0 %v1315
    %v1317 = vpop.xlane.xlu0 %1316
    %v1318 = vsub.f32 %v1282, %v1305
    %v1319 = vsub.f32 %v1285, %v1308
    %v1320 = vsub.f32 %v1290, %v1311
    %v1321 = vsub.f32 %v1293, %v1314
    %v1322 = vsub.f32 %v1298, %v1317
    %v1323 = vmul.f32 %v1318, 1.442695
    %v1324 = vpow.pop %v1323
    %v1325 = vmul.f32 %v1319, 1.442695
    %v1326 = vpow.pop %v1325
    %v1327 = vmul.f32 %v1320, 1.442695
    %v1328 = vpow.pop %v1327
    %v1329 = vmul.f32 %v1321, 1.442695
    %v1330 = vpow.pop %v1329
    %v1331 = vmul.f32 %v1322, 1.442695
    %v1332 = vpow.pop %v1331
    %v1333 = vsel %vm857, %v1324, 0.0
    %1334 = vadd.xlane.f32.xlu0 %v1333
    %v1335 = vpop.xlane.xlu0 %1334
    %v1336 = vsel %vm857, %v1326, 0.0
    %1337 = vadd.xlane.f32.xlu0 %v1336
    %v1338 = vpop.xlane.xlu0 %1337
    %v1339 = vsel %vm857, %v1328, 0.0
    %1340 = vadd.xlane.f32.xlu0 %v1339
    %v1341 = vpop.xlane.xlu0 %1340
    %v1342 = vsel %vm857, %v1330, 0.0
    %1343 = vadd.xlane.f32.xlu0 %v1342
    %v1344 = vpop.xlane.xlu0 %1343
    %v1345 = vsel %vm870, %v1332, 0.0
    %1346 = vadd.xlane.f32.xlu0 %v1345
    %v1347 = vpop.xlane.xlu0 %1346
    %v1348 = vrcp.pop %v1335
    %v1349 = vrcp.pop %v1338
    %v1350 = vrcp.pop %v1341
    %v1351 = vrcp.pop %v1344
    %v1352 = vrcp.pop %v1347
    %v1353 = vmul.f32 %v1324, %v1348
    %v1354 = vmul.f32 %v1326, %v1349
    %v1355 = vmul.f32 %v1328, %v1350
    %v1356 = vmul.f32 %v1330, %v1351
    %v1357 = vmul.f32 %v1332, %v1352
    %v1358 = vpack.c.bf16 %v1354, %v1353
    %v1359 = vpack.c.bf16 %v1356, %v1355
    %v1360 = vpack.c.bf16 %v1357, %v1357
    %1361 = vrot.lane.b32.xlu0 %v770, 48
    %v1362 = vpop.permute.xlu0 %1361
    %1363 = vrot.lane.b32.xlu0 %v771, 48
    %v1364 = vpop.permute.xlu0 %1363
    %1365 = vrot.lane.b32.xlu0 %v772, 48
    %v1366 = vpop.permute.xlu0 %1365
    %v1370 = vsel %vm857, %v1358, 0
    %v1373 = vsel %vm857, %v1359, 0
    %v1376 = vsel %vm857, %v1360, 0
    %v1379 = vsel %vm934, %v1366, 0
    %1381 = vmatprep.subr.bf16.mxu0 0
    %1382 = vmatpush1.bf16.msra.mxu0 0
    %1383 = vmatprep.subr.bf16.mxu0 0
    %1384 = vmatpush1.bf16.msra.mxu0 0
    %1385 = vmatprep.subr.bf16.mxu0 0
    %1386 = vmatpush1.bf16.msra.mxu0 0
    %1387 = vmatprep.subr.bf16.mxu0 0
    %1388 = vmatpush1.bf16.msra.mxu0 0
    %1389 = vmatprep.subr.bf16.mxu0 0
    %1390 = vmatpush1.bf16.msra.mxu0 0
    %1391 = vmatprep.subr.bf16.mxu0 0
    %1392 = vmatpush1.bf16.msra.mxu0 %v1379
    %1393 = vmatprep.subr.bf16.mxu0 0
    %1394 = vmatpush1.bf16.msra.mxu0 %v1364
    %1395 = vmatprep.subr.bf16.mxu0 0
    %1396 = vmatpush1.bf16.msra.mxu0 %v1362
    %1397 = vmatprep.subr.bf16.mxu0 0
    %1398 = vmatpush2.bf16.msra.mxu0 0
    %1399 = vmatprep.subr.bf16.mxu0 0
    %1400 = vmatpush2.bf16.msra.mxu0 0
    %1401 = vmatprep.subr.bf16.mxu0 0
    %1402 = vmatpush2.bf16.msra.mxu0 0
    %1403 = vmatprep.subr.bf16.mxu0 0
    %1404 = vmatpush2.bf16.msra.mxu0 0
    %1405 = vmatprep.subr.bf16.mxu0 0
    %1406 = vmatpush2.bf16.msra.mxu0 0
    %1407 = vmatprep.subr.bf16.mxu0 0
    %1408 = vmatpush2.bf16.msra.mxu0 0
    %1409 = vmatprep.subr.bf16.mxu0 0
    %1410 = vmatpush2.bf16.msra.mxu0 0
    %1411 = vmatprep.subr.bf16.mxu0 0
    %1412 = vmatpush2.bf16.msra.mxu0 0
    %1413 = vmatprep.mubr.bf16.mxu0 0
    %1414 = vmatmul.mubr.bf16.gmra.mxu0 %v1370
    %v1415 = vpop.f32.mrf.mxu0
    %v1416 = vadd.f32 0.0, %v1415
    %v1417 = vpop.f32.mrf.mxu0
    %v1418 = vpop.f32.mrf.mxu0
    %v1419 = vadd.f32 0.0, %v1418
    %v1420 = vpop.f32.mrf.mxu0
    %1421 = vmatprep.mubr.bf16.mxu0 0
    %1422 = vmatmul.mubr.bf16.gmra.mxu0 %v1373
    %v1423 = vpop.f32.mrf.mxu0
    %v1424 = vadd.f32 0.0, %v1423
    %v1425 = vpop.f32.mrf.mxu0
    %v1426 = vpop.f32.mrf.mxu0
    %v1427 = vadd.f32 0.0, %v1426
    %v1428 = vpop.f32.mrf.mxu0
    %1429 = vmatprep.mubr.bf16.mxu0 0
    %1430 = vmatmul.mubr.bf16.gmra.mxu0 %v1376
    %v1431 = vpop.f32.mrf.mxu0
    %v1432 = vadd.f32 0.0, %v1431
    %v1433 = vpop.f32.mrf.mxu0
    %v1434 = vpop.f32.mrf.mxu0
    %v1435 = vpop.f32.mrf.mxu0
    %1436 = vdwg.mxu0
    %1437 = vrot.lane.b32.xlu0 %v767, 104
    %v1438 = vpop.permute.xlu0 %1437
    %1439 = vrot.lane.b32.xlu0 %v768, 104
    %v1440 = vpop.permute.xlu0 %1439
    %1441 = vrot.lane.b32.xlu0 %v769, 104
    %v1442 = vpop.permute.xlu0 %1441
    %1443 = vrot.lane.b32.xlu0 %v770, 72
    %v1444 = vpop.permute.xlu0 %1443
    %1445 = vrot.lane.b32.xlu0 %v771, 72
    %v1446 = vpop.permute.xlu0 %1445
    %1447 = vrot.lane.b32.xlu0 %v772, 72
    %v1448 = vpop.permute.xlu0 %1447
    %v1450 = vsel %vm782, %v1438, 0
    %v1453 = vsel %vm782, %v1440, 0
    %v1456 = vsel %vm782, %v1442, 0
    %v1459 = vsel %vm782, %v1444, 0
    %v1462 = vsel %vm782, %v1446, 0
    %v1465 = vsel %vm782, %v1448, 0
    %1467 = vmatprep.subr.bf16.mxu0 0
    %1468 = vmatpush1.bf16.xpose.msra.mxu0 0
    %1469 = vmatprep.subr.bf16.mxu0 0
    %1470 = vmatpush1.bf16.xpose.msra.mxu0 0
    %1471 = vmatprep.subr.bf16.mxu0 0
    %1472 = vmatpush1.bf16.xpose.msra.mxu0 0
    %1473 = vmatprep.subr.bf16.mxu0 0
    %1474 = vmatpush1.bf16.xpose.msra.mxu0 0
    %1475 = vmatprep.subr.bf16.mxu0 0
    %1476 = vmatpush1.bf16.xpose.msra.mxu0 0
    %1477 = vmatprep.subr.bf16.mxu0 0
    %1478 = vmatpush1.bf16.xpose.msra.mxu0 %v1465
    %1479 = vmatprep.subr.bf16.mxu0 0
    %1480 = vmatpush1.bf16.xpose.msra.mxu0 %v1462
    %1481 = vmatprep.subr.bf16.mxu0 0
    %1482 = vmatpush1.bf16.xpose.msra.mxu0 %v1459
    %1483 = vmatprep.subr.bf16.mxu0 0
    %1484 = vmatpush2.bf16.xpose.msra.mxu0 0
    %1485 = vmatprep.subr.bf16.mxu0 0
    %1486 = vmatpush2.bf16.xpose.msra.mxu0 0
    %1487 = vmatprep.subr.bf16.mxu0 0
    %1488 = vmatpush2.bf16.xpose.msra.mxu0 0
    %1489 = vmatprep.subr.bf16.mxu0 0
    %1490 = vmatpush2.bf16.xpose.msra.mxu0 0
    %1491 = vmatprep.subr.bf16.mxu0 0
    %1492 = vmatpush2.bf16.xpose.msra.mxu0 0
    %1493 = vmatprep.subr.bf16.mxu0 0
    %1494 = vmatpush2.bf16.xpose.msra.mxu0 0
    %1495 = vmatprep.subr.bf16.mxu0 0
    %1496 = vmatpush2.bf16.xpose.msra.mxu0 0
    %1497 = vmatprep.subr.bf16.mxu0 0
    %1498 = vmatpush2.bf16.xpose.msra.mxu0 0
    %1499 = vmatprep.mubr.bf16.mxu0 0
    %1500 = vmatmul.mubr.bf16.gmra.mxu0 %v1450
    %v1501 = vpop.f32.mrf.mxu0
    %v1502 = vadd.f32 %v180, %v1501
    %v1503 = vpop.f32.mrf.mxu0
    %v1504 = vpop.f32.mrf.mxu0
    %v1505 = vadd.f32 %v181, %v1504
    %v1506 = vpop.f32.mrf.mxu0
    %1507 = vmatprep.mubr.bf16.mxu0 0
    %1508 = vmatmul.mubr.bf16.gmra.mxu0 %v1453
    %v1509 = vpop.f32.mrf.mxu0
    %v1510 = vadd.f32 %v182, %v1509
    %v1511 = vpop.f32.mrf.mxu0
    %v1512 = vpop.f32.mrf.mxu0
    %v1513 = vadd.f32 %v183, %v1512
    %v1514 = vpop.f32.mrf.mxu0
    %1515 = vmatprep.mubr.bf16.mxu0 0
    %1516 = vmatmul.mubr.bf16.gmra.mxu0 %v1456
    %v1517 = vpop.f32.mrf.mxu0
    %v1518 = vadd.f32 %v184, %v1517
    %v1519 = vpop.f32.mrf.mxu0
    %v1520 = vpop.f32.mrf.mxu0
    %v1521 = vpop.f32.mrf.mxu0
    %1522 = vdwg.mxu0
    %v1523 = vsel %vm857, %v1502, -inf
    %1524 = vmax.xlane.f32.xlu0 %v1523
    %v1525 = vpop.xlane.xlu0 %1524
    %v1526 = vsel %vm857, %v1505, -inf
    %1527 = vmax.xlane.f32.xlu0 %v1526
    %v1528 = vpop.xlane.xlu0 %1527
    %v1529 = vsel %vm857, %v1510, -inf
    %1530 = vmax.xlane.f32.xlu0 %v1529
    %v1531 = vpop.xlane.xlu0 %1530
    %v1532 = vsel %vm857, %v1513, -inf
    %1533 = vmax.xlane.f32.xlu0 %v1532
    %v1534 = vpop.xlane.xlu0 %1533
    %v1535 = vsel %vm870, %v1518, -inf
    %1536 = vmax.xlane.f32.xlu0 %v1535
    %v1537 = vpop.xlane.xlu0 %1536
    %v1538 = vsub.f32 %v1502, %v1525
    %v1539 = vsub.f32 %v1505, %v1528
    %v1540 = vsub.f32 %v1510, %v1531
    %v1541 = vsub.f32 %v1513, %v1534
    %v1542 = vsub.f32 %v1518, %v1537
    %v1543 = vmul.f32 %v1538, 1.442695
    %v1544 = vpow.pop %v1543
    %v1545 = vmul.f32 %v1539, 1.442695
    %v1546 = vpow.pop %v1545
    %v1547 = vmul.f32 %v1540, 1.442695
    %v1548 = vpow.pop %v1547
    %v1549 = vmul.f32 %v1541, 1.442695
    %v1550 = vpow.pop %v1549
    %v1551 = vmul.f32 %v1542, 1.442695
    %v1552 = vpow.pop %v1551
    %v1553 = vsel %vm857, %v1544, 0.0
    %1554 = vadd.xlane.f32.xlu0 %v1553
    %v1555 = vpop.xlane.xlu0 %1554
    %v1556 = vsel %vm857, %v1546, 0.0
    %1557 = vadd.xlane.f32.xlu0 %v1556
    %v1558 = vpop.xlane.xlu0 %1557
    %v1559 = vsel %vm857, %v1548, 0.0
    %1560 = vadd.xlane.f32.xlu0 %v1559
    %v1561 = vpop.xlane.xlu0 %1560
    %v1562 = vsel %vm857, %v1550, 0.0
    %1563 = vadd.xlane.f32.xlu0 %v1562
    %v1564 = vpop.xlane.xlu0 %1563
    %v1565 = vsel %vm870, %v1552, 0.0
    %1566 = vadd.xlane.f32.xlu0 %v1565
    %v1567 = vpop.xlane.xlu0 %1566
    %v1568 = vrcp.pop %v1555
    %v1569 = vrcp.pop %v1558
    %v1570 = vrcp.pop %v1561
    %v1571 = vrcp.pop %v1564
    %v1572 = vrcp.pop %v1567
    %v1573 = vmul.f32 %v1544, %v1568
    %v1574 = vmul.f32 %v1546, %v1569
    %v1575 = vmul.f32 %v1548, %v1570
    %v1576 = vmul.f32 %v1550, %v1571
    %v1577 = vmul.f32 %v1552, %v1572
    %v1578 = vpack.c.bf16 %v1574, %v1573
    %v1579 = vpack.c.bf16 %v1576, %v1575
    %v1580 = vpack.c.bf16 %v1577, %v1577
    %1581 = vrot.lane.b32.xlu0 %v770, 40
    %v1582 = vpop.permute.xlu0 %1581
    %1583 = vrot.lane.b32.xlu0 %v771, 40
    %v1584 = vpop.permute.xlu0 %1583
    %1585 = vrot.lane.b32.xlu0 %v772, 40
    %v1586 = vpop.permute.xlu0 %1585
    %v1590 = vsel %vm857, %v1578, 0
    %v1593 = vsel %vm857, %v1579, 0
    %v1596 = vsel %vm857, %v1580, 0
    %v1599 = vsel %vm934, %v1586, 0
    %1601 = vmatprep.subr.bf16.mxu0 0
    %1602 = vmatpush1.bf16.msra.mxu0 0
    %1603 = vmatprep.subr.bf16.mxu0 0
    %1604 = vmatpush1.bf16.msra.mxu0 0
    %1605 = vmatprep.subr.bf16.mxu0 0
    %1606 = vmatpush1.bf16.msra.mxu0 0
    %1607 = vmatprep.subr.bf16.mxu0 0
    %1608 = vmatpush1.bf16.msra.mxu0 0
    %1609 = vmatprep.subr.bf16.mxu0 0
    %1610 = vmatpush1.bf16.msra.mxu0 0
    %1611 = vmatprep.subr.bf16.mxu0 0
    %1612 = vmatpush1.bf16.msra.mxu0 %v1599
    %1613 = vmatprep.subr.bf16.mxu0 0
    %1614 = vmatpush1.bf16.msra.mxu0 %v1584
    %1615 = vmatprep.subr.bf16.mxu0 0
    %1616 = vmatpush1.bf16.msra.mxu0 %v1582
    %1617 = vmatprep.subr.bf16.mxu0 0
    %1618 = vmatpush2.bf16.msra.mxu0 0
    %1619 = vmatprep.subr.bf16.mxu0 0
    %1620 = vmatpush2.bf16.msra.mxu0 0
    %1621 = vmatprep.subr.bf16.mxu0 0
    %1622 = vmatpush2.bf16.msra.mxu0 0
    %1623 = vmatprep.subr.bf16.mxu0 0
    %1624 = vmatpush2.bf16.msra.mxu0 0
    %1625 = vmatprep.subr.bf16.mxu0 0
    %1626 = vmatpush2.bf16.msra.mxu0 0
    %1627 = vmatprep.subr.bf16.mxu0 0
    %1628 = vmatpush2.bf16.msra.mxu0 0
    %1629 = vmatprep.subr.bf16.mxu0 0
    %1630 = vmatpush2.bf16.msra.mxu0 0
    %1631 = vmatprep.subr.bf16.mxu0 0
    %1632 = vmatpush2.bf16.msra.mxu0 0
    %1633 = vmatprep.mubr.bf16.mxu0 0
    %1634 = vmatmul.mubr.bf16.gmra.mxu0 %v1590
    %v1635 = vpop.f32.mrf.mxu0
    %v1636 = vadd.f32 0.0, %v1635
    %v1637 = vpop.f32.mrf.mxu0
    %v1638 = vpop.f32.mrf.mxu0
    %v1639 = vadd.f32 0.0, %v1638
    %v1640 = vpop.f32.mrf.mxu0
    %1641 = vmatprep.mubr.bf16.mxu0 0
    %1642 = vmatmul.mubr.bf16.gmra.mxu0 %v1593
    %v1643 = vpop.f32.mrf.mxu0
    %v1644 = vadd.f32 0.0, %v1643
    %v1645 = vpop.f32.mrf.mxu0
    %v1646 = vpop.f32.mrf.mxu0
    %v1647 = vadd.f32 0.0, %v1646
    %v1648 = vpop.f32.mrf.mxu0
    %1649 = vmatprep.mubr.bf16.mxu0 0
    %1650 = vmatmul.mubr.bf16.gmra.mxu0 %v1596
    %v1651 = vpop.f32.mrf.mxu0
    %v1652 = vadd.f32 0.0, %v1651
    %v1653 = vpop.f32.mrf.mxu0
    %v1654 = vpop.f32.mrf.mxu0
    %v1655 = vpop.f32.mrf.mxu0
    %1656 = vdwg.mxu0
    %1662 = vrot.lane.b32.xlu0 %v1196, 8
    %v1663 = vpop.permute.xlu0 %1662
    %1664 = vrot.lane.b32.xlu0 %v1199, 8
    %v1665 = vpop.permute.xlu0 %1664
    %1666 = vrot.lane.b32.xlu0 %v1204, 8
    %v1667 = vpop.permute.xlu0 %1666
    %1668 = vrot.lane.b32.xlu0 %v1207, 8
    %v1669 = vpop.permute.xlu0 %1668
    %1670 = vrot.lane.b32.xlu0 %v1212, 8
    %v1671 = vpop.permute.xlu0 %1670
    %1682 = vrot.lane.b32.xlu0 %v1416, 16
    %v1683 = vpop.permute.xlu0 %1682
    %1684 = vrot.lane.b32.xlu0 %v1419, 16
    %v1685 = vpop.permute.xlu0 %1684
    %1686 = vrot.lane.b32.xlu0 %v1424, 16
    %v1687 = vpop.permute.xlu0 %1686
    %1688 = vrot.lane.b32.xlu0 %v1427, 16
    %v1689 = vpop.permute.xlu0 %1688
    %1690 = vrot.lane.b32.xlu0 %v1432, 16
    %v1691 = vpop.permute.xlu0 %1690
    %1702 = vrot.lane.b32.xlu0 %v1636, 24
    %v1703 = vpop.permute.xlu0 %1702
    %1704 = vrot.lane.b32.xlu0 %v1639, 24
    %v1705 = vpop.permute.xlu0 %1704
    %1706 = vrot.lane.b32.xlu0 %v1644, 24
    %v1707 = vpop.permute.xlu0 %1706
    %1708 = vrot.lane.b32.xlu0 %v1647, 24
    %v1709 = vpop.permute.xlu0 %1708
    %1710 = vrot.lane.b32.xlu0 %v1652, 24
    %v1711 = vpop.permute.xlu0 %1710
    %v1717 = vsel %vm782, %v973, %v1663
    %v1718 = vsel %vm782, %v976, %v1665
    %v1719 = vsel %vm782, %v981, %v1667
    %v1720 = vsel %vm782, %v984, %v1669
    %v1721 = vsel %vm782, %v989, %v1671
    %v1722 = vsel %vm421, %v1717, %v1683
    %v1723 = vsel %vm421, %v1718, %v1685
    %v1724 = vsel %vm421, %v1719, %v1687
    %v1725 = vsel %vm421, %v1720, %v1689
    %v1726 = vsel %vm421, %v1721, %v1691
    %vm1727 = vcmask 195584
    %v1728 = vsel %vm1727, %v1722, %v1703
    %v1729 = vsel %vm1727, %v1723, %v1705
    %v1730 = vsel %vm1727, %v1724, %v1707
    %v1731 = vsel %vm1727, %v1725, %v1709
    %v1732 = vsel %vm1727, %v1726, %v1711
    %v1733 = vpack.c.bf16 %v1729, %v1728
    %v1734 = vpack.c.bf16 %v1731, %v1730
    %v1735 = vpack.c.bf16 %v1732, %v1732
    %v1736 = vld [vmem:[%s21] sm:$0xf]
    %v1737 = vld [vmem:[%s21 + $0x4] sm:$0xf]
    %v1738 = vld [vmem:[%s21 + $0x8] sm:$0xf]
    %v1739 = vld [vmem:[%s21 + $0xc] sm:$0xf]
    %v1740 = vld [vmem:[%s23] sm:$0x1]
    %v1742 = vlaneseq
    %v1743 = vshrl.u32 %v1742, 7
    %v1744 = vsub.s32 0, %v1743
    %v1745 = vrot.slane %v1740, %v1744
    %v1751 = vunpack.c.l.b16 %v1736
    %v1752 = vunpack.c.l.b16 %v1737
    %v1753 = vunpack.c.l.b16 %v1738
    %v1754 = vunpack.c.l.b16 %v1739
    %v1755 = vpack.c.b16 %v1752, %v1751
    %v1756 = vpack.c.b16 %v1754, %v1753
    %v1760 = vsel %vm300, %v1733, 0
    %v1763 = vsel %vm300, %v1734, 0
    %v1766 = vsel %vm300, %v1735, 0
    %1768 = vmatprep.subr.bf16.mxu0 0
    %1769 = vmatpush1.bf16.msra.mxu0 0
    %1770 = vmatprep.subr.bf16.mxu0 0
    %1771 = vmatpush1.bf16.msra.mxu0 0
    %1772 = vmatprep.subr.bf16.mxu0 0
    %1773 = vmatpush1.bf16.msra.mxu0 0
    %1774 = vmatprep.subr.bf16.mxu0 0
    %1775 = vmatpush1.bf16.msra.mxu0 0
    %1776 = vmatprep.subr.bf16.mxu0 0
    %1777 = vmatpush1.bf16.msra.mxu0 0
    %1778 = vmatprep.subr.bf16.mxu0 0
    %1779 = vmatpush1.bf16.msra.mxu0 0
    %1780 = vmatprep.subr.bf16.mxu0 0
    %1781 = vmatpush1.bf16.msra.mxu0 %v1756
    %1782 = vmatprep.subr.bf16.mxu0 0
    %1783 = vmatpush1.bf16.msra.mxu0 %v1755
    %1784 = vmatprep.subr.bf16.mxu0 0
    %1785 = vmatpush2.bf16.msra.mxu0 0
    %1786 = vmatprep.subr.bf16.mxu0 0
    %1787 = vmatpush2.bf16.msra.mxu0 0
    %1788 = vmatprep.subr.bf16.mxu0 0
    %1789 = vmatpush2.bf16.msra.mxu0 0
    %1790 = vmatprep.subr.bf16.mxu0 0
    %1791 = vmatpush2.bf16.msra.mxu0 0
    %1792 = vmatprep.subr.bf16.mxu0 0
    %1793 = vmatpush2.bf16.msra.mxu0 0
    %1794 = vmatprep.subr.bf16.mxu0 0
    %1795 = vmatpush2.bf16.msra.mxu0 0
    %1796 = vmatprep.subr.bf16.mxu0 0
    %1797 = vmatpush2.bf16.msra.mxu0 0
    %1798 = vmatprep.subr.bf16.mxu0 0
    %1799 = vmatpush2.bf16.msra.mxu0 0
    %1800 = vmatprep.mubr.bf16.mxu0 0
    %1801 = vmatmul.mubr.bf16.gmra.mxu0 %v1760
    %v1802 = vpop.f32.mrf.mxu0
    %v1803 = vadd.f32 %v1745, %v1802
    %v1804 = vpop.f32.mrf.mxu0
    %v1805 = vpop.f32.mrf.mxu0
    %v1806 = vadd.f32 %v1745, %v1805
    %v1807 = vpop.f32.mrf.mxu0
    %1808 = vmatprep.mubr.bf16.mxu0 0
    %1809 = vmatmul.mubr.bf16.gmra.mxu0 %v1763
    %v1810 = vpop.f32.mrf.mxu0
    %v1811 = vadd.f32 %v1745, %v1810
    %v1812 = vpop.f32.mrf.mxu0
    %v1813 = vpop.f32.mrf.mxu0
    %v1814 = vadd.f32 %v1745, %v1813
    %v1815 = vpop.f32.mrf.mxu0
    %1816 = vmatprep.mubr.bf16.mxu0 0
    %1817 = vmatmul.mubr.bf16.gmra.mxu0 %v1766
    %v1818 = vpop.f32.mrf.mxu0
    %v1819 = vadd.f32 %v1745, %v1818
    %v1820 = vpop.f32.mrf.mxu0
    %v1821 = vpop.f32.mrf.mxu0
    %v1822 = vpop.f32.mrf.mxu0
    %1823 = vdwg.mxu0
    %v1824 = vadd.f32 %v385, %v1803
    %v1825 = vadd.f32 %v386, %v1806
    %v1826 = vadd.f32 %v387, %v1811
    %v1827 = vadd.f32 %v388, %v1814
    %v1828 = vadd.f32 %v389, %v1819
    %v1829 = vld [vmem:[%s25] sm:$0x1]
    %v1830 = vld [vmem:[%s27] sm:$0x1]
    %v1831 = vsel %vm300, %v1824, 0.0
    %1832 = vadd.xlane.f32.xlu0 %v1831
    %v1833 = vpop.xlane.xlu0 %1832
    %v1834 = vsel %vm300, %v1825, 0.0
    %1835 = vadd.xlane.f32.xlu0 %v1834
    %v1836 = vpop.xlane.xlu0 %1835
    %v1837 = vsel %vm300, %v1826, 0.0
    %1838 = vadd.xlane.f32.xlu0 %v1837
    %v1839 = vpop.xlane.xlu0 %1838
    %v1840 = vsel %vm300, %v1827, 0.0
    %1841 = vadd.xlane.f32.xlu0 %v1840
    %v1842 = vpop.xlane.xlu0 %1841
    %v1843 = vsel %vm313, %v1828, 0.0
    %1844 = vadd.xlane.f32.xlu0 %v1843
    %v1845 = vpop.xlane.xlu0 %1844
    %v1846 = vmul.f32 %v1833, %v317
    %v1847 = vmul.f32 %v1836, %v317
    %v1848 = vmul.f32 %v1839, %v317
    %v1849 = vmul.f32 %v1842, %v317
    %v1850 = vmul.f32 %v1845, %v317
    %v1851 = vsub.f32 %v1824, %v1846
    %v1852 = vsub.f32 %v1825, %v1847
    %v1853 = vsub.f32 %v1826, %v1848
    %v1854 = vsub.f32 %v1827, %v1849
    %v1855 = vsub.f32 %v1828, %v1850
    %v1856 = vmul.f32 %v1851, %v1851
    %v1857 = vmul.f32 %v1852, %v1852
    %v1858 = vmul.f32 %v1853, %v1853
    %v1859 = vmul.f32 %v1854, %v1854
    %v1860 = vmul.f32 %v1855, %v1855
    %v1861 = vsel %vm300, %v1856, 0.0
    %1862 = vadd.xlane.f32.xlu0 %v1861
    %v1863 = vpop.xlane.xlu0 %1862
    %v1864 = vsel %vm300, %v1857, 0.0
    %1865 = vadd.xlane.f32.xlu0 %v1864
    %v1866 = vpop.xlane.xlu0 %1865
    %v1867 = vsel %vm300, %v1858, 0.0
    %1868 = vadd.xlane.f32.xlu0 %v1867
    %v1869 = vpop.xlane.xlu0 %1868
    %v1870 = vsel %vm300, %v1859, 0.0
    %1871 = vadd.xlane.f32.xlu0 %v1870
    %v1872 = vpop.xlane.xlu0 %1871
    %v1873 = vsel %vm313, %v1860, 0.0
    %1874 = vadd.xlane.f32.xlu0 %v1873
    %v1875 = vpop.xlane.xlu0 %1874
    %v1876 = vmul.f32 %v1863, %v317
    %v1877 = vmul.f32 %v1866, %v317
    %v1878 = vmul.f32 %v1869, %v317
    %v1879 = vmul.f32 %v1872, %v317
    %v1880 = vmul.f32 %v1875, %v317
    %v1881 = vadd.f32 %v1876, 1e-06
    %v1882 = vadd.f32 %v1877, 1e-06
    %v1883 = vadd.f32 %v1878, 1e-06
    %v1884 = vadd.f32 %v1879, 1e-06
    %v1885 = vadd.f32 %v1880, 1e-06
    %v1886 = vrsqrt.pop %v1881
    %v1887 = vrsqrt.pop %v1882
    %v1888 = vrsqrt.pop %v1883
    %v1889 = vrsqrt.pop %v1884
    %v1890 = vrsqrt.pop %v1885
    %v1891 = vmul.f32 %v1851, %v1886
    %v1892 = vmul.f32 %v1852, %v1887
    %v1893 = vmul.f32 %v1853, %v1888
    %v1894 = vmul.f32 %v1854, %v1889
    %v1895 = vmul.f32 %v1855, %v1890
    %v1897 = vlaneseq
    %v1898 = vshrl.u32 %v1897, 7
    %v1899 = vsub.s32 0, %v1898
    %v1900 = vrot.slane %v1829, %v1899
    %v1902 = vmul.f32 %v1891, %v1900
    %v1903 = vmul.f32 %v1892, %v1900
    %v1904 = vmul.f32 %v1893, %v1900
    %v1905 = vmul.f32 %v1894, %v1900
    %v1906 = vmul.f32 %v1895, %v1900
    %v1908 = vlaneseq
    %v1909 = vshrl.u32 %v1908, 7
    %v1910 = vsub.s32 0, %v1909
    %v1911 = vrot.slane %v1830, %v1910
    %v1913 = vadd.f32 %v1902, %v1911
    %v1914 = vadd.f32 %v1903, %v1911
    %v1915 = vadd.f32 %v1904, %v1911
    %v1916 = vadd.f32 %v1905, %v1911
    %v1917 = vadd.f32 %v1906, %v1911
    %v1918 = vpack.c.bf16 %v1914, %v1913
    %v1919 = vpack.c.bf16 %v1916, %v1915
    %v1920 = vpack.c.bf16 %v1917, %v1917
    %v1921 = vld [vmem:[%s29] sm:$0xf]
    %v1922 = vld [vmem:[%s29 + $0x4] sm:$0xf]
    %v1923 = vld [vmem:[%s29 + $0x8] sm:$0xf]
    %v1924 = vld [vmem:[%s29 + $0xc] sm:$0xf]
    %v1925 = vld [vmem:[%s31] sm:$0x1]
    %v1927 = vlaneseq
    %v1928 = vshrl.u32 %v1927, 7
    %v1929 = vsub.s32 0, %v1928
    %v1930 = vrot.slane %v1925, %v1929
    %v1936 = vunpack.c.l.b16 %v1921
    %v1937 = vunpack.c.l.b16 %v1922
    %v1938 = vunpack.c.l.b16 %v1923
    %v1939 = vunpack.c.l.b16 %v1924
    %v1940 = vpack.c.b16 %v1937, %v1936
    %v1941 = vpack.c.b16 %v1939, %v1938
    %v1945 = vsel %vm300, %v1918, 0
    %v1948 = vsel %vm300, %v1919, 0
    %v1951 = vsel %vm300, %v1920, 0
    %1953 = vmatprep.subr.bf16.mxu0 0
    %1954 = vmatpush1.bf16.msra.mxu0 0
    %1955 = vmatprep.subr.bf16.mxu0 0
    %1956 = vmatpush1.bf16.msra.mxu0 0
    %1957 = vmatprep.subr.bf16.mxu0 0
    %1958 = vmatpush1.bf16.msra.mxu0 0
    %1959 = vmatprep.subr.bf16.mxu0 0
    %1960 = vmatpush1.bf16.msra.mxu0 0
    %1961 = vmatprep.subr.bf16.mxu0 0
    %1962 = vmatpush1.bf16.msra.mxu0 0
    %1963 = vmatprep.subr.bf16.mxu0 0
    %1964 = vmatpush1.bf16.msra.mxu0 0
    %1965 = vmatprep.subr.bf16.mxu0 0
    %1966 = vmatpush1.bf16.msra.mxu0 %v1941
    %1967 = vmatprep.subr.bf16.mxu0 0
    %1968 = vmatpush1.bf16.msra.mxu0 %v1940
    %1969 = vmatprep.subr.bf16.mxu0 0
    %1970 = vmatpush2.bf16.msra.mxu0 0
    %1971 = vmatprep.subr.bf16.mxu0 0
    %1972 = vmatpush2.bf16.msra.mxu0 0
    %1973 = vmatprep.subr.bf16.mxu0 0
    %1974 = vmatpush2.bf16.msra.mxu0 0
    %1975 = vmatprep.subr.bf16.mxu0 0
    %1976 = vmatpush2.bf16.msra.mxu0 0
    %1977 = vmatprep.subr.bf16.mxu0 0
    %1978 = vmatpush2.bf16.msra.mxu0 0
    %1979 = vmatprep.subr.bf16.mxu0 0
    %1980 = vmatpush2.bf16.msra.mxu0 0
    %1981 = vmatprep.subr.bf16.mxu0 0
    %1982 = vmatpush2.bf16.msra.mxu0 0
    %1983 = vmatprep.subr.bf16.mxu0 0
    %1984 = vmatpush2.bf16.msra.mxu0 0
    %1985 = vmatprep.mubr.bf16.mxu0 0
    %1986 = vmatmul.mubr.bf16.gmra.mxu0 %v1945
    %v1987 = vpop.f32.mrf.mxu0
    %v1988 = vadd.f32 %v1930, %v1987
    %v1989 = vpop.f32.mrf.mxu0
    %v1990 = vpop.f32.mrf.mxu0
    %v1991 = vadd.f32 %v1930, %v1990
    %v1992 = vpop.f32.mrf.mxu0
    %1993 = vmatprep.mubr.bf16.mxu0 0
    %1994 = vmatmul.mubr.bf16.gmra.mxu0 %v1948
    %v1995 = vpop.f32.mrf.mxu0
    %v1996 = vadd.f32 %v1930, %v1995
    %v1997 = vpop.f32.mrf.mxu0
    %v1998 = vpop.f32.mrf.mxu0
    %v1999 = vadd.f32 %v1930, %v1998
    %v2000 = vpop.f32.mrf.mxu0
    %2001 = vmatprep.mubr.bf16.mxu0 0
    %2002 = vmatmul.mubr.bf16.gmra.mxu0 %v1951
    %v2003 = vpop.f32.mrf.mxu0
    %v2004 = vadd.f32 %v1930, %v2003
    %v2005 = vpop.f32.mrf.mxu0
    %v2006 = vpop.f32.mrf.mxu0
    %v2007 = vpop.f32.mrf.mxu0
    %2008 = vdwg.mxu0
    %v2009 = vmul.f32 %v1988, 0.5
    %v2010 = vmul.f32 %v1991, 0.5
    %v2011 = vmul.f32 %v1996, 0.5
    %v2012 = vmul.f32 %v1999, 0.5
    %v2013 = vmul.f32 %v2004, 0.5
    %v2014 = vmul.f32 %v1988, 0.044715
    %v2015 = vmul.f32 %v1991, 0.044715
    %v2016 = vmul.f32 %v1996, 0.044715
    %v2017 = vmul.f32 %v1999, 0.044715
    %v2018 = vmul.f32 %v2004, 0.044715
    %v2019 = vmul.f32 %v2014, %v1988
    %v2020 = vmul.f32 %v2015, %v1991
    %v2021 = vmul.f32 %v2016, %v1996
    %v2022 = vmul.f32 %v2017, %v1999
    %v2023 = vmul.f32 %v2018, %v2004
    %v2024 = vmul.f32 %v2019, %v1988
    %v2025 = vmul.f32 %v2020, %v1991
    %v2026 = vmul.f32 %v2021, %v1996
    %v2027 = vmul.f32 %v2022, %v1999
    %v2028 = vmul.f32 %v2023, %v2004
    %v2029 = vadd.f32 %v1988, %v2024
    %v2030 = vadd.f32 %v1991, %v2025
    %v2031 = vadd.f32 %v1996, %v2026
    %v2032 = vadd.f32 %v1999, %v2027
    %v2033 = vadd.f32 %v2004, %v2028
    %v2034 = vmul.f32 %v2029, 0.7978846
    %v2035 = vmul.f32 %v2030, 0.7978846
    %v2036 = vmul.f32 %v2031, 0.7978846
    %v2037 = vmul.f32 %v2032, 0.7978846
    %v2038 = vmul.f32 %v2033, 0.7978846
    %v2039 = vtanh.pop %v2034
    %v2040 = vtanh.pop %v2035
    %v2041 = vtanh.pop %v2036
    %v2042 = vtanh.pop %v2037
    %v2043 = vtanh.pop %v2038
    %v2044 = vadd.f32 %v2039, 1.0
    %v2045 = vadd.f32 %v2040, 1.0
    %v2046 = vadd.f32 %v2041, 1.0
    %v2047 = vadd.f32 %v2042, 1.0
    %v2048 = vadd.f32 %v2043, 1.0
    %v2049 = vmul.f32 %v2009, %v2044
    %v2050 = vmul.f32 %v2010, %v2045
    %v2051 = vmul.f32 %v2011, %v2046
    %v2052 = vmul.f32 %v2012, %v2047
    %v2053 = vmul.f32 %v2013, %v2048
    %v2054 = vpack.c.bf16 %v2050, %v2049
    %v2055 = vpack.c.bf16 %v2052, %v2051
    %v2056 = vpack.c.bf16 %v2053, %v2053
    %v2057 = vld [vmem:[%s33] sm:$0xf]
    %v2058 = vld [vmem:[%s33 + $0x4] sm:$0xf]
    %v2059 = vld [vmem:[%s33 + $0x8] sm:$0xf]
    %v2060 = vld [vmem:[%s33 + $0xc] sm:$0xf]
    %v2061 = vld [vmem:[%s33 + $0x10] sm:$0xf]
    %v2062 = vld [vmem:[%s33 + $0x14] sm:$0xf]
    %v2063 = vld [vmem:[%s33 + $0x18] sm:$0xf]
    %v2064 = vld [vmem:[%s33 + $0x1c] sm:$0xf]
    %v2065 = vld [vmem:[%s33 + $0x20] sm:$0xf]
    %v2066 = vld [vmem:[%s33 + $0x24] sm:$0xf]
    %v2067 = vld [vmem:[%s33 + $0x28] sm:$0xf]
    %v2068 = vld [vmem:[%s33 + $0x2c] sm:$0xf]
    %v2069 = vld [vmem:[%s33 + $0x30] sm:$0xf]
    %v2070 = vld [vmem:[%s33 + $0x34] sm:$0xf]
    %v2071 = vld [vmem:[%s33 + $0x38] sm:$0xf]
    %v2072 = vld [vmem:[%s33 + $0x3c] sm:$0xf]
    %v2089 = vunpack.c.l.b16 %v2057
    %v2090 = vunpack.c.l.b16 %v2058
    %v2091 = vunpack.c.l.b16 %v2059
    %v2092 = vunpack.c.l.b16 %v2060
    %v2093 = vunpack.c.l.b16 %v2061
    %v2094 = vunpack.c.l.b16 %v2062
    %v2095 = vunpack.c.l.b16 %v2063
    %v2096 = vunpack.c.l.b16 %v2064
    %v2097 = vunpack.c.l.b16 %v2065
    %v2098 = vunpack.c.l.b16 %v2066
    %v2099 = vunpack.c.l.b16 %v2067
    %v2100 = vunpack.c.l.b16 %v2068
    %v2101 = vunpack.c.l.b16 %v2069
    %v2102 = vunpack.c.l.b16 %v2070
    %v2103 = vunpack.c.l.b16 %v2071
    %v2104 = vunpack.c.l.b16 %v2072
    %v2105 = vpack.c.b16 %v2090, %v2089
    %v2106 = vpack.c.b16 %v2092, %v2091
    %v2107 = vpack.c.b16 %v2094, %v2093
    %v2108 = vpack.c.b16 %v2096, %v2095
    %v2109 = vpack.c.b16 %v2098, %v2097
    %v2110 = vpack.c.b16 %v2100, %v2099
    %v2111 = vpack.c.b16 %v2102, %v2101
    %v2112 = vpack.c.b16 %v2104, %v2103
    %2121 = vmatprep.subr.bf16.mxu0 0
    %2122 = vmatpush1.bf16.msra.mxu0 %v2112
    %2123 = vmatprep.subr.bf16.mxu0 0
    %2124 = vmatpush1.bf16.msra.mxu0 %v2111
    %2125 = vmatprep.subr.bf16.mxu0 0
    %2126 = vmatpush1.bf16.msra.mxu0 %v2110
    %2127 = vmatprep.subr.bf16.mxu0 0
    %2128 = vmatpush1.bf16.msra.mxu0 %v2109
    %2129 = vmatprep.subr.bf16.mxu0 0
    %2130 = vmatpush1.bf16.msra.mxu0 %v2108
    %2131 = vmatprep.subr.bf16.mxu0 0
    %2132 = vmatpush1.bf16.msra.mxu0 %v2107
    %2133 = vmatprep.subr.bf16.mxu0 0
    %2134 = vmatpush1.bf16.msra.mxu0 %v2106
    %2135 = vmatprep.subr.bf16.mxu0 0
    %2136 = vmatpush1.bf16.msra.mxu0 %v2105
    %2137 = vmatprep.subr.bf16.mxu0 0
    %2138 = vmatpush2.bf16.msra.mxu0 0
    %2139 = vmatprep.subr.bf16.mxu0 0
    %2140 = vmatpush2.bf16.msra.mxu0 0
    %2141 = vmatprep.subr.bf16.mxu0 0
    %2142 = vmatpush2.bf16.msra.mxu0 0
    %2143 = vmatprep.subr.bf16.mxu0 0
    %2144 = vmatpush2.bf16.msra.mxu0 0
    %2145 = vmatprep.subr.bf16.mxu0 0
    %2146 = vmatpush2.bf16.msra.mxu0 0
    %2147 = vmatprep.subr.bf16.mxu0 0
    %2148 = vmatpush2.bf16.msra.mxu0 0
    %2149 = vmatprep.subr.bf16.mxu0 0
    %2150 = vmatpush2.bf16.msra.mxu0 0
    %2151 = vmatprep.subr.bf16.mxu0 0
    %2152 = vmatpush2.bf16.msra.mxu0 0
    %2153 = vmatprep.mubr.bf16.mxu0 0
    %2154 = vmatmul.mubr.bf16.gmra.mxu0 %v2054
    %v2155 = vpop.f32.mrf.mxu0
    %v2156 = vadd.f32 0.0, %v2155
    %v2157 = vpop.f32.mrf.mxu0
    %v2158 = vpop.f32.mrf.mxu0
    %v2159 = vadd.f32 0.0, %v2158
    %v2160 = vpop.f32.mrf.mxu0
    %2161 = vmatprep.mubr.bf16.mxu0 0
    %2162 = vmatmul.mubr.bf16.gmra.mxu0 %v2055
    %v2163 = vpop.f32.mrf.mxu0
    %v2164 = vadd.f32 0.0, %v2163
    %v2165 = vpop.f32.mrf.mxu0
    %v2166 = vpop.f32.mrf.mxu0
    %v2167 = vadd.f32 0.0, %v2166
    %v2168 = vpop.f32.mrf.mxu0
    %2169 = vmatprep.mubr.bf16.mxu0 0
    %2170 = vmatmul.mubr.bf16.gmra.mxu0 %v2056
    %v2171 = vpop.f32.mrf.mxu0
    %v2172 = vadd.f32 0.0, %v2171
    %v2173 = vpop.f32.mrf.mxu0
    %v2174 = vpop.f32.mrf.mxu0
    %v2175 = vpop.f32.mrf.mxu0
    %2176 = vdwg.mxu0
    %v2177 = vadd.f32 %v1824, %v2156
    %v2178 = vadd.f32 %v1825, %v2159
    %v2179 = vadd.f32 %v1826, %v2164
    %v2180 = vadd.f32 %v1827, %v2167
    %v2181 = vadd.f32 %v1828, %v2172
    %v2182 = vld [vmem:[%s35] sm:$0x1]
    %v2184 = vlaneseq
    %v2185 = vshrl.u32 %v2184, 7
    %v2186 = vsub.s32 0, %v2185
    %v2187 = vrot.slane %v2182, %v2186
    %v2189 = vadd.f32 %v2177, %v2187
    %v2190 = vadd.f32 %v2178, %v2187
    %v2191 = vadd.f32 %v2179, %v2187
    %v2192 = vadd.f32 %v2180, %v2187
    %v2193 = vadd.f32 %v2181, %v2187
    %v2194 = vld [vmem:[%s55] sm:$0x1]
    %v2195 = vld [vmem:[%s57] sm:$0x1]
    %v2196 = vsel %vm300, %v571, 0.0
    %2197 = vadd.xlane.f32.xlu0 %v2196
    %v2198 = vpop.xlane.xlu0 %2197
    %v2199 = vsel %vm300, %v572, 0.0
    %2200 = vadd.xlane.f32.xlu0 %v2199
    %v2201 = vpop.xlane.xlu0 %2200
    %v2202 = vsel %vm300, %v573, 0.0
    %2203 = vadd.xlane.f32.xlu0 %v2202
    %v2204 = vpop.xlane.xlu0 %2203
    %v2205 = vsel %vm300, %v574, 0.0
    %2206 = vadd.xlane.f32.xlu0 %v2205
    %v2207 = vpop.xlane.xlu0 %2206
    %v2208 = vsel %vm313, %v575, 0.0
    %2209 = vadd.xlane.f32.xlu0 %v2208
    %v2210 = vpop.xlane.xlu0 %2209
    %v2211 = vmul.f32 %v2198, %v317
    %v2212 = vmul.f32 %v2201, %v317
    %v2213 = vmul.f32 %v2204, %v317
    %v2214 = vmul.f32 %v2207, %v317
    %v2215 = vmul.f32 %v2210, %v317
    %v2216 = vsub.f32 %v571, %v2211
    %v2217 = vsub.f32 %v572, %v2212
    %v2218 = vsub.f32 %v573, %v2213
    %v2219 = vsub.f32 %v574, %v2214
    %v2220 = vsub.f32 %v575, %v2215
    %v2221 = vmul.f32 %v2216, %v2216
    %v2222 = vmul.f32 %v2217, %v2217
    %v2223 = vmul.f32 %v2218, %v2218
    %v2224 = vmul.f32 %v2219, %v2219
    %v2225 = vmul.f32 %v2220, %v2220
    %v2226 = vsel %vm300, %v2221, 0.0
    %2227 = vadd.xlane.f32.xlu0 %v2226
    %v2228 = vpop.xlane.xlu0 %2227
    %v2229 = vsel %vm300, %v2222, 0.0
    %2230 = vadd.xlane.f32.xlu0 %v2229
    %v2231 = vpop.xlane.xlu0 %2230
    %v2232 = vsel %vm300, %v2223, 0.0
    %2233 = vadd.xlane.f32.xlu0 %v2232
    %v2234 = vpop.xlane.xlu0 %2233
    %v2235 = vsel %vm300, %v2224, 0.0
    %2236 = vadd.xlane.f32.xlu0 %v2235
    %v2237 = vpop.xlane.xlu0 %2236
    %v2238 = vsel %vm313, %v2225, 0.0
    %2239 = vadd.xlane.f32.xlu0 %v2238
    %v2240 = vpop.xlane.xlu0 %2239
    %v2241 = vmul.f32 %v2228, %v317
    %v2242 = vmul.f32 %v2231, %v317
    %v2243 = vmul.f32 %v2234, %v317
    %v2244 = vmul.f32 %v2237, %v317
    %v2245 = vmul.f32 %v2240, %v317
    %v2246 = vadd.f32 %v2241, 1e-06
    %v2247 = vadd.f32 %v2242, 1e-06
    %v2248 = vadd.f32 %v2243, 1e-06
    %v2249 = vadd.f32 %v2244, 1e-06
    %v2250 = vadd.f32 %v2245, 1e-06
    %v2251 = vrsqrt.pop %v2246
    %v2252 = vrsqrt.pop %v2247
    %v2253 = vrsqrt.pop %v2248
    %v2254 = vrsqrt.pop %v2249
    %v2255 = vrsqrt.pop %v2250
    %v2256 = vmul.f32 %v2216, %v2251
    %v2257 = vmul.f32 %v2217, %v2252
    %v2258 = vmul.f32 %v2218, %v2253
    %v2259 = vmul.f32 %v2219, %v2254
    %v2260 = vmul.f32 %v2220, %v2255
    %v2262 = vlaneseq
    %v2263 = vshrl.u32 %v2262, 7
    %v2264 = vsub.s32 0, %v2263
    %v2265 = vrot.slane %v2194, %v2264
    %v2267 = vmul.f32 %v2256, %v2265
    %v2268 = vmul.f32 %v2257, %v2265
    %v2269 = vmul.f32 %v2258, %v2265
    %v2270 = vmul.f32 %v2259, %v2265
    %v2271 = vmul.f32 %v2260, %v2265
    %v2273 = vlaneseq
    %v2274 = vshrl.u32 %v2273, 7
    %v2275 = vsub.s32 0, %v2274
    %v2276 = vrot.slane %v2195, %v2275
    %v2278 = vadd.f32 %v2267, %v2276
    %v2279 = vadd.f32 %v2268, %v2276
    %v2280 = vadd.f32 %v2269, %v2276
    %v2281 = vadd.f32 %v2270, %v2276
    %v2282 = vadd.f32 %v2271, %v2276
    %v2283 = vpack.c.bf16 %v2279, %v2278
    %v2284 = vpack.c.bf16 %v2281, %v2280
    %v2285 = vpack.c.bf16 %v2282, %v2282
    %v2286 = vld [vmem:[%s59] sm:$0xf]
    %v2287 = vld [vmem:[%s59 + $0x4] sm:$0xf]
    %v2288 = vld [vmem:[%s59 + $0x8] sm:$0xf]
    %v2289 = vld [vmem:[%s59 + $0xc] sm:$0xf]
    %v2290 = vld [vmem:[%s61] sm:$0x1]
    %v2292 = vlaneseq
    %v2293 = vshrl.u32 %v2292, 7
    %v2294 = vsub.s32 0, %v2293
    %v2295 = vrot.slane %v2290, %v2294
    %v2301 = vunpack.c.l.b16 %v2286
    %v2302 = vunpack.c.l.b16 %v2287
    %v2303 = vunpack.c.l.b16 %v2288
    %v2304 = vunpack.c.l.b16 %v2289
    %v2305 = vpack.c.b16 %v2302, %v2301
    %v2306 = vpack.c.b16 %v2304, %v2303
    %v2310 = vsel %vm300, %v2283, 0
    %v2313 = vsel %vm300, %v2284, 0
    %v2316 = vsel %vm300, %v2285, 0
    %2318 = vmatprep.subr.bf16.mxu0 0
    %2319 = vmatpush1.bf16.msra.mxu0 0
    %2320 = vmatprep.subr.bf16.mxu0 0
    %2321 = vmatpush1.bf16.msra.mxu0 0
    %2322 = vmatprep.subr.bf16.mxu0 0
    %2323 = vmatpush1.bf16.msra.mxu0 0
    %2324 = vmatprep.subr.bf16.mxu0 0
    %2325 = vmatpush1.bf16.msra.mxu0 0
    %2326 = vmatprep.subr.bf16.mxu0 0
    %2327 = vmatpush1.bf16.msra.mxu0 0
    %2328 = vmatprep.subr.bf16.mxu0 0
    %2329 = vmatpush1.bf16.msra.mxu0 0
    %2330 = vmatprep.subr.bf16.mxu0 0
    %2331 = vmatpush1.bf16.msra.mxu0 %v2306
    %2332 = vmatprep.subr.bf16.mxu0 0
    %2333 = vmatpush1.bf16.msra.mxu0 %v2305
    %2334 = vmatprep.subr.bf16.mxu0 0
    %2335 = vmatpush2.bf16.msra.mxu0 0
    %2336 = vmatprep.subr.bf16.mxu0 0
    %2337 = vmatpush2.bf16.msra.mxu0 0
    %2338 = vmatprep.subr.bf16.mxu0 0
    %2339 = vmatpush2.bf16.msra.mxu0 0
    %2340 = vmatprep.subr.bf16.mxu0 0
    %2341 = vmatpush2.bf16.msra.mxu0 0
    %2342 = vmatprep.subr.bf16.mxu0 0
    %2343 = vmatpush2.bf16.msra.mxu0 0
    %2344 = vmatprep.subr.bf16.mxu0 0
    %2345 = vmatpush2.bf16.msra.mxu0 0
    %2346 = vmatprep.subr.bf16.mxu0 0
    %2347 = vmatpush2.bf16.msra.mxu0 0
    %2348 = vmatprep.subr.bf16.mxu0 0
    %2349 = vmatpush2.bf16.msra.mxu0 0
    %2350 = vmatprep.mubr.bf16.mxu0 0
    %2351 = vmatmul.mubr.bf16.gmra.mxu0 %v2310
    %v2352 = vpop.f32.mrf.mxu0
    %v2353 = vadd.f32 %v2295, %v2352
    %v2354 = vpop.f32.mrf.mxu0
    %v2355 = vpop.f32.mrf.mxu0
    %v2356 = vadd.f32 %v2295, %v2355
    %v2357 = vpop.f32.mrf.mxu0
    %2358 = vmatprep.mubr.bf16.mxu0 0
    %2359 = vmatmul.mubr.bf16.gmra.mxu0 %v2313
    %v2360 = vpop.f32.mrf.mxu0
    %v2361 = vadd.f32 %v2295, %v2360
    %v2362 = vpop.f32.mrf.mxu0
    %v2363 = vpop.f32.mrf.mxu0
    %v2364 = vadd.f32 %v2295, %v2363
    %v2365 = vpop.f32.mrf.mxu0
    %2366 = vmatprep.mubr.bf16.mxu0 0
    %2367 = vmatmul.mubr.bf16.gmra.mxu0 %v2316
    %v2368 = vpop.f32.mrf.mxu0
    %v2369 = vadd.f32 %v2295, %v2368
    %v2370 = vpop.f32.mrf.mxu0
    %v2371 = vpop.f32.mrf.mxu0
    %v2372 = vpop.f32.mrf.mxu0
    %2373 = vdwg.mxu0
    %v2374 = vmul.f32 %v2353, 0.35355338
    %v2375 = vmul.f32 %v2356, 0.35355338
    %v2376 = vmul.f32 %v2361, 0.35355338
    %v2377 = vmul.f32 %v2364, 0.35355338
    %v2378 = vmul.f32 %v2369, 0.35355338
    %v2379 = vpack.c.bf16 %v2375, %v2374
    %v2380 = vpack.c.bf16 %v2377, %v2376
    %v2381 = vpack.c.bf16 %v2378, %v2378
    %v2382 = vpack.c.bf16 %v2356, %v2353
    %v2383 = vpack.c.bf16 %v2364, %v2361
    %v2384 = vpack.c.bf16 %v2369, %v2369
    %2388 = vrot.lane.b32.xlu0 %v2382, 96
    %v2389 = vpop.permute.xlu0 %2388
    %2390 = vrot.lane.b32.xlu0 %v2383, 96
    %v2391 = vpop.permute.xlu0 %2390
    %2392 = vrot.lane.b32.xlu0 %v2384, 96
    %v2393 = vpop.permute.xlu0 %2392
    %v2395 = vsel %vm782, %v2379, 0
    %v2398 = vsel %vm782, %v2380, 0
    %v2401 = vsel %vm782, %v2381, 0
    %v2404 = vsel %vm782, %v2389, 0
    %v2407 = vsel %vm782, %v2391, 0
    %v2410 = vsel %vm782, %v2393, 0
    %2412 = vmatprep.subr.bf16.mxu0 0
    %2413 = vmatpush1.bf16.xpose.msra.mxu0 0
    %2414 = vmatprep.subr.bf16.mxu0 0
    %2415 = vmatpush1.bf16.xpose.msra.mxu0 0
    %2416 = vmatprep.subr.bf16.mxu0 0
    %2417 = vmatpush1.bf16.xpose.msra.mxu0 0
    %2418 = vmatprep.subr.bf16.mxu0 0
    %2419 = vmatpush1.bf16.xpose.msra.mxu0 0
    %2420 = vmatprep.subr.bf16.mxu0 0
    %2421 = vmatpush1.bf16.xpose.msra.mxu0 0
    %2422 = vmatprep.subr.bf16.mxu0 0
    %2423 = vmatpush1.bf16.xpose.msra.mxu0 %v2410
    %2424 = vmatprep.subr.bf16.mxu0 0
    %2425 = vmatpush1.bf16.xpose.msra.mxu0 %v2407
    %2426 = vmatprep.subr.bf16.mxu0 0
    %2427 = vmatpush1.bf16.xpose.msra.mxu0 %v2404
    %2428 = vmatprep.subr.bf16.mxu0 0
    %2429 = vmatpush2.bf16.xpose.msra.mxu0 0
    %2430 = vmatprep.subr.bf16.mxu0 0
    %2431 = vmatpush2.bf16.xpose.msra.mxu0 0
    %2432 = vmatprep.subr.bf16.mxu0 0
    %2433 = vmatpush2.bf16.xpose.msra.mxu0 0
    %2434 = vmatprep.subr.bf16.mxu0 0
    %2435 = vmatpush2.bf16.xpose.msra.mxu0 0
    %2436 = vmatprep.subr.bf16.mxu0 0
    %2437 = vmatpush2.bf16.xpose.msra.mxu0 0
    %2438 = vmatprep.subr.bf16.mxu0 0
    %2439 = vmatpush2.bf16.xpose.msra.mxu0 0
    %2440 = vmatprep.subr.bf16.mxu0 0
    %2441 = vmatpush2.bf16.xpose.msra.mxu0 0
    %2442 = vmatprep.subr.bf16.mxu0 0
    %2443 = vmatpush2.bf16.xpose.msra.mxu0 0
    %2444 = vmatprep.mubr.bf16.mxu0 0
    %2445 = vmatmul.mubr.bf16.gmra.mxu0 %v2395
    %v2446 = vpop.f32.mrf.mxu0
    %v2447 = vadd.f32 %v180, %v2446
    %v2448 = vpop.f32.mrf.mxu0
    %v2449 = vpop.f32.mrf.mxu0
    %v2450 = vadd.f32 %v181, %v2449
    %v2451 = vpop.f32.mrf.mxu0
    %2452 = vmatprep.mubr.bf16.mxu0 0
    %2453 = vmatmul.mubr.bf16.gmra.mxu0 %v2398
    %v2454 = vpop.f32.mrf.mxu0
    %v2455 = vadd.f32 %v182, %v2454
    %v2456 = vpop.f32.mrf.mxu0
    %v2457 = vpop.f32.mrf.mxu0
    %v2458 = vadd.f32 %v183, %v2457
    %v2459 = vpop.f32.mrf.mxu0
    %2460 = vmatprep.mubr.bf16.mxu0 0
    %2461 = vmatmul.mubr.bf16.gmra.mxu0 %v2401
    %v2462 = vpop.f32.mrf.mxu0
    %v2463 = vadd.f32 %v184, %v2462
    %v2464 = vpop.f32.mrf.mxu0
    %v2465 = vpop.f32.mrf.mxu0
    %v2466 = vpop.f32.mrf.mxu0
    %2467 = vdwg.mxu0
    %v2468 = vsel %vm857, %v2447, -inf
    %2469 = vmax.xlane.f32.xlu0 %v2468
    %v2470 = vpop.xlane.xlu0 %2469
    %v2471 = vsel %vm857, %v2450, -inf
    %2472 = vmax.xlane.f32.xlu0 %v2471
    %v2473 = vpop.xlane.xlu0 %2472
    %v2474 = vsel %vm857, %v2455, -inf
    %2475 = vmax.xlane.f32.xlu0 %v2474
    %v2476 = vpop.xlane.xlu0 %2475
    %v2477 = vsel %vm857, %v2458, -inf
    %2478 = vmax.xlane.f32.xlu0 %v2477
    %v2479 = vpop.xlane.xlu0 %2478
    %v2480 = vsel %vm870, %v2463, -inf
    %2481 = vmax.xlane.f32.xlu0 %v2480
    %v2482 = vpop.xlane.xlu0 %2481
    %v2483 = vsub.f32 %v2447, %v2470
    %v2484 = vsub.f32 %v2450, %v2473
    %v2485 = vsub.f32 %v2455, %v2476
    %v2486 = vsub.f32 %v2458, %v2479
    %v2487 = vsub.f32 %v2463, %v2482
    %v2488 = vmul.f32 %v2483, 1.442695
    %v2489 = vpow.pop %v2488
    %v2490 = vmul.f32 %v2484, 1.442695
    %v2491 = vpow.pop %v2490
    %v2492 = vmul.f32 %v2485, 1.442695
    %v2493 = vpow.pop %v2492
    %v2494 = vmul.f32 %v2486, 1.442695
    %v2495 = vpow.pop %v2494
    %v2496 = vmul.f32 %v2487, 1.442695
    %v2497 = vpow.pop %v2496
    %v2498 = vsel %vm857, %v2489, 0.0
    %2499 = vadd.xlane.f32.xlu0 %v2498
    %v2500 = vpop.xlane.xlu0 %2499
    %v2501 = vsel %vm857, %v2491, 0.0
    %2502 = vadd.xlane.f32.xlu0 %v2501
    %v2503 = vpop.xlane.xlu0 %2502
    %v2504 = vsel %vm857, %v2493, 0.0
    %2505 = vadd.xlane.f32.xlu0 %v2504
    %v2506 = vpop.xlane.xlu0 %2505
    %v2507 = vsel %vm857, %v2495, 0.0
    %2508 = vadd.xlane.f32.xlu0 %v2507
    %v2509 = vpop.xlane.xlu0 %2508
    %v2510 = vsel %vm870, %v2497, 0.0
    %2511 = vadd.xlane.f32.xlu0 %v2510
    %v2512 = vpop.xlane.xlu0 %2511
    %v2513 = vrcp.pop %v2500
    %v2514 = vrcp.pop %v2503
    %v2515 = vrcp.pop %v2506
    %v2516 = vrcp.pop %v2509
    %v2517 = vrcp.pop %v2512
    %v2518 = vmul.f32 %v2489, %v2513
    %v2519 = vmul.f32 %v2491, %v2514
    %v2520 = vmul.f32 %v2493, %v2515
    %v2521 = vmul.f32 %v2495, %v2516
    %v2522 = vmul.f32 %v2497, %v2517
    %v2523 = vpack.c.bf16 %v2519, %v2518
    %v2524 = vpack.c.bf16 %v2521, %v2520
    %v2525 = vpack.c.bf16 %v2522, %v2522
    %2526 = vrot.lane.b32.xlu0 %v2382, 64
    %v2527 = vpop.permute.xlu0 %2526
    %2528 = vrot.lane.b32.xlu0 %v2383, 64
    %v2529 = vpop.permute.xlu0 %2528
    %2530 = vrot.lane.b32.xlu0 %v2384, 64
    %v2531 = vpop.permute.xlu0 %2530
    %v2535 = vsel %vm857, %v2523, 0
    %v2538 = vsel %vm857, %v2524, 0
    %v2541 = vsel %vm857, %v2525, 0
    %v2544 = vsel %vm934, %v2531, 0
    %2546 = vmatprep.subr.bf16.mxu0 0
    %2547 = vmatpush1.bf16.msra.mxu0 0
    %2548 = vmatprep.subr.bf16.mxu0 0
    %2549 = vmatpush1.bf16.msra.mxu0 0
    %2550 = vmatprep.subr.bf16.mxu0 0
    %2551 = vmatpush1.bf16.msra.mxu0 0
    %2552 = vmatprep.subr.bf16.mxu0 0
    %2553 = vmatpush1.bf16.msra.mxu0 0
    %2554 = vmatprep.subr.bf16.mxu0 0
    %2555 = vmatpush1.bf16.msra.mxu0 0
    %2556 = vmatprep.subr.bf16.mxu0 0
    %2557 = vmatpush1.bf16.msra.mxu0 %v2544
    %2558 = vmatprep.subr.bf16.mxu0 0
    %2559 = vmatpush1.bf16.msra.mxu0 %v2529
    %2560 = vmatprep.subr.bf16.mxu0 0
    %2561 = vmatpush1.bf16.msra.mxu0 %v2527
    %2562 = vmatprep.subr.bf16.mxu0 0
    %2563 = vmatpush2.bf16.msra.mxu0 0
    %2564 = vmatprep.subr.bf16.mxu0 0
    %2565 = vmatpush2.bf16.msra.mxu0 0
    %2566 = vmatprep.subr.bf16.mxu0 0
    %2567 = vmatpush2.bf16.msra.mxu0 0
    %2568 = vmatprep.subr.bf16.mxu0 0
    %2569 = vmatpush2.bf16.msra.mxu0 0
    %2570 = vmatprep.subr.bf16.mxu0 0
    %2571 = vmatpush2.bf16.msra.mxu0 0
    %2572 = vmatprep.subr.bf16.mxu0 0
    %2573 = vmatpush2.bf16.msra.mxu0 0
    %2574 = vmatprep.subr.bf16.mxu0 0
    %2575 = vmatpush2.bf16.msra.mxu0 0
    %2576 = vmatprep.subr.bf16.mxu0 0
    %2577 = vmatpush2.bf16.msra.mxu0 0
    %2578 = vmatprep.mubr.bf16.mxu0 0
    %2579 = vmatmul.mubr.bf16.gmra.mxu0 %v2535
    %v2580 = vpop.f32.mrf.mxu0
    %v2581 = vadd.f32 0.0, %v2580
    %v2582 = vpop.f32.mrf.mxu0
    %v2583 = vpop.f32.mrf.mxu0
    %v2584 = vadd.f32 0.0, %v2583
    %v2585 = vpop.f32.mrf.mxu0
    %2586 = vmatprep.mubr.bf16.mxu0 0
    %2587 = vmatmul.mubr.bf16.gmra.mxu0 %v2538
    %v2588 = vpop.f32.mrf.mxu0
    %v2589 = vadd.f32 0.0, %v2588
    %v2590 = vpop.f32.mrf.mxu0
    %v2591 = vpop.f32.mrf.mxu0
    %v2592 = vadd.f32 0.0, %v2591
    %v2593 = vpop.f32.mrf.mxu0
    %2594 = vmatprep.mubr.bf16.mxu0 0
    %2595 = vmatmul.mubr.bf16.gmra.mxu0 %v2541
    %v2596 = vpop.f32.mrf.mxu0
    %v2597 = vadd.f32 0.0, %v2596
    %v2598 = vpop.f32.mrf.mxu0
    %v2599 = vpop.f32.mrf.mxu0
    %v2600 = vpop.f32.mrf.mxu0
    %2601 = vdwg.mxu0
    %2605 = vrot.lane.b32.xlu0 %v2379, 120
    %v2606 = vpop.permute.xlu0 %2605
    %2607 = vrot.lane.b32.xlu0 %v2380, 120
    %v2608 = vpop.permute.xlu0 %2607
    %2609 = vrot.lane.b32.xlu0 %v2381, 120
    %v2610 = vpop.permute.xlu0 %2609
    %2611 = vrot.lane.b32.xlu0 %v2382, 88
    %v2612 = vpop.permute.xlu0 %2611
    %2613 = vrot.lane.b32.xlu0 %v2383, 88
    %v2614 = vpop.permute.xlu0 %2613
    %2615 = vrot.lane.b32.xlu0 %v2384, 88
    %v2616 = vpop.permute.xlu0 %2615
    %v2618 = vsel %vm782, %v2606, 0
    %v2621 = vsel %vm782, %v2608, 0
    %v2624 = vsel %vm782, %v2610, 0
    %v2627 = vsel %vm782, %v2612, 0
    %v2630 = vsel %vm782, %v2614, 0
    %v2633 = vsel %vm782, %v2616, 0
    %2635 = vmatprep.subr.bf16.mxu0 0
    %2636 = vmatpush1.bf16.xpose.msra.mxu0 0
    %2637 = vmatprep.subr.bf16.mxu0 0
    %2638 = vmatpush1.bf16.xpose.msra.mxu0 0
    %2639 = vmatprep.subr.bf16.mxu0 0
    %2640 = vmatpush1.bf16.xpose.msra.mxu0 0
    %2641 = vmatprep.subr.bf16.mxu0 0
    %2642 = vmatpush1.bf16.xpose.msra.mxu0 0
    %2643 = vmatprep.subr.bf16.mxu0 0
    %2644 = vmatpush1.bf16.xpose.msra.mxu0 0
    %2645 = vmatprep.subr.bf16.mxu0 0
    %2646 = vmatpush1.bf16.xpose.msra.mxu0 %v2633
    %2647 = vmatprep.subr.bf16.mxu0 0
    %2648 = vmatpush1.bf16.xpose.msra.mxu0 %v2630
    %2649 = vmatprep.subr.bf16.mxu0 0
    %2650 = vmatpush1.bf16.xpose.msra.mxu0 %v2627
    %2651 = vmatprep.subr.bf16.mxu0 0
    %2652 = vmatpush2.bf16.xpose.msra.mxu0 0
    %2653 = vmatprep.subr.bf16.mxu0 0
    %2654 = vmatpush2.bf16.xpose.msra.mxu0 0
    %2655 = vmatprep.subr.bf16.mxu0 0
    %2656 = vmatpush2.bf16.xpose.msra.mxu0 0
    %2657 = vmatprep.subr.bf16.mxu0 0
    %2658 = vmatpush2.bf16.xpose.msra.mxu0 0
    %2659 = vmatprep.subr.bf16.mxu0 0
    %2660 = vmatpush2.bf16.xpose.msra.mxu0 0
    %2661 = vmatprep.subr.bf16.mxu0 0
    %2662 = vmatpush2.bf16.xpose.msra.mxu0 0
    %2663 = vmatprep.subr.bf16.mxu0 0
    %2664 = vmatpush2.bf16.xpose.msra.mxu0 0
    %2665 = vmatprep.subr.bf16.mxu0 0
    %2666 = vmatpush2.bf16.xpose.msra.mxu0 0
    %2667 = vmatprep.mubr.bf16.mxu0 0
    %2668 = vmatmul.mubr.bf16.gmra.mxu0 %v2618
    %v2669 = vpop.f32.mrf.mxu0
    %v2670 = vadd.f32 %v180, %v2669
    %v2671 = vpop.f32.mrf.mxu0
    %v2672 = vpop.f32.mrf.mxu0
    %v2673 = vadd.f32 %v181, %v2672
    %v2674 = vpop.f32.mrf.mxu0
    %2675 = vmatprep.mubr.bf16.mxu0 0
    %2676 = vmatmul.mubr.bf16.gmra.mxu0 %v2621
    %v2677 = vpop.f32.mrf.mxu0
    %v2678 = vadd.f32 %v182, %v2677
    %v2679 = vpop.f32.mrf.mxu0
    %v2680 = vpop.f32.mrf.mxu0
    %v2681 = vadd.f32 %v183, %v2680
    %v2682 = vpop.f32.mrf.mxu0
    %2683 = vmatprep.mubr.bf16.mxu0 0
    %2684 = vmatmul.mubr.bf16.gmra.mxu0 %v2624
    %v2685 = vpop.f32.mrf.mxu0
    %v2686 = vadd.f32 %v184, %v2685
    %v2687 = vpop.f32.mrf.mxu0
    %v2688 = vpop.f32.mrf.mxu0
    %v2689 = vpop.f32.mrf.mxu0
    %2690 = vdwg.mxu0
    %v2691 = vsel %vm857, %v2670, -inf
    %2692 = vmax.xlane.f32.xlu0 %v2691
    %v2693 = vpop.xlane.xlu0 %2692
    %v2694 = vsel %vm857, %v2673, -inf
    %2695 = vmax.xlane.f32.xlu0 %v2694
    %v2696 = vpop.xlane.xlu0 %2695
    %v2697 = vsel %vm857, %v2678, -inf
    %2698 = vmax.xlane.f32.xlu0 %v2697
    %v2699 = vpop.xlane.xlu0 %2698
    %v2700 = vsel %vm857, %v2681, -inf
    %2701 = vmax.xlane.f32.xlu0 %v2700
    %v2702 = vpop.xlane.xlu0 %2701
    %v2703 = vsel %vm870, %v2686, -inf
    %2704 = vmax.xlane.f32.xlu0 %v2703
    %v2705 = vpop.xlane.xlu0 %2704
    %v2706 = vsub.f32 %v2670, %v2693
    %v2707 = vsub.f32 %v2673, %v2696
    %v2708 = vsub.f32 %v2678, %v2699
    %v2709 = vsub.f32 %v2681, %v2702
    %v2710 = vsub.f32 %v2686, %v2705
    %v2711 = vmul.f32 %v2706, 1.442695
    %v2712 = vpow.pop %v2711
    %v2713 = vmul.f32 %v2707, 1.442695
    %v2714 = vpow.pop %v2713
    %v2715 = vmul.f32 %v2708, 1.442695
    %v2716 = vpow.pop %v2715
    %v2717 = vmul.f32 %v2709, 1.442695
    %v2718 = vpow.pop %v2717
    %v2719 = vmul.f32 %v2710, 1.442695
    %v2720 = vpow.pop %v2719
    %v2721 = vsel %vm857, %v2712, 0.0
    %2722 = vadd.xlane.f32.xlu0 %v2721
    %v2723 = vpop.xlane.xlu0 %2722
    %v2724 = vsel %vm857, %v2714, 0.0
    %2725 = vadd.xlane.f32.xlu0 %v2724
    %v2726 = vpop.xlane.xlu0 %2725
    %v2727 = vsel %vm857, %v2716, 0.0
    %2728 = vadd.xlane.f32.xlu0 %v2727
    %v2729 = vpop.xlane.xlu0 %2728
    %v2730 = vsel %vm857, %v2718, 0.0
    %2731 = vadd.xlane.f32.xlu0 %v2730
    %v2732 = vpop.xlane.xlu0 %2731
    %v2733 = vsel %vm870, %v2720, 0.0
    %2734 = vadd.xlane.f32.xlu0 %v2733
    %v2735 = vpop.xlane.xlu0 %2734
    %v2736 = vrcp.pop %v2723
    %v2737 = vrcp.pop %v2726
    %v2738 = vrcp.pop %v2729
    %v2739 = vrcp.pop %v2732
    %v2740 = vrcp.pop %v2735
    %v2741 = vmul.f32 %v2712, %v2736
    %v2742 = vmul.f32 %v2714, %v2737
    %v2743 = vmul.f32 %v2716, %v2738
    %v2744 = vmul.f32 %v2718, %v2739
    %v2745 = vmul.f32 %v2720, %v2740
    %v2746 = vpack.c.bf16 %v2742, %v2741
    %v2747 = vpack.c.bf16 %v2744, %v2743
    %v2748 = vpack.c.bf16 %v2745, %v2745
    %2749 = vrot.lane.b32.xlu0 %v2382, 56
    %v2750 = vpop.permute.xlu0 %2749
    %2751 = vrot.lane.b32.xlu0 %v2383, 56
    %v2752 = vpop.permute.xlu0 %2751
    %2753 = vrot.lane.b32.xlu0 %v2384, 56
    %v2754 = vpop.permute.xlu0 %2753
    %v2758 = vsel %vm857, %v2746, 0
    %v2761 = vsel %vm857, %v2747, 0
    %v2764 = vsel %vm857, %v2748, 0
    %v2767 = vsel %vm934, %v2754, 0
    %2769 = vmatprep.subr.bf16.mxu0 0
    %2770 = vmatpush1.bf16.msra.mxu0 0
    %2771 = vmatprep.subr.bf16.mxu0 0
    %2772 = vmatpush1.bf16.msra.mxu0 0
    %2773 = vmatprep.subr.bf16.mxu0 0
    %2774 = vmatpush1.bf16.msra.mxu0 0
    %2775 = vmatprep.subr.bf16.mxu0 0
    %2776 = vmatpush1.bf16.msra.mxu0 0
    %2777 = vmatprep.subr.bf16.mxu0 0
    %2778 = vmatpush1.bf16.msra.mxu0 0
    %2779 = vmatprep.subr.bf16.mxu0 0
    %2780 = vmatpush1.bf16.msra.mxu0 %v2767
    %2781 = vmatprep.subr.bf16.mxu0 0
    %2782 = vmatpush1.bf16.msra.mxu0 %v2752
    %2783 = vmatprep.subr.bf16.mxu0 0
    %2784 = vmatpush1.bf16.msra.mxu0 %v2750
    %2785 = vmatprep.subr.bf16.mxu0 0
    %2786 = vmatpush2.bf16.msra.mxu0 0
    %2787 = vmatprep.subr.bf16.mxu0 0
    %2788 = vmatpush2.bf16.msra.mxu0 0
    %2789 = vmatprep.subr.bf16.mxu0 0
    %2790 = vmatpush2.bf16.msra.mxu0 0
    %2791 = vmatprep.subr.bf16.mxu0 0
    %2792 = vmatpush2.bf16.msra.mxu0 0
    %2793 = vmatprep.subr.bf16.mxu0 0
    %2794 = vmatpush2.bf16.msra.mxu0 0
    %2795 = vmatprep.subr.bf16.mxu0 0
    %2796 = vmatpush2.bf16.msra.mxu0 0
    %2797 = vmatprep.subr.bf16.mxu0 0
    %2798 = vmatpush2.bf16.msra.mxu0 0
    %2799 = vmatprep.subr.bf16.mxu0 0
    %2800 = vmatpush2.bf16.msra.mxu0 0
    %2801 = vmatprep.mubr.bf16.mxu0 0
    %2802 = vmatmul.mubr.bf16.gmra.mxu0 %v2758
    %v2803 = vpop.f32.mrf.mxu0
    %v2804 = vadd.f32 0.0, %v2803
    %v2805 = vpop.f32.mrf.mxu0
    %v2806 = vpop.f32.mrf.mxu0
    %v2807 = vadd.f32 0.0, %v2806
    %v2808 = vpop.f32.mrf.mxu0
    %2809 = vmatprep.mubr.bf16.mxu0 0
    %2810 = vmatmul.mubr.bf16.gmra.mxu0 %v2761
    %v2811 = vpop.f32.mrf.mxu0
    %v2812 = vadd.f32 0.0, %v2811
    %v2813 = vpop.f32.mrf.mxu0
    %v2814 = vpop.f32.mrf.mxu0
    %v2815 = vadd.f32 0.0, %v2814
    %v2816 = vpop.f32.mrf.mxu0
    %2817 = vmatprep.mubr.bf16.mxu0 0
    %2818 = vmatmul.mubr.bf16.gmra.mxu0 %v2764
    %v2819 = vpop.f32.mrf.mxu0
    %v2820 = vadd.f32 0.0, %v2819
    %v2821 = vpop.f32.mrf.mxu0
    %v2822 = vpop.f32.mrf.mxu0
    %v2823 = vpop.f32.mrf.mxu0
    %2824 = vdwg.mxu0
    %2825 = vrot.lane.b32.xlu0 %v2379, 112
    %v2826 = vpop.permute.xlu0 %2825
    %2827 = vrot.lane.b32.xlu0 %v2380, 112
    %v2828 = vpop.permute.xlu0 %2827
    %2829 = vrot.lane.b32.xlu0 %v2381, 112
    %v2830 = vpop.permute.xlu0 %2829
    %2831 = vrot.lane.b32.xlu0 %v2382, 80
    %v2832 = vpop.permute.xlu0 %2831
    %2833 = vrot.lane.b32.xlu0 %v2383, 80
    %v2834 = vpop.permute.xlu0 %2833
    %2835 = vrot.lane.b32.xlu0 %v2384, 80
    %v2836 = vpop.permute.xlu0 %2835
    %v2838 = vsel %vm782, %v2826, 0
    %v2841 = vsel %vm782, %v2828, 0
    %v2844 = vsel %vm782, %v2830, 0
    %v2847 = vsel %vm782, %v2832, 0
    %v2850 = vsel %vm782, %v2834, 0
    %v2853 = vsel %vm782, %v2836, 0
    %2855 = vmatprep.subr.bf16.mxu0 0
    %2856 = vmatpush1.bf16.xpose.msra.mxu0 0
    %2857 = vmatprep.subr.bf16.mxu0 0
    %2858 = vmatpush1.bf16.xpose.msra.mxu0 0
    %2859 = vmatprep.subr.bf16.mxu0 0
    %2860 = vmatpush1.bf16.xpose.msra.mxu0 0
    %2861 = vmatprep.subr.bf16.mxu0 0
    %2862 = vmatpush1.bf16.xpose.msra.mxu0 0
    %2863 = vmatprep.subr.bf16.mxu0 0
    %2864 = vmatpush1.bf16.xpose.msra.mxu0 0
    %2865 = vmatprep.subr.bf16.mxu0 0
    %2866 = vmatpush1.bf16.xpose.msra.mxu0 %v2853
    %2867 = vmatprep.subr.bf16.mxu0 0
    %2868 = vmatpush1.bf16.xpose.msra.mxu0 %v2850
    %2869 = vmatprep.subr.bf16.mxu0 0
    %2870 = vmatpush1.bf16.xpose.msra.mxu0 %v2847
    %2871 = vmatprep.subr.bf16.mxu0 0
    %2872 = vmatpush2.bf16.xpose.msra.mxu0 0
    %2873 = vmatprep.subr.bf16.mxu0 0
    %2874 = vmatpush2.bf16.xpose.msra.mxu0 0
    %2875 = vmatprep.subr.bf16.mxu0 0
    %2876 = vmatpush2.bf16.xpose.msra.mxu0 0
    %2877 = vmatprep.subr.bf16.mxu0 0
    %2878 = vmatpush2.bf16.xpose.msra.mxu0 0
    %2879 = vmatprep.subr.bf16.mxu0 0
    %2880 = vmatpush2.bf16.xpose.msra.mxu0 0
    %2881 = vmatprep.subr.bf16.mxu0 0
    %2882 = vmatpush2.bf16.xpose.msra.mxu0 0
    %2883 = vmatprep.subr.bf16.mxu0 0
    %2884 = vmatpush2.bf16.xpose.msra.mxu0 0
    %2885 = vmatprep.subr.bf16.mxu0 0
    %2886 = vmatpush2.bf16.xpose.msra.mxu0 0
    %2887 = vmatprep.mubr.bf16.mxu0 0
    %2888 = vmatmul.mubr.bf16.gmra.mxu0 %v2838
    %v2889 = vpop.f32.mrf.mxu0
    %v2890 = vadd.f32 %v180, %v2889
    %v2891 = vpop.f32.mrf.mxu0
    %v2892 = vpop.f32.mrf.mxu0
    %v2893 = vadd.f32 %v181, %v2892
    %v2894 = vpop.f32.mrf.mxu0
    %2895 = vmatprep.mubr.bf16.mxu0 0
    %2896 = vmatmul.mubr.bf16.gmra.mxu0 %v2841
    %v2897 = vpop.f32.mrf.mxu0
    %v2898 = vadd.f32 %v182, %v2897
    %v2899 = vpop.f32.mrf.mxu0
    %v2900 = vpop.f32.mrf.mxu0
    %v2901 = vadd.f32 %v183, %v2900
    %v2902 = vpop.f32.mrf.mxu0
    %2903 = vmatprep.mubr.bf16.mxu0 0
    %2904 = vmatmul.mubr.bf16.gmra.mxu0 %v2844
    %v2905 = vpop.f32.mrf.mxu0
    %v2906 = vadd.f32 %v184, %v2905
    %v2907 = vpop.f32.mrf.mxu0
    %v2908 = vpop.f32.mrf.mxu0
    %v2909 = vpop.f32.mrf.mxu0
    %2910 = vdwg.mxu0
    %v2911 = vsel %vm857, %v2890, -inf
    %2912 = vmax.xlane.f32.xlu0 %v2911
    %v2913 = vpop.xlane.xlu0 %2912
    %v2914 = vsel %vm857, %v2893, -inf
    %2915 = vmax.xlane.f32.xlu0 %v2914
    %v2916 = vpop.xlane.xlu0 %2915
    %v2917 = vsel %vm857, %v2898, -inf
    %2918 = vmax.xlane.f32.xlu0 %v2917
    %v2919 = vpop.xlane.xlu0 %2918
    %v2920 = vsel %vm857, %v2901, -inf
    %2921 = vmax.xlane.f32.xlu0 %v2920
    %v2922 = vpop.xlane.xlu0 %2921
    %v2923 = vsel %vm870, %v2906, -inf
    %2924 = vmax.xlane.f32.xlu0 %v2923
    %v2925 = vpop.xlane.xlu0 %2924
    %v2926 = vsub.f32 %v2890, %v2913
    %v2927 = vsub.f32 %v2893, %v2916
    %v2928 = vsub.f32 %v2898, %v2919
    %v2929 = vsub.f32 %v2901, %v2922
    %v2930 = vsub.f32 %v2906, %v2925
    %v2931 = vmul.f32 %v2926, 1.442695
    %v2932 = vpow.pop %v2931
    %v2933 = vmul.f32 %v2927, 1.442695
    %v2934 = vpow.pop %v2933
    %v2935 = vmul.f32 %v2928, 1.442695
    %v2936 = vpow.pop %v2935
    %v2937 = vmul.f32 %v2929, 1.442695
    %v2938 = vpow.pop %v2937
    %v2939 = vmul.f32 %v2930, 1.442695
    %v2940 = vpow.pop %v2939
    %v2941 = vsel %vm857, %v2932, 0.0
    %2942 = vadd.xlane.f32.xlu0 %v2941
    %v2943 = vpop.xlane.xlu0 %2942
    %v2944 = vsel %vm857, %v2934, 0.0
    %2945 = vadd.xlane.f32.xlu0 %v2944
    %v2946 = vpop.xlane.xlu0 %2945
    %v2947 = vsel %vm857, %v2936, 0.0
    %2948 = vadd.xlane.f32.xlu0 %v2947
    %v2949 = vpop.xlane.xlu0 %2948
    %v2950 = vsel %vm857, %v2938, 0.0
    %2951 = vadd.xlane.f32.xlu0 %v2950
    %v2952 = vpop.xlane.xlu0 %2951
    %v2953 = vsel %vm870, %v2940, 0.0
    %2954 = vadd.xlane.f32.xlu0 %v2953
    %v2955 = vpop.xlane.xlu0 %2954
    %v2956 = vrcp.pop %v2943
    %v2957 = vrcp.pop %v2946
    %v2958 = vrcp.pop %v2949
    %v2959 = vrcp.pop %v2952
    %v2960 = vrcp.pop %v2955
    %v2961 = vmul.f32 %v2932, %v2956
    %v2962 = vmul.f32 %v2934, %v2957
    %v2963 = vmul.f32 %v2936, %v2958
    %v2964 = vmul.f32 %v2938, %v2959
    %v2965 = vmul.f32 %v2940, %v2960
    %v2966 = vpack.c.bf16 %v2962, %v2961
    %v2967 = vpack.c.bf16 %v2964, %v2963
    %v2968 = vpack.c.bf16 %v2965, %v2965
    %2969 = vrot.lane.b32.xlu0 %v2382, 48
    %v2970 = vpop.permute.xlu0 %2969
    %2971 = vrot.lane.b32.xlu0 %v2383, 48
    %v2972 = vpop.permute.xlu0 %2971
    %2973 = vrot.lane.b32.xlu0 %v2384, 48
    %v2974 = vpop.permute.xlu0 %2973
    %v2978 = vsel %vm857, %v2966, 0
    %v2981 = vsel %vm857, %v2967, 0
    %v2984 = vsel %vm857, %v2968, 0
    %v2987 = vsel %vm934, %v2974, 0
    %2989 = vmatprep.subr.bf16.mxu0 0
    %2990 = vmatpush1.bf16.msra.mxu0 0
    %2991 = vmatprep.subr.bf16.mxu0 0
    %2992 = vmatpush1.bf16.msra.mxu0 0
    %2993 = vmatprep.subr.bf16.mxu0 0
    %2994 = vmatpush1.bf16.msra.mxu0 0
    %2995 = vmatprep.subr.bf16.mxu0 0
    %2996 = vmatpush1.bf16.msra.mxu0 0
    %2997 = vmatprep.subr.bf16.mxu0 0
    %2998 = vmatpush1.bf16.msra.mxu0 0
    %2999 = vmatprep.subr.bf16.mxu0 0
    %3000 = vmatpush1.bf16.msra.mxu0 %v2987
    %3001 = vmatprep.subr.bf16.mxu0 0
    %3002 = vmatpush1.bf16.msra.mxu0 %v2972
    %3003 = vmatprep.subr.bf16.mxu0 0
    %3004 = vmatpush1.bf16.msra.mxu0 %v2970
    %3005 = vmatprep.subr.bf16.mxu0 0
    %3006 = vmatpush2.bf16.msra.mxu0 0
    %3007 = vmatprep.subr.bf16.mxu0 0
    %3008 = vmatpush2.bf16.msra.mxu0 0
    %3009 = vmatprep.subr.bf16.mxu0 0
    %3010 = vmatpush2.bf16.msra.mxu0 0
    %3011 = vmatprep.subr.bf16.mxu0 0
    %3012 = vmatpush2.bf16.msra.mxu0 0
    %3013 = vmatprep.subr.bf16.mxu0 0
    %3014 = vmatpush2.bf16.msra.mxu0 0
    %3015 = vmatprep.subr.bf16.mxu0 0
    %3016 = vmatpush2.bf16.msra.mxu0 0
    %3017 = vmatprep.subr.bf16.mxu0 0
    %3018 = vmatpush2.bf16.msra.mxu0 0
    %3019 = vmatprep.subr.bf16.mxu0 0
    %3020 = vmatpush2.bf16.msra.mxu0 0
    %3021 = vmatprep.mubr.bf16.mxu0 0
    %3022 = vmatmul.mubr.bf16.gmra.mxu0 %v2978
    %v3023 = vpop.f32.mrf.mxu0
    %v3024 = vadd.f32 0.0, %v3023
    %v3025 = vpop.f32.mrf.mxu0
    %v3026 = vpop.f32.mrf.mxu0
    %v3027 = vadd.f32 0.0, %v3026
    %v3028 = vpop.f32.mrf.mxu0
    %3029 = vmatprep.mubr.bf16.mxu0 0
    %3030 = vmatmul.mubr.bf16.gmra.mxu0 %v2981
    %v3031 = vpop.f32.mrf.mxu0
    %v3032 = vadd.f32 0.0, %v3031
    %v3033 = vpop.f32.mrf.mxu0
    %v3034 = vpop.f32.mrf.mxu0
    %v3035 = vadd.f32 0.0, %v3034
    %v3036 = vpop.f32.mrf.mxu0
    %3037 = vmatprep.mubr.bf16.mxu0 0
    %3038 = vmatmul.mubr.bf16.gmra.mxu0 %v2984
    %v3039 = vpop.f32.mrf.mxu0
    %v3040 = vadd.f32 0.0, %v3039
    %v3041 = vpop.f32.mrf.mxu0
    %v3042 = vpop.f32.mrf.mxu0
    %v3043 = vpop.f32.mrf.mxu0
    %3044 = vdwg.mxu0
    %3045 = vrot.lane.b32.xlu0 %v2379, 104
    %v3046 = vpop.permute.xlu0 %3045
    %3047 = vrot.lane.b32.xlu0 %v2380, 104
    %v3048 = vpop.permute.xlu0 %3047
    %3049 = vrot.lane.b32.xlu0 %v2381, 104
    %v3050 = vpop.permute.xlu0 %3049
    %3051 = vrot.lane.b32.xlu0 %v2382, 72
    %v3052 = vpop.permute.xlu0 %3051
    %3053 = vrot.lane.b32.xlu0 %v2383, 72
    %v3054 = vpop.permute.xlu0 %3053
    %3055 = vrot.lane.b32.xlu0 %v2384, 72
    %v3056 = vpop.permute.xlu0 %3055
    %v3058 = vsel %vm782, %v3046, 0
    %v3061 = vsel %vm782, %v3048, 0
    %v3064 = vsel %vm782, %v3050, 0
    %v3067 = vsel %vm782, %v3052, 0
    %v3070 = vsel %vm782, %v3054, 0
    %v3073 = vsel %vm782, %v3056, 0
    %3075 = vmatprep.subr.bf16.mxu0 0
    %3076 = vmatpush1.bf16.xpose.msra.mxu0 0
    %3077 = vmatprep.subr.bf16.mxu0 0
    %3078 = vmatpush1.bf16.xpose.msra.mxu0 0
    %3079 = vmatprep.subr.bf16.mxu0 0
    %3080 = vmatpush1.bf16.xpose.msra.mxu0 0
    %3081 = vmatprep.subr.bf16.mxu0 0
    %3082 = vmatpush1.bf16.xpose.msra.mxu0 0
    %3083 = vmatprep.subr.bf16.mxu0 0
    %3084 = vmatpush1.bf16.xpose.msra.mxu0 0
    %3085 = vmatprep.subr.bf16.mxu0 0
    %3086 = vmatpush1.bf16.xpose.msra.mxu0 %v3073
    %3087 = vmatprep.subr.bf16.mxu0 0
    %3088 = vmatpush1.bf16.xpose.msra.mxu0 %v3070
    %3089 = vmatprep.subr.bf16.mxu0 0
    %3090 = vmatpush1.bf16.xpose.msra.mxu0 %v3067
    %3091 = vmatprep.subr.bf16.mxu0 0
    %3092 = vmatpush2.bf16.xpose.msra.mxu0 0
    %3093 = vmatprep.subr.bf16.mxu0 0
    %3094 = vmatpush2.bf16.xpose.msra.mxu0 0
    %3095 = vmatprep.subr.bf16.mxu0 0
    %3096 = vmatpush2.bf16.xpose.msra.mxu0 0
    %3097 = vmatprep.subr.bf16.mxu0 0
    %3098 = vmatpush2.bf16.xpose.msra.mxu0 0
    %3099 = vmatprep.subr.bf16.mxu0 0
    %3100 = vmatpush2.bf16.xpose.msra.mxu0 0
    %3101 = vmatprep.subr.bf16.mxu0 0
    %3102 = vmatpush2.bf16.xpose.msra.mxu0 0
    %3103 = vmatprep.subr.bf16.mxu0 0
    %3104 = vmatpush2.bf16.xpose.msra.mxu0 0
    %3105 = vmatprep.subr.bf16.mxu0 0
    %3106 = vmatpush2.bf16.xpose.msra.mxu0 0
    %3107 = vmatprep.mubr.bf16.mxu0 0
    %3108 = vmatmul.mubr.bf16.gmra.mxu0 %v3058
    %v3109 = vpop.f32.mrf.mxu0
    %v3110 = vadd.f32 %v180, %v3109
    %v3111 = vpop.f32.mrf.mxu0
    %v3112 = vpop.f32.mrf.mxu0
    %v3113 = vadd.f32 %v181, %v3112
    %v3114 = vpop.f32.mrf.mxu0
    %3115 = vmatprep.mubr.bf16.mxu0 0
    %3116 = vmatmul.mubr.bf16.gmra.mxu0 %v3061
    %v3117 = vpop.f32.mrf.mxu0
    %v3118 = vadd.f32 %v182, %v3117
    %v3119 = vpop.f32.mrf.mxu0
    %v3120 = vpop.f32.mrf.mxu0
    %v3121 = vadd.f32 %v183, %v3120
    %v3122 = vpop.f32.mrf.mxu0
    %3123 = vmatprep.mubr.bf16.mxu0 0
    %3124 = vmatmul.mubr.bf16.gmra.mxu0 %v3064
    %v3125 = vpop.f32.mrf.mxu0
    %v3126 = vadd.f32 %v184, %v3125
    %v3127 = vpop.f32.mrf.mxu0
    %v3128 = vpop.f32.mrf.mxu0
    %v3129 = vpop.f32.mrf.mxu0
    %3130 = vdwg.mxu0
    %v3131 = vsel %vm857, %v3110, -inf
    %3132 = vmax.xlane.f32.xlu0 %v3131
    %v3133 = vpop.xlane.xlu0 %3132
    %v3134 = vsel %vm857, %v3113, -inf
    %3135 = vmax.xlane.f32.xlu0 %v3134
    %v3136 = vpop.xlane.xlu0 %3135
    %v3137 = vsel %vm857, %v3118, -inf
    %3138 = vmax.xlane.f32.xlu0 %v3137
    %v3139 = vpop.xlane.xlu0 %3138
    %v3140 = vsel %vm857, %v3121, -inf
    %3141 = vmax.xlane.f32.xlu0 %v3140
    %v3142 = vpop.xlane.xlu0 %3141
    %v3143 = vsel %vm870, %v3126, -inf
    %3144 = vmax.xlane.f32.xlu0 %v3143
    %v3145 = vpop.xlane.xlu0 %3144
    %v3146 = vsub.f32 %v3110, %v3133
    %v3147 = vsub.f32 %v3113, %v3136
    %v3148 = vsub.f32 %v3118, %v3139
    %v3149 = vsub.f32 %v3121, %v3142
    %v3150 = vsub.f32 %v3126, %v3145
    %v3151 = vmul.f32 %v3146, 1.442695
    %v3152 = vpow.pop %v3151
    %v3153 = vmul.f32 %v3147, 1.442695
    %v3154 = vpow.pop %v3153
    %v3155 = vmul.f32 %v3148, 1.442695
    %v3156 = vpow.pop %v3155
    %v3157 = vmul.f32 %v3149, 1.442695
    %v3158 = vpow.pop %v3157
    %v3159 = vmul.f32 %v3150, 1.442695
    %v3160 = vpow.pop %v3159
    %v3161 = vsel %vm857, %v3152, 0.0
    %3162 = vadd.xlane.f32.xlu0 %v3161
    %v3163 = vpop.xlane.xlu0 %3162
    %v3164 = vsel %vm857, %v3154, 0.0
    %3165 = vadd.xlane.f32.xlu0 %v3164
    %v3166 = vpop.xlane.xlu0 %3165
    %v3167 = vsel %vm857, %v3156, 0.0
    %3168 = vadd.xlane.f32.xlu0 %v3167
    %v3169 = vpop.xlane.xlu0 %3168
    %v3170 = vsel %vm857, %v3158, 0.0
    %3171 = vadd.xlane.f32.xlu0 %v3170
    %v3172 = vpop.xlane.xlu0 %3171
    %v3173 = vsel %vm870, %v3160, 0.0
    %3174 = vadd.xlane.f32.xlu0 %v3173
    %v3175 = vpop.xlane.xlu0 %3174
    %v3176 = vrcp.pop %v3163
    %v3177 = vrcp.pop %v3166
    %v3178 = vrcp.pop %v3169
    %v3179 = vrcp.pop %v3172
    %v3180 = vrcp.pop %v3175
    %v3181 = vmul.f32 %v3152, %v3176
    %v3182 = vmul.f32 %v3154, %v3177
    %v3183 = vmul.f32 %v3156, %v3178
    %v3184 = vmul.f32 %v3158, %v3179
    %v3185 = vmul.f32 %v3160, %v3180
    %v3186 = vpack.c.bf16 %v3182, %v3181
    %v3187 = vpack.c.bf16 %v3184, %v3183
    %v3188 = vpack.c.bf16 %v3185, %v3185
    %3189 = vrot.lane.b32.xlu0 %v2382, 40
    %v3190 = vpop.permute.xlu0 %3189
    %3191 = vrot.lane.b32.xlu0 %v2383, 40
    %v3192 = vpop.permute.xlu0 %3191
    %3193 = vrot.lane.b32.xlu0 %v2384, 40
    %v3194 = vpop.permute.xlu0 %3193
    %v3198 = vsel %vm857, %v3186, 0
    %v3201 = vsel %vm857, %v3187, 0
    %v3204 = vsel %vm857, %v3188, 0
    %v3207 = vsel %vm934, %v3194, 0
    %3209 = vmatprep.subr.bf16.mxu0 0
    %3210 = vmatpush1.bf16.msra.mxu0 0
    %3211 = vmatprep.subr.bf16.mxu0 0
    %3212 = vmatpush1.bf16.msra.mxu0 0
    %3213 = vmatprep.subr.bf16.mxu0 0
    %3214 = vmatpush1.bf16.msra.mxu0 0
    %3215 = vmatprep.subr.bf16.mxu0 0
    %3216 = vmatpush1.bf16.msra.mxu0 0
    %3217 = vmatprep.subr.bf16.mxu0 0
    %3218 = vmatpush1.bf16.msra.mxu0 0
    %3219 = vmatprep.subr.bf16.mxu0 0
    %3220 = vmatpush1.bf16.msra.mxu0 %v3207
    %3221 = vmatprep.subr.bf16.mxu0 0
    %3222 = vmatpush1.bf16.msra.mxu0 %v3192
    %3223 = vmatprep.subr.bf16.mxu0 0
    %3224 = vmatpush1.bf16.msra.mxu0 %v3190
    %3225 = vmatprep.subr.bf16.mxu0 0
    %3226 = vmatpush2.bf16.msra.mxu0 0
    %3227 = vmatprep.subr.bf16.mxu0 0
    %3228 = vmatpush2.bf16.msra.mxu0 0
    %3229 = vmatprep.subr.bf16.mxu0 0
    %3230 = vmatpush2.bf16.msra.mxu0 0
    %3231 = vmatprep.subr.bf16.mxu0 0
    %3232 = vmatpush2.bf16.msra.mxu0 0
    %3233 = vmatprep.subr.bf16.mxu0 0
    %3234 = vmatpush2.bf16.msra.mxu0 0
    %3235 = vmatprep.subr.bf16.mxu0 0
    %3236 = vmatpush2.bf16.msra.mxu0 0
    %3237 = vmatprep.subr.bf16.mxu0 0
    %3238 = vmatpush2.bf16.msra.mxu0 0
    %3239 = vmatprep.subr.bf16.mxu0 0
    %3240 = vmatpush2.bf16.msra.mxu0 0
    %3241 = vmatprep.mubr.bf16.mxu0 0
    %3242 = vmatmul.mubr.bf16.gmra.mxu0 %v3198
    %v3243 = vpop.f32.mrf.mxu0
    %v3244 = vadd.f32 0.0, %v3243
    %v3245 = vpop.f32.mrf.mxu0
    %v3246 = vpop.f32.mrf.mxu0
    %v3247 = vadd.f32 0.0, %v3246
    %v3248 = vpop.f32.mrf.mxu0
    %3249 = vmatprep.mubr.bf16.mxu0 0
    %3250 = vmatmul.mubr.bf16.gmra.mxu0 %v3201
    %v3251 = vpop.f32.mrf.mxu0
    %v3252 = vadd.f32 0.0, %v3251
    %v3253 = vpop.f32.mrf.mxu0
    %v3254 = vpop.f32.mrf.mxu0
    %v3255 = vadd.f32 0.0, %v3254
    %v3256 = vpop.f32.mrf.mxu0
    %3257 = vmatprep.mubr.bf16.mxu0 0
    %3258 = vmatmul.mubr.bf16.gmra.mxu0 %v3204
    %v3259 = vpop.f32.mrf.mxu0
    %v3260 = vadd.f32 0.0, %v3259
    %v3261 = vpop.f32.mrf.mxu0
    %v3262 = vpop.f32.mrf.mxu0
    %v3263 = vpop.f32.mrf.mxu0
    %3264 = vdwg.mxu0
    %3270 = vrot.lane.b32.xlu0 %v2804, 8
    %v3271 = vpop.permute.xlu0 %3270
    %3272 = vrot.lane.b32.xlu0 %v2807, 8
    %v3273 = vpop.permute.xlu0 %3272
    %3274 = vrot.lane.b32.xlu0 %v2812, 8
    %v3275 = vpop.permute.xlu0 %3274
    %3276 = vrot.lane.b32.xlu0 %v2815, 8
    %v3277 = vpop.permute.xlu0 %3276
    %3278 = vrot.lane.b32.xlu0 %v2820, 8
    %v3279 = vpop.permute.xlu0 %3278
    %3290 = vrot.lane.b32.xlu0 %v3024, 16
    %v3291 = vpop.permute.xlu0 %3290
    %3292 = vrot.lane.b32.xlu0 %v3027, 16
    %v3293 = vpop.permute.xlu0 %3292
    %3294 = vrot.lane.b32.xlu0 %v3032, 16
    %v3295 = vpop.permute.xlu0 %3294
    %3296 = vrot.lane.b32.xlu0 %v3035, 16
    %v3297 = vpop.permute.xlu0 %3296
    %3298 = vrot.lane.b32.xlu0 %v3040, 16
    %v3299 = vpop.permute.xlu0 %3298
    %3310 = vrot.lane.b32.xlu0 %v3244, 24
    %v3311 = vpop.permute.xlu0 %3310
    %3312 = vrot.lane.b32.xlu0 %v3247, 24
    %v3313 = vpop.permute.xlu0 %3312
    %3314 = vrot.lane.b32.xlu0 %v3252, 24
    %v3315 = vpop.permute.xlu0 %3314
    %3316 = vrot.lane.b32.xlu0 %v3255, 24
    %v3317 = vpop.permute.xlu0 %3316
    %3318 = vrot.lane.b32.xlu0 %v3260, 24
    %v3319 = vpop.permute.xlu0 %3318
    %v3325 = vsel %vm782, %v2581, %v3271
    %v3326 = vsel %vm782, %v2584, %v3273
    %v3327 = vsel %vm782, %v2589, %v3275
    %v3328 = vsel %vm782, %v2592, %v3277
    %v3329 = vsel %vm782, %v2597, %v3279
    %v3330 = vsel %vm421, %v3325, %v3291
    %v3331 = vsel %vm421, %v3326, %v3293
    %v3332 = vsel %vm421, %v3327, %v3295
    %v3333 = vsel %vm421, %v3328, %v3297
    %v3334 = vsel %vm421, %v3329, %v3299
    %v3335 = vsel %vm1727, %v3330, %v3311
    %v3336 = vsel %vm1727, %v3331, %v3313
    %v3337 = vsel %vm1727, %v3332, %v3315
    %v3338 = vsel %vm1727, %v3333, %v3317
    %v3339 = vsel %vm1727, %v3334, %v3319
    %v3340 = vpack.c.bf16 %v3336, %v3335
    %v3341 = vpack.c.bf16 %v3338, %v3337
    %v3342 = vpack.c.bf16 %v3339, %v3339
    %v3343 = vld [vmem:[%s63] sm:$0xf]
    %v3344 = vld [vmem:[%s63 + $0x4] sm:$0xf]
    %v3345 = vld [vmem:[%s63 + $0x8] sm:$0xf]
    %v3346 = vld [vmem:[%s63 + $0xc] sm:$0xf]
    %v3347 = vld [vmem:[%s65] sm:$0x1]
    %v3349 = vlaneseq
    %v3350 = vshrl.u32 %v3349, 7
    %v3351 = vsub.s32 0, %v3350
    %v3352 = vrot.slane %v3347, %v3351
    %v3358 = vunpack.c.l.b16 %v3343
    %v3359 = vunpack.c.l.b16 %v3344
    %v3360 = vunpack.c.l.b16 %v3345
    %v3361 = vunpack.c.l.b16 %v3346
    %v3362 = vpack.c.b16 %v3359, %v3358
    %v3363 = vpack.c.b16 %v3361, %v3360
    %v3367 = vsel %vm300, %v3340, 0
    %v3370 = vsel %vm300, %v3341, 0
    %v3373 = vsel %vm300, %v3342, 0
    %3375 = vmatprep.subr.bf16.mxu0 0
    %3376 = vmatpush1.bf16.msra.mxu0 0
    %3377 = vmatprep.subr.bf16.mxu0 0
    %3378 = vmatpush1.bf16.msra.mxu0 0
    %3379 = vmatprep.subr.bf16.mxu0 0
    %3380 = vmatpush1.bf16.msra.mxu0 0
    %3381 = vmatprep.subr.bf16.mxu0 0
    %3382 = vmatpush1.bf16.msra.mxu0 0
    %3383 = vmatprep.subr.bf16.mxu0 0
    %3384 = vmatpush1.bf16.msra.mxu0 0
    %3385 = vmatprep.subr.bf16.mxu0 0
    %3386 = vmatpush1.bf16.msra.mxu0 0
    %3387 = vmatprep.subr.bf16.mxu0 0
    %3388 = vmatpush1.bf16.msra.mxu0 %v3363
    %3389 = vmatprep.subr.bf16.mxu0 0
    %3390 = vmatpush1.bf16.msra.mxu0 %v3362
    %3391 = vmatprep.subr.bf16.mxu0 0
    %3392 = vmatpush2.bf16.msra.mxu0 0
    %3393 = vmatprep.subr.bf16.mxu0 0
    %3394 = vmatpush2.bf16.msra.mxu0 0
    %3395 = vmatprep.subr.bf16.mxu0 0
    %3396 = vmatpush2.bf16.msra.mxu0 0
    %3397 = vmatprep.subr.bf16.mxu0 0
    %3398 = vmatpush2.bf16.msra.mxu0 0
    %3399 = vmatprep.subr.bf16.mxu0 0
    %3400 = vmatpush2.bf16.msra.mxu0 0
    %3401 = vmatprep.subr.bf16.mxu0 0
    %3402 = vmatpush2.bf16.msra.mxu0 0
    %3403 = vmatprep.subr.bf16.mxu0 0
    %3404 = vmatpush2.bf16.msra.mxu0 0
    %3405 = vmatprep.subr.bf16.mxu0 0
    %3406 = vmatpush2.bf16.msra.mxu0 0
    %3407 = vmatprep.mubr.bf16.mxu0 0
    %3408 = vmatmul.mubr.bf16.gmra.mxu0 %v3367
    %v3409 = vpop.f32.mrf.mxu0
    %v3410 = vadd.f32 %v3352, %v3409
    %v3411 = vpop.f32.mrf.mxu0
    %v3412 = vpop.f32.mrf.mxu0
    %v3413 = vadd.f32 %v3352, %v3412
    %v3414 = vpop.f32.mrf.mxu0
    %3415 = vmatprep.mubr.bf16.mxu0 0
    %3416 = vmatmul.mubr.bf16.gmra.mxu0 %v3370
    %v3417 = vpop.f32.mrf.mxu0
    %v3418 = vadd.f32 %v3352, %v3417
    %v3419 = vpop.f32.mrf.mxu0
    %v3420 = vpop.f32.mrf.mxu0
    %v3421 = vadd.f32 %v3352, %v3420
    %v3422 = vpop.f32.mrf.mxu0
    %3423 = vmatprep.mubr.bf16.mxu0 0
    %3424 = vmatmul.mubr.bf16.gmra.mxu0 %v3373
    %v3425 = vpop.f32.mrf.mxu0
    %v3426 = vadd.f32 %v3352, %v3425
    %v3427 = vpop.f32.mrf.mxu0
    %v3428 = vpop.f32.mrf.mxu0
    %v3429 = vpop.f32.mrf.mxu0
    %3430 = vdwg.mxu0
    %v3431 = vadd.f32 %v571, %v3410
    %v3432 = vadd.f32 %v572, %v3413
    %v3433 = vadd.f32 %v573, %v3418
    %v3434 = vadd.f32 %v574, %v3421
    %v3435 = vadd.f32 %v575, %v3426
    %v3436 = vld [vmem:[%s67] sm:$0x1]
    %v3437 = vld [vmem:[%s69] sm:$0x1]
    %v3438 = vsel %vm300, %v3431, 0.0
    %3439 = vadd.xlane.f32.xlu0 %v3438
    %v3440 = vpop.xlane.xlu0 %3439
    %v3441 = vsel %vm300, %v3432, 0.0
    %3442 = vadd.xlane.f32.xlu0 %v3441
    %v3443 = vpop.xlane.xlu0 %3442
    %v3444 = vsel %vm300, %v3433, 0.0
    %3445 = vadd.xlane.f32.xlu0 %v3444
    %v3446 = vpop.xlane.xlu0 %3445
    %v3447 = vsel %vm300, %v3434, 0.0
    %3448 = vadd.xlane.f32.xlu0 %v3447
    %v3449 = vpop.xlane.xlu0 %3448
    %v3450 = vsel %vm313, %v3435, 0.0
    %3451 = vadd.xlane.f32.xlu0 %v3450
    %v3452 = vpop.xlane.xlu0 %3451
    %v3453 = vmul.f32 %v3440, %v317
    %v3454 = vmul.f32 %v3443, %v317
    %v3455 = vmul.f32 %v3446, %v317
    %v3456 = vmul.f32 %v3449, %v317
    %v3457 = vmul.f32 %v3452, %v317
    %v3458 = vsub.f32 %v3431, %v3453
    %v3459 = vsub.f32 %v3432, %v3454
    %v3460 = vsub.f32 %v3433, %v3455
    %v3461 = vsub.f32 %v3434, %v3456
    %v3462 = vsub.f32 %v3435, %v3457
    %v3463 = vmul.f32 %v3458, %v3458
    %v3464 = vmul.f32 %v3459, %v3459
    %v3465 = vmul.f32 %v3460, %v3460
    %v3466 = vmul.f32 %v3461, %v3461
    %v3467 = vmul.f32 %v3462, %v3462
    %v3468 = vsel %vm300, %v3463, 0.0
    %3469 = vadd.xlane.f32.xlu0 %v3468
    %v3470 = vpop.xlane.xlu0 %3469
    %v3471 = vsel %vm300, %v3464, 0.0
    %3472 = vadd.xlane.f32.xlu0 %v3471
    %v3473 = vpop.xlane.xlu0 %3472
    %v3474 = vsel %vm300, %v3465, 0.0
    %3475 = vadd.xlane.f32.xlu0 %v3474
    %v3476 = vpop.xlane.xlu0 %3475
    %v3477 = vsel %vm300, %v3466, 0.0
    %3478 = vadd.xlane.f32.xlu0 %v3477
    %v3479 = vpop.xlane.xlu0 %3478
    %v3480 = vsel %vm313, %v3467, 0.0
    %3481 = vadd.xlane.f32.xlu0 %v3480
    %v3482 = vpop.xlane.xlu0 %3481
    %v3483 = vmul.f32 %v3470, %v317
    %v3484 = vmul.f32 %v3473, %v317
    %v3485 = vmul.f32 %v3476, %v317
    %v3486 = vmul.f32 %v3479, %v317
    %v3487 = vmul.f32 %v3482, %v317
    %v3488 = vadd.f32 %v3483, 1e-06
    %v3489 = vadd.f32 %v3484, 1e-06
    %v3490 = vadd.f32 %v3485, 1e-06
    %v3491 = vadd.f32 %v3486, 1e-06
    %v3492 = vadd.f32 %v3487, 1e-06
    %v3493 = vrsqrt.pop %v3488
    %v3494 = vrsqrt.pop %v3489
    %v3495 = vrsqrt.pop %v3490
    %v3496 = vrsqrt.pop %v3491
    %v3497 = vrsqrt.pop %v3492
    %v3498 = vmul.f32 %v3458, %v3493
    %v3499 = vmul.f32 %v3459, %v3494
    %v3500 = vmul.f32 %v3460, %v3495
    %v3501 = vmul.f32 %v3461, %v3496
    %v3502 = vmul.f32 %v3462, %v3497
    %v3504 = vlaneseq
    %v3505 = vshrl.u32 %v3504, 7
    %v3506 = vsub.s32 0, %v3505
    %v3507 = vrot.slane %v3436, %v3506
    %v3509 = vmul.f32 %v3498, %v3507
    %v3510 = vmul.f32 %v3499, %v3507
    %v3511 = vmul.f32 %v3500, %v3507
    %v3512 = vmul.f32 %v3501, %v3507
    %v3513 = vmul.f32 %v3502, %v3507
    %v3515 = vlaneseq
    %v3516 = vshrl.u32 %v3515, 7
    %v3517 = vsub.s32 0, %v3516
    %v3518 = vrot.slane %v3437, %v3517
    %v3520 = vadd.f32 %v3509, %v3518
    %v3521 = vadd.f32 %v3510, %v3518
    %v3522 = vadd.f32 %v3511, %v3518
    %v3523 = vadd.f32 %v3512, %v3518
    %v3524 = vadd.f32 %v3513, %v3518
    %v3525 = vpack.c.bf16 %v3521, %v3520
    %v3526 = vpack.c.bf16 %v3523, %v3522
    %v3527 = vpack.c.bf16 %v3524, %v3524
    %v3528 = vld [vmem:[%s71] sm:$0xf]
    %v3529 = vld [vmem:[%s71 + $0x4] sm:$0xf]
    %v3530 = vld [vmem:[%s71 + $0x8] sm:$0xf]
    %v3531 = vld [vmem:[%s71 + $0xc] sm:$0xf]
    %v3532 = vld [vmem:[%s73] sm:$0x1]
    %v3534 = vlaneseq
    %v3535 = vshrl.u32 %v3534, 7
    %v3536 = vsub.s32 0, %v3535
    %v3537 = vrot.slane %v3532, %v3536
    %v3543 = vunpack.c.l.b16 %v3528
    %v3544 = vunpack.c.l.b16 %v3529
    %v3545 = vunpack.c.l.b16 %v3530
    %v3546 = vunpack.c.l.b16 %v3531
    %v3547 = vpack.c.b16 %v3544, %v3543
    %v3548 = vpack.c.b16 %v3546, %v3545
    %v3552 = vsel %vm300, %v3525, 0
    %v3555 = vsel %vm300, %v3526, 0
    %v3558 = vsel %vm300, %v3527, 0
    %3560 = vmatprep.subr.bf16.mxu0 0
    %3561 = vmatpush1.bf16.msra.mxu0 0
    %3562 = vmatprep.subr.bf16.mxu0 0
    %3563 = vmatpush1.bf16.msra.mxu0 0
    %3564 = vmatprep.subr.bf16.mxu0 0
    %3565 = vmatpush1.bf16.msra.mxu0 0
    %3566 = vmatprep.subr.bf16.mxu0 0
    %3567 = vmatpush1.bf16.msra.mxu0 0
    %3568 = vmatprep.subr.bf16.mxu0 0
    %3569 = vmatpush1.bf16.msra.mxu0 0
    %3570 = vmatprep.subr.bf16.mxu0 0
    %3571 = vmatpush1.bf16.msra.mxu0 0
    %3572 = vmatprep.subr.bf16.mxu0 0
    %3573 = vmatpush1.bf16.msra.mxu0 %v3548
    %3574 = vmatprep.subr.bf16.mxu0 0
    %3575 = vmatpush1.bf16.msra.mxu0 %v3547
    %3576 = vmatprep.subr.bf16.mxu0 0
    %3577 = vmatpush2.bf16.msra.mxu0 0
    %3578 = vmatprep.subr.bf16.mxu0 0
    %3579 = vmatpush2.bf16.msra.mxu0 0
    %3580 = vmatprep.subr.bf16.mxu0 0
    %3581 = vmatpush2.bf16.msra.mxu0 0
    %3582 = vmatprep.subr.bf16.mxu0 0
    %3583 = vmatpush2.bf16.msra.mxu0 0
    %3584 = vmatprep.subr.bf16.mxu0 0
    %3585 = vmatpush2.bf16.msra.mxu0 0
    %3586 = vmatprep.subr.bf16.mxu0 0
    %3587 = vmatpush2.bf16.msra.mxu0 0
    %3588 = vmatprep.subr.bf16.mxu0 0
    %3589 = vmatpush2.bf16.msra.mxu0 0
    %3590 = vmatprep.subr.bf16.mxu0 0
    %3591 = vmatpush2.bf16.msra.mxu0 0
    %3592 = vmatprep.mubr.bf16.mxu0 0
    %3593 = vmatmul.mubr.bf16.gmra.mxu0 %v3552
    %v3594 = vpop.f32.mrf.mxu0
    %v3595 = vadd.f32 %v3537, %v3594
    %v3596 = vpop.f32.mrf.mxu0
    %v3597 = vpop.f32.mrf.mxu0
    %v3598 = vadd.f32 %v3537, %v3597
    %v3599 = vpop.f32.mrf.mxu0
    %3600 = vmatprep.mubr.bf16.mxu0 0
    %3601 = vmatmul.mubr.bf16.gmra.mxu0 %v3555
    %v3602 = vpop.f32.mrf.mxu0
    %v3603 = vadd.f32 %v3537, %v3602
    %v3604 = vpop.f32.mrf.mxu0
    %v3605 = vpop.f32.mrf.mxu0
    %v3606 = vadd.f32 %v3537, %v3605
    %v3607 = vpop.f32.mrf.mxu0
    %3608 = vmatprep.mubr.bf16.mxu0 0
    %3609 = vmatmul.mubr.bf16.gmra.mxu0 %v3558
    %v3610 = vpop.f32.mrf.mxu0
    %v3611 = vadd.f32 %v3537, %v3610
    %v3612 = vpop.f32.mrf.mxu0
    %v3613 = vpop.f32.mrf.mxu0
    %v3614 = vpop.f32.mrf.mxu0
    %3615 = vdwg.mxu0
    %v3616 = vmul.f32 %v3595, 0.5
    %v3617 = vmul.f32 %v3598, 0.5
    %v3618 = vmul.f32 %v3603, 0.5
    %v3619 = vmul.f32 %v3606, 0.5
    %v3620 = vmul.f32 %v3611, 0.5
    %v3621 = vmul.f32 %v3595, 0.044715
    %v3622 = vmul.f32 %v3598, 0.044715
    %v3623 = vmul.f32 %v3603, 0.044715
    %v3624 = vmul.f32 %v3606, 0.044715
    %v3625 = vmul.f32 %v3611, 0.044715
    %v3626 = vmul.f32 %v3621, %v3595
    %v3627 = vmul.f32 %v3622, %v3598
    %v3628 = vmul.f32 %v3623, %v3603
    %v3629 = vmul.f32 %v3624, %v3606
    %v3630 = vmul.f32 %v3625, %v3611
    %v3631 = vmul.f32 %v3626, %v3595
    %v3632 = vmul.f32 %v3627, %v3598
    %v3633 = vmul.f32 %v3628, %v3603
    %v3634 = vmul.f32 %v3629, %v3606
    %v3635 = vmul.f32 %v3630, %v3611
    %v3636 = vadd.f32 %v3595, %v3631
    %v3637 = vadd.f32 %v3598, %v3632
    %v3638 = vadd.f32 %v3603, %v3633
    %v3639 = vadd.f32 %v3606, %v3634
    %v3640 = vadd.f32 %v3611, %v3635
    %v3641 = vmul.f32 %v3636, 0.7978846
    %v3642 = vmul.f32 %v3637, 0.7978846
    %v3643 = vmul.f32 %v3638, 0.7978846
    %v3644 = vmul.f32 %v3639, 0.7978846
    %v3645 = vmul.f32 %v3640, 0.7978846
    %v3646 = vtanh.pop %v3641
    %v3647 = vtanh.pop %v3642
    %v3648 = vtanh.pop %v3643
    %v3649 = vtanh.pop %v3644
    %v3650 = vtanh.pop %v3645
    %v3651 = vadd.f32 %v3646, 1.0
    %v3652 = vadd.f32 %v3647, 1.0
    %v3653 = vadd.f32 %v3648, 1.0
    %v3654 = vadd.f32 %v3649, 1.0
    %v3655 = vadd.f32 %v3650, 1.0
    %v3656 = vmul.f32 %v3616, %v3651
    %v3657 = vmul.f32 %v3617, %v3652
    %v3658 = vmul.f32 %v3618, %v3653
    %v3659 = vmul.f32 %v3619, %v3654
    %v3660 = vmul.f32 %v3620, %v3655
    %v3661 = vpack.c.bf16 %v3657, %v3656
    %v3662 = vpack.c.bf16 %v3659, %v3658
    %v3663 = vpack.c.bf16 %v3660, %v3660
    %v3664 = vld [vmem:[%s75] sm:$0xf]
    %v3665 = vld [vmem:[%s75 + $0x4] sm:$0xf]
    %v3666 = vld [vmem:[%s75 + $0x8] sm:$0xf]
    %v3667 = vld [vmem:[%s75 + $0xc] sm:$0xf]
    %v3668 = vld [vmem:[%s75 + $0x10] sm:$0xf]
    %v3669 = vld [vmem:[%s75 + $0x14] sm:$0xf]
    %v3670 = vld [vmem:[%s75 + $0x18] sm:$0xf]
    %v3671 = vld [vmem:[%s75 + $0x1c] sm:$0xf]
    %v3672 = vld [vmem:[%s75 + $0x20] sm:$0xf]
    %v3673 = vld [vmem:[%s75 + $0x24] sm:$0xf]
    %v3674 = vld [vmem:[%s75 + $0x28] sm:$0xf]
    %v3675 = vld [vmem:[%s75 + $0x2c] sm:$0xf]
    %v3676 = vld [vmem:[%s75 + $0x30] sm:$0xf]
    %v3677 = vld [vmem:[%s75 + $0x34] sm:$0xf]
    %v3678 = vld [vmem:[%s75 + $0x38] sm:$0xf]
    %v3679 = vld [vmem:[%s75 + $0x3c] sm:$0xf]
    %v3696 = vunpack.c.l.b16 %v3664
    %v3697 = vunpack.c.l.b16 %v3665
    %v3698 = vunpack.c.l.b16 %v3666
    %v3699 = vunpack.c.l.b16 %v3667
    %v3700 = vunpack.c.l.b16 %v3668
    %v3701 = vunpack.c.l.b16 %v3669
    %v3702 = vunpack.c.l.b16 %v3670
    %v3703 = vunpack.c.l.b16 %v3671
    %v3704 = vunpack.c.l.b16 %v3672
    %v3705 = vunpack.c.l.b16 %v3673
    %v3706 = vunpack.c.l.b16 %v3674
    %v3707 = vunpack.c.l.b16 %v3675
    %v3708 = vunpack.c.l.b16 %v3676
    %v3709 = vunpack.c.l.b16 %v3677
    %v3710 = vunpack.c.l.b16 %v3678
    %v3711 = vunpack.c.l.b16 %v3679
    %v3712 = vpack.c.b16 %v3697, %v3696
    %v3713 = vpack.c.b16 %v3699, %v3698
    %v3714 = vpack.c.b16 %v3701, %v3700
    %v3715 = vpack.c.b16 %v3703, %v3702
    %v3716 = vpack.c.b16 %v3705, %v3704
    %v3717 = vpack.c.b16 %v3707, %v3706
    %v3718 = vpack.c.b16 %v3709, %v3708
    %v3719 = vpack.c.b16 %v3711, %v3710
    %3728 = vmatprep.subr.bf16.mxu0 0
    %3729 = vmatpush1.bf16.msra.mxu0 %v3719
    %3730 = vmatprep.subr.bf16.mxu0 0
    %3731 = vmatpush1.bf16.msra.mxu0 %v3718
    %3732 = vmatprep.subr.bf16.mxu0 0
    %3733 = vmatpush1.bf16.msra.mxu0 %v3717
    %3734 = vmatprep.subr.bf16.mxu0 0
    %3735 = vmatpush1.bf16.msra.mxu0 %v3716
    %3736 = vmatprep.subr.bf16.mxu0 0
    %3737 = vmatpush1.bf16.msra.mxu0 %v3715
    %3738 = vmatprep.subr.bf16.mxu0 0
    %3739 = vmatpush1.bf16.msra.mxu0 %v3714
    %3740 = vmatprep.subr.bf16.mxu0 0
    %3741 = vmatpush1.bf16.msra.mxu0 %v3713
    %3742 = vmatprep.subr.bf16.mxu0 0
    %3743 = vmatpush1.bf16.msra.mxu0 %v3712
    %3744 = vmatprep.subr.bf16.mxu0 0
    %3745 = vmatpush2.bf16.msra.mxu0 0
    %3746 = vmatprep.subr.bf16.mxu0 0
    %3747 = vmatpush2.bf16.msra.mxu0 0
    %3748 = vmatprep.subr.bf16.mxu0 0
    %3749 = vmatpush2.bf16.msra.mxu0 0
    %3750 = vmatprep.subr.bf16.mxu0 0
    %3751 = vmatpush2.bf16.msra.mxu0 0
    %3752 = vmatprep.subr.bf16.mxu0 0
    %3753 = vmatpush2.bf16.msra.mxu0 0
    %3754 = vmatprep.subr.bf16.mxu0 0
    %3755 = vmatpush2.bf16.msra.mxu0 0
    %3756 = vmatprep.subr.bf16.mxu0 0
    %3757 = vmatpush2.bf16.msra.mxu0 0
    %3758 = vmatprep.subr.bf16.mxu0 0
    %3759 = vmatpush2.bf16.msra.mxu0 0
    %3760 = vmatprep.mubr.bf16.mxu0 0
    %3761 = vmatmul.mubr.bf16.gmra.mxu0 %v3661
    %v3762 = vpop.f32.mrf.mxu0
    %v3763 = vadd.f32 0.0, %v3762
    %v3764 = vpop.f32.mrf.mxu0
    %v3765 = vpop.f32.mrf.mxu0
    %v3766 = vadd.f32 0.0, %v3765
    %v3767 = vpop.f32.mrf.mxu0
    %3768 = vmatprep.mubr.bf16.mxu0 0
    %3769 = vmatmul.mubr.bf16.gmra.mxu0 %v3662
    %v3770 = vpop.f32.mrf.mxu0
    %v3771 = vadd.f32 0.0, %v3770
    %v3772 = vpop.f32.mrf.mxu0
    %v3773 = vpop.f32.mrf.mxu0
    %v3774 = vadd.f32 0.0, %v3773
    %v3775 = vpop.f32.mrf.mxu0
    %3776 = vmatprep.mubr.bf16.mxu0 0
    %3777 = vmatmul.mubr.bf16.gmra.mxu0 %v3663
    %v3778 = vpop.f32.mrf.mxu0
    %v3779 = vadd.f32 0.0, %v3778
    %v3780 = vpop.f32.mrf.mxu0
    %v3781 = vpop.f32.mrf.mxu0
    %v3782 = vpop.f32.mrf.mxu0
    %3783 = vdwg.mxu0
    %v3784 = vadd.f32 %v3431, %v3763
    %v3785 = vadd.f32 %v3432, %v3766
    %v3786 = vadd.f32 %v3433, %v3771
    %v3787 = vadd.f32 %v3434, %v3774
    %v3788 = vadd.f32 %v3435, %v3779
    %v3789 = vld [vmem:[%s77] sm:$0x1]
    %v3791 = vlaneseq
    %v3792 = vshrl.u32 %v3791, 7
    %v3793 = vsub.s32 0, %v3792
    %v3794 = vrot.slane %v3789, %v3793
    %v3796 = vadd.f32 %v3784, %v3794
    %v3797 = vadd.f32 %v3785, %v3794
    %v3798 = vadd.f32 %v3786, %v3794
    %v3799 = vadd.f32 %v3787, %v3794
    %v3800 = vadd.f32 %v3788, %v3794
    %v3801 = vadd.f32 %v2189, %v3796
    %v3802 = vmul.f32 %v3801, 0.5
    %v3803 = vadd.f32 %v3802, %v3796
    %v3804 = vmul.f32 %v3803, 0.5
    %vm3805 = vcmp.eq.s32.totalorder %v577, 0
    %vm3806 = vcmp.eq.s32.totalorder %v578, 0
    %vm3807 = vcmp.eq.s32.totalorder %v579, 0
    %vm3808 = vcmp.eq.s32.totalorder %v580, 0
    %vm3809 = vcmp.eq.s32.totalorder %v581, 0
    %v3810 = vsel %vm3805, 1, 0
    %v3811 = vsel %vm3806, 1, 0
    %v3812 = vsel %vm3807, 1, 0
    %v3813 = vsel %vm3808, 1, 0
    %v3814 = vsel %vm3809, 1, 0
    %vm3815 = vcmp.eq.s32.totalorder %v3810, 1
    %vm3816 = vcmp.eq.s32.totalorder %v3811, 1
    %vm3817 = vcmp.eq.s32.totalorder %v3812, 1
    %vm3818 = vcmp.eq.s32.totalorder %v3813, 1
    %vm3819 = vcmp.eq.s32.totalorder %v3814, 1
    %v3820 = vlaneseq
    %v3821 = vshrl.u32 %v3820, 7
    %v3822 = vsub.s32 0, %v3821
    %v3823 = vrot.slane %v3802, %v3822
    %v3824 = vsel %vm3815, %v3823, %v2189
    %v3825 = vsel %vm3816, %v3823, %v2190
    %v3826 = vsel %vm3817, %v3823, %v2191
    %v3827 = vsel %vm3818, %v3823, %v2192
    %v3828 = vsel %vm3819, %v3823, %v2193
    %v3829 = vlaneseq
    %v3830 = vshrl.u32 %v3829, 7
    %v3831 = vsub.s32 0, %v3830
    %v3832 = vrot.slane %v3804, %v3831
    %v3833 = vsel %vm3815, %v3832, %v3796
    %v3834 = vsel %vm3816, %v3832, %v3797
    %v3835 = vsel %vm3817, %v3832, %v3798
    %v3836 = vsel %vm3818, %v3832, %v3799
    %v3837 = vsel %vm3819, %v3832, %v3800
    %v3838 = vadd.f32 %v3826, %v3835
    %v3839 = vmul.f32 %v3838, 0.5
    %v3840 = vadd.f32 %v3839, %v3835
    %v3841 = vmul.f32 %v3840, 0.5
    %vm3842 = vcmp.eq.s32.totalorder %v577, 17
    %vm3843 = vcmp.eq.s32.totalorder %v578, 17
    %vm3844 = vcmp.eq.s32.totalorder %v579, 17
    %vm3845 = vcmp.eq.s32.totalorder %v580, 17
    %vm3846 = vcmp.eq.s32.totalorder %v581, 17
    %v3847 = vsel %vm3842, 1, 0
    %v3848 = vsel %vm3843, 1, 0
    %v3849 = vsel %vm3844, 1, 0
    %v3850 = vsel %vm3845, 1, 0
    %v3851 = vsel %vm3846, 1, 0
    %vm3852 = vcmp.eq.s32.totalorder %v3847, 1
    %vm3853 = vcmp.eq.s32.totalorder %v3848, 1
    %vm3854 = vcmp.eq.s32.totalorder %v3849, 1
    %vm3855 = vcmp.eq.s32.totalorder %v3850, 1
    %vm3856 = vcmp.eq.s32.totalorder %v3851, 1
    %v3857 = vlaneseq
    %v3858 = vshrl.u32 %v3857, 7
    %v3859 = vsub.s32 1, %v3858
    %v3860 = vrot.slane %v3839, %v3859
    %v3861 = vsel %vm3852, %v3860, %v3824
    %v3862 = vsel %vm3853, %v3860, %v3825
    %v3863 = vsel %vm3854, %v3860, %v3826
    %v3864 = vsel %vm3855, %v3860, %v3827
    %v3865 = vsel %vm3856, %v3860, %v3828
    %v3866 = vlaneseq
    %v3867 = vshrl.u32 %v3866, 7
    %v3868 = vsub.s32 1, %v3867
    %v3869 = vrot.slane %v3841, %v3868
    %v3870 = vsel %vm3852, %v3869, %v3833
    %v3871 = vsel %vm3853, %v3869, %v3834
    %v3872 = vsel %vm3854, %v3869, %v3835
    %v3873 = vsel %vm3855, %v3869, %v3836
    %v3874 = vsel %vm3856, %v3869, %v3837
    %s3875 = scalar_lea.vmem %s13, 1
    %v3876 = vld [vmem:[%s3875] sm:$0x1]
    %s3877 = scalar_lea.vmem %s15, 1
    %v3878 = vld [vmem:[%s3877] sm:$0x1]
    %v3879 = vsel %vm300, %v3861, 0.0
    %3880 = vadd.xlane.f32.xlu0 %v3879
    %v3881 = vpop.xlane.xlu0 %3880
    %v3882 = vsel %vm300, %v3862, 0.0
    %3883 = vadd.xlane.f32.xlu0 %v3882
    %v3884 = vpop.xlane.xlu0 %3883
    %v3885 = vsel %vm300, %v3863, 0.0
    %3886 = vadd.xlane.f32.xlu0 %v3885
    %v3887 = vpop.xlane.xlu0 %3886
    %v3888 = vsel %vm300, %v3864, 0.0
    %3889 = vadd.xlane.f32.xlu0 %v3888
    %v3890 = vpop.xlane.xlu0 %3889
    %v3891 = vsel %vm313, %v3865, 0.0
    %3892 = vadd.xlane.f32.xlu0 %v3891
    %v3893 = vpop.xlane.xlu0 %3892
    %v3894 = vmul.f32 %v3881, %v317
    %v3895 = vmul.f32 %v3884, %v317
    %v3896 = vmul.f32 %v3887, %v317
    %v3897 = vmul.f32 %v3890, %v317
    %v3898 = vmul.f32 %v3893, %v317
    %v3899 = vsub.f32 %v3861, %v3894
    %v3900 = vsub.f32 %v3862, %v3895
    %v3901 = vsub.f32 %v3863, %v3896
    %v3902 = vsub.f32 %v3864, %v3897
    %v3903 = vsub.f32 %v3865, %v3898
    %v3904 = vmul.f32 %v3899, %v3899
    %v3905 = vmul.f32 %v3900, %v3900
    %v3906 = vmul.f32 %v3901, %v3901
    %v3907 = vmul.f32 %v3902, %v3902
    %v3908 = vmul.f32 %v3903, %v3903
    %v3909 = vsel %vm300, %v3904, 0.0
    %3910 = vadd.xlane.f32.xlu0 %v3909
    %v3911 = vpop.xlane.xlu0 %3910
    %v3912 = vsel %vm300, %v3905, 0.0
    %3913 = vadd.xlane.f32.xlu0 %v3912
    %v3914 = vpop.xlane.xlu0 %3913
    %v3915 = vsel %vm300, %v3906, 0.0
    %3916 = vadd.xlane.f32.xlu0 %v3915
    %v3917 = vpop.xlane.xlu0 %3916
    %v3918 = vsel %vm300, %v3907, 0.0
    %3919 = vadd.xlane.f32.xlu0 %v3918
    %v3920 = vpop.xlane.xlu0 %3919
    %v3921 = vsel %vm313, %v3908, 0.0
    %3922 = vadd.xlane.f32.xlu0 %v3921
    %v3923 = vpop.xlane.xlu0 %3922
    %v3924 = vmul.f32 %v3911, %v317
    %v3925 = vmul.f32 %v3914, %v317
    %v3926 = vmul.f32 %v3917, %v317
    %v3927 = vmul.f32 %v3920, %v317
    %v3928 = vmul.f32 %v3923, %v317
    %v3929 = vadd.f32 %v3924, 1e-06
    %v3930 = vadd.f32 %v3925, 1e-06
    %v3931 = vadd.f32 %v3926, 1e-06
    %v3932 = vadd.f32 %v3927, 1e-06
    %v3933 = vadd.f32 %v3928, 1e-06
    %v3934 = vrsqrt.pop %v3929
    %v3935 = vrsqrt.pop %v3930
    %v3936 = vrsqrt.pop %v3931
    %v3937 = vrsqrt.pop %v3932
    %v3938 = vrsqrt.pop %v3933
    %v3939 = vmul.f32 %v3899, %v3934
    %v3940 = vmul.f32 %v3900, %v3935
    %v3941 = vmul.f32 %v3901, %v3936
    %v3942 = vmul.f32 %v3902, %v3937
    %v3943 = vmul.f32 %v3903, %v3938
    %v3945 = vlaneseq
    %v3946 = vshrl.u32 %v3945, 7
    %v3947 = vsub.s32 0, %v3946
    %v3948 = vrot.slane %v3876, %v3947
    %v3950 = vmul.f32 %v3939, %v3948
    %v3951 = vmul.f32 %v3940, %v3948
    %v3952 = vmul.f32 %v3941, %v3948
    %v3953 = vmul.f32 %v3942, %v3948
    %v3954 = vmul.f32 %v3943, %v3948
    %v3956 = vlaneseq
    %v3957 = vshrl.u32 %v3956, 7
    %v3958 = vsub.s32 0, %v3957
    %v3959 = vrot.slane %v3878, %v3958
    %v3961 = vadd.f32 %v3950, %v3959
    %v3962 = vadd.f32 %v3951, %v3959
    %v3963 = vadd.f32 %v3952, %v3959
    %v3964 = vadd.f32 %v3953, %v3959
    %v3965 = vadd.f32 %v3954, %v3959
    %v3966 = vpack.c.bf16 %v3962, %v3961
    %v3967 = vpack.c.bf16 %v3964, %v3963
    %v3968 = vpack.c.bf16 %v3965, %v3965
    %s3969 = scalar_lea.vmem %s17, 16
    %v3970 = vld [vmem:[%s3969] sm:$0xf]
    %v3971 = vld [vmem:[%s3969 + $0x4] sm:$0xf]
    %v3972 = vld [vmem:[%s3969 + $0x8] sm:$0xf]
    %v3973 = vld [vmem:[%s3969 + $0xc] sm:$0xf]
    %s3974 = scalar_lea.vmem %s19, 1
    %v3975 = vld [vmem:[%s3974] sm:$0x1]
    %v3977 = vlaneseq
    %v3978 = vshrl.u32 %v3977, 7
    %v3979 = vsub.s32 0, %v3978
    %v3980 = vrot.slane %v3975, %v3979
    %v3986 = vunpack.c.l.b16 %v3970
    %v3987 = vunpack.c.l.b16 %v3971
    %v3988 = vunpack.c.l.b16 %v3972
    %v3989 = vunpack.c.l.b16 %v3973
    %v3990 = vpack.c.b16 %v3987, %v3986
    %v3991 = vpack.c.b16 %v3989, %v3988
    %v3995 = vsel %vm300, %v3966, 0
    %v3998 = vsel %vm300, %v3967, 0
    %v4001 = vsel %vm300, %v3968, 0
    %4003 = vmatprep.subr.bf16.mxu0 0
    %4004 = vmatpush1.bf16.msra.mxu0 0
    %4005 = vmatprep.subr.bf16.mxu0 0
    %4006 = vmatpush1.bf16.msra.mxu0 0
    %4007 = vmatprep.subr.bf16.mxu0 0
    %4008 = vmatpush1.bf16.msra.mxu0 0
    %4009 = vmatprep.subr.bf16.mxu0 0
    %4010 = vmatpush1.bf16.msra.mxu0 0
    %4011 = vmatprep.subr.bf16.mxu0 0
    %4012 = vmatpush1.bf16.msra.mxu0 0
    %4013 = vmatprep.subr.bf16.mxu0 0
    %4014 = vmatpush1.bf16.msra.mxu0 0
    %4015 = vmatprep.subr.bf16.mxu0 0
    %4016 = vmatpush1.bf16.msra.mxu0 %v3991
    %4017 = vmatprep.subr.bf16.mxu0 0
    %4018 = vmatpush1.bf16.msra.mxu0 %v3990
    %4019 = vmatprep.subr.bf16.mxu0 0
    %4020 = vmatpush2.bf16.msra.mxu0 0
    %4021 = vmatprep.subr.bf16.mxu0 0
    %4022 = vmatpush2.bf16.msra.mxu0 0
    %4023 = vmatprep.subr.bf16.mxu0 0
    %4024 = vmatpush2.bf16.msra.mxu0 0
    %4025 = vmatprep.subr.bf16.mxu0 0
    %4026 = vmatpush2.bf16.msra.mxu0 0
    %4027 = vmatprep.subr.bf16.mxu0 0
    %4028 = vmatpush2.bf16.msra.mxu0 0
    %4029 = vmatprep.subr.bf16.mxu0 0
    %4030 = vmatpush2.bf16.msra.mxu0 0
    %4031 = vmatprep.subr.bf16.mxu0 0
    %4032 = vmatpush2.bf16.msra.mxu0 0
    %4033 = vmatprep.subr.bf16.mxu0 0
    %4034 = vmatpush2.bf16.msra.mxu0 0
    %4035 = vmatprep.mubr.bf16.mxu0 0
    %4036 = vmatmul.mubr.bf16.gmra.mxu0 %v3995
    %v4037 = vpop.f32.mrf.mxu0
    %v4038 = vadd.f32 %v3980, %v4037
    %v4039 = vpop.f32.mrf.mxu0
    %v4040 = vpop.f32.mrf.mxu0
    %v4041 = vadd.f32 %v3980, %v4040
    %v4042 = vpop.f32.mrf.mxu0
    %4043 = vmatprep.mubr.bf16.mxu0 0
    %4044 = vmatmul.mubr.bf16.gmra.mxu0 %v3998
    %v4045 = vpop.f32.mrf.mxu0
    %v4046 = vadd.f32 %v3980, %v4045
    %v4047 = vpop.f32.mrf.mxu0
    %v4048 = vpop.f32.mrf.mxu0
    %v4049 = vadd.f32 %v3980, %v4048
    %v4050 = vpop.f32.mrf.mxu0
    %4051 = vmatprep.mubr.bf16.mxu0 0
    %4052 = vmatmul.mubr.bf16.gmra.mxu0 %v4001
    %v4053 = vpop.f32.mrf.mxu0
    %v4054 = vadd.f32 %v3980, %v4053
    %v4055 = vpop.f32.mrf.mxu0
    %v4056 = vpop.f32.mrf.mxu0
    %v4057 = vpop.f32.mrf.mxu0
    %4058 = vdwg.mxu0
    %v4059 = vmul.f32 %v4038, 0.35355338
    %v4060 = vmul.f32 %v4041, 0.35355338
    %v4061 = vmul.f32 %v4046, 0.35355338
    %v4062 = vmul.f32 %v4049, 0.35355338
    %v4063 = vmul.f32 %v4054, 0.35355338
    %v4064 = vpack.c.bf16 %v4060, %v4059
    %v4065 = vpack.c.bf16 %v4062, %v4061
    %v4066 = vpack.c.bf16 %v4063, %v4063
    %v4067 = vpack.c.bf16 %v4041, %v4038
    %v4068 = vpack.c.bf16 %v4049, %v4046
    %v4069 = vpack.c.bf16 %v4054, %v4054
    %4073 = vrot.lane.b32.xlu0 %v4067, 96
    %v4074 = vpop.permute.xlu0 %4073
    %4075 = vrot.lane.b32.xlu0 %v4068, 96
    %v4076 = vpop.permute.xlu0 %4075
    %4077 = vrot.lane.b32.xlu0 %v4069, 96
    %v4078 = vpop.permute.xlu0 %4077
    %v4080 = vsel %vm782, %v4064, 0
    %v4083 = vsel %vm782, %v4065, 0
    %v4086 = vsel %vm782, %v4066, 0
    %v4089 = vsel %vm782, %v4074, 0
    %v4092 = vsel %vm782, %v4076, 0
    %v4095 = vsel %vm782, %v4078, 0
    %4097 = vmatprep.subr.bf16.mxu0 0
    %4098 = vmatpush1.bf16.xpose.msra.mxu0 0
    %4099 = vmatprep.subr.bf16.mxu0 0
    %4100 = vmatpush1.bf16.xpose.msra.mxu0 0
    %4101 = vmatprep.subr.bf16.mxu0 0
    %4102 = vmatpush1.bf16.xpose.msra.mxu0 0
    %4103 = vmatprep.subr.bf16.mxu0 0
    %4104 = vmatpush1.bf16.xpose.msra.mxu0 0
    %4105 = vmatprep.subr.bf16.mxu0 0
    %4106 = vmatpush1.bf16.xpose.msra.mxu0 0
    %4107 = vmatprep.subr.bf16.mxu0 0
    %4108 = vmatpush1.bf16.xpose.msra.mxu0 %v4095
    %4109 = vmatprep.subr.bf16.mxu0 0
    %4110 = vmatpush1.bf16.xpose.msra.mxu0 %v4092
    %4111 = vmatprep.subr.bf16.mxu0 0
    %4112 = vmatpush1.bf16.xpose.msra.mxu0 %v4089
    %4113 = vmatprep.subr.bf16.mxu0 0
    %4114 = vmatpush2.bf16.xpose.msra.mxu0 0
    %4115 = vmatprep.subr.bf16.mxu0 0
    %4116 = vmatpush2.bf16.xpose.msra.mxu0 0
    %4117 = vmatprep.subr.bf16.mxu0 0
    %4118 = vmatpush2.bf16.xpose.msra.mxu0 0
    %4119 = vmatprep.subr.bf16.mxu0 0
    %4120 = vmatpush2.bf16.xpose.msra.mxu0 0
    %4121 = vmatprep.subr.bf16.mxu0 0
    %4122 = vmatpush2.bf16.xpose.msra.mxu0 0
    %4123 = vmatprep.subr.bf16.mxu0 0
    %4124 = vmatpush2.bf16.xpose.msra.mxu0 0
    %4125 = vmatprep.subr.bf16.mxu0 0
    %4126 = vmatpush2.bf16.xpose.msra.mxu0 0
    %4127 = vmatprep.subr.bf16.mxu0 0
    %4128 = vmatpush2.bf16.xpose.msra.mxu0 0
    %4129 = vmatprep.mubr.bf16.mxu0 0
    %4130 = vmatmul.mubr.bf16.gmra.mxu0 %v4080
    %v4131 = vpop.f32.mrf.mxu0
    %v4132 = vadd.f32 %v180, %v4131
    %v4133 = vpop.f32.mrf.mxu0
    %v4134 = vpop.f32.mrf.mxu0
    %v4135 = vadd.f32 %v181, %v4134
    %v4136 = vpop.f32.mrf.mxu0
    %4137 = vmatprep.mubr.bf16.mxu0 0
    %4138 = vmatmul.mubr.bf16.gmra.mxu0 %v4083
    %v4139 = vpop.f32.mrf.mxu0
    %v4140 = vadd.f32 %v182, %v4139
    %v4141 = vpop.f32.mrf.mxu0
    %v4142 = vpop.f32.mrf.mxu0
    %v4143 = vadd.f32 %v183, %v4142
    %v4144 = vpop.f32.mrf.mxu0
    %4145 = vmatprep.mubr.bf16.mxu0 0
    %4146 = vmatmul.mubr.bf16.gmra.mxu0 %v4086
    %v4147 = vpop.f32.mrf.mxu0
    %v4148 = vadd.f32 %v184, %v4147
    %v4149 = vpop.f32.mrf.mxu0
    %v4150 = vpop.f32.mrf.mxu0
    %v4151 = vpop.f32.mrf.mxu0
    %4152 = vdwg.mxu0
    %v4153 = vsel %vm857, %v4132, -inf
    %4154 = vmax.xlane.f32.xlu0 %v4153
    %v4155 = vpop.xlane.xlu0 %4154
    %v4156 = vsel %vm857, %v4135, -inf
    %4157 = vmax.xlane.f32.xlu0 %v4156
    %v4158 = vpop.xlane.xlu0 %4157
    %v4159 = vsel %vm857, %v4140, -inf
    %4160 = vmax.xlane.f32.xlu0 %v4159
    %v4161 = vpop.xlane.xlu0 %4160
    %v4162 = vsel %vm857, %v4143, -inf
    %4163 = vmax.xlane.f32.xlu0 %v4162
    %v4164 = vpop.xlane.xlu0 %4163
    %v4165 = vsel %vm870, %v4148, -inf
    %4166 = vmax.xlane.f32.xlu0 %v4165
    %v4167 = vpop.xlane.xlu0 %4166
    %v4168 = vsub.f32 %v4132, %v4155
    %v4169 = vsub.f32 %v4135, %v4158
    %v4170 = vsub.f32 %v4140, %v4161
    %v4171 = vsub.f32 %v4143, %v4164
    %v4172 = vsub.f32 %v4148, %v4167
    %v4173 = vmul.f32 %v4168, 1.442695
    %v4174 = vpow.pop %v4173
    %v4175 = vmul.f32 %v4169, 1.442695
    %v4176 = vpow.pop %v4175
    %v4177 = vmul.f32 %v4170, 1.442695
    %v4178 = vpow.pop %v4177
    %v4179 = vmul.f32 %v4171, 1.442695
    %v4180 = vpow.pop %v4179
    %v4181 = vmul.f32 %v4172, 1.442695
    %v4182 = vpow.pop %v4181
    %v4183 = vsel %vm857, %v4174, 0.0
    %4184 = vadd.xlane.f32.xlu0 %v4183
    %v4185 = vpop.xlane.xlu0 %4184
    %v4186 = vsel %vm857, %v4176, 0.0
    %4187 = vadd.xlane.f32.xlu0 %v4186
    %v4188 = vpop.xlane.xlu0 %4187
    %v4189 = vsel %vm857, %v4178, 0.0
    %4190 = vadd.xlane.f32.xlu0 %v4189
    %v4191 = vpop.xlane.xlu0 %4190
    %v4192 = vsel %vm857, %v4180, 0.0
    %4193 = vadd.xlane.f32.xlu0 %v4192
    %v4194 = vpop.xlane.xlu0 %4193
    %v4195 = vsel %vm870, %v4182, 0.0
    %4196 = vadd.xlane.f32.xlu0 %v4195
    %v4197 = vpop.xlane.xlu0 %4196
    %v4198 = vrcp.pop %v4185
    %v4199 = vrcp.pop %v4188
    %v4200 = vrcp.pop %v4191
    %v4201 = vrcp.pop %v4194
    %v4202 = vrcp.pop %v4197
    %v4203 = vmul.f32 %v4174, %v4198
    %v4204 = vmul.f32 %v4176, %v4199
    %v4205 = vmul.f32 %v4178, %v4200
    %v4206 = vmul.f32 %v4180, %v4201
    %v4207 = vmul.f32 %v4182, %v4202
    %v4208 = vpack.c.bf16 %v4204, %v4203
    %v4209 = vpack.c.bf16 %v4206, %v4205
    %v4210 = vpack.c.bf16 %v4207, %v4207
    %4211 = vrot.lane.b32.xlu0 %v4067, 64
    %v4212 = vpop.permute.xlu0 %4211
    %4213 = vrot.lane.b32.xlu0 %v4068, 64
    %v4214 = vpop.permute.xlu0 %4213
    %4215 = vrot.lane.b32.xlu0 %v4069, 64
    %v4216 = vpop.permute.xlu0 %4215
    %v4220 = vsel %vm857, %v4208, 0
    %v4223 = vsel %vm857, %v4209, 0
    %v4226 = vsel %vm857, %v4210, 0
    %v4229 = vsel %vm934, %v4216, 0
    %4231 = vmatprep.subr.bf16.mxu0 0
    %4232 = vmatpush1.bf16.msra.mxu0 0
    %4233 = vmatprep.subr.bf16.mxu0 0
    %4234 = vmatpush1.bf16.msra.mxu0 0
    %4235 = vmatprep.subr.bf16.mxu0 0
    %4236 = vmatpush1.bf16.msra.mxu0 0
    %4237 = vmatprep.subr.bf16.mxu0 0
    %4238 = vmatpush1.bf16.msra.mxu0 0
    %4239 = vmatprep.subr.bf16.mxu0 0
    %4240 = vmatpush1.bf16.msra.mxu0 0
    %4241 = vmatprep.subr.bf16.mxu0 0
    %4242 = vmatpush1.bf16.msra.mxu0 %v4229
    %4243 = vmatprep.subr.bf16.mxu0 0
    %4244 = vmatpush1.bf16.msra.mxu0 %v4214
    %4245 = vmatprep.subr.bf16.mxu0 0
    %4246 = vmatpush1.bf16.msra.mxu0 %v4212
    %4247 = vmatprep.subr.bf16.mxu0 0
    %4248 = vmatpush2.bf16.msra.mxu0 0
    %4249 = vmatprep.subr.bf16.mxu0 0
    %4250 = vmatpush2.bf16.msra.mxu0 0
    %4251 = vmatprep.subr.bf16.mxu0 0
    %4252 = vmatpush2.bf16.msra.mxu0 0
    %4253 = vmatprep.subr.bf16.mxu0 0
    %4254 = vmatpush2.bf16.msra.mxu0 0
    %4255 = vmatprep.subr.bf16.mxu0 0
    %4256 = vmatpush2.bf16.msra.mxu0 0
    %4257 = vmatprep.subr.bf16.mxu0 0
    %4258 = vmatpush2.bf16.msra.mxu0 0
    %4259 = vmatprep.subr.bf16.mxu0 0
    %4260 = vmatpush2.bf16.msra.mxu0 0
    %4261 = vmatprep.subr.bf16.mxu0 0
    %4262 = vmatpush2.bf16.msra.mxu0 0
    %4263 = vmatprep.mubr.bf16.mxu0 0
    %4264 = vmatmul.mubr.bf16.gmra.mxu0 %v4220
    %v4265 = vpop.f32.mrf.mxu0
    %v4266 = vadd.f32 0.0, %v4265
    %v4267 = vpop.f32.mrf.mxu0
    %v4268 = vpop.f32.mrf.mxu0
    %v4269 = vadd.f32 0.0, %v4268
    %v4270 = vpop.f32.mrf.mxu0
    %4271 = vmatprep.mubr.bf16.mxu0 0
    %4272 = vmatmul.mubr.bf16.gmra.mxu0 %v4223
    %v4273 = vpop.f32.mrf.mxu0
    %v4274 = vadd.f32 0.0, %v4273
    %v4275 = vpop.f32.mrf.mxu0
    %v4276 = vpop.f32.mrf.mxu0
    %v4277 = vadd.f32 0.0, %v4276
    %v4278 = vpop.f32.mrf.mxu0
    %4279 = vmatprep.mubr.bf16.mxu0 0
    %4280 = vmatmul.mubr.bf16.gmra.mxu0 %v4226
    %v4281 = vpop.f32.mrf.mxu0
    %v4282 = vadd.f32 0.0, %v4281
    %v4283 = vpop.f32.mrf.mxu0
    %v4284 = vpop.f32.mrf.mxu0
    %v4285 = vpop.f32.mrf.mxu0
    %4286 = vdwg.mxu0
    %4290 = vrot.lane.b32.xlu0 %v4064, 120
    %v4291 = vpop.permute.xlu0 %4290
    %4292 = vrot.lane.b32.xlu0 %v4065, 120
    %v4293 = vpop.permute.xlu0 %4292
    %4294 = vrot.lane.b32.xlu0 %v4066, 120
    %v4295 = vpop.permute.xlu0 %4294
    %4296 = vrot.lane.b32.xlu0 %v4067, 88
    %v4297 = vpop.permute.xlu0 %4296
    %4298 = vrot.lane.b32.xlu0 %v4068, 88
    %v4299 = vpop.permute.xlu0 %4298
    %4300 = vrot.lane.b32.xlu0 %v4069, 88
    %v4301 = vpop.permute.xlu0 %4300
    %v4303 = vsel %vm782, %v4291, 0
    %v4306 = vsel %vm782, %v4293, 0
    %v4309 = vsel %vm782, %v4295, 0
    %v4312 = vsel %vm782, %v4297, 0
    %v4315 = vsel %vm782, %v4299, 0
    %v4318 = vsel %vm782, %v4301, 0
    %4320 = vmatprep.subr.bf16.mxu0 0
    %4321 = vmatpush1.bf16.xpose.msra.mxu0 0
    %4322 = vmatprep.subr.bf16.mxu0 0
    %4323 = vmatpush1.bf16.xpose.msra.mxu0 0
    %4324 = vmatprep.subr.bf16.mxu0 0
    %4325 = vmatpush1.bf16.xpose.msra.mxu0 0
    %4326 = vmatprep.subr.bf16.mxu0 0
    %4327 = vmatpush1.bf16.xpose.msra.mxu0 0
    %4328 = vmatprep.subr.bf16.mxu0 0
    %4329 = vmatpush1.bf16.xpose.msra.mxu0 0
    %4330 = vmatprep.subr.bf16.mxu0 0
    %4331 = vmatpush1.bf16.xpose.msra.mxu0 %v4318
    %4332 = vmatprep.subr.bf16.mxu0 0
    %4333 = vmatpush1.bf16.xpose.msra.mxu0 %v4315
    %4334 = vmatprep.subr.bf16.mxu0 0
    %4335 = vmatpush1.bf16.xpose.msra.mxu0 %v4312
    %4336 = vmatprep.subr.bf16.mxu0 0
    %4337 = vmatpush2.bf16.xpose.msra.mxu0 0
    %4338 = vmatprep.subr.bf16.mxu0 0
    %4339 = vmatpush2.bf16.xpose.msra.mxu0 0
    %4340 = vmatprep.subr.bf16.mxu0 0
    %4341 = vmatpush2.bf16.xpose.msra.mxu0 0
    %4342 = vmatprep.subr.bf16.mxu0 0
    %4343 = vmatpush2.bf16.xpose.msra.mxu0 0
    %4344 = vmatprep.subr.bf16.mxu0 0
    %4345 = vmatpush2.bf16.xpose.msra.mxu0 0
    %4346 = vmatprep.subr.bf16.mxu0 0
    %4347 = vmatpush2.bf16.xpose.msra.mxu0 0
    %4348 = vmatprep.subr.bf16.mxu0 0
    %4349 = vmatpush2.bf16.xpose.msra.mxu0 0
    %4350 = vmatprep.subr.bf16.mxu0 0
    %4351 = vmatpush2.bf16.xpose.msra.mxu0 0
    %4352 = vmatprep.mubr.bf16.mxu0 0
    %4353 = vmatmul.mubr.bf16.gmra.mxu0 %v4303
    %v4354 = vpop.f32.mrf.mxu0
    %v4355 = vadd.f32 %v180, %v4354
    %v4356 = vpop.f32.mrf.mxu0
    %v4357 = vpop.f32.mrf.mxu0
    %v4358 = vadd.f32 %v181, %v4357
    %v4359 = vpop.f32.mrf.mxu0
    %4360 = vmatprep.mubr.bf16.mxu0 0
    %4361 = vmatmul.mubr.bf16.gmra.mxu0 %v4306
    %v4362 = vpop.f32.mrf.mxu0
    %v4363 = vadd.f32 %v182, %v4362
    %v4364 = vpop.f32.mrf.mxu0
    %v4365 = vpop.f32.mrf.mxu0
    %v4366 = vadd.f32 %v183, %v4365
    %v4367 = vpop.f32.mrf.mxu0
    %4368 = vmatprep.mubr.bf16.mxu0 0
    %4369 = vmatmul.mubr.bf16.gmra.mxu0 %v4309
    %v4370 = vpop.f32.mrf.mxu0
    %v4371 = vadd.f32 %v184, %v4370
    %v4372 = vpop.f32.mrf.mxu0
    %v4373 = vpop.f32.mrf.mxu0
    %v4374 = vpop.f32.mrf.mxu0
    %4375 = vdwg.mxu0
    %v4376 = vsel %vm857, %v4355, -inf
    %4377 = vmax.xlane.f32.xlu0 %v4376
    %v4378 = vpop.xlane.xlu0 %4377
    %v4379 = vsel %vm857, %v4358, -inf
    %4380 = vmax.xlane.f32.xlu0 %v4379
    %v4381 = vpop.xlane.xlu0 %4380
    %v4382 = vsel %vm857, %v4363, -inf
    %4383 = vmax.xlane.f32.xlu0 %v4382
    %v4384 = vpop.xlane.xlu0 %4383
    %v4385 = vsel %vm857, %v4366, -inf
    %4386 = vmax.xlane.f32.xlu0 %v4385
    %v4387 = vpop.xlane.xlu0 %4386
    %v4388 = vsel %vm870, %v4371, -inf
    %4389 = vmax.xlane.f32.xlu0 %v4388
    %v4390 = vpop.xlane.xlu0 %4389
    %v4391 = vsub.f32 %v4355, %v4378
    %v4392 = vsub.f32 %v4358, %v4381
    %v4393 = vsub.f32 %v4363, %v4384
    %v4394 = vsub.f32 %v4366, %v4387
    %v4395 = vsub.f32 %v4371, %v4390
    %v4396 = vmul.f32 %v4391, 1.442695
    %v4397 = vpow.pop %v4396
    %v4398 = vmul.f32 %v4392, 1.442695
    %v4399 = vpow.pop %v4398
    %v4400 = vmul.f32 %v4393, 1.442695
    %v4401 = vpow.pop %v4400
    %v4402 = vmul.f32 %v4394, 1.442695
    %v4403 = vpow.pop %v4402
    %v4404 = vmul.f32 %v4395, 1.442695
    %v4405 = vpow.pop %v4404
    %v4406 = vsel %vm857, %v4397, 0.0
    %4407 = vadd.xlane.f32.xlu0 %v4406
    %v4408 = vpop.xlane.xlu0 %4407
    %v4409 = vsel %vm857, %v4399, 0.0
    %4410 = vadd.xlane.f32.xlu0 %v4409
    %v4411 = vpop.xlane.xlu0 %4410
    %v4412 = vsel %vm857, %v4401, 0.0
    %4413 = vadd.xlane.f32.xlu0 %v4412
    %v4414 = vpop.xlane.xlu0 %4413
    %v4415 = vsel %vm857, %v4403, 0.0
    %4416 = vadd.xlane.f32.xlu0 %v4415
    %v4417 = vpop.xlane.xlu0 %4416
    %v4418 = vsel %vm870, %v4405, 0.0
    %4419 = vadd.xlane.f32.xlu0 %v4418
    %v4420 = vpop.xlane.xlu0 %4419
    %v4421 = vrcp.pop %v4408
    %v4422 = vrcp.pop %v4411
    %v4423 = vrcp.pop %v4414
    %v4424 = vrcp.pop %v4417
    %v4425 = vrcp.pop %v4420
    %v4426 = vmul.f32 %v4397, %v4421
    %v4427 = vmul.f32 %v4399, %v4422
    %v4428 = vmul.f32 %v4401, %v4423
    %v4429 = vmul.f32 %v4403, %v4424
    %v4430 = vmul.f32 %v4405, %v4425
    %v4431 = vpack.c.bf16 %v4427, %v4426
    %v4432 = vpack.c.bf16 %v4429, %v4428
    %v4433 = vpack.c.bf16 %v4430, %v4430
    %4434 = vrot.lane.b32.xlu0 %v4067, 56
    %v4435 = vpop.permute.xlu0 %4434
    %4436 = vrot.lane.b32.xlu0 %v4068, 56
    %v4437 = vpop.permute.xlu0 %4436
    %4438 = vrot.lane.b32.xlu0 %v4069, 56
    %v4439 = vpop.permute.xlu0 %4438
    %v4443 = vsel %vm857, %v4431, 0
    %v4446 = vsel %vm857, %v4432, 0
    %v4449 = vsel %vm857, %v4433, 0
    %v4452 = vsel %vm934, %v4439, 0
    %4454 = vmatprep.subr.bf16.mxu0 0
    %4455 = vmatpush1.bf16.msra.mxu0 0
    %4456 = vmatprep.subr.bf16.mxu0 0
    %4457 = vmatpush1.bf16.msra.mxu0 0
    %4458 = vmatprep.subr.bf16.mxu0 0
    %4459 = vmatpush1.bf16.msra.mxu0 0
    %4460 = vmatprep.subr.bf16.mxu0 0
    %4461 = vmatpush1.bf16.msra.mxu0 0
    %4462 = vmatprep.subr.bf16.mxu0 0
    %4463 = vmatpush1.bf16.msra.mxu0 0
    %4464 = vmatprep.subr.bf16.mxu0 0
    %4465 = vmatpush1.bf16.msra.mxu0 %v4452
    %4466 = vmatprep.subr.bf16.mxu0 0
    %4467 = vmatpush1.bf16.msra.mxu0 %v4437
    %4468 = vmatprep.subr.bf16.mxu0 0
    %4469 = vmatpush1.bf16.msra.mxu0 %v4435
    %4470 = vmatprep.subr.bf16.mxu0 0
    %4471 = vmatpush2.bf16.msra.mxu0 0
    %4472 = vmatprep.subr.bf16.mxu0 0
    %4473 = vmatpush2.bf16.msra.mxu0 0
    %4474 = vmatprep.subr.bf16.mxu0 0
    %4475 = vmatpush2.bf16.msra.mxu0 0
    %4476 = vmatprep.subr.bf16.mxu0 0
    %4477 = vmatpush2.bf16.msra.mxu0 0
    %4478 = vmatprep.subr.bf16.mxu0 0
    %4479 = vmatpush2.bf16.msra.mxu0 0
    %4480 = vmatprep.subr.bf16.mxu0 0
    %4481 = vmatpush2.bf16.msra.mxu0 0
    %4482 = vmatprep.subr.bf16.mxu0 0
    %4483 = vmatpush2.bf16.msra.mxu0 0
    %4484 = vmatprep.subr.bf16.mxu0 0
    %4485 = vmatpush2.bf16.msra.mxu0 0
    %4486 = vmatprep.mubr.bf16.mxu0 0
    %4487 = vmatmul.mubr.bf16.gmra.mxu0 %v4443
    %v4488 = vpop.f32.mrf.mxu0
    %v4489 = vadd.f32 0.0, %v4488
    %v4490 = vpop.f32.mrf.mxu0
    %v4491 = vpop.f32.mrf.mxu0
    %v4492 = vadd.f32 0.0, %v4491
    %v4493 = vpop.f32.mrf.mxu0
    %4494 = vmatprep.mubr.bf16.mxu0 0
    %4495 = vmatmul.mubr.bf16.gmra.mxu0 %v4446
    %v4496 = vpop.f32.mrf.mxu0
    %v4497 = vadd.f32 0.0, %v4496
    %v4498 = vpop.f32.mrf.mxu0
    %v4499 = vpop.f32.mrf.mxu0
    %v4500 = vadd.f32 0.0, %v4499
    %v4501 = vpop.f32.mrf.mxu0
    %4502 = vmatprep.mubr.bf16.mxu0 0
    %4503 = vmatmul.mubr.bf16.gmra.mxu0 %v4449
    %v4504 = vpop.f32.mrf.mxu0
    %v4505 = vadd.f32 0.0, %v4504
    %v4506 = vpop.f32.mrf.mxu0
    %v4507 = vpop.f32.mrf.mxu0
    %v4508 = vpop.f32.mrf.mxu0
    %4509 = vdwg.mxu0
    %4510 = vrot.lane.b32.xlu0 %v4064, 112
    %v4511 = vpop.permute.xlu0 %4510
    %4512 = vrot.lane.b32.xlu0 %v4065, 112
    %v4513 = vpop.permute.xlu0 %4512
    %4514 = vrot.lane.b32.xlu0 %v4066, 112
    %v4515 = vpop.permute.xlu0 %4514
    %4516 = vrot.lane.b32.xlu0 %v4067, 80
    %v4517 = vpop.permute.xlu0 %4516
    %4518 = vrot.lane.b32.xlu0 %v4068, 80
    %v4519 = vpop.permute.xlu0 %4518
    %4520 = vrot.lane.b32.xlu0 %v4069, 80
    %v4521 = vpop.permute.xlu0 %4520
    %v4523 = vsel %vm782, %v4511, 0
    %v4526 = vsel %vm782, %v4513, 0
    %v4529 = vsel %vm782, %v4515, 0
    %v4532 = vsel %vm782, %v4517, 0
    %v4535 = vsel %vm782, %v4519, 0
    %v4538 = vsel %vm782, %v4521, 0
    %4540 = vmatprep.subr.bf16.mxu0 0
    %4541 = vmatpush1.bf16.xpose.msra.mxu0 0
    %4542 = vmatprep.subr.bf16.mxu0 0
    %4543 = vmatpush1.bf16.xpose.msra.mxu0 0
    %4544 = vmatprep.subr.bf16.mxu0 0
    %4545 = vmatpush1.bf16.xpose.msra.mxu0 0
    %4546 = vmatprep.subr.bf16.mxu0 0
    %4547 = vmatpush1.bf16.xpose.msra.mxu0 0
    %4548 = vmatprep.subr.bf16.mxu0 0
    %4549 = vmatpush1.bf16.xpose.msra.mxu0 0
    %4550 = vmatprep.subr.bf16.mxu0 0
    %4551 = vmatpush1.bf16.xpose.msra.mxu0 %v4538
    %4552 = vmatprep.subr.bf16.mxu0 0
    %4553 = vmatpush1.bf16.xpose.msra.mxu0 %v4535
    %4554 = vmatprep.subr.bf16.mxu0 0
    %4555 = vmatpush1.bf16.xpose.msra.mxu0 %v4532
    %4556 = vmatprep.subr.bf16.mxu0 0
    %4557 = vmatpush2.bf16.xpose.msra.mxu0 0
    %4558 = vmatprep.subr.bf16.mxu0 0
    %4559 = vmatpush2.bf16.xpose.msra.mxu0 0
    %4560 = vmatprep.subr.bf16.mxu0 0
    %4561 = vmatpush2.bf16.xpose.msra.mxu0 0
    %4562 = vmatprep.subr.bf16.mxu0 0
    %4563 = vmatpush2.bf16.xpose.msra.mxu0 0
    %4564 = vmatprep.subr.bf16.mxu0 0
    %4565 = vmatpush2.bf16.xpose.msra.mxu0 0
    %4566 = vmatprep.subr.bf16.mxu0 0
    %4567 = vmatpush2.bf16.xpose.msra.mxu0 0
    %4568 = vmatprep.subr.bf16.mxu0 0
    %4569 = vmatpush2.bf16.xpose.msra.mxu0 0
    %4570 = vmatprep.subr.bf16.mxu0 0
    %4571 = vmatpush2.bf16.xpose.msra.mxu0 0
    %4572 = vmatprep.mubr.bf16.mxu0 0
    %4573 = vmatmul.mubr.bf16.gmra.mxu0 %v4523
    %v4574 = vpop.f32.mrf.mxu0
    %v4575 = vadd.f32 %v180, %v4574
    %v4576 = vpop.f32.mrf.mxu0
    %v4577 = vpop.f32.mrf.mxu0
    %v4578 = vadd.f32 %v181, %v4577
    %v4579 = vpop.f32.mrf.mxu0
    %4580 = vmatprep.mubr.bf16.mxu0 0
    %4581 = vmatmul.mubr.bf16.gmra.mxu0 %v4526
    %v4582 = vpop.f32.mrf.mxu0
    %v4583 = vadd.f32 %v182, %v4582
    %v4584 = vpop.f32.mrf.mxu0
    %v4585 = vpop.f32.mrf.mxu0
    %v4586 = vadd.f32 %v183, %v4585
    %v4587 = vpop.f32.mrf.mxu0
    %4588 = vmatprep.mubr.bf16.mxu0 0
    %4589 = vmatmul.mubr.bf16.gmra.mxu0 %v4529
    %v4590 = vpop.f32.mrf.mxu0
    %v4591 = vadd.f32 %v184, %v4590
    %v4592 = vpop.f32.mrf.mxu0
    %v4593 = vpop.f32.mrf.mxu0
    %v4594 = vpop.f32.mrf.mxu0
    %4595 = vdwg.mxu0
    %v4596 = vsel %vm857, %v4575, -inf
    %4597 = vmax.xlane.f32.xlu0 %v4596
    %v4598 = vpop.xlane.xlu0 %4597
    %v4599 = vsel %vm857, %v4578, -inf
    %4600 = vmax.xlane.f32.xlu0 %v4599
    %v4601 = vpop.xlane.xlu0 %4600
    %v4602 = vsel %vm857, %v4583, -inf
    %4603 = vmax.xlane.f32.xlu0 %v4602
    %v4604 = vpop.xlane.xlu0 %4603
    %v4605 = vsel %vm857, %v4586, -inf
    %4606 = vmax.xlane.f32.xlu0 %v4605
    %v4607 = vpop.xlane.xlu0 %4606
    %v4608 = vsel %vm870, %v4591, -inf
    %4609 = vmax.xlane.f32.xlu0 %v4608
    %v4610 = vpop.xlane.xlu0 %4609
    %v4611 = vsub.f32 %v4575, %v4598
    %v4612 = vsub.f32 %v4578, %v4601
    %v4613 = vsub.f32 %v4583, %v4604
    %v4614 = vsub.f32 %v4586, %v4607
    %v4615 = vsub.f32 %v4591, %v4610
    %v4616 = vmul.f32 %v4611, 1.442695
    %v4617 = vpow.pop %v4616
    %v4618 = vmul.f32 %v4612, 1.442695
    %v4619 = vpow.pop %v4618
    %v4620 = vmul.f32 %v4613, 1.442695
    %v4621 = vpow.pop %v4620
    %v4622 = vmul.f32 %v4614, 1.442695
    %v4623 = vpow.pop %v4622
    %v4624 = vmul.f32 %v4615, 1.442695
    %v4625 = vpow.pop %v4624
    %v4626 = vsel %vm857, %v4617, 0.0
    %4627 = vadd.xlane.f32.xlu0 %v4626
    %v4628 = vpop.xlane.xlu0 %4627
    %v4629 = vsel %vm857, %v4619, 0.0
    %4630 = vadd.xlane.f32.xlu0 %v4629
    %v4631 = vpop.xlane.xlu0 %4630
    %v4632 = vsel %vm857, %v4621, 0.0
    %4633 = vadd.xlane.f32.xlu0 %v4632
    %v4634 = vpop.xlane.xlu0 %4633
    %v4635 = vsel %vm857, %v4623, 0.0
    %4636 = vadd.xlane.f32.xlu0 %v4635
    %v4637 = vpop.xlane.xlu0 %4636
    %v4638 = vsel %vm870, %v4625, 0.0
    %4639 = vadd.xlane.f32.xlu0 %v4638
    %v4640 = vpop.xlane.xlu0 %4639
    %v4641 = vrcp.pop %v4628
    %v4642 = vrcp.pop %v4631
    %v4643 = vrcp.pop %v4634
    %v4644 = vrcp.pop %v4637
    %v4645 = vrcp.pop %v4640
    %v4646 = vmul.f32 %v4617, %v4641
    %v4647 = vmul.f32 %v4619, %v4642
    %v4648 = vmul.f32 %v4621, %v4643
    %v4649 = vmul.f32 %v4623, %v4644
    %v4650 = vmul.f32 %v4625, %v4645
    %v4651 = vpack.c.bf16 %v4647, %v4646
    %v4652 = vpack.c.bf16 %v4649, %v4648
    %v4653 = vpack.c.bf16 %v4650, %v4650
    %4654 = vrot.lane.b32.xlu0 %v4067, 48
    %v4655 = vpop.permute.xlu0 %4654
    %4656 = vrot.lane.b32.xlu0 %v4068, 48
    %v4657 = vpop.permute.xlu0 %4656
    %4658 = vrot.lane.b32.xlu0 %v4069, 48
    %v4659 = vpop.permute.xlu0 %4658
    %v4663 = vsel %vm857, %v4651, 0
    %v4666 = vsel %vm857, %v4652, 0
    %v4669 = vsel %vm857, %v4653, 0
    %v4672 = vsel %vm934, %v4659, 0
    %4674 = vmatprep.subr.bf16.mxu0 0
    %4675 = vmatpush1.bf16.msra.mxu0 0
    %4676 = vmatprep.subr.bf16.mxu0 0
    %4677 = vmatpush1.bf16.msra.mxu0 0
    %4678 = vmatprep.subr.bf16.mxu0 0
    %4679 = vmatpush1.bf16.msra.mxu0 0
    %4680 = vmatprep.subr.bf16.mxu0 0
    %4681 = vmatpush1.bf16.msra.mxu0 0
    %4682 = vmatprep.subr.bf16.mxu0 0
    %4683 = vmatpush1.bf16.msra.mxu0 0
    %4684 = vmatprep.subr.bf16.mxu0 0
    %4685 = vmatpush1.bf16.msra.mxu0 %v4672
    %4686 = vmatprep.subr.bf16.mxu0 0
    %4687 = vmatpush1.bf16.msra.mxu0 %v4657
    %4688 = vmatprep.subr.bf16.mxu0 0
    %4689 = vmatpush1.bf16.msra.mxu0 %v4655
    %4690 = vmatprep.subr.bf16.mxu0 0
    %4691 = vmatpush2.bf16.msra.mxu0 0
    %4692 = vmatprep.subr.bf16.mxu0 0
    %4693 = vmatpush2.bf16.msra.mxu0 0
    %4694 = vmatprep.subr.bf16.mxu0 0
    %4695 = vmatpush2.bf16.msra.mxu0 0
    %4696 = vmatprep.subr.bf16.mxu0 0
    %4697 = vmatpush2.bf16.msra.mxu0 0
    %4698 = vmatprep.subr.bf16.mxu0 0
    %4699 = vmatpush2.bf16.msra.mxu0 0
    %4700 = vmatprep.subr.bf16.mxu0 0
    %4701 = vmatpush2.bf16.msra.mxu0 0
    %4702 = vmatprep.subr.bf16.mxu0 0
    %4703 = vmatpush2.bf16.msra.mxu0 0
    %4704 = vmatprep.subr.bf16.mxu0 0
    %4705 = vmatpush2.bf16.msra.mxu0 0
    %4706 = vmatprep.mubr.bf16.mxu0 0
    %4707 = vmatmul.mubr.bf16.gmra.mxu0 %v4663
    %v4708 = vpop.f32.mrf.mxu0
    %v4709 = vadd.f32 0.0, %v4708
    %v4710 = vpop.f32.mrf.mxu0
    %v4711 = vpop.f32.mrf.mxu0
    %v4712 = vadd.f32 0.0, %v4711
    %v4713 = vpop.f32.mrf.mxu0
    %4714 = vmatprep.mubr.bf16.mxu0 0
    %4715 = vmatmul.mubr.bf16.gmra.mxu0 %v4666
    %v4716 = vpop.f32.mrf.mxu0
    %v4717 = vadd.f32 0.0, %v4716
    %v4718 = vpop.f32.mrf.mxu0
    %v4719 = vpop.f32.mrf.mxu0
    %v4720 = vadd.f32 0.0, %v4719
    %v4721 = vpop.f32.mrf.mxu0
    %4722 = vmatprep.mubr.bf16.mxu0 0
    %4723 = vmatmul.mubr.bf16.gmra.mxu0 %v4669
    %v4724 = vpop.f32.mrf.mxu0
    %v4725 = vadd.f32 0.0, %v4724
    %v4726 = vpop.f32.mrf.mxu0
    %v4727 = vpop.f32.mrf.mxu0
    %v4728 = vpop.f32.mrf.mxu0
    %4729 = vdwg.mxu0
    %4730 = vrot.lane.b32.xlu0 %v4064, 104
    %v4731 = vpop.permute.xlu0 %4730
    %4732 = vrot.lane.b32.xlu0 %v4065, 104
    %v4733 = vpop.permute.xlu0 %4732
    %4734 = vrot.lane.b32.xlu0 %v4066, 104
    %v4735 = vpop.permute.xlu0 %4734
    %4736 = vrot.lane.b32.xlu0 %v4067, 72
    %v4737 = vpop.permute.xlu0 %4736
    %4738 = vrot.lane.b32.xlu0 %v4068, 72
    %v4739 = vpop.permute.xlu0 %4738
    %4740 = vrot.lane.b32.xlu0 %v4069, 72
    %v4741 = vpop.permute.xlu0 %4740
    %v4743 = vsel %vm782, %v4731, 0
    %v4746 = vsel %vm782, %v4733, 0
    %v4749 = vsel %vm782, %v4735, 0
    %v4752 = vsel %vm782, %v4737, 0
    %v4755 = vsel %vm782, %v4739, 0
    %v4758 = vsel %vm782, %v4741, 0
    %4760 = vmatprep.subr.bf16.mxu0 0
    %4761 = vmatpush1.bf16.xpose.msra.mxu0 0
    %4762 = vmatprep.subr.bf16.mxu0 0
    %4763 = vmatpush1.bf16.xpose.msra.mxu0 0
    %4764 = vmatprep.subr.bf16.mxu0 0
    %4765 = vmatpush1.bf16.xpose.msra.mxu0 0
    %4766 = vmatprep.subr.bf16.mxu0 0
    %4767 = vmatpush1.bf16.xpose.msra.mxu0 0
    %4768 = vmatprep.subr.bf16.mxu0 0
    %4769 = vmatpush1.bf16.xpose.msra.mxu0 0
    %4770 = vmatprep.subr.bf16.mxu0 0
    %4771 = vmatpush1.bf16.xpose.msra.mxu0 %v4758
    %4772 = vmatprep.subr.bf16.mxu0 0
    %4773 = vmatpush1.bf16.xpose.msra.mxu0 %v4755
    %4774 = vmatprep.subr.bf16.mxu0 0
    %4775 = vmatpush1.bf16.xpose.msra.mxu0 %v4752
    %4776 = vmatprep.subr.bf16.mxu0 0
    %4777 = vmatpush2.bf16.xpose.msra.mxu0 0
    %4778 = vmatprep.subr.bf16.mxu0 0
    %4779 = vmatpush2.bf16.xpose.msra.mxu0 0
    %4780 = vmatprep.subr.bf16.mxu0 0
    %4781 = vmatpush2.bf16.xpose.msra.mxu0 0
    %4782 = vmatprep.subr.bf16.mxu0 0
    %4783 = vmatpush2.bf16.xpose.msra.mxu0 0
    %4784 = vmatprep.subr.bf16.mxu0 0
    %4785 = vmatpush2.bf16.xpose.msra.mxu0 0
    %4786 = vmatprep.subr.bf16.mxu0 0
    %4787 = vmatpush2.bf16.xpose.msra.mxu0 0
    %4788 = vmatprep.subr.bf16.mxu0 0
    %4789 = vmatpush2.bf16.xpose.msra.mxu0 0
    %4790 = vmatprep.subr.bf16.mxu0 0
    %4791 = vmatpush2.bf16.xpose.msra.mxu0 0
    %4792 = vmatprep.mubr.bf16.mxu0 0
    %4793 = vmatmul.mubr.bf16.gmra.mxu0 %v4743
    %v4794 = vpop.f32.mrf.mxu0
    %v4795 = vadd.f32 %v180, %v4794
    %v4796 = vpop.f32.mrf.mxu0
    %v4797 = vpop.f32.mrf.mxu0
    %v4798 = vadd.f32 %v181, %v4797
    %v4799 = vpop.f32.mrf.mxu0
    %4800 = vmatprep.mubr.bf16.mxu0 0
    %4801 = vmatmul.mubr.bf16.gmra.mxu0 %v4746
    %v4802 = vpop.f32.mrf.mxu0
    %v4803 = vadd.f32 %v182, %v4802
    %v4804 = vpop.f32.mrf.mxu0
    %v4805 = vpop.f32.mrf.mxu0
    %v4806 = vadd.f32 %v183, %v4805
    %v4807 = vpop.f32.mrf.mxu0
    %4808 = vmatprep.mubr.bf16.mxu0 0
    %4809 = vmatmul.mubr.bf16.gmra.mxu0 %v4749
    %v4810 = vpop.f32.mrf.mxu0
    %v4811 = vadd.f32 %v184, %v4810
    %v4812 = vpop.f32.mrf.mxu0
    %v4813 = vpop.f32.mrf.mxu0
    %v4814 = vpop.f32.mrf.mxu0
    %4815 = vdwg.mxu0
    %v4816 = vsel %vm857, %v4795, -inf
    %4817 = vmax.xlane.f32.xlu0 %v4816
    %v4818 = vpop.xlane.xlu0 %4817
    %v4819 = vsel %vm857, %v4798, -inf
    %4820 = vmax.xlane.f32.xlu0 %v4819
    %v4821 = vpop.xlane.xlu0 %4820
    %v4822 = vsel %vm857, %v4803, -inf
    %4823 = vmax.xlane.f32.xlu0 %v4822
    %v4824 = vpop.xlane.xlu0 %4823
    %v4825 = vsel %vm857, %v4806, -inf
    %4826 = vmax.xlane.f32.xlu0 %v4825
    %v4827 = vpop.xlane.xlu0 %4826
    %v4828 = vsel %vm870, %v4811, -inf
    %4829 = vmax.xlane.f32.xlu0 %v4828
    %v4830 = vpop.xlane.xlu0 %4829
    %v4831 = vsub.f32 %v4795, %v4818
    %v4832 = vsub.f32 %v4798, %v4821
    %v4833 = vsub.f32 %v4803, %v4824
    %v4834 = vsub.f32 %v4806, %v4827
    %v4835 = vsub.f32 %v4811, %v4830
    %v4836 = vmul.f32 %v4831, 1.442695
    %v4837 = vpow.pop %v4836
    %v4838 = vmul.f32 %v4832, 1.442695
    %v4839 = vpow.pop %v4838
    %v4840 = vmul.f32 %v4833, 1.442695
    %v4841 = vpow.pop %v4840
    %v4842 = vmul.f32 %v4834, 1.442695
    %v4843 = vpow.pop %v4842
    %v4844 = vmul.f32 %v4835, 1.442695
    %v4845 = vpow.pop %v4844
    %v4846 = vsel %vm857, %v4837, 0.0
    %4847 = vadd.xlane.f32.xlu0 %v4846
    %v4848 = vpop.xlane.xlu0 %4847
    %v4849 = vsel %vm857, %v4839, 0.0
    %4850 = vadd.xlane.f32.xlu0 %v4849
    %v4851 = vpop.xlane.xlu0 %4850
    %v4852 = vsel %vm857, %v4841, 0.0
    %4853 = vadd.xlane.f32.xlu0 %v4852
    %v4854 = vpop.xlane.xlu0 %4853
    %v4855 = vsel %vm857, %v4843, 0.0
    %4856 = vadd.xlane.f32.xlu0 %v4855
    %v4857 = vpop.xlane.xlu0 %4856
    %v4858 = vsel %vm870, %v4845, 0.0
    %4859 = vadd.xlane.f32.xlu0 %v4858
    %v4860 = vpop.xlane.xlu0 %4859
    %v4861 = vrcp.pop %v4848
    %v4862 = vrcp.pop %v4851
    %v4863 = vrcp.pop %v4854
    %v4864 = vrcp.pop %v4857
    %v4865 = vrcp.pop %v4860
    %v4866 = vmul.f32 %v4837, %v4861
    %v4867 = vmul.f32 %v4839, %v4862
    %v4868 = vmul.f32 %v4841, %v4863
    %v4869 = vmul.f32 %v4843, %v4864
    %v4870 = vmul.f32 %v4845, %v4865
    %v4871 = vpack.c.bf16 %v4867, %v4866
    %v4872 = vpack.c.bf16 %v4869, %v4868
    %v4873 = vpack.c.bf16 %v4870, %v4870
    %4874 = vrot.lane.b32.xlu0 %v4067, 40
    %v4875 = vpop.permute.xlu0 %4874
    %4876 = vrot.lane.b32.xlu0 %v4068, 40
    %v4877 = vpop.permute.xlu0 %4876
    %4878 = vrot.lane.b32.xlu0 %v4069, 40
    %v4879 = vpop.permute.xlu0 %4878
    %v4883 = vsel %vm857, %v4871, 0
    %v4886 = vsel %vm857, %v4872, 0
    %v4889 = vsel %vm857, %v4873, 0
    %v4892 = vsel %vm934, %v4879, 0
    %4894 = vmatprep.subr.bf16.mxu0 0
    %4895 = vmatpush1.bf16.msra.mxu0 0
    %4896 = vmatprep.subr.bf16.mxu0 0
    %4897 = vmatpush1.bf16.msra.mxu0 0
    %4898 = vmatprep.subr.bf16.mxu0 0
    %4899 = vmatpush1.bf16.msra.mxu0 0
    %4900 = vmatprep.subr.bf16.mxu0 0
    %4901 = vmatpush1.bf16.msra.mxu0 0
    %4902 = vmatprep.subr.bf16.mxu0 0
    %4903 = vmatpush1.bf16.msra.mxu0 0
    %4904 = vmatprep.subr.bf16.mxu0 0
    %4905 = vmatpush1.bf16.msra.mxu0 %v4892
    %4906 = vmatprep.subr.bf16.mxu0 0
    %4907 = vmatpush1.bf16.msra.mxu0 %v4877
    %4908 = vmatprep.subr.bf16.mxu0 0
    %4909 = vmatpush1.bf16.msra.mxu0 %v4875
    %4910 = vmatprep.subr.bf16.mxu0 0
    %4911 = vmatpush2.bf16.msra.mxu0 0
    %4912 = vmatprep.subr.bf16.mxu0 0
    %4913 = vmatpush2.bf16.msra.mxu0 0
    %4914 = vmatprep.subr.bf16.mxu0 0
    %4915 = vmatpush2.bf16.msra.mxu0 0
    %4916 = vmatprep.subr.bf16.mxu0 0
    %4917 = vmatpush2.bf16.msra.mxu0 0
    %4918 = vmatprep.subr.bf16.mxu0 0
    %4919 = vmatpush2.bf16.msra.mxu0 0
    %4920 = vmatprep.subr.bf16.mxu0 0
    %4921 = vmatpush2.bf16.msra.mxu0 0
    %4922 = vmatprep.subr.bf16.mxu0 0
    %4923 = vmatpush2.bf16.msra.mxu0 0
    %4924 = vmatprep.subr.bf16.mxu0 0
    %4925 = vmatpush2.bf16.msra.mxu0 0
    %4926 = vmatprep.mubr.bf16.mxu0 0
    %4927 = vmatmul.mubr.bf16.gmra.mxu0 %v4883
    %v4928 = vpop.f32.mrf.mxu0
    %v4929 = vadd.f32 0.0, %v4928
    %v4930 = vpop.f32.mrf.mxu0
    %v4931 = vpop.f32.mrf.mxu0
    %v4932 = vadd.f32 0.0, %v4931
    %v4933 = vpop.f32.mrf.mxu0
    %4934 = vmatprep.mubr.bf16.mxu0 0
    %4935 = vmatmul.mubr.bf16.gmra.mxu0 %v4886
    %v4936 = vpop.f32.mrf.mxu0
    %v4937 = vadd.f32 0.0, %v4936
    %v4938 = vpop.f32.mrf.mxu0
    %v4939 = vpop.f32.mrf.mxu0
    %v4940 = vadd.f32 0.0, %v4939
    %v4941 = vpop.f32.mrf.mxu0
    %4942 = vmatprep.mubr.bf16.mxu0 0
    %4943 = vmatmul.mubr.bf16.gmra.mxu0 %v4889
    %v4944 = vpop.f32.mrf.mxu0
    %v4945 = vadd.f32 0.0, %v4944
    %v4946 = vpop.f32.mrf.mxu0
    %v4947 = vpop.f32.mrf.mxu0
    %v4948 = vpop.f32.mrf.mxu0
    %4949 = vdwg.mxu0
    %4955 = vrot.lane.b32.xlu0 %v4489, 8
    %v4956 = vpop.permute.xlu0 %4955
    %4957 = vrot.lane.b32.xlu0 %v4492, 8
    %v4958 = vpop.permute.xlu0 %4957
    %4959 = vrot.lane.b32.xlu0 %v4497, 8
    %v4960 = vpop.permute.xlu0 %4959
    %4961 = vrot.lane.b32.xlu0 %v4500, 8
    %v4962 = vpop.permute.xlu0 %4961
    %4963 = vrot.lane.b32.xlu0 %v4505, 8
    %v4964 = vpop.permute.xlu0 %4963
    %4975 = vrot.lane.b32.xlu0 %v4709, 16
    %v4976 = vpop.permute.xlu0 %4975
    %4977 = vrot.lane.b32.xlu0 %v4712, 16
    %v4978 = vpop.permute.xlu0 %4977
    %4979 = vrot.lane.b32.xlu0 %v4717, 16
    %v4980 = vpop.permute.xlu0 %4979
    %4981 = vrot.lane.b32.xlu0 %v4720, 16
    %v4982 = vpop.permute.xlu0 %4981
    %4983 = vrot.lane.b32.xlu0 %v4725, 16
    %v4984 = vpop.permute.xlu0 %4983
    %4995 = vrot.lane.b32.xlu0 %v4929, 24
    %v4996 = vpop.permute.xlu0 %4995
    %4997 = vrot.lane.b32.xlu0 %v4932, 24
    %v4998 = vpop.permute.xlu0 %4997
    %4999 = vrot.lane.b32.xlu0 %v4937, 24
    %v5000 = vpop.permute.xlu0 %4999
    %5001 = vrot.lane.b32.xlu0 %v4940, 24
    %v5002 = vpop.permute.xlu0 %5001
    %5003 = vrot.lane.b32.xlu0 %v4945, 24
    %v5004 = vpop.permute.xlu0 %5003
    %v5010 = vsel %vm782, %v4266, %v4956
    %v5011 = vsel %vm782, %v4269, %v4958
    %v5012 = vsel %vm782, %v4274, %v4960
    %v5013 = vsel %vm782, %v4277, %v4962
    %v5014 = vsel %vm782, %v4282, %v4964
    %v5015 = vsel %vm421, %v5010, %v4976
    %v5016 = vsel %vm421, %v5011, %v4978
    %v5017 = vsel %vm421, %v5012, %v4980
    %v5018 = vsel %vm421, %v5013, %v4982
    %v5019 = vsel %vm421, %v5014, %v4984
    %v5020 = vsel %vm1727, %v5015, %v4996
    %v5021 = vsel %vm1727, %v5016, %v4998
    %v5022 = vsel %vm1727, %v5017, %v5000
    %v5023 = vsel %vm1727, %v5018, %v5002
    %v5024 = vsel %vm1727, %v5019, %v5004
    %v5025 = vpack.c.bf16 %v5021, %v5020
    %v5026 = vpack.c.bf16 %v5023, %v5022
    %v5027 = vpack.c.bf16 %v5024, %v5024
    %s5028 = scalar_lea.vmem %s21, 16
    %v5029 = vld [vmem:[%s5028] sm:$0xf]
    %v5030 = vld [vmem:[%s5028 + $0x4] sm:$0xf]
    %v5031 = vld [vmem:[%s5028 + $0x8] sm:$0xf]
    %v5032 = vld [vmem:[%s5028 + $0xc] sm:$0xf]
    %s5033 = scalar_lea.vmem %s23, 1
    %v5034 = vld [vmem:[%s5033] sm:$0x1]
    %v5036 = vlaneseq
    %v5037 = vshrl.u32 %v5036, 7
    %v5038 = vsub.s32 0, %v5037
    %v5039 = vrot.slane %v5034, %v5038
    %v5045 = vunpack.c.l.b16 %v5029
    %v5046 = vunpack.c.l.b16 %v5030
    %v5047 = vunpack.c.l.b16 %v5031
    %v5048 = vunpack.c.l.b16 %v5032
    %v5049 = vpack.c.b16 %v5046, %v5045
    %v5050 = vpack.c.b16 %v5048, %v5047
    %v5054 = vsel %vm300, %v5025, 0
    %v5057 = vsel %vm300, %v5026, 0
    %v5060 = vsel %vm300, %v5027, 0
    %5062 = vmatprep.subr.bf16.mxu0 0
    %5063 = vmatpush1.bf16.msra.mxu0 0
    %5064 = vmatprep.subr.bf16.mxu0 0
    %5065 = vmatpush1.bf16.msra.mxu0 0
    %5066 = vmatprep.subr.bf16.mxu0 0
    %5067 = vmatpush1.bf16.msra.mxu0 0
    %5068 = vmatprep.subr.bf16.mxu0 0
    %5069 = vmatpush1.bf16.msra.mxu0 0
    %5070 = vmatprep.subr.bf16.mxu0 0
    %5071 = vmatpush1.bf16.msra.mxu0 0
    %5072 = vmatprep.subr.bf16.mxu0 0
    %5073 = vmatpush1.bf16.msra.mxu0 0
    %5074 = vmatprep.subr.bf16.mxu0 0
    %5075 = vmatpush1.bf16.msra.mxu0 %v5050
    %5076 = vmatprep.subr.bf16.mxu0 0
    %5077 = vmatpush1.bf16.msra.mxu0 %v5049
    %5078 = vmatprep.subr.bf16.mxu0 0
    %5079 = vmatpush2.bf16.msra.mxu0 0
    %5080 = vmatprep.subr.bf16.mxu0 0
    %5081 = vmatpush2.bf16.msra.mxu0 0
    %5082 = vmatprep.subr.bf16.mxu0 0
    %5083 = vmatpush2.bf16.msra.mxu0 0
    %5084 = vmatprep.subr.bf16.mxu0 0
    %5085 = vmatpush2.bf16.msra.mxu0 0
    %5086 = vmatprep.subr.bf16.mxu0 0
    %5087 = vmatpush2.bf16.msra.mxu0 0
    %5088 = vmatprep.subr.bf16.mxu0 0
    %5089 = vmatpush2.bf16.msra.mxu0 0
    %5090 = vmatprep.subr.bf16.mxu0 0
    %5091 = vmatpush2.bf16.msra.mxu0 0
    %5092 = vmatprep.subr.bf16.mxu0 0
    %5093 = vmatpush2.bf16.msra.mxu0 0
    %5094 = vmatprep.mubr.bf16.mxu0 0
    %5095 = vmatmul.mubr.bf16.gmra.mxu0 %v5054
    %v5096 = vpop.f32.mrf.mxu0
    %v5097 = vadd.f32 %v5039, %v5096
    %v5098 = vpop.f32.mrf.mxu0
    %v5099 = vpop.f32.mrf.mxu0
    %v5100 = vadd.f32 %v5039, %v5099
    %v5101 = vpop.f32.mrf.mxu0
    %5102 = vmatprep.mubr.bf16.mxu0 0
    %5103 = vmatmul.mubr.bf16.gmra.mxu0 %v5057
    %v5104 = vpop.f32.mrf.mxu0
    %v5105 = vadd.f32 %v5039, %v5104
    %v5106 = vpop.f32.mrf.mxu0
    %v5107 = vpop.f32.mrf.mxu0
    %v5108 = vadd.f32 %v5039, %v5107
    %v5109 = vpop.f32.mrf.mxu0
    %5110 = vmatprep.mubr.bf16.mxu0 0
    %5111 = vmatmul.mubr.bf16.gmra.mxu0 %v5060
    %v5112 = vpop.f32.mrf.mxu0
    %v5113 = vadd.f32 %v5039, %v5112
    %v5114 = vpop.f32.mrf.mxu0
    %v5115 = vpop.f32.mrf.mxu0
    %v5116 = vpop.f32.mrf.mxu0
    %5117 = vdwg.mxu0
    %v5118 = vadd.f32 %v3861, %v5097
    %v5119 = vadd.f32 %v3862, %v5100
    %v5120 = vadd.f32 %v3863, %v5105
    %v5121 = vadd.f32 %v3864, %v5108
    %v5122 = vadd.f32 %v3865, %v5113
    %s5123 = scalar_lea.vmem %s25, 1
    %v5124 = vld [vmem:[%s5123] sm:$0x1]
    %s5125 = scalar_lea.vmem %s27, 1
    %v5126 = vld [vmem:[%s5125] sm:$0x1]
    %v5127 = vsel %vm300, %v5118, 0.0
    %5128 = vadd.xlane.f32.xlu0 %v5127
    %v5129 = vpop.xlane.xlu0 %5128
    %v5130 = vsel %vm300, %v5119, 0.0
    %5131 = vadd.xlane.f32.xlu0 %v5130
    %v5132 = vpop.xlane.xlu0 %5131
    %v5133 = vsel %vm300, %v5120, 0.0
    %5134 = vadd.xlane.f32.xlu0 %v5133
    %v5135 = vpop.xlane.xlu0 %5134
    %v5136 = vsel %vm300, %v5121, 0.0
    %5137 = vadd.xlane.f32.xlu0 %v5136
    %v5138 = vpop.xlane.xlu0 %5137
    %v5139 = vsel %vm313, %v5122, 0.0
    %5140 = vadd.xlane.f32.xlu0 %v5139
    %v5141 = vpop.xlane.xlu0 %5140
    %v5142 = vmul.f32 %v5129, %v317
    %v5143 = vmul.f32 %v5132, %v317
    %v5144 = vmul.f32 %v5135, %v317
    %v5145 = vmul.f32 %v5138, %v317
    %v5146 = vmul.f32 %v5141, %v317
    %v5147 = vsub.f32 %v5118, %v5142
    %v5148 = vsub.f32 %v5119, %v5143
    %v5149 = vsub.f32 %v5120, %v5144
    %v5150 = vsub.f32 %v5121, %v5145
    %v5151 = vsub.f32 %v5122, %v5146
    %v5152 = vmul.f32 %v5147, %v5147
    %v5153 = vmul.f32 %v5148, %v5148
    %v5154 = vmul.f32 %v5149, %v5149
    %v5155 = vmul.f32 %v5150, %v5150
    %v5156 = vmul.f32 %v5151, %v5151
    %v5157 = vsel %vm300, %v5152, 0.0
    %5158 = vadd.xlane.f32.xlu0 %v5157
    %v5159 = vpop.xlane.xlu0 %5158
    %v5160 = vsel %vm300, %v5153, 0.0
    %5161 = vadd.xlane.f32.xlu0 %v5160
    %v5162 = vpop.xlane.xlu0 %5161
    %v5163 = vsel %vm300, %v5154, 0.0
    %5164 = vadd.xlane.f32.xlu0 %v5163
    %v5165 = vpop.xlane.xlu0 %5164
    %v5166 = vsel %vm300, %v5155, 0.0
    %5167 = vadd.xlane.f32.xlu0 %v5166
    %v5168 = vpop.xlane.xlu0 %5167
    %v5169 = vsel %vm313, %v5156, 0.0
    %5170 = vadd.xlane.f32.xlu0 %v5169
    %v5171 = vpop.xlane.xlu0 %5170
    %v5172 = vmul.f32 %v5159, %v317
    %v5173 = vmul.f32 %v5162, %v317
    %v5174 = vmul.f32 %v5165, %v317
    %v5175 = vmul.f32 %v5168, %v317
    %v5176 = vmul.f32 %v5171, %v317
    %v5177 = vadd.f32 %v5172, 1e-06
    %v5178 = vadd.f32 %v5173, 1e-06
    %v5179 = vadd.f32 %v5174, 1e-06
    %v5180 = vadd.f32 %v5175, 1e-06
    %v5181 = vadd.f32 %v5176, 1e-06
    %v5182 = vrsqrt.pop %v5177
    %v5183 = vrsqrt.pop %v5178
    %v5184 = vrsqrt.pop %v5179
    %v5185 = vrsqrt.pop %v5180
    %v5186 = vrsqrt.pop %v5181
    %v5187 = vmul.f32 %v5147, %v5182
    %v5188 = vmul.f32 %v5148, %v5183
    %v5189 = vmul.f32 %v5149, %v5184
    %v5190 = vmul.f32 %v5150, %v5185
    %v5191 = vmul.f32 %v5151, %v5186
    %v5193 = vlaneseq
    %v5194 = vshrl.u32 %v5193, 7
    %v5195 = vsub.s32 0, %v5194
    %v5196 = vrot.slane %v5124, %v5195
    %v5198 = vmul.f32 %v5187, %v5196
    %v5199 = vmul.f32 %v5188, %v5196
    %v5200 = vmul.f32 %v5189, %v5196
    %v5201 = vmul.f32 %v5190, %v5196
    %v5202 = vmul.f32 %v5191, %v5196
    %v5204 = vlaneseq
    %v5205 = vshrl.u32 %v5204, 7
    %v5206 = vsub.s32 0, %v5205
    %v5207 = vrot.slane %v5126, %v5206
    %v5209 = vadd.f32 %v5198, %v5207
    %v5210 = vadd.f32 %v5199, %v5207
    %v5211 = vadd.f32 %v5200, %v5207
    %v5212 = vadd.f32 %v5201, %v5207
    %v5213 = vadd.f32 %v5202, %v5207
    %v5214 = vpack.c.bf16 %v5210, %v5209
    %v5215 = vpack.c.bf16 %v5212, %v5211
    %v5216 = vpack.c.bf16 %v5213, %v5213
    %s5217 = scalar_lea.vmem %s29, 16
    %v5218 = vld [vmem:[%s5217] sm:$0xf]
    %v5219 = vld [vmem:[%s5217 + $0x4] sm:$0xf]
    %v5220 = vld [vmem:[%s5217 + $0x8] sm:$0xf]
    %v5221 = vld [vmem:[%s5217 + $0xc] sm:$0xf]
    %s5222 = scalar_lea.vmem %s31, 1
    %v5223 = vld [vmem:[%s5222] sm:$0x1]
    %v5225 = vlaneseq
    %v5226 = vshrl.u32 %v5225, 7
    %v5227 = vsub.s32 0, %v5226
    %v5228 = vrot.slane %v5223, %v5227
    %v5234 = vunpack.c.l.b16 %v5218
    %v5235 = vunpack.c.l.b16 %v5219
    %v5236 = vunpack.c.l.b16 %v5220
    %v5237 = vunpack.c.l.b16 %v5221
    %v5238 = vpack.c.b16 %v5235, %v5234
    %v5239 = vpack.c.b16 %v5237, %v5236
    %v5243 = vsel %vm300, %v5214, 0
    %v5246 = vsel %vm300, %v5215, 0
    %v5249 = vsel %vm300, %v5216, 0
    %5251 = vmatprep.subr.bf16.mxu0 0
    %5252 = vmatpush1.bf16.msra.mxu0 0
    %5253 = vmatprep.subr.bf16.mxu0 0
    %5254 = vmatpush1.bf16.msra.mxu0 0
    %5255 = vmatprep.subr.bf16.mxu0 0
    %5256 = vmatpush1.bf16.msra.mxu0 0
    %5257 = vmatprep.subr.bf16.mxu0 0
    %5258 = vmatpush1.bf16.msra.mxu0 0
    %5259 = vmatprep.subr.bf16.mxu0 0
    %5260 = vmatpush1.bf16.msra.mxu0 0
    %5261 = vmatprep.subr.bf16.mxu0 0
    %5262 = vmatpush1.bf16.msra.mxu0 0
    %5263 = vmatprep.subr.bf16.mxu0 0
    %5264 = vmatpush1.bf16.msra.mxu0 %v5239
    %5265 = vmatprep.subr.bf16.mxu0 0
    %5266 = vmatpush1.bf16.msra.mxu0 %v5238
    %5267 = vmatprep.subr.bf16.mxu0 0
    %5268 = vmatpush2.bf16.msra.mxu0 0
    %5269 = vmatprep.subr.bf16.mxu0 0
    %5270 = vmatpush2.bf16.msra.mxu0 0
    %5271 = vmatprep.subr.bf16.mxu0 0
    %5272 = vmatpush2.bf16.msra.mxu0 0
    %5273 = vmatprep.subr.bf16.mxu0 0
    %5274 = vmatpush2.bf16.msra.mxu0 0
    %5275 = vmatprep.subr.bf16.mxu0 0
    %5276 = vmatpush2.bf16.msra.mxu0 0
    %5277 = vmatprep.subr.bf16.mxu0 0
    %5278 = vmatpush2.bf16.msra.mxu0 0
    %5279 = vmatprep.subr.bf16.mxu0 0
    %5280 = vmatpush2.bf16.msra.mxu0 0
    %5281 = vmatprep.subr.bf16.mxu0 0
    %5282 = vmatpush2.bf16.msra.mxu0 0
    %5283 = vmatprep.mubr.bf16.mxu0 0
    %5284 = vmatmul.mubr.bf16.gmra.mxu0 %v5243
    %v5285 = vpop.f32.mrf.mxu0
    %v5286 = vadd.f32 %v5228, %v5285
    %v5287 = vpop.f32.mrf.mxu0
    %v5288 = vpop.f32.mrf.mxu0
    %v5289 = vadd.f32 %v5228, %v5288
    %v5290 = vpop.f32.mrf.mxu0
    %5291 = vmatprep.mubr.bf16.mxu0 0
    %5292 = vmatmul.mubr.bf16.gmra.mxu0 %v5246
    %v5293 = vpop.f32.mrf.mxu0
    %v5294 = vadd.f32 %v5228, %v5293
    %v5295 = vpop.f32.mrf.mxu0
    %v5296 = vpop.f32.mrf.mxu0
    %v5297 = vadd.f32 %v5228, %v5296
    %v5298 = vpop.f32.mrf.mxu0
    %5299 = vmatprep.mubr.bf16.mxu0 0
    %5300 = vmatmul.mubr.bf16.gmra.mxu0 %v5249
    %v5301 = vpop.f32.mrf.mxu0
    %v5302 = vadd.f32 %v5228, %v5301
    %v5303 = vpop.f32.mrf.mxu0
    %v5304 = vpop.f32.mrf.mxu0
    %v5305 = vpop.f32.mrf.mxu0
    %5306 = vdwg.mxu0
    %v5307 = vmul.f32 %v5286, 0.5
    %v5308 = vmul.f32 %v5289, 0.5
    %v5309 = vmul.f32 %v5294, 0.5
    %v5310 = vmul.f32 %v5297, 0.5
    %v5311 = vmul.f32 %v5302, 0.5
    %v5312 = vmul.f32 %v5286, 0.044715
    %v5313 = vmul.f32 %v5289, 0.044715
    %v5314 = vmul.f32 %v5294, 0.044715
    %v5315 = vmul.f32 %v5297, 0.044715
    %v5316 = vmul.f32 %v5302, 0.044715
    %v5317 = vmul.f32 %v5312, %v5286
    %v5318 = vmul.f32 %v5313, %v5289
    %v5319 = vmul.f32 %v5314, %v5294
    %v5320 = vmul.f32 %v5315, %v5297
    %v5321 = vmul.f32 %v5316, %v5302
    %v5322 = vmul.f32 %v5317, %v5286
    %v5323 = vmul.f32 %v5318, %v5289
    %v5324 = vmul.f32 %v5319, %v5294
    %v5325 = vmul.f32 %v5320, %v5297
    %v5326 = vmul.f32 %v5321, %v5302
    %v5327 = vadd.f32 %v5286, %v5322
    %v5328 = vadd.f32 %v5289, %v5323
    %v5329 = vadd.f32 %v5294, %v5324
    %v5330 = vadd.f32 %v5297, %v5325
    %v5331 = vadd.f32 %v5302, %v5326
    %v5332 = vmul.f32 %v5327, 0.7978846
    %v5333 = vmul.f32 %v5328, 0.7978846
    %v5334 = vmul.f32 %v5329, 0.7978846
    %v5335 = vmul.f32 %v5330, 0.7978846
    %v5336 = vmul.f32 %v5331, 0.7978846
    %v5337 = vtanh.pop %v5332
    %v5338 = vtanh.pop %v5333
    %v5339 = vtanh.pop %v5334
    %v5340 = vtanh.pop %v5335
    %v5341 = vtanh.pop %v5336
    %v5342 = vadd.f32 %v5337, 1.0
    %v5343 = vadd.f32 %v5338, 1.0
    %v5344 = vadd.f32 %v5339, 1.0
    %v5345 = vadd.f32 %v5340, 1.0
    %v5346 = vadd.f32 %v5341, 1.0
    %v5347 = vmul.f32 %v5307, %v5342
    %v5348 = vmul.f32 %v5308, %v5343
    %v5349 = vmul.f32 %v5309, %v5344
    %v5350 = vmul.f32 %v5310, %v5345
    %v5351 = vmul.f32 %v5311, %v5346
    %v5352 = vpack.c.bf16 %v5348, %v5347
    %v5353 = vpack.c.bf16 %v5350, %v5349
    %v5354 = vpack.c.bf16 %v5351, %v5351
    %s5355 = scalar_lea.vmem %s33, 64
    %v5356 = vld [vmem:[%s5355] sm:$0xf]
    %v5357 = vld [vmem:[%s5355 + $0x4] sm:$0xf]
    %v5358 = vld [vmem:[%s5355 + $0x8] sm:$0xf]
    %v5359 = vld [vmem:[%s5355 + $0xc] sm:$0xf]
    %v5360 = vld [vmem:[%s5355 + $0x10] sm:$0xf]
    %v5361 = vld [vmem:[%s5355 + $0x14] sm:$0xf]
    %v5362 = vld [vmem:[%s5355 + $0x18] sm:$0xf]
    %v5363 = vld [vmem:[%s5355 + $0x1c] sm:$0xf]
    %v5364 = vld [vmem:[%s5355 + $0x20] sm:$0xf]
    %v5365 = vld [vmem:[%s5355 + $0x24] sm:$0xf]
    %v5366 = vld [vmem:[%s5355 + $0x28] sm:$0xf]
    %v5367 = vld [vmem:[%s5355 + $0x2c] sm:$0xf]
    %v5368 = vld [vmem:[%s5355 + $0x30] sm:$0xf]
    %v5369 = vld [vmem:[%s5355 + $0x34] sm:$0xf]
    %v5370 = vld [vmem:[%s5355 + $0x38] sm:$0xf]
    %v5371 = vld [vmem:[%s5355 + $0x3c] sm:$0xf]
    %v5388 = vunpack.c.l.b16 %v5356
    %v5389 = vunpack.c.l.b16 %v5357
    %v5390 = vunpack.c.l.b16 %v5358
    %v5391 = vunpack.c.l.b16 %v5359
    %v5392 = vunpack.c.l.b16 %v5360
    %v5393 = vunpack.c.l.b16 %v5361
    %v5394 = vunpack.c.l.b16 %v5362
    %v5395 = vunpack.c.l.b16 %v5363
    %v5396 = vunpack.c.l.b16 %v5364
    %v5397 = vunpack.c.l.b16 %v5365
    %v5398 = vunpack.c.l.b16 %v5366
    %v5399 = vunpack.c.l.b16 %v5367
    %v5400 = vunpack.c.l.b16 %v5368
    %v5401 = vunpack.c.l.b16 %v5369
    %v5402 = vunpack.c.l.b16 %v5370
    %v5403 = vunpack.c.l.b16 %v5371
    %v5404 = vpack.c.b16 %v5389, %v5388
    %v5405 = vpack.c.b16 %v5391, %v5390
    %v5406 = vpack.c.b16 %v5393, %v5392
    %v5407 = vpack.c.b16 %v5395, %v5394
    %v5408 = vpack.c.b16 %v5397, %v5396
    %v5409 = vpack.c.b16 %v5399, %v5398
    %v5410 = vpack.c.b16 %v5401, %v5400
    %v5411 = vpack.c.b16 %v5403, %v5402
    %5420 = vmatprep.subr.bf16.mxu0 0
    %5421 = vmatpush1.bf16.msra.mxu0 %v5411
    %5422 = vmatprep.subr.bf16.mxu0 0
    %5423 = vmatpush1.bf16.msra.mxu0 %v5410
    %5424 = vmatprep.subr.bf16.mxu0 0
    %5425 = vmatpush1.bf16.msra.mxu0 %v5409
    %5426 = vmatprep.subr.bf16.mxu0 0
    %5427 = vmatpush1.bf16.msra.mxu0 %v5408
    %5428 = vmatprep.subr.bf16.mxu0 0
    %5429 = vmatpush1.bf16.msra.mxu0 %v5407
    %5430 = vmatprep.subr.bf16.mxu0 0
    %5431 = vmatpush1.bf16.msra.mxu0 %v5406
    %5432 = vmatprep.subr.bf16.mxu0 0
    %5433 = vmatpush1.bf16.msra.mxu0 %v5405
    %5434 = vmatprep.subr.bf16.mxu0 0
    %5435 = vmatpush1.bf16.msra.mxu0 %v5404
    %5436 = vmatprep.subr.bf16.mxu0 0
    %5437 = vmatpush2.bf16.msra.mxu0 0
    %5438 = vmatprep.subr.bf16.mxu0 0
    %5439 = vmatpush2.bf16.msra.mxu0 0
    %5440 = vmatprep.subr.bf16.mxu0 0
    %5441 = vmatpush2.bf16.msra.mxu0 0
    %5442 = vmatprep.subr.bf16.mxu0 0
    %5443 = vmatpush2.bf16.msra.mxu0 0
    %5444 = vmatprep.subr.bf16.mxu0 0
    %5445 = vmatpush2.bf16.msra.mxu0 0
    %5446 = vmatprep.subr.bf16.mxu0 0
    %5447 = vmatpush2.bf16.msra.mxu0 0
    %5448 = vmatprep.subr.bf16.mxu0 0
    %5449 = vmatpush2.bf16.msra.mxu0 0
    %5450 = vmatprep.subr.bf16.mxu0 0
    %5451 = vmatpush2.bf16.msra.mxu0 0
    %5452 = vmatprep.mubr.bf16.mxu0 0
    %5453 = vmatmul.mubr.bf16.gmra.mxu0 %v5352
    %v5454 = vpop.f32.mrf.mxu0
    %v5455 = vadd.f32 0.0, %v5454
    %v5456 = vpop.f32.mrf.mxu0
    %v5457 = vpop.f32.mrf.mxu0
    %v5458 = vpop.f32.mrf.mxu0
    %5459 = vmatprep.mubr.bf16.mxu0 0
    %5460 = vmatmul.mubr.bf16.gmra.mxu0 %v5353
    %v5461 = vpop.f32.mrf.mxu0
    %v5462 = vadd.f32 0.0, %v5461
    %v5463 = vpop.f32.mrf.mxu0
    %v5464 = vpop.f32.mrf.mxu0
    %v5465 = vpop.f32.mrf.mxu0
    %5466 = vmatprep.mubr.bf16.mxu0 0
    %5467 = vmatmul.mubr.bf16.gmra.mxu0 %v5354
    %v5468 = vpop.f32.mrf.mxu0
    %v5469 = vpop.f32.mrf.mxu0
    %v5470 = vpop.f32.mrf.mxu0
    %v5471 = vpop.f32.mrf.mxu0
    %5472 = vdwg.mxu0
    %v5473 = vadd.f32 %v5118, %v5455
    %v5474 = vadd.f32 %v5120, %v5462
    %s5475 = scalar_lea.vmem %s35, 1
    %v5476 = vld [vmem:[%s5475] sm:$0x1]
    %v5478 = vlaneseq
    %v5479 = vshrl.u32 %v5478, 7
    %v5480 = vsub.s32 0, %v5479
    %v5481 = vrot.slane %v5476, %v5480
    %v5483 = vadd.f32 %v5473, %v5481
    %v5484 = vadd.f32 %v5474, %v5481
    %s5485 = scalar_lea.vmem %s55, 1
    %v5486 = vld [vmem:[%s5485] sm:$0x1]
    %s5487 = scalar_lea.vmem %s57, 1
    %v5488 = vld [vmem:[%s5487] sm:$0x1]
    %v5489 = vsel %vm300, %v3870, 0.0
    %5490 = vadd.xlane.f32.xlu0 %v5489
    %v5491 = vpop.xlane.xlu0 %5490
    %v5492 = vsel %vm300, %v3871, 0.0
    %5493 = vadd.xlane.f32.xlu0 %v5492
    %v5494 = vpop.xlane.xlu0 %5493
    %v5495 = vsel %vm300, %v3872, 0.0
    %5496 = vadd.xlane.f32.xlu0 %v5495
    %v5497 = vpop.xlane.xlu0 %5496
    %v5498 = vsel %vm300, %v3873, 0.0
    %5499 = vadd.xlane.f32.xlu0 %v5498
    %v5500 = vpop.xlane.xlu0 %5499
    %v5501 = vsel %vm313, %v3874, 0.0
    %5502 = vadd.xlane.f32.xlu0 %v5501
    %v5503 = vpop.xlane.xlu0 %5502
    %v5504 = vmul.f32 %v5491, %v317
    %v5505 = vmul.f32 %v5494, %v317
    %v5506 = vmul.f32 %v5497, %v317
    %v5507 = vmul.f32 %v5500, %v317
    %v5508 = vmul.f32 %v5503, %v317
    %v5509 = vsub.f32 %v3870, %v5504
    %v5510 = vsub.f32 %v3871, %v5505
    %v5511 = vsub.f32 %v3872, %v5506
    %v5512 = vsub.f32 %v3873, %v5507
    %v5513 = vsub.f32 %v3874, %v5508
    %v5514 = vmul.f32 %v5509, %v5509
    %v5515 = vmul.f32 %v5510, %v5510
    %v5516 = vmul.f32 %v5511, %v5511
    %v5517 = vmul.f32 %v5512, %v5512
    %v5518 = vmul.f32 %v5513, %v5513
    %v5519 = vsel %vm300, %v5514, 0.0
    %5520 = vadd.xlane.f32.xlu0 %v5519
    %v5521 = vpop.xlane.xlu0 %5520
    %v5522 = vsel %vm300, %v5515, 0.0
    %5523 = vadd.xlane.f32.xlu0 %v5522
    %v5524 = vpop.xlane.xlu0 %5523
    %v5525 = vsel %vm300, %v5516, 0.0
    %5526 = vadd.xlane.f32.xlu0 %v5525
    %v5527 = vpop.xlane.xlu0 %5526
    %v5528 = vsel %vm300, %v5517, 0.0
    %5529 = vadd.xlane.f32.xlu0 %v5528
    %v5530 = vpop.xlane.xlu0 %5529
    %v5531 = vsel %vm313, %v5518, 0.0
    %5532 = vadd.xlane.f32.xlu0 %v5531
    %v5533 = vpop.xlane.xlu0 %5532
    %v5534 = vmul.f32 %v5521, %v317
    %v5535 = vmul.f32 %v5524, %v317
    %v5536 = vmul.f32 %v5527, %v317
    %v5537 = vmul.f32 %v5530, %v317
    %v5538 = vmul.f32 %v5533, %v317
    %v5539 = vadd.f32 %v5534, 1e-06
    %v5540 = vadd.f32 %v5535, 1e-06
    %v5541 = vadd.f32 %v5536, 1e-06
    %v5542 = vadd.f32 %v5537, 1e-06
    %v5543 = vadd.f32 %v5538, 1e-06
    %v5544 = vrsqrt.pop %v5539
    %v5545 = vrsqrt.pop %v5540
    %v5546 = vrsqrt.pop %v5541
    %v5547 = vrsqrt.pop %v5542
    %v5548 = vrsqrt.pop %v5543
    %v5549 = vmul.f32 %v5509, %v5544
    %v5550 = vmul.f32 %v5510, %v5545
    %v5551 = vmul.f32 %v5511, %v5546
    %v5552 = vmul.f32 %v5512, %v5547
    %v5553 = vmul.f32 %v5513, %v5548
    %v5555 = vlaneseq
    %v5556 = vshrl.u32 %v5555, 7
    %v5557 = vsub.s32 0, %v5556
    %v5558 = vrot.slane %v5486, %v5557
    %v5560 = vmul.f32 %v5549, %v5558
    %v5561 = vmul.f32 %v5550, %v5558
    %v5562 = vmul.f32 %v5551, %v5558
    %v5563 = vmul.f32 %v5552, %v5558
    %v5564 = vmul.f32 %v5553, %v5558
    %v5566 = vlaneseq
    %v5567 = vshrl.u32 %v5566, 7
    %v5568 = vsub.s32 0, %v5567
    %v5569 = vrot.slane %v5488, %v5568
    %v5571 = vadd.f32 %v5560, %v5569
    %v5572 = vadd.f32 %v5561, %v5569
    %v5573 = vadd.f32 %v5562, %v5569
    %v5574 = vadd.f32 %v5563, %v5569
    %v5575 = vadd.f32 %v5564, %v5569
    %v5576 = vpack.c.bf16 %v5572, %v5571
    %v5577 = vpack.c.bf16 %v5574, %v5573
    %v5578 = vpack.c.bf16 %v5575, %v5575
    %s5579 = scalar_lea.vmem %s59, 16
    %v5580 = vld [vmem:[%s5579] sm:$0xf]
    %v5581 = vld [vmem:[%s5579 + $0x4] sm:$0xf]
    %v5582 = vld [vmem:[%s5579 + $0x8] sm:$0xf]
    %v5583 = vld [vmem:[%s5579 + $0xc] sm:$0xf]
    %s5584 = scalar_lea.vmem %s61, 1
    %v5585 = vld [vmem:[%s5584] sm:$0x1]
    %v5587 = vlaneseq
    %v5588 = vshrl.u32 %v5587, 7
    %v5589 = vsub.s32 0, %v5588
    %v5590 = vrot.slane %v5585, %v5589
    %v5596 = vunpack.c.l.b16 %v5580
    %v5597 = vunpack.c.l.b16 %v5581
    %v5598 = vunpack.c.l.b16 %v5582
    %v5599 = vunpack.c.l.b16 %v5583
    %v5600 = vpack.c.b16 %v5597, %v5596
    %v5601 = vpack.c.b16 %v5599, %v5598
    %v5605 = vsel %vm300, %v5576, 0
    %v5608 = vsel %vm300, %v5577, 0
    %v5611 = vsel %vm300, %v5578, 0
    %5613 = vmatprep.subr.bf16.mxu0 0
    %5614 = vmatpush1.bf16.msra.mxu0 0
    %5615 = vmatprep.subr.bf16.mxu0 0
    %5616 = vmatpush1.bf16.msra.mxu0 0
    %5617 = vmatprep.subr.bf16.mxu0 0
    %5618 = vmatpush1.bf16.msra.mxu0 0
    %5619 = vmatprep.subr.bf16.mxu0 0
    %5620 = vmatpush1.bf16.msra.mxu0 0
    %5621 = vmatprep.subr.bf16.mxu0 0
    %5622 = vmatpush1.bf16.msra.mxu0 0
    %5623 = vmatprep.subr.bf16.mxu0 0
    %5624 = vmatpush1.bf16.msra.mxu0 0
    %5625 = vmatprep.subr.bf16.mxu0 0
    %5626 = vmatpush1.bf16.msra.mxu0 %v5601
    %5627 = vmatprep.subr.bf16.mxu0 0
    %5628 = vmatpush1.bf16.msra.mxu0 %v5600
    %5629 = vmatprep.subr.bf16.mxu0 0
    %5630 = vmatpush2.bf16.msra.mxu0 0
    %5631 = vmatprep.subr.bf16.mxu0 0
    %5632 = vmatpush2.bf16.msra.mxu0 0
    %5633 = vmatprep.subr.bf16.mxu0 0
    %5634 = vmatpush2.bf16.msra.mxu0 0
    %5635 = vmatprep.subr.bf16.mxu0 0
    %5636 = vmatpush2.bf16.msra.mxu0 0
    %5637 = vmatprep.subr.bf16.mxu0 0
    %5638 = vmatpush2.bf16.msra.mxu0 0
    %5639 = vmatprep.subr.bf16.mxu0 0
    %5640 = vmatpush2.bf16.msra.mxu0 0
    %5641 = vmatprep.subr.bf16.mxu0 0
    %5642 = vmatpush2.bf16.msra.mxu0 0
    %5643 = vmatprep.subr.bf16.mxu0 0
    %5644 = vmatpush2.bf16.msra.mxu0 0
    %5645 = vmatprep.mubr.bf16.mxu0 0
    %5646 = vmatmul.mubr.bf16.gmra.mxu0 %v5605
    %v5647 = vpop.f32.mrf.mxu0
    %v5648 = vadd.f32 %v5590, %v5647
    %v5649 = vpop.f32.mrf.mxu0
    %v5650 = vpop.f32.mrf.mxu0
    %v5651 = vadd.f32 %v5590, %v5650
    %v5652 = vpop.f32.mrf.mxu0
    %5653 = vmatprep.mubr.bf16.mxu0 0
    %5654 = vmatmul.mubr.bf16.gmra.mxu0 %v5608
    %v5655 = vpop.f32.mrf.mxu0
    %v5656 = vadd.f32 %v5590, %v5655
    %v5657 = vpop.f32.mrf.mxu0
    %v5658 = vpop.f32.mrf.mxu0
    %v5659 = vadd.f32 %v5590, %v5658
    %v5660 = vpop.f32.mrf.mxu0
    %5661 = vmatprep.mubr.bf16.mxu0 0
    %5662 = vmatmul.mubr.bf16.gmra.mxu0 %v5611
    %v5663 = vpop.f32.mrf.mxu0
    %v5664 = vadd.f32 %v5590, %v5663
    %v5665 = vpop.f32.mrf.mxu0
    %v5666 = vpop.f32.mrf.mxu0
    %v5667 = vpop.f32.mrf.mxu0
    %5668 = vdwg.mxu0
    %v5669 = vmul.f32 %v5648, 0.35355338
    %v5670 = vmul.f32 %v5651, 0.35355338
    %v5671 = vmul.f32 %v5656, 0.35355338
    %v5672 = vmul.f32 %v5659, 0.35355338
    %v5673 = vmul.f32 %v5664, 0.35355338
    %v5674 = vpack.c.bf16 %v5670, %v5669
    %v5675 = vpack.c.bf16 %v5672, %v5671
    %v5676 = vpack.c.bf16 %v5673, %v5673
    %v5677 = vpack.c.bf16 %v5651, %v5648
    %v5678 = vpack.c.bf16 %v5659, %v5656
    %v5679 = vpack.c.bf16 %v5664, %v5664
    %5683 = vrot.lane.b32.xlu0 %v5677, 96
    %v5684 = vpop.permute.xlu0 %5683
    %5685 = vrot.lane.b32.xlu0 %v5678, 96
    %v5686 = vpop.permute.xlu0 %5685
    %5687 = vrot.lane.b32.xlu0 %v5679, 96
    %v5688 = vpop.permute.xlu0 %5687
    %v5690 = vsel %vm782, %v5674, 0
    %v5693 = vsel %vm782, %v5675, 0
    %v5696 = vsel %vm782, %v5676, 0
    %v5699 = vsel %vm782, %v5684, 0
    %v5702 = vsel %vm782, %v5686, 0
    %v5705 = vsel %vm782, %v5688, 0
    %5707 = vmatprep.subr.bf16.mxu0 0
    %5708 = vmatpush1.bf16.xpose.msra.mxu0 0
    %5709 = vmatprep.subr.bf16.mxu0 0
    %5710 = vmatpush1.bf16.xpose.msra.mxu0 0
    %5711 = vmatprep.subr.bf16.mxu0 0
    %5712 = vmatpush1.bf16.xpose.msra.mxu0 0
    %5713 = vmatprep.subr.bf16.mxu0 0
    %5714 = vmatpush1.bf16.xpose.msra.mxu0 0
    %5715 = vmatprep.subr.bf16.mxu0 0
    %5716 = vmatpush1.bf16.xpose.msra.mxu0 0
    %5717 = vmatprep.subr.bf16.mxu0 0
    %5718 = vmatpush1.bf16.xpose.msra.mxu0 %v5705
    %5719 = vmatprep.subr.bf16.mxu0 0
    %5720 = vmatpush1.bf16.xpose.msra.mxu0 %v5702
    %5721 = vmatprep.subr.bf16.mxu0 0
    %5722 = vmatpush1.bf16.xpose.msra.mxu0 %v5699
    %5723 = vmatprep.subr.bf16.mxu0 0
    %5724 = vmatpush2.bf16.xpose.msra.mxu0 0
    %5725 = vmatprep.subr.bf16.mxu0 0
    %5726 = vmatpush2.bf16.xpose.msra.mxu0 0
    %5727 = vmatprep.subr.bf16.mxu0 0
    %5728 = vmatpush2.bf16.xpose.msra.mxu0 0
    %5729 = vmatprep.subr.bf16.mxu0 0
    %5730 = vmatpush2.bf16.xpose.msra.mxu0 0
    %5731 = vmatprep.subr.bf16.mxu0 0
    %5732 = vmatpush2.bf16.xpose.msra.mxu0 0
    %5733 = vmatprep.subr.bf16.mxu0 0
    %5734 = vmatpush2.bf16.xpose.msra.mxu0 0
    %5735 = vmatprep.subr.bf16.mxu0 0
    %5736 = vmatpush2.bf16.xpose.msra.mxu0 0
    %5737 = vmatprep.subr.bf16.mxu0 0
    %5738 = vmatpush2.bf16.xpose.msra.mxu0 0
    %5739 = vmatprep.mubr.bf16.mxu0 0
    %5740 = vmatmul.mubr.bf16.gmra.mxu0 %v5690
    %v5741 = vpop.f32.mrf.mxu0
    %v5742 = vadd.f32 %v180, %v5741
    %v5743 = vpop.f32.mrf.mxu0
    %v5744 = vpop.f32.mrf.mxu0
    %v5745 = vadd.f32 %v181, %v5744
    %v5746 = vpop.f32.mrf.mxu0
    %5747 = vmatprep.mubr.bf16.mxu0 0
    %5748 = vmatmul.mubr.bf16.gmra.mxu0 %v5693
    %v5749 = vpop.f32.mrf.mxu0
    %v5750 = vadd.f32 %v182, %v5749
    %v5751 = vpop.f32.mrf.mxu0
    %v5752 = vpop.f32.mrf.mxu0
    %v5753 = vadd.f32 %v183, %v5752
    %v5754 = vpop.f32.mrf.mxu0
    %5755 = vmatprep.mubr.bf16.mxu0 0
    %5756 = vmatmul.mubr.bf16.gmra.mxu0 %v5696
    %v5757 = vpop.f32.mrf.mxu0
    %v5758 = vadd.f32 %v184, %v5757
    %v5759 = vpop.f32.mrf.mxu0
    %v5760 = vpop.f32.mrf.mxu0
    %v5761 = vpop.f32.mrf.mxu0
    %5762 = vdwg.mxu0
    %v5763 = vsel %vm857, %v5742, -inf
    %5764 = vmax.xlane.f32.xlu0 %v5763
    %v5765 = vpop.xlane.xlu0 %5764
    %v5766 = vsel %vm857, %v5745, -inf
    %5767 = vmax.xlane.f32.xlu0 %v5766
    %v5768 = vpop.xlane.xlu0 %5767
    %v5769 = vsel %vm857, %v5750, -inf
    %5770 = vmax.xlane.f32.xlu0 %v5769
    %v5771 = vpop.xlane.xlu0 %5770
    %v5772 = vsel %vm857, %v5753, -inf
    %5773 = vmax.xlane.f32.xlu0 %v5772
    %v5774 = vpop.xlane.xlu0 %5773
    %v5775 = vsel %vm870, %v5758, -inf
    %5776 = vmax.xlane.f32.xlu0 %v5775
    %v5777 = vpop.xlane.xlu0 %5776
    %v5778 = vsub.f32 %v5742, %v5765
    %v5779 = vsub.f32 %v5745, %v5768
    %v5780 = vsub.f32 %v5750, %v5771
    %v5781 = vsub.f32 %v5753, %v5774
    %v5782 = vsub.f32 %v5758, %v5777
    %v5783 = vmul.f32 %v5778, 1.442695
    %v5784 = vpow.pop %v5783
    %v5785 = vmul.f32 %v5779, 1.442695
    %v5786 = vpow.pop %v5785
    %v5787 = vmul.f32 %v5780, 1.442695
    %v5788 = vpow.pop %v5787
    %v5789 = vmul.f32 %v5781, 1.442695
    %v5790 = vpow.pop %v5789
    %v5791 = vmul.f32 %v5782, 1.442695
    %v5792 = vpow.pop %v5791
    %v5793 = vsel %vm857, %v5784, 0.0
    %5794 = vadd.xlane.f32.xlu0 %v5793
    %v5795 = vpop.xlane.xlu0 %5794
    %v5796 = vsel %vm857, %v5786, 0.0
    %5797 = vadd.xlane.f32.xlu0 %v5796
    %v5798 = vpop.xlane.xlu0 %5797
    %v5799 = vsel %vm857, %v5788, 0.0
    %5800 = vadd.xlane.f32.xlu0 %v5799
    %v5801 = vpop.xlane.xlu0 %5800
    %v5802 = vsel %vm857, %v5790, 0.0
    %5803 = vadd.xlane.f32.xlu0 %v5802
    %v5804 = vpop.xlane.xlu0 %5803
    %v5805 = vsel %vm870, %v5792, 0.0
    %5806 = vadd.xlane.f32.xlu0 %v5805
    %v5807 = vpop.xlane.xlu0 %5806
    %v5808 = vrcp.pop %v5795
    %v5809 = vrcp.pop %v5798
    %v5810 = vrcp.pop %v5801
    %v5811 = vrcp.pop %v5804
    %v5812 = vrcp.pop %v5807
    %v5813 = vmul.f32 %v5784, %v5808
    %v5814 = vmul.f32 %v5786, %v5809
    %v5815 = vmul.f32 %v5788, %v5810
    %v5816 = vmul.f32 %v5790, %v5811
    %v5817 = vmul.f32 %v5792, %v5812
    %v5818 = vpack.c.bf16 %v5814, %v5813
    %v5819 = vpack.c.bf16 %v5816, %v5815
    %v5820 = vpack.c.bf16 %v5817, %v5817
    %5821 = vrot.lane.b32.xlu0 %v5677, 64
    %v5822 = vpop.permute.xlu0 %5821
    %5823 = vrot.lane.b32.xlu0 %v5678, 64
    %v5824 = vpop.permute.xlu0 %5823
    %5825 = vrot.lane.b32.xlu0 %v5679, 64
    %v5826 = vpop.permute.xlu0 %5825
    %v5830 = vsel %vm857, %v5818, 0
    %v5833 = vsel %vm857, %v5819, 0
    %v5836 = vsel %vm857, %v5820, 0
    %v5839 = vsel %vm934, %v5826, 0
    %5841 = vmatprep.subr.bf16.mxu0 0
    %5842 = vmatpush1.bf16.msra.mxu0 0
    %5843 = vmatprep.subr.bf16.mxu0 0
    %5844 = vmatpush1.bf16.msra.mxu0 0
    %5845 = vmatprep.subr.bf16.mxu0 0
    %5846 = vmatpush1.bf16.msra.mxu0 0
    %5847 = vmatprep.subr.bf16.mxu0 0
    %5848 = vmatpush1.bf16.msra.mxu0 0
    %5849 = vmatprep.subr.bf16.mxu0 0
    %5850 = vmatpush1.bf16.msra.mxu0 0
    %5851 = vmatprep.subr.bf16.mxu0 0
    %5852 = vmatpush1.bf16.msra.mxu0 %v5839
    %5853 = vmatprep.subr.bf16.mxu0 0
    %5854 = vmatpush1.bf16.msra.mxu0 %v5824
    %5855 = vmatprep.subr.bf16.mxu0 0
    %5856 = vmatpush1.bf16.msra.mxu0 %v5822
    %5857 = vmatprep.subr.bf16.mxu0 0
    %5858 = vmatpush2.bf16.msra.mxu0 0
    %5859 = vmatprep.subr.bf16.mxu0 0
    %5860 = vmatpush2.bf16.msra.mxu0 0
    %5861 = vmatprep.subr.bf16.mxu0 0
    %5862 = vmatpush2.bf16.msra.mxu0 0
    %5863 = vmatprep.subr.bf16.mxu0 0
    %5864 = vmatpush2.bf16.msra.mxu0 0
    %5865 = vmatprep.subr.bf16.mxu0 0
    %5866 = vmatpush2.bf16.msra.mxu0 0
    %5867 = vmatprep.subr.bf16.mxu0 0
    %5868 = vmatpush2.bf16.msra.mxu0 0
    %5869 = vmatprep.subr.bf16.mxu0 0
    %5870 = vmatpush2.bf16.msra.mxu0 0
    %5871 = vmatprep.subr.bf16.mxu0 0
    %5872 = vmatpush2.bf16.msra.mxu0 0
    %5873 = vmatprep.mubr.bf16.mxu0 0
    %5874 = vmatmul.mubr.bf16.gmra.mxu0 %v5830
    %v5875 = vpop.f32.mrf.mxu0
    %v5876 = vadd.f32 0.0, %v5875
    %v5877 = vpop.f32.mrf.mxu0
    %v5878 = vpop.f32.mrf.mxu0
    %v5879 = vadd.f32 0.0, %v5878
    %v5880 = vpop.f32.mrf.mxu0
    %5881 = vmatprep.mubr.bf16.mxu0 0
    %5882 = vmatmul.mubr.bf16.gmra.mxu0 %v5833
    %v5883 = vpop.f32.mrf.mxu0
    %v5884 = vadd.f32 0.0, %v5883
    %v5885 = vpop.f32.mrf.mxu0
    %v5886 = vpop.f32.mrf.mxu0
    %v5887 = vadd.f32 0.0, %v5886
    %v5888 = vpop.f32.mrf.mxu0
    %5889 = vmatprep.mubr.bf16.mxu0 0
    %5890 = vmatmul.mubr.bf16.gmra.mxu0 %v5836
    %v5891 = vpop.f32.mrf.mxu0
    %v5892 = vadd.f32 0.0, %v5891
    %v5893 = vpop.f32.mrf.mxu0
    %v5894 = vpop.f32.mrf.mxu0
    %v5895 = vpop.f32.mrf.mxu0
    %5896 = vdwg.mxu0
    %5900 = vrot.lane.b32.xlu0 %v5674, 120
    %v5901 = vpop.permute.xlu0 %5900
    %5902 = vrot.lane.b32.xlu0 %v5675, 120
    %v5903 = vpop.permute.xlu0 %5902
    %5904 = vrot.lane.b32.xlu0 %v5676, 120
    %v5905 = vpop.permute.xlu0 %5904
    %5906 = vrot.lane.b32.xlu0 %v5677, 88
    %v5907 = vpop.permute.xlu0 %5906
    %5908 = vrot.lane.b32.xlu0 %v5678, 88
    %v5909 = vpop.permute.xlu0 %5908
    %5910 = vrot.lane.b32.xlu0 %v5679, 88
    %v5911 = vpop.permute.xlu0 %5910
    %v5913 = vsel %vm782, %v5901, 0
    %v5916 = vsel %vm782, %v5903, 0
    %v5919 = vsel %vm782, %v5905, 0
    %v5922 = vsel %vm782, %v5907, 0
    %v5925 = vsel %vm782, %v5909, 0
    %v5928 = vsel %vm782, %v5911, 0
    %5930 = vmatprep.subr.bf16.mxu0 0
    %5931 = vmatpush1.bf16.xpose.msra.mxu0 0
    %5932 = vmatprep.subr.bf16.mxu0 0
    %5933 = vmatpush1.bf16.xpose.msra.mxu0 0
    %5934 = vmatprep.subr.bf16.mxu0 0
    %5935 = vmatpush1.bf16.xpose.msra.mxu0 0
    %5936 = vmatprep.subr.bf16.mxu0 0
    %5937 = vmatpush1.bf16.xpose.msra.mxu0 0
    %5938 = vmatprep.subr.bf16.mxu0 0
    %5939 = vmatpush1.bf16.xpose.msra.mxu0 0
    %5940 = vmatprep.subr.bf16.mxu0 0
    %5941 = vmatpush1.bf16.xpose.msra.mxu0 %v5928
    %5942 = vmatprep.subr.bf16.mxu0 0
    %5943 = vmatpush1.bf16.xpose.msra.mxu0 %v5925
    %5944 = vmatprep.subr.bf16.mxu0 0
    %5945 = vmatpush1.bf16.xpose.msra.mxu0 %v5922
    %5946 = vmatprep.subr.bf16.mxu0 0
    %5947 = vmatpush2.bf16.xpose.msra.mxu0 0
    %5948 = vmatprep.subr.bf16.mxu0 0
    %5949 = vmatpush2.bf16.xpose.msra.mxu0 0
    %5950 = vmatprep.subr.bf16.mxu0 0
    %5951 = vmatpush2.bf16.xpose.msra.mxu0 0
    %5952 = vmatprep.subr.bf16.mxu0 0
    %5953 = vmatpush2.bf16.xpose.msra.mxu0 0
    %5954 = vmatprep.subr.bf16.mxu0 0
    %5955 = vmatpush2.bf16.xpose.msra.mxu0 0
    %5956 = vmatprep.subr.bf16.mxu0 0
    %5957 = vmatpush2.bf16.xpose.msra.mxu0 0
    %5958 = vmatprep.subr.bf16.mxu0 0
    %5959 = vmatpush2.bf16.xpose.msra.mxu0 0
    %5960 = vmatprep.subr.bf16.mxu0 0
    %5961 = vmatpush2.bf16.xpose.msra.mxu0 0
    %5962 = vmatprep.mubr.bf16.mxu0 0
    %5963 = vmatmul.mubr.bf16.gmra.mxu0 %v5913
    %v5964 = vpop.f32.mrf.mxu0
    %v5965 = vadd.f32 %v180, %v5964
    %v5966 = vpop.f32.mrf.mxu0
    %v5967 = vpop.f32.mrf.mxu0
    %v5968 = vadd.f32 %v181, %v5967
    %v5969 = vpop.f32.mrf.mxu0
    %5970 = vmatprep.mubr.bf16.mxu0 0
    %5971 = vmatmul.mubr.bf16.gmra.mxu0 %v5916
    %v5972 = vpop.f32.mrf.mxu0
    %v5973 = vadd.f32 %v182, %v5972
    %v5974 = vpop.f32.mrf.mxu0
    %v5975 = vpop.f32.mrf.mxu0
    %v5976 = vadd.f32 %v183, %v5975
    %v5977 = vpop.f32.mrf.mxu0
    %5978 = vmatprep.mubr.bf16.mxu0 0
    %5979 = vmatmul.mubr.bf16.gmra.mxu0 %v5919
    %v5980 = vpop.f32.mrf.mxu0
    %v5981 = vadd.f32 %v184, %v5980
    %v5982 = vpop.f32.mrf.mxu0
    %v5983 = vpop.f32.mrf.mxu0
    %v5984 = vpop.f32.mrf.mxu0
    %5985 = vdwg.mxu0
    %v5986 = vsel %vm857, %v5965, -inf
    %5987 = vmax.xlane.f32.xlu0 %v5986
    %v5988 = vpop.xlane.xlu0 %5987
    %v5989 = vsel %vm857, %v5968, -inf
    %5990 = vmax.xlane.f32.xlu0 %v5989
    %v5991 = vpop.xlane.xlu0 %5990
    %v5992 = vsel %vm857, %v5973, -inf
    %5993 = vmax.xlane.f32.xlu0 %v5992
    %v5994 = vpop.xlane.xlu0 %5993
    %v5995 = vsel %vm857, %v5976, -inf
    %5996 = vmax.xlane.f32.xlu0 %v5995
    %v5997 = vpop.xlane.xlu0 %5996
    %v5998 = vsel %vm870, %v5981, -inf
    %5999 = vmax.xlane.f32.xlu0 %v5998
    %v6000 = vpop.xlane.xlu0 %5999
    %v6001 = vsub.f32 %v5965, %v5988
    %v6002 = vsub.f32 %v5968, %v5991
    %v6003 = vsub.f32 %v5973, %v5994
    %v6004 = vsub.f32 %v5976, %v5997
    %v6005 = vsub.f32 %v5981, %v6000
    %v6006 = vmul.f32 %v6001, 1.442695
    %v6007 = vpow.pop %v6006
    %v6008 = vmul.f32 %v6002, 1.442695
    %v6009 = vpow.pop %v6008
    %v6010 = vmul.f32 %v6003, 1.442695
    %v6011 = vpow.pop %v6010
    %v6012 = vmul.f32 %v6004, 1.442695
    %v6013 = vpow.pop %v6012
    %v6014 = vmul.f32 %v6005, 1.442695
    %v6015 = vpow.pop %v6014
    %v6016 = vsel %vm857, %v6007, 0.0
    %6017 = vadd.xlane.f32.xlu0 %v6016
    %v6018 = vpop.xlane.xlu0 %6017
    %v6019 = vsel %vm857, %v6009, 0.0
    %6020 = vadd.xlane.f32.xlu0 %v6019
    %v6021 = vpop.xlane.xlu0 %6020
    %v6022 = vsel %vm857, %v6011, 0.0
    %6023 = vadd.xlane.f32.xlu0 %v6022
    %v6024 = vpop.xlane.xlu0 %6023
    %v6025 = vsel %vm857, %v6013, 0.0
    %6026 = vadd.xlane.f32.xlu0 %v6025
    %v6027 = vpop.xlane.xlu0 %6026
    %v6028 = vsel %vm870, %v6015, 0.0
    %6029 = vadd.xlane.f32.xlu0 %v6028
    %v6030 = vpop.xlane.xlu0 %6029
    %v6031 = vrcp.pop %v6018
    %v6032 = vrcp.pop %v6021
    %v6033 = vrcp.pop %v6024
    %v6034 = vrcp.pop %v6027
    %v6035 = vrcp.pop %v6030
    %v6036 = vmul.f32 %v6007, %v6031
    %v6037 = vmul.f32 %v6009, %v6032
    %v6038 = vmul.f32 %v6011, %v6033
    %v6039 = vmul.f32 %v6013, %v6034
    %v6040 = vmul.f32 %v6015, %v6035
    %v6041 = vpack.c.bf16 %v6037, %v6036
    %v6042 = vpack.c.bf16 %v6039, %v6038
    %v6043 = vpack.c.bf16 %v6040, %v6040
    %6044 = vrot.lane.b32.xlu0 %v5677, 56
    %v6045 = vpop.permute.xlu0 %6044
    %6046 = vrot.lane.b32.xlu0 %v5678, 56
    %v6047 = vpop.permute.xlu0 %6046
    %6048 = vrot.lane.b32.xlu0 %v5679, 56
    %v6049 = vpop.permute.xlu0 %6048
    %v6053 = vsel %vm857, %v6041, 0
    %v6056 = vsel %vm857, %v6042, 0
    %v6059 = vsel %vm857, %v6043, 0
    %v6062 = vsel %vm934, %v6049, 0
    %6064 = vmatprep.subr.bf16.mxu0 0
    %6065 = vmatpush1.bf16.msra.mxu0 0
    %6066 = vmatprep.subr.bf16.mxu0 0
    %6067 = vmatpush1.bf16.msra.mxu0 0
    %6068 = vmatprep.subr.bf16.mxu0 0
    %6069 = vmatpush1.bf16.msra.mxu0 0
    %6070 = vmatprep.subr.bf16.mxu0 0
    %6071 = vmatpush1.bf16.msra.mxu0 0
    %6072 = vmatprep.subr.bf16.mxu0 0
    %6073 = vmatpush1.bf16.msra.mxu0 0
    %6074 = vmatprep.subr.bf16.mxu0 0
    %6075 = vmatpush1.bf16.msra.mxu0 %v6062
    %6076 = vmatprep.subr.bf16.mxu0 0
    %6077 = vmatpush1.bf16.msra.mxu0 %v6047
    %6078 = vmatprep.subr.bf16.mxu0 0
    %6079 = vmatpush1.bf16.msra.mxu0 %v6045
    %6080 = vmatprep.subr.bf16.mxu0 0
    %6081 = vmatpush2.bf16.msra.mxu0 0
    %6082 = vmatprep.subr.bf16.mxu0 0
    %6083 = vmatpush2.bf16.msra.mxu0 0
    %6084 = vmatprep.subr.bf16.mxu0 0
    %6085 = vmatpush2.bf16.msra.mxu0 0
    %6086 = vmatprep.subr.bf16.mxu0 0
    %6087 = vmatpush2.bf16.msra.mxu0 0
    %6088 = vmatprep.subr.bf16.mxu0 0
    %6089 = vmatpush2.bf16.msra.mxu0 0
    %6090 = vmatprep.subr.bf16.mxu0 0
    %6091 = vmatpush2.bf16.msra.mxu0 0
    %6092 = vmatprep.subr.bf16.mxu0 0
    %6093 = vmatpush2.bf16.msra.mxu0 0
    %6094 = vmatprep.subr.bf16.mxu0 0
    %6095 = vmatpush2.bf16.msra.mxu0 0
    %6096 = vmatprep.mubr.bf16.mxu0 0
    %6097 = vmatmul.mubr.bf16.gmra.mxu0 %v6053
    %v6098 = vpop.f32.mrf.mxu0
    %v6099 = vadd.f32 0.0, %v6098
    %v6100 = vpop.f32.mrf.mxu0
    %v6101 = vpop.f32.mrf.mxu0
    %v6102 = vadd.f32 0.0, %v6101
    %v6103 = vpop.f32.mrf.mxu0
    %6104 = vmatprep.mubr.bf16.mxu0 0
    %6105 = vmatmul.mubr.bf16.gmra.mxu0 %v6056
    %v6106 = vpop.f32.mrf.mxu0
    %v6107 = vadd.f32 0.0, %v6106
    %v6108 = vpop.f32.mrf.mxu0
    %v6109 = vpop.f32.mrf.mxu0
    %v6110 = vadd.f32 0.0, %v6109
    %v6111 = vpop.f32.mrf.mxu0
    %6112 = vmatprep.mubr.bf16.mxu0 0
    %6113 = vmatmul.mubr.bf16.gmra.mxu0 %v6059
    %v6114 = vpop.f32.mrf.mxu0
    %v6115 = vadd.f32 0.0, %v6114
    %v6116 = vpop.f32.mrf.mxu0
    %v6117 = vpop.f32.mrf.mxu0
    %v6118 = vpop.f32.mrf.mxu0
    %6119 = vdwg.mxu0
    %6120 = vrot.lane.b32.xlu0 %v5674, 112
    %v6121 = vpop.permute.xlu0 %6120
    %6122 = vrot.lane.b32.xlu0 %v5675, 112
    %v6123 = vpop.permute.xlu0 %6122
    %6124 = vrot.lane.b32.xlu0 %v5676, 112
    %v6125 = vpop.permute.xlu0 %6124
    %6126 = vrot.lane.b32.xlu0 %v5677, 80
    %v6127 = vpop.permute.xlu0 %6126
    %6128 = vrot.lane.b32.xlu0 %v5678, 80
    %v6129 = vpop.permute.xlu0 %6128
    %6130 = vrot.lane.b32.xlu0 %v5679, 80
    %v6131 = vpop.permute.xlu0 %6130
    %v6133 = vsel %vm782, %v6121, 0
    %v6136 = vsel %vm782, %v6123, 0
    %v6139 = vsel %vm782, %v6125, 0
    %v6142 = vsel %vm782, %v6127, 0
    %v6145 = vsel %vm782, %v6129, 0
    %v6148 = vsel %vm782, %v6131, 0
    %6150 = vmatprep.subr.bf16.mxu0 0
    %6151 = vmatpush1.bf16.xpose.msra.mxu0 0
    %6152 = vmatprep.subr.bf16.mxu0 0
    %6153 = vmatpush1.bf16.xpose.msra.mxu0 0
    %6154 = vmatprep.subr.bf16.mxu0 0
    %6155 = vmatpush1.bf16.xpose.msra.mxu0 0
    %6156 = vmatprep.subr.bf16.mxu0 0
    %6157 = vmatpush1.bf16.xpose.msra.mxu0 0
    %6158 = vmatprep.subr.bf16.mxu0 0
    %6159 = vmatpush1.bf16.xpose.msra.mxu0 0
    %6160 = vmatprep.subr.bf16.mxu0 0
    %6161 = vmatpush1.bf16.xpose.msra.mxu0 %v6148
    %6162 = vmatprep.subr.bf16.mxu0 0
    %6163 = vmatpush1.bf16.xpose.msra.mxu0 %v6145
    %6164 = vmatprep.subr.bf16.mxu0 0
    %6165 = vmatpush1.bf16.xpose.msra.mxu0 %v6142
    %6166 = vmatprep.subr.bf16.mxu0 0
    %6167 = vmatpush2.bf16.xpose.msra.mxu0 0
    %6168 = vmatprep.subr.bf16.mxu0 0
    %6169 = vmatpush2.bf16.xpose.msra.mxu0 0
    %6170 = vmatprep.subr.bf16.mxu0 0
    %6171 = vmatpush2.bf16.xpose.msra.mxu0 0
    %6172 = vmatprep.subr.bf16.mxu0 0
    %6173 = vmatpush2.bf16.xpose.msra.mxu0 0
    %6174 = vmatprep.subr.bf16.mxu0 0
    %6175 = vmatpush2.bf16.xpose.msra.mxu0 0
    %6176 = vmatprep.subr.bf16.mxu0 0
    %6177 = vmatpush2.bf16.xpose.msra.mxu0 0
    %6178 = vmatprep.subr.bf16.mxu0 0
    %6179 = vmatpush2.bf16.xpose.msra.mxu0 0
    %6180 = vmatprep.subr.bf16.mxu0 0
    %6181 = vmatpush2.bf16.xpose.msra.mxu0 0
    %6182 = vmatprep.mubr.bf16.mxu0 0
    %6183 = vmatmul.mubr.bf16.gmra.mxu0 %v6133
    %v6184 = vpop.f32.mrf.mxu0
    %v6185 = vadd.f32 %v180, %v6184
    %v6186 = vpop.f32.mrf.mxu0
    %v6187 = vpop.f32.mrf.mxu0
    %v6188 = vadd.f32 %v181, %v6187
    %v6189 = vpop.f32.mrf.mxu0
    %6190 = vmatprep.mubr.bf16.mxu0 0
    %6191 = vmatmul.mubr.bf16.gmra.mxu0 %v6136
    %v6192 = vpop.f32.mrf.mxu0
    %v6193 = vadd.f32 %v182, %v6192
    %v6194 = vpop.f32.mrf.mxu0
    %v6195 = vpop.f32.mrf.mxu0
    %v6196 = vadd.f32 %v183, %v6195
    %v6197 = vpop.f32.mrf.mxu0
    %6198 = vmatprep.mubr.bf16.mxu0 0
    %6199 = vmatmul.mubr.bf16.gmra.mxu0 %v6139
    %v6200 = vpop.f32.mrf.mxu0
    %v6201 = vadd.f32 %v184, %v6200
    %v6202 = vpop.f32.mrf.mxu0
    %v6203 = vpop.f32.mrf.mxu0
    %v6204 = vpop.f32.mrf.mxu0
    %6205 = vdwg.mxu0
    %v6206 = vsel %vm857, %v6185, -inf
    %6207 = vmax.xlane.f32.xlu0 %v6206
    %v6208 = vpop.xlane.xlu0 %6207
    %v6209 = vsel %vm857, %v6188, -inf
    %6210 = vmax.xlane.f32.xlu0 %v6209
    %v6211 = vpop.xlane.xlu0 %6210
    %v6212 = vsel %vm857, %v6193, -inf
    %6213 = vmax.xlane.f32.xlu0 %v6212
    %v6214 = vpop.xlane.xlu0 %6213
    %v6215 = vsel %vm857, %v6196, -inf
    %6216 = vmax.xlane.f32.xlu0 %v6215
    %v6217 = vpop.xlane.xlu0 %6216
    %v6218 = vsel %vm870, %v6201, -inf
    %6219 = vmax.xlane.f32.xlu0 %v6218
    %v6220 = vpop.xlane.xlu0 %6219
    %v6221 = vsub.f32 %v6185, %v6208
    %v6222 = vsub.f32 %v6188, %v6211
    %v6223 = vsub.f32 %v6193, %v6214
    %v6224 = vsub.f32 %v6196, %v6217
    %v6225 = vsub.f32 %v6201, %v6220
    %v6226 = vmul.f32 %v6221, 1.442695
    %v6227 = vpow.pop %v6226
    %v6228 = vmul.f32 %v6222, 1.442695
    %v6229 = vpow.pop %v6228
    %v6230 = vmul.f32 %v6223, 1.442695
    %v6231 = vpow.pop %v6230
    %v6232 = vmul.f32 %v6224, 1.442695
    %v6233 = vpow.pop %v6232
    %v6234 = vmul.f32 %v6225, 1.442695
    %v6235 = vpow.pop %v6234
    %v6236 = vsel %vm857, %v6227, 0.0
    %6237 = vadd.xlane.f32.xlu0 %v6236
    %v6238 = vpop.xlane.xlu0 %6237
    %v6239 = vsel %vm857, %v6229, 0.0
    %6240 = vadd.xlane.f32.xlu0 %v6239
    %v6241 = vpop.xlane.xlu0 %6240
    %v6242 = vsel %vm857, %v6231, 0.0
    %6243 = vadd.xlane.f32.xlu0 %v6242
    %v6244 = vpop.xlane.xlu0 %6243
    %v6245 = vsel %vm857, %v6233, 0.0
    %6246 = vadd.xlane.f32.xlu0 %v6245
    %v6247 = vpop.xlane.xlu0 %6246
    %v6248 = vsel %vm870, %v6235, 0.0
    %6249 = vadd.xlane.f32.xlu0 %v6248
    %v6250 = vpop.xlane.xlu0 %6249
    %v6251 = vrcp.pop %v6238
    %v6252 = vrcp.pop %v6241
    %v6253 = vrcp.pop %v6244
    %v6254 = vrcp.pop %v6247
    %v6255 = vrcp.pop %v6250
    %v6256 = vmul.f32 %v6227, %v6251
    %v6257 = vmul.f32 %v6229, %v6252
    %v6258 = vmul.f32 %v6231, %v6253
    %v6259 = vmul.f32 %v6233, %v6254
    %v6260 = vmul.f32 %v6235, %v6255
    %v6261 = vpack.c.bf16 %v6257, %v6256
    %v6262 = vpack.c.bf16 %v6259, %v6258
    %v6263 = vpack.c.bf16 %v6260, %v6260
    %6264 = vrot.lane.b32.xlu0 %v5677, 48
    %v6265 = vpop.permute.xlu0 %6264
    %6266 = vrot.lane.b32.xlu0 %v5678, 48
    %v6267 = vpop.permute.xlu0 %6266
    %6268 = vrot.lane.b32.xlu0 %v5679, 48
    %v6269 = vpop.permute.xlu0 %6268
    %v6273 = vsel %vm857, %v6261, 0
    %v6276 = vsel %vm857, %v6262, 0
    %v6279 = vsel %vm857, %v6263, 0
    %v6282 = vsel %vm934, %v6269, 0
    %6284 = vmatprep.subr.bf16.mxu0 0
    %6285 = vmatpush1.bf16.msra.mxu0 0
    %6286 = vmatprep.subr.bf16.mxu0 0
    %6287 = vmatpush1.bf16.msra.mxu0 0
    %6288 = vmatprep.subr.bf16.mxu0 0
    %6289 = vmatpush1.bf16.msra.mxu0 0
    %6290 = vmatprep.subr.bf16.mxu0 0
    %6291 = vmatpush1.bf16.msra.mxu0 0
    %6292 = vmatprep.subr.bf16.mxu0 0
    %6293 = vmatpush1.bf16.msra.mxu0 0
    %6294 = vmatprep.subr.bf16.mxu0 0
    %6295 = vmatpush1.bf16.msra.mxu0 %v6282
    %6296 = vmatprep.subr.bf16.mxu0 0
    %6297 = vmatpush1.bf16.msra.mxu0 %v6267
    %6298 = vmatprep.subr.bf16.mxu0 0
    %6299 = vmatpush1.bf16.msra.mxu0 %v6265
    %6300 = vmatprep.subr.bf16.mxu0 0
    %6301 = vmatpush2.bf16.msra.mxu0 0
    %6302 = vmatprep.subr.bf16.mxu0 0
    %6303 = vmatpush2.bf16.msra.mxu0 0
    %6304 = vmatprep.subr.bf16.mxu0 0
    %6305 = vmatpush2.bf16.msra.mxu0 0
    %6306 = vmatprep.subr.bf16.mxu0 0
    %6307 = vmatpush2.bf16.msra.mxu0 0
    %6308 = vmatprep.subr.bf16.mxu0 0
    %6309 = vmatpush2.bf16.msra.mxu0 0
    %6310 = vmatprep.subr.bf16.mxu0 0
    %6311 = vmatpush2.bf16.msra.mxu0 0
    %6312 = vmatprep.subr.bf16.mxu0 0
    %6313 = vmatpush2.bf16.msra.mxu0 0
    %6314 = vmatprep.subr.bf16.mxu0 0
    %6315 = vmatpush2.bf16.msra.mxu0 0
    %6316 = vmatprep.mubr.bf16.mxu0 0
    %6317 = vmatmul.mubr.bf16.gmra.mxu0 %v6273
    %v6318 = vpop.f32.mrf.mxu0
    %v6319 = vadd.f32 0.0, %v6318
    %v6320 = vpop.f32.mrf.mxu0
    %v6321 = vpop.f32.mrf.mxu0
    %v6322 = vadd.f32 0.0, %v6321
    %v6323 = vpop.f32.mrf.mxu0
    %6324 = vmatprep.mubr.bf16.mxu0 0
    %6325 = vmatmul.mubr.bf16.gmra.mxu0 %v6276
    %v6326 = vpop.f32.mrf.mxu0
    %v6327 = vadd.f32 0.0, %v6326
    %v6328 = vpop.f32.mrf.mxu0
    %v6329 = vpop.f32.mrf.mxu0
    %v6330 = vadd.f32 0.0, %v6329
    %v6331 = vpop.f32.mrf.mxu0
    %6332 = vmatprep.mubr.bf16.mxu0 0
    %6333 = vmatmul.mubr.bf16.gmra.mxu0 %v6279
    %v6334 = vpop.f32.mrf.mxu0
    %v6335 = vadd.f32 0.0, %v6334
    %v6336 = vpop.f32.mrf.mxu0
    %v6337 = vpop.f32.mrf.mxu0
    %v6338 = vpop.f32.mrf.mxu0
    %6339 = vdwg.mxu0
    %6340 = vrot.lane.b32.xlu0 %v5674, 104
    %v6341 = vpop.permute.xlu0 %6340
    %6342 = vrot.lane.b32.xlu0 %v5675, 104
    %v6343 = vpop.permute.xlu0 %6342
    %6344 = vrot.lane.b32.xlu0 %v5676, 104
    %v6345 = vpop.permute.xlu0 %6344
    %6346 = vrot.lane.b32.xlu0 %v5677, 72
    %v6347 = vpop.permute.xlu0 %6346
    %6348 = vrot.lane.b32.xlu0 %v5678, 72
    %v6349 = vpop.permute.xlu0 %6348
    %6350 = vrot.lane.b32.xlu0 %v5679, 72
    %v6351 = vpop.permute.xlu0 %6350
    %v6353 = vsel %vm782, %v6341, 0
    %v6356 = vsel %vm782, %v6343, 0
    %v6359 = vsel %vm782, %v6345, 0
    %v6362 = vsel %vm782, %v6347, 0
    %v6365 = vsel %vm782, %v6349, 0
    %v6368 = vsel %vm782, %v6351, 0
    %6370 = vmatprep.subr.bf16.mxu0 0
    %6371 = vmatpush1.bf16.xpose.msra.mxu0 0
    %6372 = vmatprep.subr.bf16.mxu0 0
    %6373 = vmatpush1.bf16.xpose.msra.mxu0 0
    %6374 = vmatprep.subr.bf16.mxu0 0
    %6375 = vmatpush1.bf16.xpose.msra.mxu0 0
    %6376 = vmatprep.subr.bf16.mxu0 0
    %6377 = vmatpush1.bf16.xpose.msra.mxu0 0
    %6378 = vmatprep.subr.bf16.mxu0 0
    %6379 = vmatpush1.bf16.xpose.msra.mxu0 0
    %6380 = vmatprep.subr.bf16.mxu0 0
    %6381 = vmatpush1.bf16.xpose.msra.mxu0 %v6368
    %6382 = vmatprep.subr.bf16.mxu0 0
    %6383 = vmatpush1.bf16.xpose.msra.mxu0 %v6365
    %6384 = vmatprep.subr.bf16.mxu0 0
    %6385 = vmatpush1.bf16.xpose.msra.mxu0 %v6362
    %6386 = vmatprep.subr.bf16.mxu0 0
    %6387 = vmatpush2.bf16.xpose.msra.mxu0 0
    %6388 = vmatprep.subr.bf16.mxu0 0
    %6389 = vmatpush2.bf16.xpose.msra.mxu0 0
    %6390 = vmatprep.subr.bf16.mxu0 0
    %6391 = vmatpush2.bf16.xpose.msra.mxu0 0
    %6392 = vmatprep.subr.bf16.mxu0 0
    %6393 = vmatpush2.bf16.xpose.msra.mxu0 0
    %6394 = vmatprep.subr.bf16.mxu0 0
    %6395 = vmatpush2.bf16.xpose.msra.mxu0 0
    %6396 = vmatprep.subr.bf16.mxu0 0
    %6397 = vmatpush2.bf16.xpose.msra.mxu0 0
    %6398 = vmatprep.subr.bf16.mxu0 0
    %6399 = vmatpush2.bf16.xpose.msra.mxu0 0
    %6400 = vmatprep.subr.bf16.mxu0 0
    %6401 = vmatpush2.bf16.xpose.msra.mxu0 0
    %6402 = vmatprep.mubr.bf16.mxu0 0
    %6403 = vmatmul.mubr.bf16.gmra.mxu0 %v6353
    %v6404 = vpop.f32.mrf.mxu0
    %v6405 = vadd.f32 %v180, %v6404
    %v6406 = vpop.f32.mrf.mxu0
    %v6407 = vpop.f32.mrf.mxu0
    %v6408 = vadd.f32 %v181, %v6407
    %v6409 = vpop.f32.mrf.mxu0
    %6410 = vmatprep.mubr.bf16.mxu0 0
    %6411 = vmatmul.mubr.bf16.gmra.mxu0 %v6356
    %v6412 = vpop.f32.mrf.mxu0
    %v6413 = vadd.f32 %v182, %v6412
    %v6414 = vpop.f32.mrf.mxu0
    %v6415 = vpop.f32.mrf.mxu0
    %v6416 = vadd.f32 %v183, %v6415
    %v6417 = vpop.f32.mrf.mxu0
    %6418 = vmatprep.mubr.bf16.mxu0 0
    %6419 = vmatmul.mubr.bf16.gmra.mxu0 %v6359
    %v6420 = vpop.f32.mrf.mxu0
    %v6421 = vadd.f32 %v184, %v6420
    %v6422 = vpop.f32.mrf.mxu0
    %v6423 = vpop.f32.mrf.mxu0
    %v6424 = vpop.f32.mrf.mxu0
    %6425 = vdwg.mxu0
    %v6426 = vsel %vm857, %v6405, -inf
    %6427 = vmax.xlane.f32.xlu0 %v6426
    %v6428 = vpop.xlane.xlu0 %6427
    %v6429 = vsel %vm857, %v6408, -inf
    %6430 = vmax.xlane.f32.xlu0 %v6429
    %v6431 = vpop.xlane.xlu0 %6430
    %v6432 = vsel %vm857, %v6413, -inf
    %6433 = vmax.xlane.f32.xlu0 %v6432
    %v6434 = vpop.xlane.xlu0 %6433
    %v6435 = vsel %vm857, %v6416, -inf
    %6436 = vmax.xlane.f32.xlu0 %v6435
    %v6437 = vpop.xlane.xlu0 %6436
    %v6438 = vsel %vm870, %v6421, -inf
    %6439 = vmax.xlane.f32.xlu0 %v6438
    %v6440 = vpop.xlane.xlu0 %6439
    %v6441 = vsub.f32 %v6405, %v6428
    %v6442 = vsub.f32 %v6408, %v6431
    %v6443 = vsub.f32 %v6413, %v6434
    %v6444 = vsub.f32 %v6416, %v6437
    %v6445 = vsub.f32 %v6421, %v6440
    %v6446 = vmul.f32 %v6441, 1.442695
    %v6447 = vpow.pop %v6446
    %v6448 = vmul.f32 %v6442, 1.442695
    %v6449 = vpow.pop %v6448
    %v6450 = vmul.f32 %v6443, 1.442695
    %v6451 = vpow.pop %v6450
    %v6452 = vmul.f32 %v6444, 1.442695
    %v6453 = vpow.pop %v6452
    %v6454 = vmul.f32 %v6445, 1.442695
    %v6455 = vpow.pop %v6454
    %v6456 = vsel %vm857, %v6447, 0.0
    %6457 = vadd.xlane.f32.xlu0 %v6456
    %v6458 = vpop.xlane.xlu0 %6457
    %v6459 = vsel %vm857, %v6449, 0.0
    %6460 = vadd.xlane.f32.xlu0 %v6459
    %v6461 = vpop.xlane.xlu0 %6460
    %v6462 = vsel %vm857, %v6451, 0.0
    %6463 = vadd.xlane.f32.xlu0 %v6462
    %v6464 = vpop.xlane.xlu0 %6463
    %v6465 = vsel %vm857, %v6453, 0.0
    %6466 = vadd.xlane.f32.xlu0 %v6465
    %v6467 = vpop.xlane.xlu0 %6466
    %v6468 = vsel %vm870, %v6455, 0.0
    %6469 = vadd.xlane.f32.xlu0 %v6468
    %v6470 = vpop.xlane.xlu0 %6469
    %v6471 = vrcp.pop %v6458
    %v6472 = vrcp.pop %v6461
    %v6473 = vrcp.pop %v6464
    %v6474 = vrcp.pop %v6467
    %v6475 = vrcp.pop %v6470
    %v6476 = vmul.f32 %v6447, %v6471
    %v6477 = vmul.f32 %v6449, %v6472
    %v6478 = vmul.f32 %v6451, %v6473
    %v6479 = vmul.f32 %v6453, %v6474
    %v6480 = vmul.f32 %v6455, %v6475
    %v6481 = vpack.c.bf16 %v6477, %v6476
    %v6482 = vpack.c.bf16 %v6479, %v6478
    %v6483 = vpack.c.bf16 %v6480, %v6480
    %6484 = vrot.lane.b32.xlu0 %v5677, 40
    %v6485 = vpop.permute.xlu0 %6484
    %6486 = vrot.lane.b32.xlu0 %v5678, 40
    %v6487 = vpop.permute.xlu0 %6486
    %6488 = vrot.lane.b32.xlu0 %v5679, 40
    %v6489 = vpop.permute.xlu0 %6488
    %v6493 = vsel %vm857, %v6481, 0
    %v6496 = vsel %vm857, %v6482, 0
    %v6499 = vsel %vm857, %v6483, 0
    %v6502 = vsel %vm934, %v6489, 0
    %6504 = vmatprep.subr.bf16.mxu0 0
    %6505 = vmatpush1.bf16.msra.mxu0 0
    %6506 = vmatprep.subr.bf16.mxu0 0
    %6507 = vmatpush1.bf16.msra.mxu0 0
    %6508 = vmatprep.subr.bf16.mxu0 0
    %6509 = vmatpush1.bf16.msra.mxu0 0
    %6510 = vmatprep.subr.bf16.mxu0 0
    %6511 = vmatpush1.bf16.msra.mxu0 0
    %6512 = vmatprep.subr.bf16.mxu0 0
    %6513 = vmatpush1.bf16.msra.mxu0 0
    %6514 = vmatprep.subr.bf16.mxu0 0
    %6515 = vmatpush1.bf16.msra.mxu0 %v6502
    %6516 = vmatprep.subr.bf16.mxu0 0
    %6517 = vmatpush1.bf16.msra.mxu0 %v6487
    %6518 = vmatprep.subr.bf16.mxu0 0
    %6519 = vmatpush1.bf16.msra.mxu0 %v6485
    %6520 = vmatprep.subr.bf16.mxu0 0
    %6521 = vmatpush2.bf16.msra.mxu0 0
    %6522 = vmatprep.subr.bf16.mxu0 0
    %6523 = vmatpush2.bf16.msra.mxu0 0
    %6524 = vmatprep.subr.bf16.mxu0 0
    %6525 = vmatpush2.bf16.msra.mxu0 0
    %6526 = vmatprep.subr.bf16.mxu0 0
    %6527 = vmatpush2.bf16.msra.mxu0 0
    %6528 = vmatprep.subr.bf16.mxu0 0
    %6529 = vmatpush2.bf16.msra.mxu0 0
    %6530 = vmatprep.subr.bf16.mxu0 0
    %6531 = vmatpush2.bf16.msra.mxu0 0
    %6532 = vmatprep.subr.bf16.mxu0 0
    %6533 = vmatpush2.bf16.msra.mxu0 0
    %6534 = vmatprep.subr.bf16.mxu0 0
    %6535 = vmatpush2.bf16.msra.mxu0 0
    %6536 = vmatprep.mubr.bf16.mxu0 0
    %6537 = vmatmul.mubr.bf16.gmra.mxu0 %v6493
    %v6538 = vpop.f32.mrf.mxu0
    %v6539 = vadd.f32 0.0, %v6538
    %v6540 = vpop.f32.mrf.mxu0
    %v6541 = vpop.f32.mrf.mxu0
    %v6542 = vadd.f32 0.0, %v6541
    %v6543 = vpop.f32.mrf.mxu0
    %6544 = vmatprep.mubr.bf16.mxu0 0
    %6545 = vmatmul.mubr.bf16.gmra.mxu0 %v6496
    %v6546 = vpop.f32.mrf.mxu0
    %v6547 = vadd.f32 0.0, %v6546
    %v6548 = vpop.f32.mrf.mxu0
    %v6549 = vpop.f32.mrf.mxu0
    %v6550 = vadd.f32 0.0, %v6549
    %v6551 = vpop.f32.mrf.mxu0
    %6552 = vmatprep.mubr.bf16.mxu0 0
    %6553 = vmatmul.mubr.bf16.gmra.mxu0 %v6499
    %v6554 = vpop.f32.mrf.mxu0
    %v6555 = vadd.f32 0.0, %v6554
    %v6556 = vpop.f32.mrf.mxu0
    %v6557 = vpop.f32.mrf.mxu0
    %v6558 = vpop.f32.mrf.mxu0
    %6559 = vdwg.mxu0
    %6565 = vrot.lane.b32.xlu0 %v6099, 8
    %v6566 = vpop.permute.xlu0 %6565
    %6567 = vrot.lane.b32.xlu0 %v6102, 8
    %v6568 = vpop.permute.xlu0 %6567
    %6569 = vrot.lane.b32.xlu0 %v6107, 8
    %v6570 = vpop.permute.xlu0 %6569
    %6571 = vrot.lane.b32.xlu0 %v6110, 8
    %v6572 = vpop.permute.xlu0 %6571
    %6573 = vrot.lane.b32.xlu0 %v6115, 8
    %v6574 = vpop.permute.xlu0 %6573
    %6585 = vrot.lane.b32.xlu0 %v6319, 16
    %v6586 = vpop.permute.xlu0 %6585
    %6587 = vrot.lane.b32.xlu0 %v6322, 16
    %v6588 = vpop.permute.xlu0 %6587
    %6589 = vrot.lane.b32.xlu0 %v6327, 16
    %v6590 = vpop.permute.xlu0 %6589
    %6591 = vrot.lane.b32.xlu0 %v6330, 16
    %v6592 = vpop.permute.xlu0 %6591
    %6593 = vrot.lane.b32.xlu0 %v6335, 16
    %v6594 = vpop.permute.xlu0 %6593
    %6605 = vrot.lane.b32.xlu0 %v6539, 24
    %v6606 = vpop.permute.xlu0 %6605
    %6607 = vrot.lane.b32.xlu0 %v6542, 24
    %v6608 = vpop.permute.xlu0 %6607
    %6609 = vrot.lane.b32.xlu0 %v6547, 24
    %v6610 = vpop.permute.xlu0 %6609
    %6611 = vrot.lane.b32.xlu0 %v6550, 24
    %v6612 = vpop.permute.xlu0 %6611
    %6613 = vrot.lane.b32.xlu0 %v6555, 24
    %v6614 = vpop.permute.xlu0 %6613
    %v6620 = vsel %vm782, %v5876, %v6566
    %v6621 = vsel %vm782, %v5879, %v6568
    %v6622 = vsel %vm782, %v5884, %v6570
    %v6623 = vsel %vm782, %v5887, %v6572
    %v6624 = vsel %vm782, %v5892, %v6574
    %v6625 = vsel %vm421, %v6620, %v6586
    %v6626 = vsel %vm421, %v6621, %v6588
    %v6627 = vsel %vm421, %v6622, %v6590
    %v6628 = vsel %vm421, %v6623, %v6592
    %v6629 = vsel %vm421, %v6624, %v6594
    %v6630 = vsel %vm1727, %v6625, %v6606
    %v6631 = vsel %vm1727, %v6626, %v6608
    %v6632 = vsel %vm1727, %v6627, %v6610
    %v6633 = vsel %vm1727, %v6628, %v6612
    %v6634 = vsel %vm1727, %v6629, %v6614
    %v6635 = vpack.c.bf16 %v6631, %v6630
    %v6636 = vpack.c.bf16 %v6633, %v6632
    %v6637 = vpack.c.bf16 %v6634, %v6634
    %s6638 = scalar_lea.vmem %s63, 16
    %v6639 = vld [vmem:[%s6638] sm:$0xf]
    %v6640 = vld [vmem:[%s6638 + $0x4] sm:$0xf]
    %v6641 = vld [vmem:[%s6638 + $0x8] sm:$0xf]
    %v6642 = vld [vmem:[%s6638 + $0xc] sm:$0xf]
    %s6643 = scalar_lea.vmem %s65, 1
    %v6644 = vld [vmem:[%s6643] sm:$0x1]
    %v6646 = vlaneseq
    %v6647 = vshrl.u32 %v6646, 7
    %v6648 = vsub.s32 0, %v6647
    %v6649 = vrot.slane %v6644, %v6648
    %v6655 = vunpack.c.l.b16 %v6639
    %v6656 = vunpack.c.l.b16 %v6640
    %v6657 = vunpack.c.l.b16 %v6641
    %v6658 = vunpack.c.l.b16 %v6642
    %v6659 = vpack.c.b16 %v6656, %v6655
    %v6660 = vpack.c.b16 %v6658, %v6657
    %v6664 = vsel %vm300, %v6635, 0
    %v6667 = vsel %vm300, %v6636, 0
    %v6670 = vsel %vm300, %v6637, 0
    %6672 = vmatprep.subr.bf16.mxu0 0
    %6673 = vmatpush1.bf16.msra.mxu0 0
    %6674 = vmatprep.subr.bf16.mxu0 0
    %6675 = vmatpush1.bf16.msra.mxu0 0
    %6676 = vmatprep.subr.bf16.mxu0 0
    %6677 = vmatpush1.bf16.msra.mxu0 0
    %6678 = vmatprep.subr.bf16.mxu0 0
    %6679 = vmatpush1.bf16.msra.mxu0 0
    %6680 = vmatprep.subr.bf16.mxu0 0
    %6681 = vmatpush1.bf16.msra.mxu0 0
    %6682 = vmatprep.subr.bf16.mxu0 0
    %6683 = vmatpush1.bf16.msra.mxu0 0
    %6684 = vmatprep.subr.bf16.mxu0 0
    %6685 = vmatpush1.bf16.msra.mxu0 %v6660
    %6686 = vmatprep.subr.bf16.mxu0 0
    %6687 = vmatpush1.bf16.msra.mxu0 %v6659
    %6688 = vmatprep.subr.bf16.mxu0 0
    %6689 = vmatpush2.bf16.msra.mxu0 0
    %6690 = vmatprep.subr.bf16.mxu0 0
    %6691 = vmatpush2.bf16.msra.mxu0 0
    %6692 = vmatprep.subr.bf16.mxu0 0
    %6693 = vmatpush2.bf16.msra.mxu0 0
    %6694 = vmatprep.subr.bf16.mxu0 0
    %6695 = vmatpush2.bf16.msra.mxu0 0
    %6696 = vmatprep.subr.bf16.mxu0 0
    %6697 = vmatpush2.bf16.msra.mxu0 0
    %6698 = vmatprep.subr.bf16.mxu0 0
    %6699 = vmatpush2.bf16.msra.mxu0 0
    %6700 = vmatprep.subr.bf16.mxu0 0
    %6701 = vmatpush2.bf16.msra.mxu0 0
    %6702 = vmatprep.subr.bf16.mxu0 0
    %6703 = vmatpush2.bf16.msra.mxu0 0
    %6704 = vmatprep.mubr.bf16.mxu0 0
    %6705 = vmatmul.mubr.bf16.gmra.mxu0 %v6664
    %v6706 = vpop.f32.mrf.mxu0
    %v6707 = vadd.f32 %v6649, %v6706
    %v6708 = vpop.f32.mrf.mxu0
    %v6709 = vpop.f32.mrf.mxu0
    %v6710 = vadd.f32 %v6649, %v6709
    %v6711 = vpop.f32.mrf.mxu0
    %6712 = vmatprep.mubr.bf16.mxu0 0
    %6713 = vmatmul.mubr.bf16.gmra.mxu0 %v6667
    %v6714 = vpop.f32.mrf.mxu0
    %v6715 = vadd.f32 %v6649, %v6714
    %v6716 = vpop.f32.mrf.mxu0
    %v6717 = vpop.f32.mrf.mxu0
    %v6718 = vadd.f32 %v6649, %v6717
    %v6719 = vpop.f32.mrf.mxu0
    %6720 = vmatprep.mubr.bf16.mxu0 0
    %6721 = vmatmul.mubr.bf16.gmra.mxu0 %v6670
    %v6722 = vpop.f32.mrf.mxu0
    %v6723 = vadd.f32 %v6649, %v6722
    %v6724 = vpop.f32.mrf.mxu0
    %v6725 = vpop.f32.mrf.mxu0
    %v6726 = vpop.f32.mrf.mxu0
    %6727 = vdwg.mxu0
    %v6728 = vadd.f32 %v3870, %v6707
    %v6729 = vadd.f32 %v3871, %v6710
    %v6730 = vadd.f32 %v3872, %v6715
    %v6731 = vadd.f32 %v3873, %v6718
    %v6732 = vadd.f32 %v3874, %v6723
    %s6733 = scalar_lea.vmem %s67, 1
    %v6734 = vld [vmem:[%s6733] sm:$0x1]
    %s6735 = scalar_lea.vmem %s69, 1
    %v6736 = vld [vmem:[%s6735] sm:$0x1]
    %v6737 = vsel %vm300, %v6728, 0.0
    %6738 = vadd.xlane.f32.xlu0 %v6737
    %v6739 = vpop.xlane.xlu0 %6738
    %v6740 = vsel %vm300, %v6729, 0.0
    %6741 = vadd.xlane.f32.xlu0 %v6740
    %v6742 = vpop.xlane.xlu0 %6741
    %v6743 = vsel %vm300, %v6730, 0.0
    %6744 = vadd.xlane.f32.xlu0 %v6743
    %v6745 = vpop.xlane.xlu0 %6744
    %v6746 = vsel %vm300, %v6731, 0.0
    %6747 = vadd.xlane.f32.xlu0 %v6746
    %v6748 = vpop.xlane.xlu0 %6747
    %v6749 = vsel %vm313, %v6732, 0.0
    %6750 = vadd.xlane.f32.xlu0 %v6749
    %v6751 = vpop.xlane.xlu0 %6750
    %v6752 = vmul.f32 %v6739, %v317
    %v6753 = vmul.f32 %v6742, %v317
    %v6754 = vmul.f32 %v6745, %v317
    %v6755 = vmul.f32 %v6748, %v317
    %v6756 = vmul.f32 %v6751, %v317
    %v6757 = vsub.f32 %v6728, %v6752
    %v6758 = vsub.f32 %v6729, %v6753
    %v6759 = vsub.f32 %v6730, %v6754
    %v6760 = vsub.f32 %v6731, %v6755
    %v6761 = vsub.f32 %v6732, %v6756
    %v6762 = vmul.f32 %v6757, %v6757
    %v6763 = vmul.f32 %v6758, %v6758
    %v6764 = vmul.f32 %v6759, %v6759
    %v6765 = vmul.f32 %v6760, %v6760
    %v6766 = vmul.f32 %v6761, %v6761
    %v6767 = vsel %vm300, %v6762, 0.0
    %6768 = vadd.xlane.f32.xlu0 %v6767
    %v6769 = vpop.xlane.xlu0 %6768
    %v6770 = vsel %vm300, %v6763, 0.0
    %6771 = vadd.xlane.f32.xlu0 %v6770
    %v6772 = vpop.xlane.xlu0 %6771
    %v6773 = vsel %vm300, %v6764, 0.0
    %6774 = vadd.xlane.f32.xlu0 %v6773
    %v6775 = vpop.xlane.xlu0 %6774
    %v6776 = vsel %vm300, %v6765, 0.0
    %6777 = vadd.xlane.f32.xlu0 %v6776
    %v6778 = vpop.xlane.xlu0 %6777
    %v6779 = vsel %vm313, %v6766, 0.0
    %6780 = vadd.xlane.f32.xlu0 %v6779
    %v6781 = vpop.xlane.xlu0 %6780
    %v6782 = vmul.f32 %v6769, %v317
    %v6783 = vmul.f32 %v6772, %v317
    %v6784 = vmul.f32 %v6775, %v317
    %v6785 = vmul.f32 %v6778, %v317
    %v6786 = vmul.f32 %v6781, %v317
    %v6787 = vadd.f32 %v6782, 1e-06
    %v6788 = vadd.f32 %v6783, 1e-06
    %v6789 = vadd.f32 %v6784, 1e-06
    %v6790 = vadd.f32 %v6785, 1e-06
    %v6791 = vadd.f32 %v6786, 1e-06
    %v6792 = vrsqrt.pop %v6787
    %v6793 = vrsqrt.pop %v6788
    %v6794 = vrsqrt.pop %v6789
    %v6795 = vrsqrt.pop %v6790
    %v6796 = vrsqrt.pop %v6791
    %v6797 = vmul.f32 %v6757, %v6792
    %v6798 = vmul.f32 %v6758, %v6793
    %v6799 = vmul.f32 %v6759, %v6794
    %v6800 = vmul.f32 %v6760, %v6795
    %v6801 = vmul.f32 %v6761, %v6796
    %v6803 = vlaneseq
    %v6804 = vshrl.u32 %v6803, 7
    %v6805 = vsub.s32 0, %v6804
    %v6806 = vrot.slane %v6734, %v6805
    %v6808 = vmul.f32 %v6797, %v6806
    %v6809 = vmul.f32 %v6798, %v6806
    %v6810 = vmul.f32 %v6799, %v6806
    %v6811 = vmul.f32 %v6800, %v6806
    %v6812 = vmul.f32 %v6801, %v6806
    %v6814 = vlaneseq
    %v6815 = vshrl.u32 %v6814, 7
    %v6816 = vsub.s32 0, %v6815
    %v6817 = vrot.slane %v6736, %v6816
    %v6819 = vadd.f32 %v6808, %v6817
    %v6820 = vadd.f32 %v6809, %v6817
    %v6821 = vadd.f32 %v6810, %v6817
    %v6822 = vadd.f32 %v6811, %v6817
    %v6823 = vadd.f32 %v6812, %v6817
    %v6824 = vpack.c.bf16 %v6820, %v6819
    %v6825 = vpack.c.bf16 %v6822, %v6821
    %v6826 = vpack.c.bf16 %v6823, %v6823
    %s6827 = scalar_lea.vmem %s71, 16
    %v6828 = vld [vmem:[%s6827] sm:$0xf]
    %v6829 = vld [vmem:[%s6827 + $0x4] sm:$0xf]
    %v6830 = vld [vmem:[%s6827 + $0x8] sm:$0xf]
    %v6831 = vld [vmem:[%s6827 + $0xc] sm:$0xf]
    %s6832 = scalar_lea.vmem %s73, 1
    %v6833 = vld [vmem:[%s6832] sm:$0x1]
    %v6835 = vlaneseq
    %v6836 = vshrl.u32 %v6835, 7
    %v6837 = vsub.s32 0, %v6836
    %v6838 = vrot.slane %v6833, %v6837
    %v6844 = vunpack.c.l.b16 %v6828
    %v6845 = vunpack.c.l.b16 %v6829
    %v6846 = vunpack.c.l.b16 %v6830
    %v6847 = vunpack.c.l.b16 %v6831
    %v6848 = vpack.c.b16 %v6845, %v6844
    %v6849 = vpack.c.b16 %v6847, %v6846
    %v6853 = vsel %vm300, %v6824, 0
    %v6856 = vsel %vm300, %v6825, 0
    %v6859 = vsel %vm300, %v6826, 0
    %6861 = vmatprep.subr.bf16.mxu0 0
    %6862 = vmatpush1.bf16.msra.mxu0 0
    %6863 = vmatprep.subr.bf16.mxu0 0
    %6864 = vmatpush1.bf16.msra.mxu0 0
    %6865 = vmatprep.subr.bf16.mxu0 0
    %6866 = vmatpush1.bf16.msra.mxu0 0
    %6867 = vmatprep.subr.bf16.mxu0 0
    %6868 = vmatpush1.bf16.msra.mxu0 0
    %6869 = vmatprep.subr.bf16.mxu0 0
    %6870 = vmatpush1.bf16.msra.mxu0 0
    %6871 = vmatprep.subr.bf16.mxu0 0
    %6872 = vmatpush1.bf16.msra.mxu0 0
    %6873 = vmatprep.subr.bf16.mxu0 0
    %6874 = vmatpush1.bf16.msra.mxu0 %v6849
    %6875 = vmatprep.subr.bf16.mxu0 0
    %6876 = vmatpush1.bf16.msra.mxu0 %v6848
    %6877 = vmatprep.subr.bf16.mxu0 0
    %6878 = vmatpush2.bf16.msra.mxu0 0
    %6879 = vmatprep.subr.bf16.mxu0 0
    %6880 = vmatpush2.bf16.msra.mxu0 0
    %6881 = vmatprep.subr.bf16.mxu0 0
    %6882 = vmatpush2.bf16.msra.mxu0 0
    %6883 = vmatprep.subr.bf16.mxu0 0
    %6884 = vmatpush2.bf16.msra.mxu0 0
    %6885 = vmatprep.subr.bf16.mxu0 0
    %6886 = vmatpush2.bf16.msra.mxu0 0
    %6887 = vmatprep.subr.bf16.mxu0 0
    %6888 = vmatpush2.bf16.msra.mxu0 0
    %6889 = vmatprep.subr.bf16.mxu0 0
    %6890 = vmatpush2.bf16.msra.mxu0 0
    %6891 = vmatprep.subr.bf16.mxu0 0
    %6892 = vmatpush2.bf16.msra.mxu0 0
    %6893 = vmatprep.mubr.bf16.mxu0 0
    %6894 = vmatmul.mubr.bf16.gmra.mxu0 %v6853
    %v6895 = vpop.f32.mrf.mxu0
    %v6896 = vadd.f32 %v6838, %v6895
    %v6897 = vpop.f32.mrf.mxu0
    %v6898 = vpop.f32.mrf.mxu0
    %v6899 = vadd.f32 %v6838, %v6898
    %v6900 = vpop.f32.mrf.mxu0
    %6901 = vmatprep.mubr.bf16.mxu0 0
    %6902 = vmatmul.mubr.bf16.gmra.mxu0 %v6856
    %v6903 = vpop.f32.mrf.mxu0
    %v6904 = vadd.f32 %v6838, %v6903
    %v6905 = vpop.f32.mrf.mxu0
    %v6906 = vpop.f32.mrf.mxu0
    %v6907 = vadd.f32 %v6838, %v6906
    %v6908 = vpop.f32.mrf.mxu0
    %6909 = vmatprep.mubr.bf16.mxu0 0
    %6910 = vmatmul.mubr.bf16.gmra.mxu0 %v6859
    %v6911 = vpop.f32.mrf.mxu0
    %v6912 = vadd.f32 %v6838, %v6911
    %v6913 = vpop.f32.mrf.mxu0
    %v6914 = vpop.f32.mrf.mxu0
    %v6915 = vpop.f32.mrf.mxu0
    %6916 = vdwg.mxu0
    %v6917 = vmul.f32 %v6896, 0.5
    %v6918 = vmul.f32 %v6899, 0.5
    %v6919 = vmul.f32 %v6904, 0.5
    %v6920 = vmul.f32 %v6907, 0.5
    %v6921 = vmul.f32 %v6912, 0.5
    %v6922 = vmul.f32 %v6896, 0.044715
    %v6923 = vmul.f32 %v6899, 0.044715
    %v6924 = vmul.f32 %v6904, 0.044715
    %v6925 = vmul.f32 %v6907, 0.044715
    %v6926 = vmul.f32 %v6912, 0.044715
    %v6927 = vmul.f32 %v6922, %v6896
    %v6928 = vmul.f32 %v6923, %v6899
    %v6929 = vmul.f32 %v6924, %v6904
    %v6930 = vmul.f32 %v6925, %v6907
    %v6931 = vmul.f32 %v6926, %v6912
    %v6932 = vmul.f32 %v6927, %v6896
    %v6933 = vmul.f32 %v6928, %v6899
    %v6934 = vmul.f32 %v6929, %v6904
    %v6935 = vmul.f32 %v6930, %v6907
    %v6936 = vmul.f32 %v6931, %v6912
    %v6937 = vadd.f32 %v6896, %v6932
    %v6938 = vadd.f32 %v6899, %v6933
    %v6939 = vadd.f32 %v6904, %v6934
    %v6940 = vadd.f32 %v6907, %v6935
    %v6941 = vadd.f32 %v6912, %v6936
    %v6942 = vmul.f32 %v6937, 0.7978846
    %v6943 = vmul.f32 %v6938, 0.7978846
    %v6944 = vmul.f32 %v6939, 0.7978846
    %v6945 = vmul.f32 %v6940, 0.7978846
    %v6946 = vmul.f32 %v6941, 0.7978846
    %v6947 = vtanh.pop %v6942
    %v6948 = vtanh.pop %v6943
    %v6949 = vtanh.pop %v6944
    %v6950 = vtanh.pop %v6945
    %v6951 = vtanh.pop %v6946
    %v6952 = vadd.f32 %v6947, 1.0
    %v6953 = vadd.f32 %v6948, 1.0
    %v6954 = vadd.f32 %v6949, 1.0
    %v6955 = vadd.f32 %v6950, 1.0
    %v6956 = vadd.f32 %v6951, 1.0
    %v6957 = vmul.f32 %v6917, %v6952
    %v6958 = vmul.f32 %v6918, %v6953
    %v6959 = vmul.f32 %v6919, %v6954
    %v6960 = vmul.f32 %v6920, %v6955
    %v6961 = vmul.f32 %v6921, %v6956
    %v6962 = vpack.c.bf16 %v6958, %v6957
    %v6963 = vpack.c.bf16 %v6960, %v6959
    %v6964 = vpack.c.bf16 %v6961, %v6961
    %s6965 = scalar_lea.vmem %s75, 64
    %v6966 = vld [vmem:[%s6965] sm:$0xf]
    %v6967 = vld [vmem:[%s6965 + $0x4] sm:$0xf]
    %v6968 = vld [vmem:[%s6965 + $0x8] sm:$0xf]
    %v6969 = vld [vmem:[%s6965 + $0xc] sm:$0xf]
    %v6970 = vld [vmem:[%s6965 + $0x10] sm:$0xf]
    %v6971 = vld [vmem:[%s6965 + $0x14] sm:$0xf]
    %v6972 = vld [vmem:[%s6965 + $0x18] sm:$0xf]
    %v6973 = vld [vmem:[%s6965 + $0x1c] sm:$0xf]
    %v6974 = vld [vmem:[%s6965 + $0x20] sm:$0xf]
    %v6975 = vld [vmem:[%s6965 + $0x24] sm:$0xf]
    %v6976 = vld [vmem:[%s6965 + $0x28] sm:$0xf]
    %v6977 = vld [vmem:[%s6965 + $0x2c] sm:$0xf]
    %v6978 = vld [vmem:[%s6965 + $0x30] sm:$0xf]
    %v6979 = vld [vmem:[%s6965 + $0x34] sm:$0xf]
    %v6980 = vld [vmem:[%s6965 + $0x38] sm:$0xf]
    %v6981 = vld [vmem:[%s6965 + $0x3c] sm:$0xf]
    %v6998 = vunpack.c.l.b16 %v6966
    %v6999 = vunpack.c.l.b16 %v6967
    %v7000 = vunpack.c.l.b16 %v6968
    %v7001 = vunpack.c.l.b16 %v6969
    %v7002 = vunpack.c.l.b16 %v6970
    %v7003 = vunpack.c.l.b16 %v6971
    %v7004 = vunpack.c.l.b16 %v6972
    %v7005 = vunpack.c.l.b16 %v6973
    %v7006 = vunpack.c.l.b16 %v6974
    %v7007 = vunpack.c.l.b16 %v6975
    %v7008 = vunpack.c.l.b16 %v6976
    %v7009 = vunpack.c.l.b16 %v6977
    %v7010 = vunpack.c.l.b16 %v6978
    %v7011 = vunpack.c.l.b16 %v6979
    %v7012 = vunpack.c.l.b16 %v6980
    %v7013 = vunpack.c.l.b16 %v6981
    %v7014 = vpack.c.b16 %v6999, %v6998
    %v7015 = vpack.c.b16 %v7001, %v7000
    %v7016 = vpack.c.b16 %v7003, %v7002
    %v7017 = vpack.c.b16 %v7005, %v7004
    %v7018 = vpack.c.b16 %v7007, %v7006
    %v7019 = vpack.c.b16 %v7009, %v7008
    %v7020 = vpack.c.b16 %v7011, %v7010
    %v7021 = vpack.c.b16 %v7013, %v7012
    %7030 = vmatprep.subr.bf16.mxu0 0
    %7031 = vmatpush1.bf16.msra.mxu0 %v7021
    %7032 = vmatprep.subr.bf16.mxu0 0
    %7033 = vmatpush1.bf16.msra.mxu0 %v7020
    %7034 = vmatprep.subr.bf16.mxu0 0
    %7035 = vmatpush1.bf16.msra.mxu0 %v7019
    %7036 = vmatprep.subr.bf16.mxu0 0
    %7037 = vmatpush1.bf16.msra.mxu0 %v7018
    %7038 = vmatprep.subr.bf16.mxu0 0
    %7039 = vmatpush1.bf16.msra.mxu0 %v7017
    %7040 = vmatprep.subr.bf16.mxu0 0
    %7041 = vmatpush1.bf16.msra.mxu0 %v7016
    %7042 = vmatprep.subr.bf16.mxu0 0
    %7043 = vmatpush1.bf16.msra.mxu0 %v7015
    %7044 = vmatprep.subr.bf16.mxu0 0
    %7045 = vmatpush1.bf16.msra.mxu0 %v7014
    %7046 = vmatprep.subr.bf16.mxu0 0
    %7047 = vmatpush2.bf16.msra.mxu0 0
    %7048 = vmatprep.subr.bf16.mxu0 0
    %7049 = vmatpush2.bf16.msra.mxu0 0
    %7050 = vmatprep.subr.bf16.mxu0 0
    %7051 = vmatpush2.bf16.msra.mxu0 0
    %7052 = vmatprep.subr.bf16.mxu0 0
    %7053 = vmatpush2.bf16.msra.mxu0 0
    %7054 = vmatprep.subr.bf16.mxu0 0
    %7055 = vmatpush2.bf16.msra.mxu0 0
    %7056 = vmatprep.subr.bf16.mxu0 0
    %7057 = vmatpush2.bf16.msra.mxu0 0
    %7058 = vmatprep.subr.bf16.mxu0 0
    %7059 = vmatpush2.bf16.msra.mxu0 0
    %7060 = vmatprep.subr.bf16.mxu0 0
    %7061 = vmatpush2.bf16.msra.mxu0 0
    %7062 = vmatprep.mubr.bf16.mxu0 0
    %7063 = vmatmul.mubr.bf16.gmra.mxu0 %v6962
    %v7064 = vpop.f32.mrf.mxu0
    %v7065 = vadd.f32 0.0, %v7064
    %v7066 = vpop.f32.mrf.mxu0
    %v7067 = vpop.f32.mrf.mxu0
    %v7068 = vpop.f32.mrf.mxu0
    %7069 = vmatprep.mubr.bf16.mxu0 0
    %7070 = vmatmul.mubr.bf16.gmra.mxu0 %v6963
    %v7071 = vpop.f32.mrf.mxu0
    %v7072 = vadd.f32 0.0, %v7071
    %v7073 = vpop.f32.mrf.mxu0
    %v7074 = vpop.f32.mrf.mxu0
    %v7075 = vpop.f32.mrf.mxu0
    %7076 = vmatprep.mubr.bf16.mxu0 0
    %7077 = vmatmul.mubr.bf16.gmra.mxu0 %v6964
    %v7078 = vpop.f32.mrf.mxu0
    %v7079 = vpop.f32.mrf.mxu0
    %v7080 = vpop.f32.mrf.mxu0
    %v7081 = vpop.f32.mrf.mxu0
    %7082 = vdwg.mxu0
    %v7083 = vadd.f32 %v6728, %v7065
    %v7084 = vadd.f32 %v6730, %v7072
    %s7085 = scalar_lea.vmem %s77, 1
    %v7086 = vld [vmem:[%s7085] sm:$0x1]
    %v7088 = vlaneseq
    %v7089 = vshrl.u32 %v7088, 7
    %v7090 = vsub.s32 0, %v7089
    %v7091 = vrot.slane %v7086, %v7090
    %v7093 = vadd.f32 %v7083, %v7091
    %v7094 = vadd.f32 %v7084, %v7091
    %v7095 = vadd.f32 %v5483, %v7093
    %v7096 = vmul.f32 %v7095, 0.5
    %v7097 = vadd.f32 %v7096, %v7093
    %v7098 = vmul.f32 %v7097, 0.5
    %v7099 = vlaneseq
    %v7100 = vshrl.u32 %v7099, 7
    %v7101 = vsub.s32 0, %v7100
    %v7102 = vrot.slane %v7096, %v7101
    %v7103 = vsel %vm3815, %v7102, %v5483
    %v7104 = vsel %vm3817, %v7102, %v5484
    %v7105 = vlaneseq
    %v7106 = vshrl.u32 %v7105, 7
    %v7107 = vsub.s32 0, %v7106
    %v7108 = vrot.slane %v7098, %v7107
    %v7109 = vsel %vm3815, %v7108, %v7093
    %v7110 = vsel %vm3817, %v7108, %v7094
    %v7111 = vadd.f32 %v7104, %v7110
    %v7112 = vmul.f32 %v7111, 0.5
    %v7113 = vadd.f32 %v7112, %v7110
    %v7114 = vmul.f32 %v7113, 0.5
    %v7115 = vlaneseq
    %v7116 = vshrl.u32 %v7115, 7
    %v7117 = vsub.s32 1, %v7116
    %v7118 = vrot.slane %v7112, %v7117
    %v7119 = vsel %vm3852, %v7118, %v7103
    %v7120 = vsel %vm3854, %v7118, %v7104
    %v7121 = vlaneseq
    %v7122 = vshrl.u32 %v7121, 7
    %v7123 = vsub.s32 1, %v7122
    %v7124 = vrot.slane %v7114, %v7123
    %v7125 = vsel %vm3852, %v7124, %v7109
    %v7126 = vsel %vm3854, %v7124, %v7110
    %v7127 = vsel %vm934, %v7119, %v7120
    %v7128 = vsel %vm934, %v7125, %v7126
    %v7129 = vld [vmem:[%s37] sm:$0x1]
    %v7130 = vld [vmem:[%s39] sm:$0x1]
    %v7131 = vsel %vm313, %v7127, 0.0
    %7132 = vadd.xlane.f32.xlu0 %v7131
    %v7133 = vpop.xlane.xlu0 %7132
    %v7134 = vmul.f32 %v7133, %v317
    %v7135 = vsub.f32 %v7127, %v7134
    %v7136 = vmul.f32 %v7135, %v7135
    %v7137 = vsel %vm313, %v7136, 0.0
    %7138 = vadd.xlane.f32.xlu0 %v7137
    %v7139 = vpop.xlane.xlu0 %7138
    %v7140 = vmul.f32 %v7139, %v317
    %v7141 = vadd.f32 %v7140, 1e-06
    %v7142 = vrsqrt.pop %v7141
    %v7143 = vmul.f32 %v7135, %v7142
    %v7145 = vlaneseq
    %v7146 = vshrl.u32 %v7145, 7
    %v7147 = vsub.s32 0, %v7146
    %v7148 = vrot.slane %v7129, %v7147
    %v7150 = vmul.f32 %v7143, %v7148
    %v7152 = vlaneseq
    %v7153 = vshrl.u32 %v7152, 7
    %v7154 = vsub.s32 0, %v7153
    %v7155 = vrot.slane %v7130, %v7154
    %v7157 = vadd.f32 %v7150, %v7155
    %v7158 = vld [vmem:[%s79] sm:$0x1]
    %v7159 = vld [vmem:[%s81] sm:$0x1]
    %v7160 = vsel %vm313, %v7128, 0.0
    %7161 = vadd.xlane.f32.xlu0 %v7160
    %v7162 = vpop.xlane.xlu0 %7161
    %v7163 = vmul.f32 %v7162, %v317
    %v7164 = vsub.f32 %v7128, %v7163
    %v7165 = vmul.f32 %v7164, %v7164
    %v7166 = vsel %vm313, %v7165, 0.0
    %7167 = vadd.xlane.f32.xlu0 %v7166
    %v7168 = vpop.xlane.xlu0 %7167
    %v7169 = vmul.f32 %v7168, %v317
    %v7170 = vadd.f32 %v7169, 1e-06
    %v7171 = vrsqrt.pop %v7170
    %v7172 = vmul.f32 %v7164, %v7171
    %v7174 = vlaneseq
    %v7175 = vshrl.u32 %v7174, 7
    %v7176 = vsub.s32 0, %v7175
    %v7177 = vrot.slane %v7158, %v7176
    %v7179 = vmul.f32 %v7172, %v7177
    %v7181 = vlaneseq
    %v7182 = vshrl.u32 %v7181, 7
    %v7183 = vsub.s32 0, %v7182
    %v7184 = vrot.slane %v7159, %v7183
    %v7186 = vadd.f32 %v7179, %v7184
    %v7187 = vpack.c.bf16 %v7157, %v7157
    %v7188 = vld [vmem:[%s41] sm:$0xf]
    %v7189 = vld [vmem:[%s41 + $0x4] sm:$0xf]
    %v7190 = vld [vmem:[%s41 + $0x8] sm:$0xf]
    %v7191 = vld [vmem:[%s41 + $0xc] sm:$0xf]
    %v7192 = vld [vmem:[%s43] sm:$0x1]
    %v7194 = vlaneseq
    %v7195 = vshrl.u32 %v7194, 7
    %v7196 = vsub.s32 0, %v7195
    %v7197 = vrot.slane %v7192, %v7196
    %v7203 = vunpack.c.l.b16 %v7188
    %v7204 = vunpack.c.l.b16 %v7189
    %v7205 = vunpack.c.l.b16 %v7190
    %v7206 = vunpack.c.l.b16 %v7191
    %v7207 = vpack.c.b16 %v7204, %v7203
    %v7208 = vpack.c.b16 %v7206, %v7205
    %v7212 = vsel %vm300, %v7187, 0
    %7214 = vmatprep.subr.bf16.mxu0 0
    %7215 = vmatpush1.bf16.msra.mxu0 0
    %7216 = vmatprep.subr.bf16.mxu0 0
    %7217 = vmatpush1.bf16.msra.mxu0 0
    %7218 = vmatprep.subr.bf16.mxu0 0
    %7219 = vmatpush1.bf16.msra.mxu0 0
    %7220 = vmatprep.subr.bf16.mxu0 0
    %7221 = vmatpush1.bf16.msra.mxu0 0
    %7222 = vmatprep.subr.bf16.mxu0 0
    %7223 = vmatpush1.bf16.msra.mxu0 0
    %7224 = vmatprep.subr.bf16.mxu0 0
    %7225 = vmatpush1.bf16.msra.mxu0 0
    %7226 = vmatprep.subr.bf16.mxu0 0
    %7227 = vmatpush1.bf16.msra.mxu0 %v7208
    %7228 = vmatprep.subr.bf16.mxu0 0
    %7229 = vmatpush1.bf16.msra.mxu0 %v7207
    %7230 = vmatprep.subr.bf16.mxu0 0
    %7231 = vmatpush2.bf16.msra.mxu0 0
    %7232 = vmatprep.subr.bf16.mxu0 0
    %7233 = vmatpush2.bf16.msra.mxu0 0
    %7234 = vmatprep.subr.bf16.mxu0 0
    %7235 = vmatpush2.bf16.msra.mxu0 0
    %7236 = vmatprep.subr.bf16.mxu0 0
    %7237 = vmatpush2.bf16.msra.mxu0 0
    %7238 = vmatprep.subr.bf16.mxu0 0
    %7239 = vmatpush2.bf16.msra.mxu0 0
    %7240 = vmatprep.subr.bf16.mxu0 0
    %7241 = vmatpush2.bf16.msra.mxu0 0
    %7242 = vmatprep.subr.bf16.mxu0 0
    %7243 = vmatpush2.bf16.msra.mxu0 0
    %7244 = vmatprep.subr.bf16.mxu0 0
    %7245 = vmatpush2.bf16.msra.mxu0 0
    %7246 = vmatprep.mubr.bf16.mxu0 0
    %7247 = vmatmul.mubr.bf16.gmra.mxu0 %v7212
    %v7248 = vpop.f32.mrf.mxu0
    %v7249 = vadd.f32 %v7197, %v7248
    %v7250 = vpop.f32.mrf.mxu0
    %v7251 = vpop.f32.mrf.mxu0
    %v7252 = vpop.f32.mrf.mxu0
    %7253 = vdwg.mxu0
    %v7254 = vpack.c.bf16 %v7186, %v7186
    %v7255 = vld [vmem:[%s83] sm:$0xf]
    %v7256 = vld [vmem:[%s83 + $0x4] sm:$0xf]
    %v7257 = vld [vmem:[%s83 + $0x8] sm:$0xf]
    %v7258 = vld [vmem:[%s83 + $0xc] sm:$0xf]
    %v7263 = vunpack.c.l.b16 %v7255
    %v7264 = vunpack.c.l.b16 %v7256
    %v7265 = vunpack.c.l.b16 %v7257
    %v7266 = vunpack.c.l.b16 %v7258
    %v7267 = vpack.c.b16 %v7264, %v7263
    %v7268 = vpack.c.b16 %v7266, %v7265
    %v7272 = vsel %vm300, %v7254, 0
    %7274 = vmatprep.subr.bf16.mxu0 0
    %7275 = vmatpush1.bf16.msra.mxu0 0
    %7276 = vmatprep.subr.bf16.mxu0 0
    %7277 = vmatpush1.bf16.msra.mxu0 0
    %7278 = vmatprep.subr.bf16.mxu0 0
    %7279 = vmatpush1.bf16.msra.mxu0 0
    %7280 = vmatprep.subr.bf16.mxu0 0
    %7281 = vmatpush1.bf16.msra.mxu0 0
    %7282 = vmatprep.subr.bf16.mxu0 0
    %7283 = vmatpush1.bf16.msra.mxu0 0
    %7284 = vmatprep.subr.bf16.mxu0 0
    %7285 = vmatpush1.bf16.msra.mxu0 0
    %7286 = vmatprep.subr.bf16.mxu0 0
    %7287 = vmatpush1.bf16.msra.mxu0 %v7268
    %7288 = vmatprep.subr.bf16.mxu0 0
    %7289 = vmatpush1.bf16.msra.mxu0 %v7267
    %7290 = vmatprep.subr.bf16.mxu0 0
    %7291 = vmatpush2.bf16.msra.mxu0 0
    %7292 = vmatprep.subr.bf16.mxu0 0
    %7293 = vmatpush2.bf16.msra.mxu0 0
    %7294 = vmatprep.subr.bf16.mxu0 0
    %7295 = vmatpush2.bf16.msra.mxu0 0
    %7296 = vmatprep.subr.bf16.mxu0 0
    %7297 = vmatpush2.bf16.msra.mxu0 0
    %7298 = vmatprep.subr.bf16.mxu0 0
    %7299 = vmatpush2.bf16.msra.mxu0 0
    %7300 = vmatprep.subr.bf16.mxu0 0
    %7301 = vmatpush2.bf16.msra.mxu0 0
    %7302 = vmatprep.subr.bf16.mxu0 0
    %7303 = vmatpush2.bf16.msra.mxu0 0
    %7304 = vmatprep.subr.bf16.mxu0 0
    %7305 = vmatpush2.bf16.msra.mxu0 0
    %7306 = vmatprep.mubr.bf16.mxu0 0
    %7307 = vmatmul.mubr.bf16.gmra.mxu0 %v7272
    %v7308 = vpop.f32.mrf.mxu0
    %v7309 = vadd.f32 0.0, %v7308
    %v7310 = vpop.f32.mrf.mxu0
    %v7311 = vpop.f32.mrf.mxu0
    %v7312 = vpop.f32.mrf.mxu0
    %7313 = vdwg.mxu0
    %v7314 = vadd.f32 %v7249, %v7309
    %v7315 = vld [vmem:[%s85] sm:$0x1]
    %v7317 = vlaneseq
    %v7318 = vshrl.u32 %v7317, 7
    %v7319 = vsub.s32 0, %v7318
    %v7320 = vrot.slane %v7315, %v7319
    %v7322 = vadd.f32 %v7314, %v7320
    %vm7323 = vcmask 74752
    %7324 = vst.msk [vmem:[#allocation2] sm:$0x3] %vm7323, %v7322
    // Predicated region
    $region174: #{ds_mvit_forward.1} parent=1 // pred_check
      _
    $region175: #{ds_mvit_forward.1} parent=1 // pred_check_branch
      %7326 = sbr.rel (0) target = $region177
    $region176: #{ds_mvit_forward.1} parent=1 // pred_region
      %s7328 = ssub.s32 32, 32
      %7329 = vsyncadd [#allocation3], %s7328
      %s7331 = sshll.u32 [#allocation2], 4
      %s7332 = int_to_ptr.vmem [resolvable:$true] %s7331
      %7334 = dma.vmem_to_hbm [thread:$0]  %s7332, 32, %s87, [#allocation3]
    $region177: #{ds_mvit_forward.1} parent=1 // pred_fallthru
      _
    // Predicated region
    $region178: #{ds_mvit_forward.1} parent=1 // pred_check
      _
    $region179: #{ds_mvit_forward.1} parent=1 // pred_check_branch
      %7336 = sbr.rel (0) target = $region181
    $region180: #{ds_mvit_forward.1} parent=1 // pred_region
      %7337 = dma.done [#allocation3], 32
    $region181: #{ds_mvit_forward.1} parent=1 // pred_fallthru
      _
    %7338 = vsyncpa [#allocation3], 1

</llo_original>
